<compile_context>
chip_gen: v6e
topology: v6e:2x2x1
jax: 0.10.0
libtpu: 0.0.40
codegen_flags: <defaults>
</compile_context>

<pallas_src>
import functools

import numpy as np
import jax
import jax.numpy as jnp
from jax import lax
from jax.experimental import pallas as pl
from jax.experimental.pallas import tpu as pltpu


# ---------------------------------------------------------------------------
# Fused kernel (one grid step == TB images)
# ---------------------------------------------------------------------------

def _lenet_kernel(x_ref, t1_ref, b1_ref, p1_ref, t2_ref, b2_ref, p2_ref,
                  f1_ref, bf1_ref, f2_ref, bf2_ref, f3_ref, bf3_ref,
                  out_ref, *, tb, compute_dtype):
    f32 = jnp.float32
    cdt = compute_dtype

    # Input block: rows = h*tb + b (h = 0..31, b = image-in-tile), lanes = c*32 + w.
    x = x_ref[...]                                                   # (32*tb, 96)

    # ---- conv1 (3->6, 5x5 valid): 5 accumulating GEMMs, K=96 ---------------
    # y1 row block a (a = 0..27) == conv1 output row a for every image.
    y1 = jnp.dot(x[0:28 * tb], t1_ref[0], preferred_element_type=f32)
    for i in range(1, 5):
        y1 = y1 + jnp.dot(x[i * tb:(i + 28) * tb], t1_ref[i],
                          preferred_element_type=f32)
    y1 = jnp.maximum(y1 + b1_ref[...], 0.0)                          # (28*tb, 168)

    # ---- maxpool1 2x2: height = shifted-row max (valid at even row blocks),
    #      width = max over two 0/1-selection GEMMs --------------------------
    h1 = jnp.maximum(y1[0:27 * tb], y1[tb:28 * tb]).astype(cdt)      # (27*tb, 168)
    z1 = jnp.maximum(
        jnp.dot(h1, p1_ref[0], preferred_element_type=f32),
        jnp.dot(h1, p1_ref[1], preferred_element_type=f32)).astype(cdt)  # (27*tb, 84)

    # ---- conv2 (6->16, 5x5 valid): 5 accumulating GEMMs, K=84 --------------
    # z1 row block 2q == pooled conv1 row q.  y2 row block r is valid at even r
    # (r = 2m == conv2 output row m).
    y2 = jnp.dot(z1[0:19 * tb], t2_ref[0], preferred_element_type=f32)
    for i in range(1, 5):
        y2 = y2 + jnp.dot(z1[2 * i * tb:(2 * i + 19) * tb], t2_ref[i],
                          preferred_element_type=f32)
    y2 = jnp.maximum(y2 + b2_ref[...], 0.0)                          # (19*tb, 160)

    # ---- maxpool2 2x2 (valid at row blocks r = 4*q2) ------------------------
    h2 = jnp.maximum(y2[0:17 * tb], y2[2 * tb:19 * tb]).astype(cdt)  # (17*tb, 160)
    z2 = jnp.maximum(
        jnp.dot(h2, p2_ref[0], preferred_element_type=f32),
        jnp.dot(h2, p2_ref[1], preferred_element_type=f32)).astype(cdt)  # (17*tb, 80)

    # ---- fc1: 400 -> 120, batched over TB images (NCHW flatten in f1_ref) ---
    a1 = jnp.dot(z2[0:tb], f1_ref[0], preferred_element_type=f32)
    for h in range(1, 5):
        a1 = a1 + jnp.dot(z2[4 * h * tb:(4 * h + 1) * tb], f1_ref[h],
                          preferred_element_type=f32)
    a1 = jnp.maximum(a1 + bf1_ref[...], 0.0).astype(cdt)             # (tb, 120)

    # ---- fc2: 120 -> 84 ------------------------------------------------------
    a2 = jnp.maximum(
        jnp.dot(a1, f2_ref[...], preferred_element_type=f32) + bf2_ref[...],
        0.0).astype(cdt)                                             # (tb, 84)

    # ---- fc3: 84 -> num_classes (lane-padded to 128) -------------------------
    out_ref[...] = (jnp.dot(a2, f3_ref[...], preferred_element_type=f32)
                    + bf3_ref[...])                                  # (tb, 128)


# ---------------------------------------------------------------------------
# Host-side constant construction (row-Toeplitz conv matrices, pool selectors,
# permuted FC weights, lane-tiled biases)
# ---------------------------------------------------------------------------

def _build_constants(params, num_classes, compute_dtype):
    g = lambda a: np.asarray(jax.device_get(a), np.float32)
    W1, b1 = g(params["conv1_w"]), g(params["conv1_b"])      # (6,3,5,5), (6,)
    W2, b2 = g(params["conv2_w"]), g(params["conv2_b"])      # (16,6,5,5), (16,)
    Wf1, bfc1 = g(params["fc1_w"]), g(params["fc1_b"])       # (120,400), (120,)
    Wf2, bfc2 = g(params["fc2_w"]), g(params["fc2_b"])       # (84,120),  (84,)
    Wf3, bfc3 = g(params["fc3_w"]), g(params["fc3_b"])       # (nc,84),   (nc,)

    ncp = ((num_classes + 127) // 128) * 128                  # lane-dense output

    # conv1 row-Toeplitz (kernel-row i): T1[i, c*32+w_in, ow*6+o] = W1[o,c,i,w_in-ow]
    T1 = np.zeros((5, 96, 168), np.float32)
    for i in range(5):
        for c in range(3):
            for ow in range(28):
                for j in range(5):
                    T1[i, c * 32 + ow + j, ow * 6:(ow + 1) * 6] = W1[:, c, i, j]

    # conv2 row-Toeplitz: input lanes are (w1*6 + c); T2[i, w1*6+c, ow*16+o]
    T2 = np.zeros((5, 84, 160), np.float32)
    for i in range(5):
        for c in range(6):
            for ow in range(10):
                for j in range(5):
                    T2[i, (ow + j) * 6 + c, ow * 16:(ow + 1) * 16] = W2[:, c, i, j]

    # 2x2 max-pool width-selection matrices (right-multiply, even/odd column).
    P1 = np.zeros((2, 168, 84), np.float32)
    for q in range(14):
        for o in range(6):
            P1[0, (2 * q) * 6 + o, q * 6 + o] = 1.0
            P1[1, (2 * q + 1) * 6 + o, q * 6 + o] = 1.0
    P2 = np.zeros((2, 160, 80), np.float32)
    for q in range(5):
        for o in range(16):
            P2[0, (2 * q) * 16 + o, q * 16 + o] = 1.0
            P2[1, (2 * q + 1) * 16 + o, q * 16 + o] = 1.0

    # fc1 with PyTorch's NCHW .view(B,-1) permutation baked in:
    # kernel feature lanes per pooled row h are (w*16 + c); flat index = c*25+h*5+w.
    F1 = np.zeros((5, 80, 120), np.float32)
    for h in range(5):
        for w in range(5):
            for c in range(16):
                F1[h, w * 16 + c, :] = Wf1[:, c * 25 + h * 5 + w]

    F2 = np.ascontiguousarray(Wf2.T)                          # (120, 84)
    F3 = np.zeros((84, ncp), np.float32)
    F3[:, :num_classes] = Wf3.T

    B1 = np.tile(b1, 28)[None, :]                             # (1, 168)
    B2 = np.tile(b2, 10)[None, :]                             # (1, 160)
    BF1 = bfc1[None, :]                                       # (1, 120)
    BF2 = bfc2[None, :]                                       # (1, 84)
    BF3 = np.zeros((1, ncp), np.float32)
    BF3[0, :num_classes] = bfc3

    mm = lambda a: jnp.asarray(a, compute_dtype)              # MXU operands
    fp = lambda a: jnp.asarray(a, jnp.float32)                # f32 epilogue consts
    weights = [mm(T1), fp(B1), mm(P1),
               mm(T2), fp(B2), mm(P2),
               mm(F1), fp(BF1), mm(F2), fp(BF2), mm(F3), fp(BF3)]
    return weights, ncp


# ---------------------------------------------------------------------------
# Forward-pass wrapper (single fused pallas_call, grid over batch tiles)
# ---------------------------------------------------------------------------

def make_animal_classifier_forward(params, num_classes,
                                   compute_dtype=jnp.bfloat16, batch_tile=16):
    weights, ncp = _build_constants(params, num_classes, compute_dtype)
    tb = int(batch_tile)
    kernel = functools.partial(_lenet_kernel, tb=tb, compute_dtype=compute_dtype)

    def forward(x_nchw):                                      # (B, 3, 32, 32)
        B = x_nchw.shape[0]
        assert x_nchw.shape[1:] == (3, 32, 32)
        nb = pl.cdiv(B, tb)
        bp = nb * tb

        # Host prep (plain XLA ops, outside the kernel): pad batch to a multiple
        # of TB, go to rows = (tile, h, b), lanes = (c, w), cast to compute dtype.
        xp = jnp.pad(x_nchw, ((0, bp - B), (0, 0), (0, 0), (0, 0)))
        xr = xp.transpose(0, 2, 1, 3).reshape(bp, 32, 96)             # (b, h, c*32+w)
        xr = xr.reshape(nb, tb, 32, 96).transpose(0, 2, 1, 3)         # (tile, h, b, :)
        xr = xr.reshape(nb * 32 * tb, 96).astype(compute_dtype)

        in_specs = [pl.BlockSpec((32 * tb, 96), lambda b: (b, 0))]
        for w in weights:                                      # weights: constant index_map
            in_specs.append(pl.BlockSpec(w.shape, lambda b, _nd=w.ndim: (0,) * _nd))

        out = pl.pallas_call(
            kernel,
            grid=(nb,),
            in_specs=in_specs,
            out_specs=pl.BlockSpec((tb, ncp), lambda b: (b, 0)),
            out_shape=jax.ShapeDtypeStruct((bp, ncp), jnp.float32),
            compiler_params=pltpu.CompilerParams(
                dimension_semantics=("parallel",),
                vmem_limit_bytes=64 * 1024 * 1024,
            ),
        )(xr, *weights)
        return out[:B, :num_classes]                           # (B, num_classes)

    return forward


# ---------------------------------------------------------------------------
# Pure-JAX reference (for the in-script correctness check)
# ---------------------------------------------------------------------------

def _reference_forward(x, params):
    prec = lax.Precision.HIGHEST
    y = lax.conv_general_dilated(
        x, params["conv1_w"], window_strides=(1, 1), padding="VALID",
        dimension_numbers=("NCHW", "OIHW", "NCHW"), precision=prec)
    y = jax.nn.relu(y + params["conv1_b"][None, :, None, None])
    y = lax.reduce_window(y, -jnp.inf, lax.max, (1, 1, 2, 2), (1, 1, 2, 2), "VALID")
    y = lax.conv_general_dilated(
        y, params["conv2_w"], window_strides=(1, 1), padding="VALID",
        dimension_numbers=("NCHW", "OIHW", "NCHW"), precision=prec)
    y = jax.nn.relu(y + params["conv2_b"][None, :, None, None])
    y = lax.reduce_window(y, -jnp.inf, lax.max, (1, 1, 2, 2), (1, 1, 2, 2), "VALID")
    y = y.reshape(y.shape[0], -1)                              # NCHW flatten
    y = jax.nn.relu(jnp.dot(y, params["fc1_w"].T, precision=prec) + params["fc1_b"])
    y = jax.nn.relu(jnp.dot(y, params["fc2_w"].T, precision=prec) + params["fc2_b"])
    return jnp.dot(y, params["fc3_w"].T, precision=prec) + params["fc3_b"]


# ---------------------------------------------------------------------------
# Deterministic parameter init (PyTorch-shaped, Kaiming-uniform-style bounds)
# ---------------------------------------------------------------------------

def init_params(key, num_classes):
    ks = jax.random.split(key, 10)

    def u(k, shape, fan_in):
        bound = 1.0 / (fan_in ** 0.5)
        return jax.random.uniform(k, shape, jnp.float32, -bound, bound)

    return {
        "conv1_w": u(ks[0], (6, 3, 5, 5), 3 * 25),
        "conv1_b": u(ks[1], (6,), 3 * 25),
        "conv2_w": u(ks[2], (16, 6, 5, 5), 6 * 25),
        "conv2_b": u(ks[3], (16,), 6 * 25),
        "fc1_w":   u(ks[4], (120, 16 * 5 * 5), 16 * 5 * 5),
        "fc1_b":   u(ks[5], (120,), 16 * 5 * 5),
        "fc2_w":   u(ks[6], (84, 120), 120),
        "fc2_b":   u(ks[7], (84,), 84),
        "fc3_w":   u(ks[8], (num_classes, 84), 84),
        "fc3_b":   u(ks[9], (num_classes,), 84),
    }


if __name__ == "__main__":
    num_classes = 10
    key = jax.random.PRNGKey(0)
    pkey, xkey = jax.random.split(key)
    params = init_params(pkey, num_classes)

    # Input must be 32x32 so the flattened feature size is 16*5*5 = 400.
    x = jax.random.normal(xkey, (2, 3, 32, 32), jnp.float32)

    ref = jax.block_until_ready(_reference_forward(x, params))

    # Exact-precision path: verify the fused kernel against the pure-JAX reference.
    # 2e-2 is orders of magnitude below the O(1) error any layout/permutation bug
    # would produce, yet safely above worst-case accumulated rounding noise.
    fwd_f32 = jax.jit(make_animal_classifier_forward(params, num_classes,
                                                     compute_dtype=jnp.float32))
    out_f32 = jax.block_until_ready(fwd_f32(x))
    max_err = float(jnp.max(jnp.abs(out_f32 - ref)))
    assert max_err < 2e-2, f"f32 kernel/reference mismatch: max abs err = {max_err}"

    # Default fast path: bf16 MXU operands, f32 accumulation + f32 epilogue.
    fwd = jax.jit(make_animal_classifier_forward(params, num_classes))
    out = jax.block_until_ready(fwd(x))
    bf16_err = float(jnp.max(jnp.abs(out - ref)))
    assert bf16_err < 0.5, f"bf16 kernel/reference mismatch: max abs err = {bf16_err}"

    assert out.shape == (2, num_classes)
    assert out.dtype == jnp.float32
    assert bool(jnp.all(jnp.isfinite(out)))
    print("KERNEL_OK")
</pallas_src>

<mosaic_0001>
module attributes {stable_mosaic.version = 11 : i64} {
  func.func @_lenet_kernel(%arg0: i32, %arg1: memref<512x96xf32, #tpu.memory_space<vmem>>, %arg2: memref<5x96x168xf32, #tpu.memory_space<vmem>>, %arg3: memref<1x168xf32, #tpu.memory_space<vmem>>, %arg4: memref<2x168x84xf32, #tpu.memory_space<vmem>>, %arg5: memref<5x84x160xf32, #tpu.memory_space<vmem>>, %arg6: memref<1x160xf32, #tpu.memory_space<vmem>>, %arg7: memref<2x160x80xf32, #tpu.memory_space<vmem>>, %arg8: memref<5x80x120xf32, #tpu.memory_space<vmem>>, %arg9: memref<1x120xf32, #tpu.memory_space<vmem>>, %arg10: memref<120x84xf32, #tpu.memory_space<vmem>>, %arg11: memref<1x84xf32, #tpu.memory_space<vmem>>, %arg12: memref<84x128xf32, #tpu.memory_space<vmem>>, %arg13: memref<1x128xf32, #tpu.memory_space<vmem>>, %arg14: memref<16x128xf32, #tpu.memory_space<vmem>>) attributes {dimension_semantics = [#tpu.dimension_semantics<parallel>], iteration_bounds = array<i64: 1>, scalar_prefetch = 0 : i64, scratch_operands = 0 : i64, tpu.core_type = #tpu.core_type<tc>, window_params = [{transform_indices = @transform_0, window_bounds = array<i64: 512, 96>}, {pipeline_mode = #tpu.pipeline_mode<synchronous>, transform_indices = @transform_1, window_bounds = array<i64: 5, 96, 168>}, {pipeline_mode = #tpu.pipeline_mode<synchronous>, transform_indices = @transform_2, window_bounds = array<i64: 1, 168>}, {pipeline_mode = #tpu.pipeline_mode<synchronous>, transform_indices = @transform_3, window_bounds = array<i64: 2, 168, 84>}, {pipeline_mode = #tpu.pipeline_mode<synchronous>, transform_indices = @transform_4, window_bounds = array<i64: 5, 84, 160>}, {pipeline_mode = #tpu.pipeline_mode<synchronous>, transform_indices = @transform_5, window_bounds = array<i64: 1, 160>}, {pipeline_mode = #tpu.pipeline_mode<synchronous>, transform_indices = @transform_6, window_bounds = array<i64: 2, 160, 80>}, {pipeline_mode = #tpu.pipeline_mode<synchronous>, transform_indices = @transform_7, window_bounds = array<i64: 5, 80, 120>}, {pipeline_mode = #tpu.pipeline_mode<synchronous>, transform_indices = @transform_8, window_bounds = array<i64: 1, 120>}, {pipeline_mode = #tpu.pipeline_mode<synchronous>, transform_indices = @transform_9, window_bounds = array<i64: 120, 84>}, {pipeline_mode = #tpu.pipeline_mode<synchronous>, transform_indices = @transform_10, window_bounds = array<i64: 1, 84>}, {pipeline_mode = #tpu.pipeline_mode<synchronous>, transform_indices = @transform_11, window_bounds = array<i64: 84, 128>}, {pipeline_mode = #tpu.pipeline_mode<synchronous>, transform_indices = @transform_12, window_bounds = array<i64: 1, 128>}, {transform_indices = @transform_13, window_bounds = array<i64: 16, 128>}]} {
    %c0 = arith.constant 0 : index
    %c0_0 = arith.constant 0 : index
    %0 = vector.load %arg1[%c0, %c0_0] : memref<512x96xf32, #tpu.memory_space<vmem>>, vector<512x96xf32>
    %1 = vector.extract_strided_slice %0 {offsets = [0, 0], sizes = [448, 96], strides = [1, 1]} : vector<512x96xf32> to vector<448x96xf32>
    %c0_1 = arith.constant 0 : index
    %c0_2 = arith.constant 0 : index
    %c0_3 = arith.constant 0 : index
    %2 = vector.load %arg2[%c0_1, %c0_2, %c0_3] : memref<5x96x168xf32, #tpu.memory_space<vmem>>, vector<1x96x168xf32>
    %3 = vector.shape_cast %2 : vector<1x96x168xf32> to vector<96x168xf32>
    %cst = arith.constant dense<0.000000e+00> : vector<448x168xf32>
    %4 = tpu.matmul %1, %3, %cst {dimension_numbers = #tpu.dot_dimension_numbers<[1], [0], [0], [1], [0, 0, 1, 1], [], []>} : vector<448x96xf32>, vector<96x168xf32>, vector<448x168xf32> -> vector<448x168xf32>
    %5 = vector.extract_strided_slice %0 {offsets = [16, 0], sizes = [448, 96], strides = [1, 1]} : vector<512x96xf32> to vector<448x96xf32>
    %c1 = arith.constant 1 : index
    %c0_4 = arith.constant 0 : index
    %c0_5 = arith.constant 0 : index
    %6 = vector.load %arg2[%c1, %c0_4, %c0_5] : memref<5x96x168xf32, #tpu.memory_space<vmem>>, vector<1x96x168xf32>
    %7 = vector.shape_cast %6 : vector<1x96x168xf32> to vector<96x168xf32>
    %cst_6 = arith.constant dense<0.000000e+00> : vector<448x168xf32>
    %8 = tpu.matmul %5, %7, %cst_6 {dimension_numbers = #tpu.dot_dimension_numbers<[1], [0], [0], [1], [0, 0, 1, 1], [], []>} : vector<448x96xf32>, vector<96x168xf32>, vector<448x168xf32> -> vector<448x168xf32>
    %9 = arith.addf %4, %8 : vector<448x168xf32>
    %10 = vector.extract_strided_slice %0 {offsets = [32, 0], sizes = [448, 96], strides = [1, 1]} : vector<512x96xf32> to vector<448x96xf32>
    %c2 = arith.constant 2 : index
    %c0_7 = arith.constant 0 : index
    %c0_8 = arith.constant 0 : index
    %11 = vector.load %arg2[%c2, %c0_7, %c0_8] : memref<5x96x168xf32, #tpu.memory_space<vmem>>, vector<1x96x168xf32>
    %12 = vector.shape_cast %11 : vector<1x96x168xf32> to vector<96x168xf32>
    %cst_9 = arith.constant dense<0.000000e+00> : vector<448x168xf32>
    %13 = tpu.matmul %10, %12, %cst_9 {dimension_numbers = #tpu.dot_dimension_numbers<[1], [0], [0], [1], [0, 0, 1, 1], [], []>} : vector<448x96xf32>, vector<96x168xf32>, vector<448x168xf32> -> vector<448x168xf32>
    %14 = arith.addf %9, %13 : vector<448x168xf32>
    %15 = vector.extract_strided_slice %0 {offsets = [48, 0], sizes = [448, 96], strides = [1, 1]} : vector<512x96xf32> to vector<448x96xf32>
    %c3 = arith.constant 3 : index
    %c0_10 = arith.constant 0 : index
    %c0_11 = arith.constant 0 : index
    %16 = vector.load %arg2[%c3, %c0_10, %c0_11] : memref<5x96x168xf32, #tpu.memory_space<vmem>>, vector<1x96x168xf32>
    %17 = vector.shape_cast %16 : vector<1x96x168xf32> to vector<96x168xf32>
    %cst_12 = arith.constant dense<0.000000e+00> : vector<448x168xf32>
    %18 = tpu.matmul %15, %17, %cst_12 {dimension_numbers = #tpu.dot_dimension_numbers<[1], [0], [0], [1], [0, 0, 1, 1], [], []>} : vector<448x96xf32>, vector<96x168xf32>, vector<448x168xf32> -> vector<448x168xf32>
    %19 = arith.addf %14, %18 : vector<448x168xf32>
    %20 = vector.extract_strided_slice %0 {offsets = [64, 0], sizes = [448, 96], strides = [1, 1]} : vector<512x96xf32> to vector<448x96xf32>
    %c4 = arith.constant 4 : index
    %c0_13 = arith.constant 0 : index
    %c0_14 = arith.constant 0 : index
    %21 = vector.load %arg2[%c4, %c0_13, %c0_14] : memref<5x96x168xf32, #tpu.memory_space<vmem>>, vector<1x96x168xf32>
    %22 = vector.shape_cast %21 : vector<1x96x168xf32> to vector<96x168xf32>
    %cst_15 = arith.constant dense<0.000000e+00> : vector<448x168xf32>
    %23 = tpu.matmul %20, %22, %cst_15 {dimension_numbers = #tpu.dot_dimension_numbers<[1], [0], [0], [1], [0, 0, 1, 1], [], []>} : vector<448x96xf32>, vector<96x168xf32>, vector<448x168xf32> -> vector<448x168xf32>
    %24 = arith.addf %19, %23 : vector<448x168xf32>
    %c0_16 = arith.constant 0 : index
    %c0_17 = arith.constant 0 : index
    %25 = vector.load %arg3[%c0_16, %c0_17] : memref<1x168xf32, #tpu.memory_space<vmem>>, vector<1x168xf32>
    %26 = vector.broadcast %25 : vector<1x168xf32> to vector<448x168xf32>
    %27 = arith.addf %24, %26 : vector<448x168xf32>
    %cst_18 = arith.constant 0.000000e+00 : f32
    %28 = vector.broadcast %cst_18 : f32 to vector<448x168xf32>
    %29 = arith.maximumf %27, %28 : vector<448x168xf32>
    %30 = vector.extract_strided_slice %29 {offsets = [0, 0], sizes = [432, 168], strides = [1, 1]} : vector<448x168xf32> to vector<432x168xf32>
    %31 = vector.extract_strided_slice %29 {offsets = [16, 0], sizes = [432, 168], strides = [1, 1]} : vector<448x168xf32> to vector<432x168xf32>
    %32 = arith.maximumf %30, %31 : vector<432x168xf32>
    %c0_19 = arith.constant 0 : index
    %c0_20 = arith.constant 0 : index
    %c0_21 = arith.constant 0 : index
    %33 = vector.load %arg4[%c0_19, %c0_20, %c0_21] : memref<2x168x84xf32, #tpu.memory_space<vmem>>, vector<1x168x84xf32>
    %34 = vector.shape_cast %33 : vector<1x168x84xf32> to vector<168x84xf32>
    %cst_22 = arith.constant dense<0.000000e+00> : vector<432x84xf32>
    %35 = tpu.matmul %32, %34, %cst_22 {dimension_numbers = #tpu.dot_dimension_numbers<[1], [0], [0], [1], [0, 0, 1, 1], [], []>} : vector<432x168xf32>, vector<168x84xf32>, vector<432x84xf32> -> vector<432x84xf32>
    %c1_23 = arith.constant 1 : index
    %c0_24 = arith.constant 0 : index
    %c0_25 = arith.constant 0 : index
    %36 = vector.load %arg4[%c1_23, %c0_24, %c0_25] : memref<2x168x84xf32, #tpu.memory_space<vmem>>, vector<1x168x84xf32>
    %37 = vector.shape_cast %36 : vector<1x168x84xf32> to vector<168x84xf32>
    %cst_26 = arith.constant dense<0.000000e+00> : vector<432x84xf32>
    %38 = tpu.matmul %32, %37, %cst_26 {dimension_numbers = #tpu.dot_dimension_numbers<[1], [0], [0], [1], [0, 0, 1, 1], [], []>} : vector<432x168xf32>, vector<168x84xf32>, vector<432x84xf32> -> vector<432x84xf32>
    %39 = arith.maximumf %35, %38 : vector<432x84xf32>
    %40 = vector.extract_strided_slice %39 {offsets = [0, 0], sizes = [304, 84], strides = [1, 1]} : vector<432x84xf32> to vector<304x84xf32>
    %c0_27 = arith.constant 0 : index
    %c0_28 = arith.constant 0 : index
    %c0_29 = arith.constant 0 : index
    %41 = vector.load %arg5[%c0_27, %c0_28, %c0_29] : memref<5x84x160xf32, #tpu.memory_space<vmem>>, vector<1x84x160xf32>
    %42 = vector.shape_cast %41 : vector<1x84x160xf32> to vector<84x160xf32>
    %cst_30 = arith.constant dense<0.000000e+00> : vector<304x160xf32>
    %43 = tpu.matmul %40, %42, %cst_30 {dimension_numbers = #tpu.dot_dimension_numbers<[1], [0], [0], [1], [0, 0, 1, 1], [], []>} : vector<304x84xf32>, vector<84x160xf32>, vector<304x160xf32> -> vector<304x160xf32>
    %44 = vector.extract_strided_slice %39 {offsets = [32, 0], sizes = [304, 84], strides = [1, 1]} : vector<432x84xf32> to vector<304x84xf32>
    %c1_31 = arith.constant 1 : index
    %c0_32 = arith.constant 0 : index
    %c0_33 = arith.constant 0 : index
    %45 = vector.load %arg5[%c1_31, %c0_32, %c0_33] : memref<5x84x160xf32, #tpu.memory_space<vmem>>, vector<1x84x160xf32>
    %46 = vector.shape_cast %45 : vector<1x84x160xf32> to vector<84x160xf32>
    %cst_34 = arith.constant dense<0.000000e+00> : vector<304x160xf32>
    %47 = tpu.matmul %44, %46, %cst_34 {dimension_numbers = #tpu.dot_dimension_numbers<[1], [0], [0], [1], [0, 0, 1, 1], [], []>} : vector<304x84xf32>, vector<84x160xf32>, vector<304x160xf32> -> vector<304x160xf32>
    %48 = arith.addf %43, %47 : vector<304x160xf32>
    %49 = vector.extract_strided_slice %39 {offsets = [64, 0], sizes = [304, 84], strides = [1, 1]} : vector<432x84xf32> to vector<304x84xf32>
    %c2_35 = arith.constant 2 : index
    %c0_36 = arith.constant 0 : index
    %c0_37 = arith.constant 0 : index
    %50 = vector.load %arg5[%c2_35, %c0_36, %c0_37] : memref<5x84x160xf32, #tpu.memory_space<vmem>>, vector<1x84x160xf32>
    %51 = vector.shape_cast %50 : vector<1x84x160xf32> to vector<84x160xf32>
    %cst_38 = arith.constant dense<0.000000e+00> : vector<304x160xf32>
    %52 = tpu.matmul %49, %51, %cst_38 {dimension_numbers = #tpu.dot_dimension_numbers<[1], [0], [0], [1], [0, 0, 1, 1], [], []>} : vector<304x84xf32>, vector<84x160xf32>, vector<304x160xf32> -> vector<304x160xf32>
    %53 = arith.addf %48, %52 : vector<304x160xf32>
    %54 = vector.extract_strided_slice %39 {offsets = [96, 0], sizes = [304, 84], strides = [1, 1]} : vector<432x84xf32> to vector<304x84xf32>
    %c3_39 = arith.constant 3 : index
    %c0_40 = arith.constant 0 : index
    %c0_41 = arith.constant 0 : index
    %55 = vector.load %arg5[%c3_39, %c0_40, %c0_41] : memref<5x84x160xf32, #tpu.memory_space<vmem>>, vector<1x84x160xf32>
    %56 = vector.shape_cast %55 : vector<1x84x160xf32> to vector<84x160xf32>
    %cst_42 = arith.constant dense<0.000000e+00> : vector<304x160xf32>
    %57 = tpu.matmul %54, %56, %cst_42 {dimension_numbers = #tpu.dot_dimension_numbers<[1], [0], [0], [1], [0, 0, 1, 1], [], []>} : vector<304x84xf32>, vector<84x160xf32>, vector<304x160xf32> -> vector<304x160xf32>
    %58 = arith.addf %53, %57 : vector<304x160xf32>
    %59 = vector.extract_strided_slice %39 {offsets = [128, 0], sizes = [304, 84], strides = [1, 1]} : vector<432x84xf32> to vector<304x84xf32>
    %c4_43 = arith.constant 4 : index
    %c0_44 = arith.constant 0 : index
    %c0_45 = arith.constant 0 : index
    %60 = vector.load %arg5[%c4_43, %c0_44, %c0_45] : memref<5x84x160xf32, #tpu.memory_space<vmem>>, vector<1x84x160xf32>
    %61 = vector.shape_cast %60 : vector<1x84x160xf32> to vector<84x160xf32>
    %cst_46 = arith.constant dense<0.000000e+00> : vector<304x160xf32>
    %62 = tpu.matmul %59, %61, %cst_46 {dimension_numbers = #tpu.dot_dimension_numbers<[1], [0], [0], [1], [0, 0, 1, 1], [], []>} : vector<304x84xf32>, vector<84x160xf32>, vector<304x160xf32> -> vector<304x160xf32>
    %63 = arith.addf %58, %62 : vector<304x160xf32>
    %c0_47 = arith.constant 0 : index
    %c0_48 = arith.constant 0 : index
    %64 = vector.load %arg6[%c0_47, %c0_48] : memref<1x160xf32, #tpu.memory_space<vmem>>, vector<1x160xf32>
    %65 = vector.broadcast %64 : vector<1x160xf32> to vector<304x160xf32>
    %66 = arith.addf %63, %65 : vector<304x160xf32>
    %cst_49 = arith.constant 0.000000e+00 : f32
    %67 = vector.broadcast %cst_49 : f32 to vector<304x160xf32>
    %68 = arith.maximumf %66, %67 : vector<304x160xf32>
    %69 = vector.extract_strided_slice %68 {offsets = [0, 0], sizes = [272, 160], strides = [1, 1]} : vector<304x160xf32> to vector<272x160xf32>
    %70 = vector.extract_strided_slice %68 {offsets = [32, 0], sizes = [272, 160], strides = [1, 1]} : vector<304x160xf32> to vector<272x160xf32>
    %71 = arith.maximumf %69, %70 : vector<272x160xf32>
    %c0_50 = arith.constant 0 : index
    %c0_51 = arith.constant 0 : index
    %c0_52 = arith.constant 0 : index
    %72 = vector.load %arg7[%c0_50, %c0_51, %c0_52] : memref<2x160x80xf32, #tpu.memory_space<vmem>>, vector<1x160x80xf32>
    %73 = vector.shape_cast %72 : vector<1x160x80xf32> to vector<160x80xf32>
    %cst_53 = arith.constant dense<0.000000e+00> : vector<272x80xf32>
    %74 = tpu.matmul %71, %73, %cst_53 {dimension_numbers = #tpu.dot_dimension_numbers<[1], [0], [0], [1], [0, 0, 1, 1], [], []>} : vector<272x160xf32>, vector<160x80xf32>, vector<272x80xf32> -> vector<272x80xf32>
    %c1_54 = arith.constant 1 : index
    %c0_55 = arith.constant 0 : index
    %c0_56 = arith.constant 0 : index
    %75 = vector.load %arg7[%c1_54, %c0_55, %c0_56] : memref<2x160x80xf32, #tpu.memory_space<vmem>>, vector<1x160x80xf32>
    %76 = vector.shape_cast %75 : vector<1x160x80xf32> to vector<160x80xf32>
    %cst_57 = arith.constant dense<0.000000e+00> : vector<272x80xf32>
    %77 = tpu.matmul %71, %76, %cst_57 {dimension_numbers = #tpu.dot_dimension_numbers<[1], [0], [0], [1], [0, 0, 1, 1], [], []>} : vector<272x160xf32>, vector<160x80xf32>, vector<272x80xf32> -> vector<272x80xf32>
    %78 = arith.maximumf %74, %77 : vector<272x80xf32>
    %79 = vector.extract_strided_slice %78 {offsets = [0, 0], sizes = [16, 80], strides = [1, 1]} : vector<272x80xf32> to vector<16x80xf32>
    %c0_58 = arith.constant 0 : index
    %c0_59 = arith.constant 0 : index
    %c0_60 = arith.constant 0 : index
    %80 = vector.load %arg8[%c0_58, %c0_59, %c0_60] : memref<5x80x120xf32, #tpu.memory_space<vmem>>, vector<1x80x120xf32>
    %81 = vector.shape_cast %80 : vector<1x80x120xf32> to vector<80x120xf32>
    %cst_61 = arith.constant dense<0.000000e+00> : vector<16x120xf32>
    %82 = tpu.matmul %79, %81, %cst_61 {dimension_numbers = #tpu.dot_dimension_numbers<[1], [0], [0], [1], [0, 0, 1, 1], [], []>} : vector<16x80xf32>, vector<80x120xf32>, vector<16x120xf32> -> vector<16x120xf32>
    %83 = vector.extract_strided_slice %78 {offsets = [64, 0], sizes = [16, 80], strides = [1, 1]} : vector<272x80xf32> to vector<16x80xf32>
    %c1_62 = arith.constant 1 : index
    %c0_63 = arith.constant 0 : index
    %c0_64 = arith.constant 0 : index
    %84 = vector.load %arg8[%c1_62, %c0_63, %c0_64] : memref<5x80x120xf32, #tpu.memory_space<vmem>>, vector<1x80x120xf32>
    %85 = vector.shape_cast %84 : vector<1x80x120xf32> to vector<80x120xf32>
    %cst_65 = arith.constant dense<0.000000e+00> : vector<16x120xf32>
    %86 = tpu.matmul %83, %85, %cst_65 {dimension_numbers = #tpu.dot_dimension_numbers<[1], [0], [0], [1], [0, 0, 1, 1], [], []>} : vector<16x80xf32>, vector<80x120xf32>, vector<16x120xf32> -> vector<16x120xf32>
    %87 = arith.addf %82, %86 : vector<16x120xf32>
    %88 = vector.extract_strided_slice %78 {offsets = [128, 0], sizes = [16, 80], strides = [1, 1]} : vector<272x80xf32> to vector<16x80xf32>
    %c2_66 = arith.constant 2 : index
    %c0_67 = arith.constant 0 : index
    %c0_68 = arith.constant 0 : index
    %89 = vector.load %arg8[%c2_66, %c0_67, %c0_68] : memref<5x80x120xf32, #tpu.memory_space<vmem>>, vector<1x80x120xf32>
    %90 = vector.shape_cast %89 : vector<1x80x120xf32> to vector<80x120xf32>
    %cst_69 = arith.constant dense<0.000000e+00> : vector<16x120xf32>
    %91 = tpu.matmul %88, %90, %cst_69 {dimension_numbers = #tpu.dot_dimension_numbers<[1], [0], [0], [1], [0, 0, 1, 1], [], []>} : vector<16x80xf32>, vector<80x120xf32>, vector<16x120xf32> -> vector<16x120xf32>
    %92 = arith.addf %87, %91 : vector<16x120xf32>
    %93 = vector.extract_strided_slice %78 {offsets = [192, 0], sizes = [16, 80], strides = [1, 1]} : vector<272x80xf32> to vector<16x80xf32>
    %c3_70 = arith.constant 3 : index
    %c0_71 = arith.constant 0 : index
    %c0_72 = arith.constant 0 : index
    %94 = vector.load %arg8[%c3_70, %c0_71, %c0_72] : memref<5x80x120xf32, #tpu.memory_space<vmem>>, vector<1x80x120xf32>
    %95 = vector.shape_cast %94 : vector<1x80x120xf32> to vector<80x120xf32>
    %cst_73 = arith.constant dense<0.000000e+00> : vector<16x120xf32>
    %96 = tpu.matmul %93, %95, %cst_73 {dimension_numbers = #tpu.dot_dimension_numbers<[1], [0], [0], [1], [0, 0, 1, 1], [], []>} : vector<16x80xf32>, vector<80x120xf32>, vector<16x120xf32> -> vector<16x120xf32>
    %97 = arith.addf %92, %96 : vector<16x120xf32>
    %98 = vector.extract_strided_slice %78 {offsets = [256, 0], sizes = [16, 80], strides = [1, 1]} : vector<272x80xf32> to vector<16x80xf32>
    %c4_74 = arith.constant 4 : index
    %c0_75 = arith.constant 0 : index
    %c0_76 = arith.constant 0 : index
    %99 = vector.load %arg8[%c4_74, %c0_75, %c0_76] : memref<5x80x120xf32, #tpu.memory_space<vmem>>, vector<1x80x120xf32>
    %100 = vector.shape_cast %99 : vector<1x80x120xf32> to vector<80x120xf32>
    %cst_77 = arith.constant dense<0.000000e+00> : vector<16x120xf32>
    %101 = tpu.matmul %98, %100, %cst_77 {dimension_numbers = #tpu.dot_dimension_numbers<[1], [0], [0], [1], [0, 0, 1, 1], [], []>} : vector<16x80xf32>, vector<80x120xf32>, vector<16x120xf32> -> vector<16x120xf32>
    %102 = arith.addf %97, %101 : vector<16x120xf32>
    %c0_78 = arith.constant 0 : index
    %c0_79 = arith.constant 0 : index
    %103 = vector.load %arg9[%c0_78, %c0_79] : memref<1x120xf32, #tpu.memory_space<vmem>>, vector<1x120xf32>
    %104 = vector.broadcast %103 : vector<1x120xf32> to vector<16x120xf32>
    %105 = arith.addf %102, %104 : vector<16x120xf32>
    %cst_80 = arith.constant 0.000000e+00 : f32
    %106 = vector.broadcast %cst_80 : f32 to vector<16x120xf32>
    %107 = arith.maximumf %105, %106 : vector<16x120xf32>
    %c0_81 = arith.constant 0 : index
    %c0_82 = arith.constant 0 : index
    %108 = vector.load %arg10[%c0_81, %c0_82] : memref<120x84xf32, #tpu.memory_space<vmem>>, vector<120x84xf32>
    %cst_83 = arith.constant dense<0.000000e+00> : vector<16x84xf32>
    %109 = tpu.matmul %107, %108, %cst_83 {dimension_numbers = #tpu.dot_dimension_numbers<[1], [0], [0], [1], [0, 0, 1, 1], [], []>} : vector<16x120xf32>, vector<120x84xf32>, vector<16x84xf32> -> vector<16x84xf32>
    %c0_84 = arith.constant 0 : index
    %c0_85 = arith.constant 0 : index
    %110 = vector.load %arg11[%c0_84, %c0_85] : memref<1x84xf32, #tpu.memory_space<vmem>>, vector<1x84xf32>
    %111 = vector.broadcast %110 : vector<1x84xf32> to vector<16x84xf32>
    %112 = arith.addf %109, %111 : vector<16x84xf32>
    %cst_86 = arith.constant 0.000000e+00 : f32
    %113 = vector.broadcast %cst_86 : f32 to vector<16x84xf32>
    %114 = arith.maximumf %112, %113 : vector<16x84xf32>
    %c0_87 = arith.constant 0 : index
    %c0_88 = arith.constant 0 : index
    %115 = vector.load %arg12[%c0_87, %c0_88] : memref<84x128xf32, #tpu.memory_space<vmem>>, vector<84x128xf32>
    %cst_89 = arith.constant dense<0.000000e+00> : vector<16x128xf32>
    %116 = tpu.matmul %114, %115, %cst_89 {dimension_numbers = #tpu.dot_dimension_numbers<[1], [0], [0], [1], [0, 0, 1, 1], [], []>} : vector<16x84xf32>, vector<84x128xf32>, vector<16x128xf32> -> vector<16x128xf32>
    %c0_90 = arith.constant 0 : index
    %c0_91 = arith.constant 0 : index
    %117 = vector.load %arg13[%c0_90, %c0_91] : memref<1x128xf32, #tpu.memory_space<vmem>>, vector<1x128xf32>
    %118 = vector.broadcast %117 : vector<1x128xf32> to vector<16x128xf32>
    %119 = arith.addf %116, %118 : vector<16x128xf32>
    %c0_92 = arith.constant 0 : index
    %c0_93 = arith.constant 0 : index
    %120 = vector.load %arg14[%c0_92, %c0_93] : memref<16x128xf32, #tpu.memory_space<vmem>>, vector<16x128xf32>
    tpu.vector_store %arg14[%c0_92, %c0_93], %119 {strides = array<i32>} : memref<16x128xf32, #tpu.memory_space<vmem>>, vector<16x128xf32>,
    return
  }
  func.func @transform_0(%arg0: i32) -> (i32, i32) {
    %c0_i32 = arith.constant 0 : i32
    %c0_i32_0 = arith.constant 0 : i32
    return %arg0, %c0_i32 : i32, i32
  }
  func.func @transform_1(%arg0: i32) -> (i32, i32, i32) {
    %c0_i32 = arith.constant 0 : i32
    %c0_i32_0 = arith.constant 0 : i32
    %c0_i32_1 = arith.constant 0 : i32
    %c0_i32_2 = arith.constant 0 : i32
    return %c0_i32, %c0_i32_0, %c0_i32_1 : i32, i32, i32
  }
  func.func @transform_2(%arg0: i32) -> (i32, i32) {
    %c0_i32 = arith.constant 0 : i32
    %c0_i32_0 = arith.constant 0 : i32
    %c0_i32_1 = arith.constant 0 : i32
    return %c0_i32, %c0_i32_0 : i32, i32
  }
  func.func @transform_3(%arg0: i32) -> (i32, i32, i32) {
    %c0_i32 = arith.constant 0 : i32
    %c0_i32_0 = arith.constant 0 : i32
    %c0_i32_1 = arith.constant 0 : i32
    %c0_i32_2 = arith.constant 0 : i32
    return %c0_i32, %c0_i32_0, %c0_i32_1 : i32, i32, i32
  }
  func.func @transform_4(%arg0: i32) -> (i32, i32, i32) {
    %c0_i32 = arith.constant 0 : i32
    %c0_i32_0 = arith.constant 0 : i32
    %c0_i32_1 = arith.constant 0 : i32
    %c0_i32_2 = arith.constant 0 : i32
    return %c0_i32, %c0_i32_0, %c0_i32_1 : i32, i32, i32
  }
  func.func @transform_5(%arg0: i32) -> (i32, i32) {
    %c0_i32 = arith.constant 0 : i32
    %c0_i32_0 = arith.constant 0 : i32
    %c0_i32_1 = arith.constant 0 : i32
    return %c0_i32, %c0_i32_0 : i32, i32
  }
  func.func @transform_6(%arg0: i32) -> (i32, i32, i32) {
    %c0_i32 = arith.constant 0 : i32
    %c0_i32_0 = arith.constant 0 : i32
    %c0_i32_1 = arith.constant 0 : i32
    %c0_i32_2 = arith.constant 0 : i32
    return %c0_i32, %c0_i32_0, %c0_i32_1 : i32, i32, i32
  }
  func.func @transform_7(%arg0: i32) -> (i32, i32, i32) {
    %c0_i32 = arith.constant 0 : i32
    %c0_i32_0 = arith.constant 0 : i32
    %c0_i32_1 = arith.constant 0 : i32
    %c0_i32_2 = arith.constant 0 : i32
    return %c0_i32, %c0_i32_0, %c0_i32_1 : i32, i32, i32
  }
  func.func @transform_8(%arg0: i32) -> (i32, i32) {
    %c0_i32 = arith.constant 0 : i32
    %c0_i32_0 = arith.constant 0 : i32
    %c0_i32_1 = arith.constant 0 : i32
    return %c0_i32, %c0_i32_0 : i32, i32
  }
  func.func @transform_9(%arg0: i32) -> (i32, i32) {
    %c0_i32 = arith.constant 0 : i32
    %c0_i32_0 = arith.constant 0 : i32
    %c0_i32_1 = arith.constant 0 : i32
    return %c0_i32, %c0_i32_0 : i32, i32
  }
  func.func @transform_10(%arg0: i32) -> (i32, i32) {
    %c0_i32 = arith.constant 0 : i32
    %c0_i32_0 = arith.constant 0 : i32
    %c0_i32_1 = arith.constant 0 : i32
    return %c0_i32, %c0_i32_0 : i32, i32
  }
  func.func @transform_11(%arg0: i32) -> (i32, i32) {
    %c0_i32 = arith.constant 0 : i32
    %c0_i32_0 = arith.constant 0 : i32
    %c0_i32_1 = arith.constant 0 : i32
    return %c0_i32, %c0_i32_0 : i32, i32
  }
  func.func @transform_12(%arg0: i32) -> (i32, i32) {
    %c0_i32 = arith.constant 0 : i32
    %c0_i32_0 = arith.constant 0 : i32
    %c0_i32_1 = arith.constant 0 : i32
    return %c0_i32, %c0_i32_0 : i32, i32
  }
  func.func @transform_13(%arg0: i32) -> (i32, i32) {
    %c0_i32 = arith.constant 0 : i32
    %c0_i32_0 = arith.constant 0 : i32
    return %arg0, %c0_i32 : i32, i32
  }
}

</mosaic_0001>

<llo_original>
// kernel: forward.1
$region0: #{forward.1}
  #allocation0 [shape = 'u32[]', space=smem, size = 0x4, offset = 0x4, fixed_abs, tag = 'smem constant byte address 0x4 - core index']
  #allocation1 [shape = 'u32[144,128]{1,0:T(1,128)}', space=vmem, size = 0x12000, scoped, tag = 'internal scratch']
  %s0 = inlined_call_operand.vmem [shape: f32[512,96], index: 0, kind: input, shape index: {}]
  %s1 = inlined_call_operand.vmem [shape: f32[5,96,168], index: 1, kind: input, shape index: {}]
  %s2 = inlined_call_operand.vmem [shape: f32[1,168], index: 2, kind: input, shape index: {}]
  %s3 = inlined_call_operand.vmem [shape: f32[2,168,84], index: 3, kind: input, shape index: {}]
  %s4 = inlined_call_operand.vmem [shape: f32[5,84,160], index: 4, kind: input, shape index: {}]
  %s5 = inlined_call_operand.vmem [shape: f32[1,160], index: 5, kind: input, shape index: {}]
  %s6 = inlined_call_operand.vmem [shape: f32[2,160,80], index: 6, kind: input, shape index: {}]
  %s7 = inlined_call_operand.vmem [shape: f32[5,80,120], index: 7, kind: input, shape index: {}]
  %s8 = inlined_call_operand.vmem [shape: f32[1,120], index: 8, kind: input, shape index: {}]
  %s9 = inlined_call_operand.vmem [shape: f32[120,84], index: 9, kind: input, shape index: {}]
  %s10 = inlined_call_operand.vmem [shape: f32[1,84], index: 10, kind: input, shape index: {}]
  %s11 = inlined_call_operand.vmem [shape: f32[84,128], index: 11, kind: input, shape index: {}]
  %s12 = inlined_call_operand.vmem [shape: f32[1,128], index: 12, kind: input, shape index: {}]
  %s13 = inlined_call_operand.vmem [shape: f32[16,128], index: 13, kind: output, shape index: {}]
  %s14 = sld [smem:[#allocation0]]
  $region62: #{forward.1} parent=0
    _
  %s16 = ssub.s32 1, %s14
  %s17 = scalar_select 0, %s16, %s14
  // Predicated region
  $region2: #{forward.1} parent=0 // pred_check
    _
  $region3: #{forward.1} parent=0 // pred_check_branch
    %19 = sbr.rel (0) target = $region5
  $region4: #{forward.1} parent=0 // pred_region
    _
  $region5: #{forward.1} parent=0 // pred_fallthru
    _
  // Predicated region
  $region6: #{forward.1} parent=0 // pred_check
    _
  $region7: #{forward.1} parent=0 // pred_check_branch
    %21 = sbr.rel (0) target = $region9
  $region8: #{forward.1} parent=0 // pred_region
    _
  $region9: #{forward.1} parent=0 // pred_fallthru
    _
  // Predicated region
  $region10: #{forward.1} parent=0 // pred_check
    _
  $region11: #{forward.1} parent=0 // pred_check_branch
    %23 = sbr.rel (0) target = $region13
  $region12: #{forward.1} parent=0 // pred_region
    _
  $region13: #{forward.1} parent=0 // pred_fallthru
    _
  // Predicated region
  $region14: #{forward.1} parent=0 // pred_check
    _
  $region15: #{forward.1} parent=0 // pred_check_branch
    %25 = sbr.rel (0) target = $region17
  $region16: #{forward.1} parent=0 // pred_region
    _
  $region17: #{forward.1} parent=0 // pred_fallthru
    _
  // Predicated region
  $region18: #{forward.1} parent=0 // pred_check
    _
  $region19: #{forward.1} parent=0 // pred_check_branch
    %27 = sbr.rel (0) target = $region21
  $region20: #{forward.1} parent=0 // pred_region
    _
  $region21: #{forward.1} parent=0 // pred_fallthru
    _
  // Predicated region
  $region22: #{forward.1} parent=0 // pred_check
    _
  $region23: #{forward.1} parent=0 // pred_check_branch
    %29 = sbr.rel (0) target = $region25
  $region24: #{forward.1} parent=0 // pred_region
    _
  $region25: #{forward.1} parent=0 // pred_fallthru
    _
  // Predicated region
  $region26: #{forward.1} parent=0 // pred_check
    _
  $region27: #{forward.1} parent=0 // pred_check_branch
    %31 = sbr.rel (0) target = $region29
  $region28: #{forward.1} parent=0 // pred_region
    _
  $region29: #{forward.1} parent=0 // pred_fallthru
    _
  // Predicated region
  $region30: #{forward.1} parent=0 // pred_check
    _
  $region31: #{forward.1} parent=0 // pred_check_branch
    %33 = sbr.rel (0) target = $region33
  $region32: #{forward.1} parent=0 // pred_region
    _
  $region33: #{forward.1} parent=0 // pred_fallthru
    _
  // Predicated region
  $region34: #{forward.1} parent=0 // pred_check
    _
  $region35: #{forward.1} parent=0 // pred_check_branch
    %35 = sbr.rel (0) target = $region37
  $region36: #{forward.1} parent=0 // pred_region
    _
  $region37: #{forward.1} parent=0 // pred_fallthru
    _
  // Predicated region
  $region38: #{forward.1} parent=0 // pred_check
    _
  $region39: #{forward.1} parent=0 // pred_check_branch
    %37 = sbr.rel (0) target = $region41
  $region40: #{forward.1} parent=0 // pred_region
    _
  $region41: #{forward.1} parent=0 // pred_fallthru
    _
  // Predicated region
  $region42: #{forward.1} parent=0 // pred_check
    _
  $region43: #{forward.1} parent=0 // pred_check_branch
    %39 = sbr.rel (0) target = $region45
  $region44: #{forward.1} parent=0 // pred_region
    _
  $region45: #{forward.1} parent=0 // pred_fallthru
    _
  // Predicated region
  $region46: #{forward.1} parent=0 // pred_check
    _
  $region47: #{forward.1} parent=0 // pred_check_branch
    %41 = sbr.rel (0) target = $region49
  $region48: #{forward.1} parent=0 // pred_region
    _
  $region49: #{forward.1} parent=0 // pred_fallthru
    _
  // Predicated region
  $region50: #{forward.1} parent=0 // pred_check
    _
  $region51: #{forward.1} parent=0 // pred_check_branch
    %43 = sbr.rel (0) target = $region53
  $region52: #{forward.1} parent=0 // pred_region
    _
  $region53: #{forward.1} parent=0 // pred_fallthru
    _
  %v44 = vld [vmem:[%s0] sm:$0xff]
  %v45 = vld [vmem:[%s0 + $0x8] sm:$0xff]
  %v46 = vld [vmem:[%s0 + $0x10] sm:$0xff]
  %v47 = vld [vmem:[%s0 + $0x18] sm:$0xff]
  %v48 = vld [vmem:[%s0 + $0x20] sm:$0xff]
  %v49 = vld [vmem:[%s0 + $0x28] sm:$0xff]
  %v50 = vld [vmem:[%s0 + $0x30] sm:$0xff]
  %v51 = vld [vmem:[%s0 + $0x38] sm:$0xff]
  %v52 = vld [vmem:[%s0 + $0x40] sm:$0xff]
  %v53 = vld [vmem:[%s0 + $0x48] sm:$0xff]
  %v54 = vld [vmem:[%s0 + $0x50] sm:$0xff]
  %v55 = vld [vmem:[%s0 + $0x58] sm:$0xff]
  %v56 = vld [vmem:[%s0 + $0x60] sm:$0xff]
  %v57 = vld [vmem:[%s0 + $0x68] sm:$0xff]
  %v58 = vld [vmem:[%s0 + $0x70] sm:$0xff]
  %v59 = vld [vmem:[%s0 + $0x78] sm:$0xff]
  %v60 = vld [vmem:[%s0 + $0x80] sm:$0xff]
  %v61 = vld [vmem:[%s0 + $0x88] sm:$0xff]
  %v62 = vld [vmem:[%s0 + $0x90] sm:$0xff]
  %v63 = vld [vmem:[%s0 + $0x98] sm:$0xff]
  %v64 = vld [vmem:[%s0 + $0xa0] sm:$0xff]
  %v65 = vld [vmem:[%s0 + $0xa8] sm:$0xff]
  %v66 = vld [vmem:[%s0 + $0xb0] sm:$0xff]
  %v67 = vld [vmem:[%s0 + $0xb8] sm:$0xff]
  %v68 = vld [vmem:[%s0 + $0xc0] sm:$0xff]
  %v69 = vld [vmem:[%s0 + $0xc8] sm:$0xff]
  %v70 = vld [vmem:[%s0 + $0xd0] sm:$0xff]
  %v71 = vld [vmem:[%s0 + $0xd8] sm:$0xff]
  %v72 = vld [vmem:[%s0 + $0xe0] sm:$0xff]
  %v73 = vld [vmem:[%s0 + $0xe8] sm:$0xff]
  %v74 = vld [vmem:[%s0 + $0xf0] sm:$0xff]
  %v75 = vld [vmem:[%s0 + $0xf8] sm:$0xff]
  %v76 = vld [vmem:[%s0 + $0x100] sm:$0xff]
  %v77 = vld [vmem:[%s0 + $0x108] sm:$0xff]
  %v78 = vld [vmem:[%s0 + $0x110] sm:$0xff]
  %v79 = vld [vmem:[%s0 + $0x118] sm:$0xff]
  %v80 = vld [vmem:[%s0 + $0x120] sm:$0xff]
  %v81 = vld [vmem:[%s0 + $0x128] sm:$0xff]
  %v82 = vld [vmem:[%s0 + $0x130] sm:$0xff]
  %v83 = vld [vmem:[%s0 + $0x138] sm:$0xff]
  %v84 = vld [vmem:[%s0 + $0x140] sm:$0xff]
  %v85 = vld [vmem:[%s0 + $0x148] sm:$0xff]
  %v86 = vld [vmem:[%s0 + $0x150] sm:$0xff]
  %v87 = vld [vmem:[%s0 + $0x158] sm:$0xff]
  %v88 = vld [vmem:[%s0 + $0x160] sm:$0xff]
  %v89 = vld [vmem:[%s0 + $0x168] sm:$0xff]
  %v90 = vld [vmem:[%s0 + $0x170] sm:$0xff]
  %v91 = vld [vmem:[%s0 + $0x178] sm:$0xff]
  %v92 = vld [vmem:[%s0 + $0x180] sm:$0xff]
  %v93 = vld [vmem:[%s0 + $0x188] sm:$0xff]
  %v94 = vld [vmem:[%s0 + $0x190] sm:$0xff]
  %v95 = vld [vmem:[%s0 + $0x198] sm:$0xff]
  %v96 = vld [vmem:[%s0 + $0x1a0] sm:$0xff]
  %v97 = vld [vmem:[%s0 + $0x1a8] sm:$0xff]
  %v98 = vld [vmem:[%s0 + $0x1b0] sm:$0xff]
  %v99 = vld [vmem:[%s0 + $0x1b8] sm:$0xff]
  %v100 = vld [vmem:[%s0 + $0x1c0] sm:$0xff]
  %v101 = vld [vmem:[%s0 + $0x1c8] sm:$0xff]
  %v102 = vld [vmem:[%s0 + $0x1d0] sm:$0xff]
  %v103 = vld [vmem:[%s0 + $0x1d8] sm:$0xff]
  %v104 = vld [vmem:[%s0 + $0x1e0] sm:$0xff]
  %v105 = vld [vmem:[%s0 + $0x1e8] sm:$0xff]
  %v106 = vld [vmem:[%s0 + $0x1f0] sm:$0xff]
  %v107 = vld [vmem:[%s0 + $0x1f8] sm:$0xff]
  %v108 = vld [vmem:[%s1] sm:$0xff]
  %v109 = vld [vmem:[%s1 + $0x8] sm:$0xff]
  %v110 = vld [vmem:[%s1 + $0x10] sm:$0xff]
  %v111 = vld [vmem:[%s1 + $0x18] sm:$0xff]
  %v112 = vld [vmem:[%s1 + $0x20] sm:$0xff]
  %v113 = vld [vmem:[%s1 + $0x28] sm:$0xff]
  %v114 = vld [vmem:[%s1 + $0x30] sm:$0xff]
  %v115 = vld [vmem:[%s1 + $0x38] sm:$0xff]
  %v116 = vld [vmem:[%s1 + $0x40] sm:$0xff]
  %v117 = vld [vmem:[%s1 + $0x48] sm:$0xff]
  %v118 = vld [vmem:[%s1 + $0x50] sm:$0xff]
  %v119 = vld [vmem:[%s1 + $0x58] sm:$0xff]
  %v120 = vld [vmem:[%s1 + $0x60] sm:$0xff]
  %v121 = vld [vmem:[%s1 + $0x68] sm:$0xff]
  %v122 = vld [vmem:[%s1 + $0x70] sm:$0xff]
  %v123 = vld [vmem:[%s1 + $0x78] sm:$0xff]
  %v124 = vld [vmem:[%s1 + $0x80] sm:$0xff]
  %v125 = vld [vmem:[%s1 + $0x88] sm:$0xff]
  %v126 = vld [vmem:[%s1 + $0x90] sm:$0xff]
  %v127 = vld [vmem:[%s1 + $0x98] sm:$0xff]
  %v128 = vld [vmem:[%s1 + $0xa0] sm:$0xff]
  %v129 = vld [vmem:[%s1 + $0xa8] sm:$0xff]
  %v130 = vld [vmem:[%s1 + $0xb0] sm:$0xff]
  %v131 = vld [vmem:[%s1 + $0xb8] sm:$0xff]
  %s132 = scalar_lea.vmem %s1, 192
  %v133 = vld [vmem:[%s132] sm:$0xff]
  %v134 = vld [vmem:[%s132 + $0x8] sm:$0xff]
  %v135 = vld [vmem:[%s132 + $0x10] sm:$0xff]
  %v136 = vld [vmem:[%s132 + $0x18] sm:$0xff]
  %v137 = vld [vmem:[%s132 + $0x20] sm:$0xff]
  %v138 = vld [vmem:[%s132 + $0x28] sm:$0xff]
  %v139 = vld [vmem:[%s132 + $0x30] sm:$0xff]
  %v140 = vld [vmem:[%s132 + $0x38] sm:$0xff]
  %v141 = vld [vmem:[%s132 + $0x40] sm:$0xff]
  %v142 = vld [vmem:[%s132 + $0x48] sm:$0xff]
  %v143 = vld [vmem:[%s132 + $0x50] sm:$0xff]
  %v144 = vld [vmem:[%s132 + $0x58] sm:$0xff]
  %v145 = vld [vmem:[%s132 + $0x60] sm:$0xff]
  %v146 = vld [vmem:[%s132 + $0x68] sm:$0xff]
  %v147 = vld [vmem:[%s132 + $0x70] sm:$0xff]
  %v148 = vld [vmem:[%s132 + $0x78] sm:$0xff]
  %v149 = vld [vmem:[%s132 + $0x80] sm:$0xff]
  %v150 = vld [vmem:[%s132 + $0x88] sm:$0xff]
  %v151 = vld [vmem:[%s132 + $0x90] sm:$0xff]
  %v152 = vld [vmem:[%s132 + $0x98] sm:$0xff]
  %v153 = vld [vmem:[%s132 + $0xa0] sm:$0xff]
  %v154 = vld [vmem:[%s132 + $0xa8] sm:$0xff]
  %v155 = vld [vmem:[%s132 + $0xb0] sm:$0xff]
  %v156 = vld [vmem:[%s132 + $0xb8] sm:$0xff]
  %vm157 = vcmask 785408
  %v159 = vsel %vm157, %v46, 0
  %v162 = vsel %vm157, %v47, 0
  %v165 = vsel %vm157, %v48, 0
  %v168 = vsel %vm157, %v49, 0
  %v171 = vsel %vm157, %v50, 0
  %v174 = vsel %vm157, %v51, 0
  %v177 = vsel %vm157, %v52, 0
  %v180 = vsel %vm157, %v53, 0
  %v183 = vsel %vm157, %v54, 0
  %v186 = vsel %vm157, %v55, 0
  %v189 = vsel %vm157, %v56, 0
  %v192 = vsel %vm157, %v57, 0
  %v195 = vsel %vm157, %v58, 0
  %v198 = vsel %vm157, %v59, 0
  %v201 = vsel %vm157, %v60, 0
  %v204 = vsel %vm157, %v61, 0
  %v207 = vsel %vm157, %v62, 0
  %v210 = vsel %vm157, %v63, 0
  %v213 = vsel %vm157, %v64, 0
  %v216 = vsel %vm157, %v65, 0
  %v219 = vsel %vm157, %v66, 0
  %v222 = vsel %vm157, %v67, 0
  %v225 = vsel %vm157, %v68, 0
  %v228 = vsel %vm157, %v69, 0
  %v231 = vsel %vm157, %v70, 0
  %v234 = vsel %vm157, %v71, 0
  %v237 = vsel %vm157, %v72, 0
  %v240 = vsel %vm157, %v73, 0
  %v243 = vsel %vm157, %v74, 0
  %v246 = vsel %vm157, %v75, 0
  %v249 = vsel %vm157, %v76, 0
  %v252 = vsel %vm157, %v77, 0
  %v255 = vsel %vm157, %v78, 0
  %v258 = vsel %vm157, %v79, 0
  %v261 = vsel %vm157, %v80, 0
  %v264 = vsel %vm157, %v81, 0
  %v267 = vsel %vm157, %v82, 0
  %v270 = vsel %vm157, %v83, 0
  %v273 = vsel %vm157, %v84, 0
  %v276 = vsel %vm157, %v85, 0
  %v279 = vsel %vm157, %v86, 0
  %v282 = vsel %vm157, %v87, 0
  %v285 = vsel %vm157, %v88, 0
  %v288 = vsel %vm157, %v89, 0
  %v291 = vsel %vm157, %v90, 0
  %v294 = vsel %vm157, %v91, 0
  %v297 = vsel %vm157, %v92, 0
  %v300 = vsel %vm157, %v93, 0
  %v303 = vsel %vm157, %v94, 0
  %v306 = vsel %vm157, %v95, 0
  %v309 = vsel %vm157, %v96, 0
  %v312 = vsel %vm157, %v97, 0
  %v315 = vsel %vm157, %v98, 0
  %v318 = vsel %vm157, %v99, 0
  %v321 = vsel %vm157, %v100, 0
  %v324 = vsel %vm157, %v101, 0
  %326 = vmatprep.subr.mxu0 0.0
  %327 = vmatpush1.msra.mxu0 0.0
  %328 = vmatprep.subr.mxu0 0.0
  %329 = vmatpush1.msra.mxu0 0.0
  %330 = vmatprep.subr.mxu0 0.0
  %331 = vmatpush1.msra.mxu0 0.0
  %332 = vmatprep.subr.mxu0 0.0
  %333 = vmatpush1.msra.mxu0 0.0
  %334 = vmatprep.subr.mxu0 %v156
  %335 = vmatpush1.msra.mxu0 %v155
  %336 = vmatprep.subr.mxu0 %v154
  %337 = vmatpush1.msra.mxu0 %v153
  %338 = vmatprep.subr.mxu0 %v152
  %339 = vmatpush1.msra.mxu0 %v151
  %340 = vmatprep.subr.mxu0 %v150
  %341 = vmatpush1.msra.mxu0 %v149
  %342 = vmatprep.subr.mxu0 %v148
  %343 = vmatpush1.msra.mxu0 %v147
  %344 = vmatprep.subr.mxu0 %v146
  %345 = vmatpush1.msra.mxu0 %v145
  %346 = vmatprep.subr.mxu0 %v144
  %347 = vmatpush1.msra.mxu0 %v143
  %348 = vmatprep.subr.mxu0 %v142
  %349 = vmatpush1.msra.mxu0 %v141
  %350 = vmatprep.subr.mxu0 %v140
  %351 = vmatpush1.msra.mxu0 %v139
  %352 = vmatprep.subr.mxu0 %v138
  %353 = vmatpush1.msra.mxu0 %v137
  %354 = vmatprep.subr.mxu0 %v136
  %355 = vmatpush1.msra.mxu0 %v135
  %356 = vmatprep.subr.mxu0 %v134
  %357 = vmatpush1.msra.mxu0 %v133
  %358 = vmatprep.subr.mxu0 0.0
  %359 = vmatpush2.msra.mxu0 0.0
  %360 = vmatprep.subr.mxu0 0.0
  %361 = vmatpush2.msra.mxu0 0.0
  %362 = vmatprep.subr.mxu0 0.0
  %363 = vmatpush2.msra.mxu0 0.0
  %364 = vmatprep.subr.mxu0 0.0
  %365 = vmatpush2.msra.mxu0 0.0
  %366 = vmatprep.subr.mxu0 0.0
  %367 = vmatpush2.msra.mxu0 0.0
  %368 = vmatprep.subr.mxu0 0.0
  %369 = vmatpush2.msra.mxu0 0.0
  %370 = vmatprep.subr.mxu0 0.0
  %371 = vmatpush2.msra.mxu0 0.0
  %372 = vmatprep.subr.mxu0 0.0
  %373 = vmatpush2.msra.mxu0 0.0
  %374 = vmatprep.subr.mxu0 0.0
  %375 = vmatpush2.msra.mxu0 0.0
  %376 = vmatprep.subr.mxu0 0.0
  %377 = vmatpush2.msra.mxu0 0.0
  %378 = vmatprep.subr.mxu0 0.0
  %379 = vmatpush2.msra.mxu0 0.0
  %380 = vmatprep.subr.mxu0 0.0
  %381 = vmatpush2.msra.mxu0 0.0
  %382 = vmatprep.subr.mxu0 0.0
  %383 = vmatpush2.msra.mxu0 0.0
  %384 = vmatprep.subr.mxu0 0.0
  %385 = vmatpush2.msra.mxu0 0.0
  %386 = vmatprep.subr.mxu0 0.0
  %387 = vmatpush2.msra.mxu0 0.0
  %388 = vmatprep.subr.mxu0 0.0
  %389 = vmatpush2.msra.mxu0 0.0
  %390 = vmatprep.mubr.f32.mxu0 0.0
  %391 = vmatmul.mubr.f32.gmra.mxu0 %v159
  %v392 = vpop.f32.mrf.mxu0
  %v393 = vadd.f32 0.0, %v392
  %v394 = vpop.f32.mrf.mxu0
  %v395 = vadd.f32 0.0, %v394
  %396 = vmatprep.mubr.f32.mxu0 0.0
  %397 = vmatmul.mubr.f32.gmra.mxu0 %v162
  %v398 = vpop.f32.mrf.mxu0
  %v399 = vadd.f32 0.0, %v398
  %v400 = vpop.f32.mrf.mxu0
  %v401 = vadd.f32 0.0, %v400
  %402 = vmatprep.mubr.f32.mxu0 0.0
  %403 = vmatmul.mubr.f32.gmra.mxu0 %v165
  %v404 = vpop.f32.mrf.mxu0
  %v405 = vadd.f32 0.0, %v404
  %v406 = vpop.f32.mrf.mxu0
  %v407 = vadd.f32 0.0, %v406
  %408 = vmatprep.mubr.f32.mxu0 0.0
  %409 = vmatmul.mubr.f32.gmra.mxu0 %v168
  %v410 = vpop.f32.mrf.mxu0
  %v411 = vadd.f32 0.0, %v410
  %v412 = vpop.f32.mrf.mxu0
  %v413 = vadd.f32 0.0, %v412
  %414 = vmatprep.mubr.f32.mxu0 0.0
  %415 = vmatmul.mubr.f32.gmra.mxu0 %v171
  %v416 = vpop.f32.mrf.mxu0
  %v417 = vadd.f32 0.0, %v416
  %v418 = vpop.f32.mrf.mxu0
  %v419 = vadd.f32 0.0, %v418
  %420 = vmatprep.mubr.f32.mxu0 0.0
  %421 = vmatmul.mubr.f32.gmra.mxu0 %v174
  %v422 = vpop.f32.mrf.mxu0
  %v423 = vadd.f32 0.0, %v422
  %v424 = vpop.f32.mrf.mxu0
  %v425 = vadd.f32 0.0, %v424
  %426 = vmatprep.mubr.f32.mxu0 0.0
  %427 = vmatmul.mubr.f32.gmra.mxu0 %v177
  %v428 = vpop.f32.mrf.mxu0
  %v429 = vadd.f32 0.0, %v428
  %v430 = vpop.f32.mrf.mxu0
  %v431 = vadd.f32 0.0, %v430
  %432 = vmatprep.mubr.f32.mxu0 0.0
  %433 = vmatmul.mubr.f32.gmra.mxu0 %v180
  %v434 = vpop.f32.mrf.mxu0
  %v435 = vadd.f32 0.0, %v434
  %v436 = vpop.f32.mrf.mxu0
  %v437 = vadd.f32 0.0, %v436
  %438 = vmatprep.mubr.f32.mxu0 0.0
  %439 = vmatmul.mubr.f32.gmra.mxu0 %v183
  %v440 = vpop.f32.mrf.mxu0
  %v441 = vadd.f32 0.0, %v440
  %v442 = vpop.f32.mrf.mxu0
  %v443 = vadd.f32 0.0, %v442
  %444 = vmatprep.mubr.f32.mxu0 0.0
  %445 = vmatmul.mubr.f32.gmra.mxu0 %v186
  %v446 = vpop.f32.mrf.mxu0
  %v447 = vadd.f32 0.0, %v446
  %v448 = vpop.f32.mrf.mxu0
  %v449 = vadd.f32 0.0, %v448
  %450 = vmatprep.mubr.f32.mxu0 0.0
  %451 = vmatmul.mubr.f32.gmra.mxu0 %v189
  %v452 = vpop.f32.mrf.mxu0
  %v453 = vadd.f32 0.0, %v452
  %v454 = vpop.f32.mrf.mxu0
  %v455 = vadd.f32 0.0, %v454
  %456 = vmatprep.mubr.f32.mxu0 0.0
  %457 = vmatmul.mubr.f32.gmra.mxu0 %v192
  %v458 = vpop.f32.mrf.mxu0
  %v459 = vadd.f32 0.0, %v458
  %v460 = vpop.f32.mrf.mxu0
  %v461 = vadd.f32 0.0, %v460
  %462 = vmatprep.mubr.f32.mxu0 0.0
  %463 = vmatmul.mubr.f32.gmra.mxu0 %v195
  %v464 = vpop.f32.mrf.mxu0
  %v465 = vadd.f32 0.0, %v464
  %v466 = vpop.f32.mrf.mxu0
  %v467 = vadd.f32 0.0, %v466
  %468 = vmatprep.mubr.f32.mxu0 0.0
  %469 = vmatmul.mubr.f32.gmra.mxu0 %v198
  %v470 = vpop.f32.mrf.mxu0
  %v471 = vadd.f32 0.0, %v470
  %v472 = vpop.f32.mrf.mxu0
  %v473 = vadd.f32 0.0, %v472
  %474 = vmatprep.mubr.f32.mxu0 0.0
  %475 = vmatmul.mubr.f32.gmra.mxu0 %v201
  %v476 = vpop.f32.mrf.mxu0
  %v477 = vadd.f32 0.0, %v476
  %v478 = vpop.f32.mrf.mxu0
  %v479 = vadd.f32 0.0, %v478
  %480 = vmatprep.mubr.f32.mxu0 0.0
  %481 = vmatmul.mubr.f32.gmra.mxu0 %v204
  %v482 = vpop.f32.mrf.mxu0
  %v483 = vadd.f32 0.0, %v482
  %v484 = vpop.f32.mrf.mxu0
  %v485 = vadd.f32 0.0, %v484
  %486 = vmatprep.mubr.f32.mxu0 0.0
  %487 = vmatmul.mubr.f32.gmra.mxu0 %v207
  %v488 = vpop.f32.mrf.mxu0
  %v489 = vadd.f32 0.0, %v488
  %v490 = vpop.f32.mrf.mxu0
  %v491 = vadd.f32 0.0, %v490
  %492 = vmatprep.mubr.f32.mxu0 0.0
  %493 = vmatmul.mubr.f32.gmra.mxu0 %v210
  %v494 = vpop.f32.mrf.mxu0
  %v495 = vadd.f32 0.0, %v494
  %v496 = vpop.f32.mrf.mxu0
  %v497 = vadd.f32 0.0, %v496
  %498 = vmatprep.mubr.f32.mxu0 0.0
  %499 = vmatmul.mubr.f32.gmra.mxu0 %v213
  %v500 = vpop.f32.mrf.mxu0
  %v501 = vadd.f32 0.0, %v500
  %v502 = vpop.f32.mrf.mxu0
  %v503 = vadd.f32 0.0, %v502
  %504 = vmatprep.mubr.f32.mxu0 0.0
  %505 = vmatmul.mubr.f32.gmra.mxu0 %v216
  %v506 = vpop.f32.mrf.mxu0
  %v507 = vadd.f32 0.0, %v506
  %v508 = vpop.f32.mrf.mxu0
  %v509 = vadd.f32 0.0, %v508
  %510 = vmatprep.mubr.f32.mxu0 0.0
  %511 = vmatmul.mubr.f32.gmra.mxu0 %v219
  %v512 = vpop.f32.mrf.mxu0
  %v513 = vadd.f32 0.0, %v512
  %v514 = vpop.f32.mrf.mxu0
  %v515 = vadd.f32 0.0, %v514
  %516 = vmatprep.mubr.f32.mxu0 0.0
  %517 = vmatmul.mubr.f32.gmra.mxu0 %v222
  %v518 = vpop.f32.mrf.mxu0
  %v519 = vadd.f32 0.0, %v518
  %v520 = vpop.f32.mrf.mxu0
  %v521 = vadd.f32 0.0, %v520
  %522 = vmatprep.mubr.f32.mxu0 0.0
  %523 = vmatmul.mubr.f32.gmra.mxu0 %v225
  %v524 = vpop.f32.mrf.mxu0
  %v525 = vadd.f32 0.0, %v524
  %v526 = vpop.f32.mrf.mxu0
  %v527 = vadd.f32 0.0, %v526
  %528 = vmatprep.mubr.f32.mxu0 0.0
  %529 = vmatmul.mubr.f32.gmra.mxu0 %v228
  %v530 = vpop.f32.mrf.mxu0
  %v531 = vadd.f32 0.0, %v530
  %v532 = vpop.f32.mrf.mxu0
  %v533 = vadd.f32 0.0, %v532
  %534 = vmatprep.mubr.f32.mxu0 0.0
  %535 = vmatmul.mubr.f32.gmra.mxu0 %v231
  %v536 = vpop.f32.mrf.mxu0
  %v537 = vadd.f32 0.0, %v536
  %v538 = vpop.f32.mrf.mxu0
  %v539 = vadd.f32 0.0, %v538
  %540 = vmatprep.mubr.f32.mxu0 0.0
  %541 = vmatmul.mubr.f32.gmra.mxu0 %v234
  %v542 = vpop.f32.mrf.mxu0
  %v543 = vadd.f32 0.0, %v542
  %v544 = vpop.f32.mrf.mxu0
  %v545 = vadd.f32 0.0, %v544
  %546 = vmatprep.mubr.f32.mxu0 0.0
  %547 = vmatmul.mubr.f32.gmra.mxu0 %v237
  %v548 = vpop.f32.mrf.mxu0
  %v549 = vadd.f32 0.0, %v548
  %v550 = vpop.f32.mrf.mxu0
  %v551 = vadd.f32 0.0, %v550
  %552 = vmatprep.mubr.f32.mxu0 0.0
  %553 = vmatmul.mubr.f32.gmra.mxu0 %v240
  %v554 = vpop.f32.mrf.mxu0
  %v555 = vadd.f32 0.0, %v554
  %v556 = vpop.f32.mrf.mxu0
  %v557 = vadd.f32 0.0, %v556
  %558 = vmatprep.mubr.f32.mxu0 0.0
  %559 = vmatmul.mubr.f32.gmra.mxu0 %v243
  %v560 = vpop.f32.mrf.mxu0
  %v561 = vadd.f32 0.0, %v560
  %v562 = vpop.f32.mrf.mxu0
  %v563 = vadd.f32 0.0, %v562
  %564 = vmatprep.mubr.f32.mxu0 0.0
  %565 = vmatmul.mubr.f32.gmra.mxu0 %v246
  %v566 = vpop.f32.mrf.mxu0
  %v567 = vadd.f32 0.0, %v566
  %v568 = vpop.f32.mrf.mxu0
  %v569 = vadd.f32 0.0, %v568
  %570 = vmatprep.mubr.f32.mxu0 0.0
  %571 = vmatmul.mubr.f32.gmra.mxu0 %v249
  %v572 = vpop.f32.mrf.mxu0
  %v573 = vadd.f32 0.0, %v572
  %v574 = vpop.f32.mrf.mxu0
  %v575 = vadd.f32 0.0, %v574
  %576 = vmatprep.mubr.f32.mxu0 0.0
  %577 = vmatmul.mubr.f32.gmra.mxu0 %v252
  %v578 = vpop.f32.mrf.mxu0
  %v579 = vadd.f32 0.0, %v578
  %v580 = vpop.f32.mrf.mxu0
  %v581 = vadd.f32 0.0, %v580
  %582 = vmatprep.mubr.f32.mxu0 0.0
  %583 = vmatmul.mubr.f32.gmra.mxu0 %v255
  %v584 = vpop.f32.mrf.mxu0
  %v585 = vadd.f32 0.0, %v584
  %v586 = vpop.f32.mrf.mxu0
  %v587 = vadd.f32 0.0, %v586
  %588 = vmatprep.mubr.f32.mxu0 0.0
  %589 = vmatmul.mubr.f32.gmra.mxu0 %v258
  %v590 = vpop.f32.mrf.mxu0
  %v591 = vadd.f32 0.0, %v590
  %v592 = vpop.f32.mrf.mxu0
  %v593 = vadd.f32 0.0, %v592
  %594 = vmatprep.mubr.f32.mxu0 0.0
  %595 = vmatmul.mubr.f32.gmra.mxu0 %v261
  %v596 = vpop.f32.mrf.mxu0
  %v597 = vadd.f32 0.0, %v596
  %v598 = vpop.f32.mrf.mxu0
  %v599 = vadd.f32 0.0, %v598
  %600 = vmatprep.mubr.f32.mxu0 0.0
  %601 = vmatmul.mubr.f32.gmra.mxu0 %v264
  %v602 = vpop.f32.mrf.mxu0
  %v603 = vadd.f32 0.0, %v602
  %v604 = vpop.f32.mrf.mxu0
  %v605 = vadd.f32 0.0, %v604
  %606 = vmatprep.mubr.f32.mxu0 0.0
  %607 = vmatmul.mubr.f32.gmra.mxu0 %v267
  %v608 = vpop.f32.mrf.mxu0
  %v609 = vadd.f32 0.0, %v608
  %v610 = vpop.f32.mrf.mxu0
  %v611 = vadd.f32 0.0, %v610
  %612 = vmatprep.mubr.f32.mxu0 0.0
  %613 = vmatmul.mubr.f32.gmra.mxu0 %v270
  %v614 = vpop.f32.mrf.mxu0
  %v615 = vadd.f32 0.0, %v614
  %v616 = vpop.f32.mrf.mxu0
  %v617 = vadd.f32 0.0, %v616
  %618 = vmatprep.mubr.f32.mxu0 0.0
  %619 = vmatmul.mubr.f32.gmra.mxu0 %v273
  %v620 = vpop.f32.mrf.mxu0
  %v621 = vadd.f32 0.0, %v620
  %v622 = vpop.f32.mrf.mxu0
  %v623 = vadd.f32 0.0, %v622
  %624 = vmatprep.mubr.f32.mxu0 0.0
  %625 = vmatmul.mubr.f32.gmra.mxu0 %v276
  %v626 = vpop.f32.mrf.mxu0
  %v627 = vadd.f32 0.0, %v626
  %v628 = vpop.f32.mrf.mxu0
  %v629 = vadd.f32 0.0, %v628
  %630 = vmatprep.mubr.f32.mxu0 0.0
  %631 = vmatmul.mubr.f32.gmra.mxu0 %v279
  %v632 = vpop.f32.mrf.mxu0
  %v633 = vadd.f32 0.0, %v632
  %v634 = vpop.f32.mrf.mxu0
  %v635 = vadd.f32 0.0, %v634
  %636 = vmatprep.mubr.f32.mxu0 0.0
  %637 = vmatmul.mubr.f32.gmra.mxu0 %v282
  %v638 = vpop.f32.mrf.mxu0
  %v639 = vadd.f32 0.0, %v638
  %v640 = vpop.f32.mrf.mxu0
  %v641 = vadd.f32 0.0, %v640
  %642 = vmatprep.mubr.f32.mxu0 0.0
  %643 = vmatmul.mubr.f32.gmra.mxu0 %v285
  %v644 = vpop.f32.mrf.mxu0
  %v645 = vadd.f32 0.0, %v644
  %v646 = vpop.f32.mrf.mxu0
  %v647 = vadd.f32 0.0, %v646
  %648 = vmatprep.mubr.f32.mxu0 0.0
  %649 = vmatmul.mubr.f32.gmra.mxu0 %v288
  %v650 = vpop.f32.mrf.mxu0
  %v651 = vadd.f32 0.0, %v650
  %v652 = vpop.f32.mrf.mxu0
  %v653 = vadd.f32 0.0, %v652
  %654 = vmatprep.mubr.f32.mxu0 0.0
  %655 = vmatmul.mubr.f32.gmra.mxu0 %v291
  %v656 = vpop.f32.mrf.mxu0
  %v657 = vadd.f32 0.0, %v656
  %v658 = vpop.f32.mrf.mxu0
  %v659 = vadd.f32 0.0, %v658
  %660 = vmatprep.mubr.f32.mxu0 0.0
  %661 = vmatmul.mubr.f32.gmra.mxu0 %v294
  %v662 = vpop.f32.mrf.mxu0
  %v663 = vadd.f32 0.0, %v662
  %v664 = vpop.f32.mrf.mxu0
  %v665 = vadd.f32 0.0, %v664
  %666 = vmatprep.mubr.f32.mxu0 0.0
  %667 = vmatmul.mubr.f32.gmra.mxu0 %v297
  %v668 = vpop.f32.mrf.mxu0
  %v669 = vadd.f32 0.0, %v668
  %v670 = vpop.f32.mrf.mxu0
  %v671 = vadd.f32 0.0, %v670
  %672 = vmatprep.mubr.f32.mxu0 0.0
  %673 = vmatmul.mubr.f32.gmra.mxu0 %v300
  %v674 = vpop.f32.mrf.mxu0
  %v675 = vadd.f32 0.0, %v674
  %v676 = vpop.f32.mrf.mxu0
  %v677 = vadd.f32 0.0, %v676
  %678 = vmatprep.mubr.f32.mxu0 0.0
  %679 = vmatmul.mubr.f32.gmra.mxu0 %v303
  %v680 = vpop.f32.mrf.mxu0
  %v681 = vadd.f32 0.0, %v680
  %v682 = vpop.f32.mrf.mxu0
  %v683 = vadd.f32 0.0, %v682
  %684 = vmatprep.mubr.f32.mxu0 0.0
  %685 = vmatmul.mubr.f32.gmra.mxu0 %v306
  %v686 = vpop.f32.mrf.mxu0
  %v687 = vadd.f32 0.0, %v686
  %v688 = vpop.f32.mrf.mxu0
  %v689 = vadd.f32 0.0, %v688
  %690 = vmatprep.mubr.f32.mxu0 0.0
  %691 = vmatmul.mubr.f32.gmra.mxu0 %v309
  %v692 = vpop.f32.mrf.mxu0
  %v693 = vadd.f32 0.0, %v692
  %v694 = vpop.f32.mrf.mxu0
  %v695 = vadd.f32 0.0, %v694
  %696 = vmatprep.mubr.f32.mxu0 0.0
  %697 = vmatmul.mubr.f32.gmra.mxu0 %v312
  %v698 = vpop.f32.mrf.mxu0
  %v699 = vadd.f32 0.0, %v698
  %v700 = vpop.f32.mrf.mxu0
  %v701 = vadd.f32 0.0, %v700
  %702 = vmatprep.mubr.f32.mxu0 0.0
  %703 = vmatmul.mubr.f32.gmra.mxu0 %v315
  %v704 = vpop.f32.mrf.mxu0
  %v705 = vadd.f32 0.0, %v704
  %v706 = vpop.f32.mrf.mxu0
  %v707 = vadd.f32 0.0, %v706
  %708 = vmatprep.mubr.f32.mxu0 0.0
  %709 = vmatmul.mubr.f32.gmra.mxu0 %v318
  %v710 = vpop.f32.mrf.mxu0
  %v711 = vadd.f32 0.0, %v710
  %v712 = vpop.f32.mrf.mxu0
  %v713 = vadd.f32 0.0, %v712
  %714 = vmatprep.mubr.f32.mxu0 0.0
  %715 = vmatmul.mubr.f32.gmra.mxu0 %v321
  %v716 = vpop.f32.mrf.mxu0
  %v717 = vadd.f32 0.0, %v716
  %v718 = vpop.f32.mrf.mxu0
  %v719 = vadd.f32 0.0, %v718
  %720 = vmatprep.mubr.f32.mxu0 0.0
  %721 = vmatmul.mubr.f32.gmra.mxu0 %v324
  %v722 = vpop.f32.mrf.mxu0
  %v723 = vadd.f32 0.0, %v722
  %v724 = vpop.f32.mrf.mxu0
  %v725 = vadd.f32 0.0, %v724
  %726 = vdwg.mxu0
  %v728 = vsel %vm157, %v44, 0
  %v731 = vsel %vm157, %v45, 0
  %733 = vmatprep.subr.mxu0 0.0
  %734 = vmatpush1.msra.mxu0 0.0
  %735 = vmatprep.subr.mxu0 0.0
  %736 = vmatpush1.msra.mxu0 0.0
  %737 = vmatprep.subr.mxu0 0.0
  %738 = vmatpush1.msra.mxu0 0.0
  %739 = vmatprep.subr.mxu0 0.0
  %740 = vmatpush1.msra.mxu0 0.0
  %741 = vmatprep.subr.mxu0 %v131
  %742 = vmatpush1.msra.mxu0 %v130
  %743 = vmatprep.subr.mxu0 %v129
  %744 = vmatpush1.msra.mxu0 %v128
  %745 = vmatprep.subr.mxu0 %v127
  %746 = vmatpush1.msra.mxu0 %v126
  %747 = vmatprep.subr.mxu0 %v125
  %748 = vmatpush1.msra.mxu0 %v124
  %749 = vmatprep.subr.mxu0 %v123
  %750 = vmatpush1.msra.mxu0 %v122
  %751 = vmatprep.subr.mxu0 %v121
  %752 = vmatpush1.msra.mxu0 %v120
  %753 = vmatprep.subr.mxu0 %v119
  %754 = vmatpush1.msra.mxu0 %v118
  %755 = vmatprep.subr.mxu0 %v117
  %756 = vmatpush1.msra.mxu0 %v116
  %757 = vmatprep.subr.mxu0 %v115
  %758 = vmatpush1.msra.mxu0 %v114
  %759 = vmatprep.subr.mxu0 %v113
  %760 = vmatpush1.msra.mxu0 %v112
  %761 = vmatprep.subr.mxu0 %v111
  %762 = vmatpush1.msra.mxu0 %v110
  %763 = vmatprep.subr.mxu0 %v109
  %764 = vmatpush1.msra.mxu0 %v108
  %765 = vmatprep.subr.mxu0 0.0
  %766 = vmatpush2.msra.mxu0 0.0
  %767 = vmatprep.subr.mxu0 0.0
  %768 = vmatpush2.msra.mxu0 0.0
  %769 = vmatprep.subr.mxu0 0.0
  %770 = vmatpush2.msra.mxu0 0.0
  %771 = vmatprep.subr.mxu0 0.0
  %772 = vmatpush2.msra.mxu0 0.0
  %773 = vmatprep.subr.mxu0 0.0
  %774 = vmatpush2.msra.mxu0 0.0
  %775 = vmatprep.subr.mxu0 0.0
  %776 = vmatpush2.msra.mxu0 0.0
  %777 = vmatprep.subr.mxu0 0.0
  %778 = vmatpush2.msra.mxu0 0.0
  %779 = vmatprep.subr.mxu0 0.0
  %780 = vmatpush2.msra.mxu0 0.0
  %781 = vmatprep.subr.mxu0 0.0
  %782 = vmatpush2.msra.mxu0 0.0
  %783 = vmatprep.subr.mxu0 0.0
  %784 = vmatpush2.msra.mxu0 0.0
  %785 = vmatprep.subr.mxu0 0.0
  %786 = vmatpush2.msra.mxu0 0.0
  %787 = vmatprep.subr.mxu0 0.0
  %788 = vmatpush2.msra.mxu0 0.0
  %789 = vmatprep.subr.mxu0 0.0
  %790 = vmatpush2.msra.mxu0 0.0
  %791 = vmatprep.subr.mxu0 0.0
  %792 = vmatpush2.msra.mxu0 0.0
  %793 = vmatprep.subr.mxu0 0.0
  %794 = vmatpush2.msra.mxu0 0.0
  %795 = vmatprep.subr.mxu0 0.0
  %796 = vmatpush2.msra.mxu0 0.0
  %797 = vmatprep.mubr.f32.mxu0 0.0
  %798 = vmatmul.mubr.f32.gmra.mxu0 %v728
  %v799 = vpop.f32.mrf.mxu0
  %v800 = vadd.f32 %v393, %v799
  %v801 = vpop.f32.mrf.mxu0
  %v802 = vadd.f32 %v395, %v801
  %803 = vmatprep.mubr.f32.mxu0 0.0
  %804 = vmatmul.mubr.f32.gmra.mxu0 %v731
  %v805 = vpop.f32.mrf.mxu0
  %v806 = vadd.f32 %v399, %v805
  %v807 = vpop.f32.mrf.mxu0
  %v808 = vadd.f32 %v401, %v807
  %809 = vmatprep.mubr.f32.mxu0 0.0
  %810 = vmatmul.mubr.f32.gmra.mxu0 %v159
  %v811 = vpop.f32.mrf.mxu0
  %v812 = vadd.f32 %v405, %v811
  %v813 = vpop.f32.mrf.mxu0
  %v814 = vadd.f32 %v407, %v813
  %815 = vmatprep.mubr.f32.mxu0 0.0
  %816 = vmatmul.mubr.f32.gmra.mxu0 %v162
  %v817 = vpop.f32.mrf.mxu0
  %v818 = vadd.f32 %v411, %v817
  %v819 = vpop.f32.mrf.mxu0
  %v820 = vadd.f32 %v413, %v819
  %821 = vmatprep.mubr.f32.mxu0 0.0
  %822 = vmatmul.mubr.f32.gmra.mxu0 %v165
  %v823 = vpop.f32.mrf.mxu0
  %v824 = vadd.f32 %v417, %v823
  %v825 = vpop.f32.mrf.mxu0
  %v826 = vadd.f32 %v419, %v825
  %827 = vmatprep.mubr.f32.mxu0 0.0
  %828 = vmatmul.mubr.f32.gmra.mxu0 %v168
  %v829 = vpop.f32.mrf.mxu0
  %v830 = vadd.f32 %v423, %v829
  %v831 = vpop.f32.mrf.mxu0
  %v832 = vadd.f32 %v425, %v831
  %833 = vmatprep.mubr.f32.mxu0 0.0
  %834 = vmatmul.mubr.f32.gmra.mxu0 %v171
  %v835 = vpop.f32.mrf.mxu0
  %v836 = vadd.f32 %v429, %v835
  %v837 = vpop.f32.mrf.mxu0
  %v838 = vadd.f32 %v431, %v837
  %839 = vmatprep.mubr.f32.mxu0 0.0
  %840 = vmatmul.mubr.f32.gmra.mxu0 %v174
  %v841 = vpop.f32.mrf.mxu0
  %v842 = vadd.f32 %v435, %v841
  %v843 = vpop.f32.mrf.mxu0
  %v844 = vadd.f32 %v437, %v843
  %845 = vmatprep.mubr.f32.mxu0 0.0
  %846 = vmatmul.mubr.f32.gmra.mxu0 %v177
  %v847 = vpop.f32.mrf.mxu0
  %v848 = vadd.f32 %v441, %v847
  %v849 = vpop.f32.mrf.mxu0
  %v850 = vadd.f32 %v443, %v849
  %851 = vmatprep.mubr.f32.mxu0 0.0
  %852 = vmatmul.mubr.f32.gmra.mxu0 %v180
  %v853 = vpop.f32.mrf.mxu0
  %v854 = vadd.f32 %v447, %v853
  %v855 = vpop.f32.mrf.mxu0
  %v856 = vadd.f32 %v449, %v855
  %857 = vmatprep.mubr.f32.mxu0 0.0
  %858 = vmatmul.mubr.f32.gmra.mxu0 %v183
  %v859 = vpop.f32.mrf.mxu0
  %v860 = vadd.f32 %v453, %v859
  %v861 = vpop.f32.mrf.mxu0
  %v862 = vadd.f32 %v455, %v861
  %863 = vmatprep.mubr.f32.mxu0 0.0
  %864 = vmatmul.mubr.f32.gmra.mxu0 %v186
  %v865 = vpop.f32.mrf.mxu0
  %v866 = vadd.f32 %v459, %v865
  %v867 = vpop.f32.mrf.mxu0
  %v868 = vadd.f32 %v461, %v867
  %869 = vmatprep.mubr.f32.mxu0 0.0
  %870 = vmatmul.mubr.f32.gmra.mxu0 %v189
  %v871 = vpop.f32.mrf.mxu0
  %v872 = vadd.f32 %v465, %v871
  %v873 = vpop.f32.mrf.mxu0
  %v874 = vadd.f32 %v467, %v873
  %875 = vmatprep.mubr.f32.mxu0 0.0
  %876 = vmatmul.mubr.f32.gmra.mxu0 %v192
  %v877 = vpop.f32.mrf.mxu0
  %v878 = vadd.f32 %v471, %v877
  %v879 = vpop.f32.mrf.mxu0
  %v880 = vadd.f32 %v473, %v879
  %881 = vmatprep.mubr.f32.mxu0 0.0
  %882 = vmatmul.mubr.f32.gmra.mxu0 %v195
  %v883 = vpop.f32.mrf.mxu0
  %v884 = vadd.f32 %v477, %v883
  %v885 = vpop.f32.mrf.mxu0
  %v886 = vadd.f32 %v479, %v885
  %887 = vmatprep.mubr.f32.mxu0 0.0
  %888 = vmatmul.mubr.f32.gmra.mxu0 %v198
  %v889 = vpop.f32.mrf.mxu0
  %v890 = vadd.f32 %v483, %v889
  %v891 = vpop.f32.mrf.mxu0
  %v892 = vadd.f32 %v485, %v891
  %893 = vmatprep.mubr.f32.mxu0 0.0
  %894 = vmatmul.mubr.f32.gmra.mxu0 %v201
  %v895 = vpop.f32.mrf.mxu0
  %v896 = vadd.f32 %v489, %v895
  %v897 = vpop.f32.mrf.mxu0
  %v898 = vadd.f32 %v491, %v897
  %899 = vmatprep.mubr.f32.mxu0 0.0
  %900 = vmatmul.mubr.f32.gmra.mxu0 %v204
  %v901 = vpop.f32.mrf.mxu0
  %v902 = vadd.f32 %v495, %v901
  %v903 = vpop.f32.mrf.mxu0
  %v904 = vadd.f32 %v497, %v903
  %905 = vmatprep.mubr.f32.mxu0 0.0
  %906 = vmatmul.mubr.f32.gmra.mxu0 %v207
  %v907 = vpop.f32.mrf.mxu0
  %v908 = vadd.f32 %v501, %v907
  %v909 = vpop.f32.mrf.mxu0
  %v910 = vadd.f32 %v503, %v909
  %911 = vmatprep.mubr.f32.mxu0 0.0
  %912 = vmatmul.mubr.f32.gmra.mxu0 %v210
  %v913 = vpop.f32.mrf.mxu0
  %v914 = vadd.f32 %v507, %v913
  %v915 = vpop.f32.mrf.mxu0
  %v916 = vadd.f32 %v509, %v915
  %917 = vmatprep.mubr.f32.mxu0 0.0
  %918 = vmatmul.mubr.f32.gmra.mxu0 %v213
  %v919 = vpop.f32.mrf.mxu0
  %v920 = vadd.f32 %v513, %v919
  %v921 = vpop.f32.mrf.mxu0
  %v922 = vadd.f32 %v515, %v921
  %923 = vmatprep.mubr.f32.mxu0 0.0
  %924 = vmatmul.mubr.f32.gmra.mxu0 %v216
  %v925 = vpop.f32.mrf.mxu0
  %v926 = vadd.f32 %v519, %v925
  %v927 = vpop.f32.mrf.mxu0
  %v928 = vadd.f32 %v521, %v927
  %929 = vmatprep.mubr.f32.mxu0 0.0
  %930 = vmatmul.mubr.f32.gmra.mxu0 %v219
  %v931 = vpop.f32.mrf.mxu0
  %v932 = vadd.f32 %v525, %v931
  %v933 = vpop.f32.mrf.mxu0
  %v934 = vadd.f32 %v527, %v933
  %935 = vmatprep.mubr.f32.mxu0 0.0
  %936 = vmatmul.mubr.f32.gmra.mxu0 %v222
  %v937 = vpop.f32.mrf.mxu0
  %v938 = vadd.f32 %v531, %v937
  %v939 = vpop.f32.mrf.mxu0
  %v940 = vadd.f32 %v533, %v939
  %941 = vmatprep.mubr.f32.mxu0 0.0
  %942 = vmatmul.mubr.f32.gmra.mxu0 %v225
  %v943 = vpop.f32.mrf.mxu0
  %v944 = vadd.f32 %v537, %v943
  %v945 = vpop.f32.mrf.mxu0
  %v946 = vadd.f32 %v539, %v945
  %947 = vmatprep.mubr.f32.mxu0 0.0
  %948 = vmatmul.mubr.f32.gmra.mxu0 %v228
  %v949 = vpop.f32.mrf.mxu0
  %v950 = vadd.f32 %v543, %v949
  %v951 = vpop.f32.mrf.mxu0
  %v952 = vadd.f32 %v545, %v951
  %953 = vmatprep.mubr.f32.mxu0 0.0
  %954 = vmatmul.mubr.f32.gmra.mxu0 %v231
  %v955 = vpop.f32.mrf.mxu0
  %v956 = vadd.f32 %v549, %v955
  %v957 = vpop.f32.mrf.mxu0
  %v958 = vadd.f32 %v551, %v957
  %959 = vmatprep.mubr.f32.mxu0 0.0
  %960 = vmatmul.mubr.f32.gmra.mxu0 %v234
  %v961 = vpop.f32.mrf.mxu0
  %v962 = vadd.f32 %v555, %v961
  %v963 = vpop.f32.mrf.mxu0
  %v964 = vadd.f32 %v557, %v963
  %965 = vmatprep.mubr.f32.mxu0 0.0
  %966 = vmatmul.mubr.f32.gmra.mxu0 %v237
  %v967 = vpop.f32.mrf.mxu0
  %v968 = vadd.f32 %v561, %v967
  %v969 = vpop.f32.mrf.mxu0
  %v970 = vadd.f32 %v563, %v969
  %971 = vmatprep.mubr.f32.mxu0 0.0
  %972 = vmatmul.mubr.f32.gmra.mxu0 %v240
  %v973 = vpop.f32.mrf.mxu0
  %v974 = vadd.f32 %v567, %v973
  %v975 = vpop.f32.mrf.mxu0
  %v976 = vadd.f32 %v569, %v975
  %977 = vmatprep.mubr.f32.mxu0 0.0
  %978 = vmatmul.mubr.f32.gmra.mxu0 %v243
  %v979 = vpop.f32.mrf.mxu0
  %v980 = vadd.f32 %v573, %v979
  %v981 = vpop.f32.mrf.mxu0
  %v982 = vadd.f32 %v575, %v981
  %983 = vmatprep.mubr.f32.mxu0 0.0
  %984 = vmatmul.mubr.f32.gmra.mxu0 %v246
  %v985 = vpop.f32.mrf.mxu0
  %v986 = vadd.f32 %v579, %v985
  %v987 = vpop.f32.mrf.mxu0
  %v988 = vadd.f32 %v581, %v987
  %989 = vmatprep.mubr.f32.mxu0 0.0
  %990 = vmatmul.mubr.f32.gmra.mxu0 %v249
  %v991 = vpop.f32.mrf.mxu0
  %v992 = vadd.f32 %v585, %v991
  %v993 = vpop.f32.mrf.mxu0
  %v994 = vadd.f32 %v587, %v993
  %995 = vmatprep.mubr.f32.mxu0 0.0
  %996 = vmatmul.mubr.f32.gmra.mxu0 %v252
  %v997 = vpop.f32.mrf.mxu0
  %v998 = vadd.f32 %v591, %v997
  %v999 = vpop.f32.mrf.mxu0
  %v1000 = vadd.f32 %v593, %v999
  %1001 = vmatprep.mubr.f32.mxu0 0.0
  %1002 = vmatmul.mubr.f32.gmra.mxu0 %v255
  %v1003 = vpop.f32.mrf.mxu0
  %v1004 = vadd.f32 %v597, %v1003
  %v1005 = vpop.f32.mrf.mxu0
  %v1006 = vadd.f32 %v599, %v1005
  %1007 = vmatprep.mubr.f32.mxu0 0.0
  %1008 = vmatmul.mubr.f32.gmra.mxu0 %v258
  %v1009 = vpop.f32.mrf.mxu0
  %v1010 = vadd.f32 %v603, %v1009
  %v1011 = vpop.f32.mrf.mxu0
  %v1012 = vadd.f32 %v605, %v1011
  %1013 = vmatprep.mubr.f32.mxu0 0.0
  %1014 = vmatmul.mubr.f32.gmra.mxu0 %v261
  %v1015 = vpop.f32.mrf.mxu0
  %v1016 = vadd.f32 %v609, %v1015
  %v1017 = vpop.f32.mrf.mxu0
  %v1018 = vadd.f32 %v611, %v1017
  %1019 = vmatprep.mubr.f32.mxu0 0.0
  %1020 = vmatmul.mubr.f32.gmra.mxu0 %v264
  %v1021 = vpop.f32.mrf.mxu0
  %v1022 = vadd.f32 %v615, %v1021
  %v1023 = vpop.f32.mrf.mxu0
  %v1024 = vadd.f32 %v617, %v1023
  %1025 = vmatprep.mubr.f32.mxu0 0.0
  %1026 = vmatmul.mubr.f32.gmra.mxu0 %v267
  %v1027 = vpop.f32.mrf.mxu0
  %v1028 = vadd.f32 %v621, %v1027
  %v1029 = vpop.f32.mrf.mxu0
  %v1030 = vadd.f32 %v623, %v1029
  %1031 = vmatprep.mubr.f32.mxu0 0.0
  %1032 = vmatmul.mubr.f32.gmra.mxu0 %v270
  %v1033 = vpop.f32.mrf.mxu0
  %v1034 = vadd.f32 %v627, %v1033
  %v1035 = vpop.f32.mrf.mxu0
  %v1036 = vadd.f32 %v629, %v1035
  %1037 = vmatprep.mubr.f32.mxu0 0.0
  %1038 = vmatmul.mubr.f32.gmra.mxu0 %v273
  %v1039 = vpop.f32.mrf.mxu0
  %v1040 = vadd.f32 %v633, %v1039
  %v1041 = vpop.f32.mrf.mxu0
  %v1042 = vadd.f32 %v635, %v1041
  %1043 = vmatprep.mubr.f32.mxu0 0.0
  %1044 = vmatmul.mubr.f32.gmra.mxu0 %v276
  %v1045 = vpop.f32.mrf.mxu0
  %v1046 = vadd.f32 %v639, %v1045
  %v1047 = vpop.f32.mrf.mxu0
  %v1048 = vadd.f32 %v641, %v1047
  %1049 = vmatprep.mubr.f32.mxu0 0.0
  %1050 = vmatmul.mubr.f32.gmra.mxu0 %v279
  %v1051 = vpop.f32.mrf.mxu0
  %v1052 = vadd.f32 %v645, %v1051
  %v1053 = vpop.f32.mrf.mxu0
  %v1054 = vadd.f32 %v647, %v1053
  %1055 = vmatprep.mubr.f32.mxu0 0.0
  %1056 = vmatmul.mubr.f32.gmra.mxu0 %v282
  %v1057 = vpop.f32.mrf.mxu0
  %v1058 = vadd.f32 %v651, %v1057
  %v1059 = vpop.f32.mrf.mxu0
  %v1060 = vadd.f32 %v653, %v1059
  %1061 = vmatprep.mubr.f32.mxu0 0.0
  %1062 = vmatmul.mubr.f32.gmra.mxu0 %v285
  %v1063 = vpop.f32.mrf.mxu0
  %v1064 = vadd.f32 %v657, %v1063
  %v1065 = vpop.f32.mrf.mxu0
  %v1066 = vadd.f32 %v659, %v1065
  %1067 = vmatprep.mubr.f32.mxu0 0.0
  %1068 = vmatmul.mubr.f32.gmra.mxu0 %v288
  %v1069 = vpop.f32.mrf.mxu0
  %v1070 = vadd.f32 %v663, %v1069
  %v1071 = vpop.f32.mrf.mxu0
  %v1072 = vadd.f32 %v665, %v1071
  %1073 = vmatprep.mubr.f32.mxu0 0.0
  %1074 = vmatmul.mubr.f32.gmra.mxu0 %v291
  %v1075 = vpop.f32.mrf.mxu0
  %v1076 = vadd.f32 %v669, %v1075
  %v1077 = vpop.f32.mrf.mxu0
  %v1078 = vadd.f32 %v671, %v1077
  %1079 = vmatprep.mubr.f32.mxu0 0.0
  %1080 = vmatmul.mubr.f32.gmra.mxu0 %v294
  %v1081 = vpop.f32.mrf.mxu0
  %v1082 = vadd.f32 %v675, %v1081
  %v1083 = vpop.f32.mrf.mxu0
  %v1084 = vadd.f32 %v677, %v1083
  %1085 = vmatprep.mubr.f32.mxu0 0.0
  %1086 = vmatmul.mubr.f32.gmra.mxu0 %v297
  %v1087 = vpop.f32.mrf.mxu0
  %v1088 = vadd.f32 %v681, %v1087
  %v1089 = vpop.f32.mrf.mxu0
  %v1090 = vadd.f32 %v683, %v1089
  %1091 = vmatprep.mubr.f32.mxu0 0.0
  %1092 = vmatmul.mubr.f32.gmra.mxu0 %v300
  %v1093 = vpop.f32.mrf.mxu0
  %v1094 = vadd.f32 %v687, %v1093
  %v1095 = vpop.f32.mrf.mxu0
  %v1096 = vadd.f32 %v689, %v1095
  %1097 = vmatprep.mubr.f32.mxu0 0.0
  %1098 = vmatmul.mubr.f32.gmra.mxu0 %v303
  %v1099 = vpop.f32.mrf.mxu0
  %v1100 = vadd.f32 %v693, %v1099
  %v1101 = vpop.f32.mrf.mxu0
  %v1102 = vadd.f32 %v695, %v1101
  %1103 = vmatprep.mubr.f32.mxu0 0.0
  %1104 = vmatmul.mubr.f32.gmra.mxu0 %v306
  %v1105 = vpop.f32.mrf.mxu0
  %v1106 = vadd.f32 %v699, %v1105
  %v1107 = vpop.f32.mrf.mxu0
  %v1108 = vadd.f32 %v701, %v1107
  %1109 = vmatprep.mubr.f32.mxu0 0.0
  %1110 = vmatmul.mubr.f32.gmra.mxu0 %v309
  %v1111 = vpop.f32.mrf.mxu0
  %v1112 = vadd.f32 %v705, %v1111
  %v1113 = vpop.f32.mrf.mxu0
  %v1114 = vadd.f32 %v707, %v1113
  %1115 = vmatprep.mubr.f32.mxu0 0.0
  %1116 = vmatmul.mubr.f32.gmra.mxu0 %v312
  %v1117 = vpop.f32.mrf.mxu0
  %v1118 = vadd.f32 %v711, %v1117
  %v1119 = vpop.f32.mrf.mxu0
  %v1120 = vadd.f32 %v713, %v1119
  %1121 = vmatprep.mubr.f32.mxu0 0.0
  %1122 = vmatmul.mubr.f32.gmra.mxu0 %v315
  %v1123 = vpop.f32.mrf.mxu0
  %v1124 = vadd.f32 %v717, %v1123
  %v1125 = vpop.f32.mrf.mxu0
  %v1126 = vadd.f32 %v719, %v1125
  %1127 = vmatprep.mubr.f32.mxu0 0.0
  %1128 = vmatmul.mubr.f32.gmra.mxu0 %v318
  %v1129 = vpop.f32.mrf.mxu0
  %v1130 = vadd.f32 %v723, %v1129
  %v1131 = vpop.f32.mrf.mxu0
  %v1132 = vadd.f32 %v725, %v1131
  %1133 = vdwg.mxu0
  %s1134 = scalar_lea.vmem %s1, 384
  %v1135 = vld [vmem:[%s1134] sm:$0xff]
  %v1136 = vld [vmem:[%s1134 + $0x8] sm:$0xff]
  %v1137 = vld [vmem:[%s1134 + $0x10] sm:$0xff]
  %v1138 = vld [vmem:[%s1134 + $0x18] sm:$0xff]
  %v1139 = vld [vmem:[%s1134 + $0x20] sm:$0xff]
  %v1140 = vld [vmem:[%s1134 + $0x28] sm:$0xff]
  %v1141 = vld [vmem:[%s1134 + $0x30] sm:$0xff]
  %v1142 = vld [vmem:[%s1134 + $0x38] sm:$0xff]
  %v1143 = vld [vmem:[%s1134 + $0x40] sm:$0xff]
  %v1144 = vld [vmem:[%s1134 + $0x48] sm:$0xff]
  %v1145 = vld [vmem:[%s1134 + $0x50] sm:$0xff]
  %v1146 = vld [vmem:[%s1134 + $0x58] sm:$0xff]
  %v1147 = vld [vmem:[%s1134 + $0x60] sm:$0xff]
  %v1148 = vld [vmem:[%s1134 + $0x68] sm:$0xff]
  %v1149 = vld [vmem:[%s1134 + $0x70] sm:$0xff]
  %v1150 = vld [vmem:[%s1134 + $0x78] sm:$0xff]
  %v1151 = vld [vmem:[%s1134 + $0x80] sm:$0xff]
  %v1152 = vld [vmem:[%s1134 + $0x88] sm:$0xff]
  %v1153 = vld [vmem:[%s1134 + $0x90] sm:$0xff]
  %v1154 = vld [vmem:[%s1134 + $0x98] sm:$0xff]
  %v1155 = vld [vmem:[%s1134 + $0xa0] sm:$0xff]
  %v1156 = vld [vmem:[%s1134 + $0xa8] sm:$0xff]
  %v1157 = vld [vmem:[%s1134 + $0xb0] sm:$0xff]
  %v1158 = vld [vmem:[%s1134 + $0xb8] sm:$0xff]
  %v1160 = vsel %vm157, %v102, 0
  %v1163 = vsel %vm157, %v103, 0
  %1165 = vmatprep.subr.mxu0 0.0
  %1166 = vmatpush1.msra.mxu0 0.0
  %1167 = vmatprep.subr.mxu0 0.0
  %1168 = vmatpush1.msra.mxu0 0.0
  %1169 = vmatprep.subr.mxu0 0.0
  %1170 = vmatpush1.msra.mxu0 0.0
  %1171 = vmatprep.subr.mxu0 0.0
  %1172 = vmatpush1.msra.mxu0 0.0
  %1173 = vmatprep.subr.mxu0 %v1158
  %1174 = vmatpush1.msra.mxu0 %v1157
  %1175 = vmatprep.subr.mxu0 %v1156
  %1176 = vmatpush1.msra.mxu0 %v1155
  %1177 = vmatprep.subr.mxu0 %v1154
  %1178 = vmatpush1.msra.mxu0 %v1153
  %1179 = vmatprep.subr.mxu0 %v1152
  %1180 = vmatpush1.msra.mxu0 %v1151
  %1181 = vmatprep.subr.mxu0 %v1150
  %1182 = vmatpush1.msra.mxu0 %v1149
  %1183 = vmatprep.subr.mxu0 %v1148
  %1184 = vmatpush1.msra.mxu0 %v1147
  %1185 = vmatprep.subr.mxu0 %v1146
  %1186 = vmatpush1.msra.mxu0 %v1145
  %1187 = vmatprep.subr.mxu0 %v1144
  %1188 = vmatpush1.msra.mxu0 %v1143
  %1189 = vmatprep.subr.mxu0 %v1142
  %1190 = vmatpush1.msra.mxu0 %v1141
  %1191 = vmatprep.subr.mxu0 %v1140
  %1192 = vmatpush1.msra.mxu0 %v1139
  %1193 = vmatprep.subr.mxu0 %v1138
  %1194 = vmatpush1.msra.mxu0 %v1137
  %1195 = vmatprep.subr.mxu0 %v1136
  %1196 = vmatpush1.msra.mxu0 %v1135
  %1197 = vmatprep.subr.mxu0 0.0
  %1198 = vmatpush2.msra.mxu0 0.0
  %1199 = vmatprep.subr.mxu0 0.0
  %1200 = vmatpush2.msra.mxu0 0.0
  %1201 = vmatprep.subr.mxu0 0.0
  %1202 = vmatpush2.msra.mxu0 0.0
  %1203 = vmatprep.subr.mxu0 0.0
  %1204 = vmatpush2.msra.mxu0 0.0
  %1205 = vmatprep.subr.mxu0 0.0
  %1206 = vmatpush2.msra.mxu0 0.0
  %1207 = vmatprep.subr.mxu0 0.0
  %1208 = vmatpush2.msra.mxu0 0.0
  %1209 = vmatprep.subr.mxu0 0.0
  %1210 = vmatpush2.msra.mxu0 0.0
  %1211 = vmatprep.subr.mxu0 0.0
  %1212 = vmatpush2.msra.mxu0 0.0
  %1213 = vmatprep.subr.mxu0 0.0
  %1214 = vmatpush2.msra.mxu0 0.0
  %1215 = vmatprep.subr.mxu0 0.0
  %1216 = vmatpush2.msra.mxu0 0.0
  %1217 = vmatprep.subr.mxu0 0.0
  %1218 = vmatpush2.msra.mxu0 0.0
  %1219 = vmatprep.subr.mxu0 0.0
  %1220 = vmatpush2.msra.mxu0 0.0
  %1221 = vmatprep.subr.mxu0 0.0
  %1222 = vmatpush2.msra.mxu0 0.0
  %1223 = vmatprep.subr.mxu0 0.0
  %1224 = vmatpush2.msra.mxu0 0.0
  %1225 = vmatprep.subr.mxu0 0.0
  %1226 = vmatpush2.msra.mxu0 0.0
  %1227 = vmatprep.subr.mxu0 0.0
  %1228 = vmatpush2.msra.mxu0 0.0
  %1229 = vmatprep.mubr.f32.mxu0 0.0
  %1230 = vmatmul.mubr.f32.gmra.mxu0 %v165
  %v1231 = vpop.f32.mrf.mxu0
  %v1232 = vadd.f32 0.0, %v1231
  %v1233 = vpop.f32.mrf.mxu0
  %v1234 = vadd.f32 0.0, %v1233
  %1235 = vmatprep.mubr.f32.mxu0 0.0
  %1236 = vmatmul.mubr.f32.gmra.mxu0 %v168
  %v1237 = vpop.f32.mrf.mxu0
  %v1238 = vadd.f32 0.0, %v1237
  %v1239 = vpop.f32.mrf.mxu0
  %v1240 = vadd.f32 0.0, %v1239
  %1241 = vmatprep.mubr.f32.mxu0 0.0
  %1242 = vmatmul.mubr.f32.gmra.mxu0 %v171
  %v1243 = vpop.f32.mrf.mxu0
  %v1244 = vadd.f32 0.0, %v1243
  %v1245 = vpop.f32.mrf.mxu0
  %v1246 = vadd.f32 0.0, %v1245
  %1247 = vmatprep.mubr.f32.mxu0 0.0
  %1248 = vmatmul.mubr.f32.gmra.mxu0 %v174
  %v1249 = vpop.f32.mrf.mxu0
  %v1250 = vadd.f32 0.0, %v1249
  %v1251 = vpop.f32.mrf.mxu0
  %v1252 = vadd.f32 0.0, %v1251
  %1253 = vmatprep.mubr.f32.mxu0 0.0
  %1254 = vmatmul.mubr.f32.gmra.mxu0 %v177
  %v1255 = vpop.f32.mrf.mxu0
  %v1256 = vadd.f32 0.0, %v1255
  %v1257 = vpop.f32.mrf.mxu0
  %v1258 = vadd.f32 0.0, %v1257
  %1259 = vmatprep.mubr.f32.mxu0 0.0
  %1260 = vmatmul.mubr.f32.gmra.mxu0 %v180
  %v1261 = vpop.f32.mrf.mxu0
  %v1262 = vadd.f32 0.0, %v1261
  %v1263 = vpop.f32.mrf.mxu0
  %v1264 = vadd.f32 0.0, %v1263
  %1265 = vmatprep.mubr.f32.mxu0 0.0
  %1266 = vmatmul.mubr.f32.gmra.mxu0 %v183
  %v1267 = vpop.f32.mrf.mxu0
  %v1268 = vadd.f32 0.0, %v1267
  %v1269 = vpop.f32.mrf.mxu0
  %v1270 = vadd.f32 0.0, %v1269
  %1271 = vmatprep.mubr.f32.mxu0 0.0
  %1272 = vmatmul.mubr.f32.gmra.mxu0 %v186
  %v1273 = vpop.f32.mrf.mxu0
  %v1274 = vadd.f32 0.0, %v1273
  %v1275 = vpop.f32.mrf.mxu0
  %v1276 = vadd.f32 0.0, %v1275
  %1277 = vmatprep.mubr.f32.mxu0 0.0
  %1278 = vmatmul.mubr.f32.gmra.mxu0 %v189
  %v1279 = vpop.f32.mrf.mxu0
  %v1280 = vadd.f32 0.0, %v1279
  %v1281 = vpop.f32.mrf.mxu0
  %v1282 = vadd.f32 0.0, %v1281
  %1283 = vmatprep.mubr.f32.mxu0 0.0
  %1284 = vmatmul.mubr.f32.gmra.mxu0 %v192
  %v1285 = vpop.f32.mrf.mxu0
  %v1286 = vadd.f32 0.0, %v1285
  %v1287 = vpop.f32.mrf.mxu0
  %v1288 = vadd.f32 0.0, %v1287
  %1289 = vmatprep.mubr.f32.mxu0 0.0
  %1290 = vmatmul.mubr.f32.gmra.mxu0 %v195
  %v1291 = vpop.f32.mrf.mxu0
  %v1292 = vadd.f32 0.0, %v1291
  %v1293 = vpop.f32.mrf.mxu0
  %v1294 = vadd.f32 0.0, %v1293
  %1295 = vmatprep.mubr.f32.mxu0 0.0
  %1296 = vmatmul.mubr.f32.gmra.mxu0 %v198
  %v1297 = vpop.f32.mrf.mxu0
  %v1298 = vadd.f32 0.0, %v1297
  %v1299 = vpop.f32.mrf.mxu0
  %v1300 = vadd.f32 0.0, %v1299
  %1301 = vmatprep.mubr.f32.mxu0 0.0
  %1302 = vmatmul.mubr.f32.gmra.mxu0 %v201
  %v1303 = vpop.f32.mrf.mxu0
  %v1304 = vadd.f32 0.0, %v1303
  %v1305 = vpop.f32.mrf.mxu0
  %v1306 = vadd.f32 0.0, %v1305
  %1307 = vmatprep.mubr.f32.mxu0 0.0
  %1308 = vmatmul.mubr.f32.gmra.mxu0 %v204
  %v1309 = vpop.f32.mrf.mxu0
  %v1310 = vadd.f32 0.0, %v1309
  %v1311 = vpop.f32.mrf.mxu0
  %v1312 = vadd.f32 0.0, %v1311
  %1313 = vmatprep.mubr.f32.mxu0 0.0
  %1314 = vmatmul.mubr.f32.gmra.mxu0 %v207
  %v1315 = vpop.f32.mrf.mxu0
  %v1316 = vadd.f32 0.0, %v1315
  %v1317 = vpop.f32.mrf.mxu0
  %v1318 = vadd.f32 0.0, %v1317
  %1319 = vmatprep.mubr.f32.mxu0 0.0
  %1320 = vmatmul.mubr.f32.gmra.mxu0 %v210
  %v1321 = vpop.f32.mrf.mxu0
  %v1322 = vadd.f32 0.0, %v1321
  %v1323 = vpop.f32.mrf.mxu0
  %v1324 = vadd.f32 0.0, %v1323
  %1325 = vmatprep.mubr.f32.mxu0 0.0
  %1326 = vmatmul.mubr.f32.gmra.mxu0 %v213
  %v1327 = vpop.f32.mrf.mxu0
  %v1328 = vadd.f32 0.0, %v1327
  %v1329 = vpop.f32.mrf.mxu0
  %v1330 = vadd.f32 0.0, %v1329
  %1331 = vmatprep.mubr.f32.mxu0 0.0
  %1332 = vmatmul.mubr.f32.gmra.mxu0 %v216
  %v1333 = vpop.f32.mrf.mxu0
  %v1334 = vadd.f32 0.0, %v1333
  %v1335 = vpop.f32.mrf.mxu0
  %v1336 = vadd.f32 0.0, %v1335
  %1337 = vmatprep.mubr.f32.mxu0 0.0
  %1338 = vmatmul.mubr.f32.gmra.mxu0 %v219
  %v1339 = vpop.f32.mrf.mxu0
  %v1340 = vadd.f32 0.0, %v1339
  %v1341 = vpop.f32.mrf.mxu0
  %v1342 = vadd.f32 0.0, %v1341
  %1343 = vmatprep.mubr.f32.mxu0 0.0
  %1344 = vmatmul.mubr.f32.gmra.mxu0 %v222
  %v1345 = vpop.f32.mrf.mxu0
  %v1346 = vadd.f32 0.0, %v1345
  %v1347 = vpop.f32.mrf.mxu0
  %v1348 = vadd.f32 0.0, %v1347
  %1349 = vmatprep.mubr.f32.mxu0 0.0
  %1350 = vmatmul.mubr.f32.gmra.mxu0 %v225
  %v1351 = vpop.f32.mrf.mxu0
  %v1352 = vadd.f32 0.0, %v1351
  %v1353 = vpop.f32.mrf.mxu0
  %v1354 = vadd.f32 0.0, %v1353
  %1355 = vmatprep.mubr.f32.mxu0 0.0
  %1356 = vmatmul.mubr.f32.gmra.mxu0 %v228
  %v1357 = vpop.f32.mrf.mxu0
  %v1358 = vadd.f32 0.0, %v1357
  %v1359 = vpop.f32.mrf.mxu0
  %v1360 = vadd.f32 0.0, %v1359
  %1361 = vmatprep.mubr.f32.mxu0 0.0
  %1362 = vmatmul.mubr.f32.gmra.mxu0 %v231
  %v1363 = vpop.f32.mrf.mxu0
  %v1364 = vadd.f32 0.0, %v1363
  %v1365 = vpop.f32.mrf.mxu0
  %v1366 = vadd.f32 0.0, %v1365
  %1367 = vmatprep.mubr.f32.mxu0 0.0
  %1368 = vmatmul.mubr.f32.gmra.mxu0 %v234
  %v1369 = vpop.f32.mrf.mxu0
  %v1370 = vadd.f32 0.0, %v1369
  %v1371 = vpop.f32.mrf.mxu0
  %v1372 = vadd.f32 0.0, %v1371
  %1373 = vmatprep.mubr.f32.mxu0 0.0
  %1374 = vmatmul.mubr.f32.gmra.mxu0 %v237
  %v1375 = vpop.f32.mrf.mxu0
  %v1376 = vadd.f32 0.0, %v1375
  %v1377 = vpop.f32.mrf.mxu0
  %v1378 = vadd.f32 0.0, %v1377
  %1379 = vmatprep.mubr.f32.mxu0 0.0
  %1380 = vmatmul.mubr.f32.gmra.mxu0 %v240
  %v1381 = vpop.f32.mrf.mxu0
  %v1382 = vadd.f32 0.0, %v1381
  %v1383 = vpop.f32.mrf.mxu0
  %v1384 = vadd.f32 0.0, %v1383
  %1385 = vmatprep.mubr.f32.mxu0 0.0
  %1386 = vmatmul.mubr.f32.gmra.mxu0 %v243
  %v1387 = vpop.f32.mrf.mxu0
  %v1388 = vadd.f32 0.0, %v1387
  %v1389 = vpop.f32.mrf.mxu0
  %v1390 = vadd.f32 0.0, %v1389
  %1391 = vmatprep.mubr.f32.mxu0 0.0
  %1392 = vmatmul.mubr.f32.gmra.mxu0 %v246
  %v1393 = vpop.f32.mrf.mxu0
  %v1394 = vadd.f32 0.0, %v1393
  %v1395 = vpop.f32.mrf.mxu0
  %v1396 = vadd.f32 0.0, %v1395
  %1397 = vmatprep.mubr.f32.mxu0 0.0
  %1398 = vmatmul.mubr.f32.gmra.mxu0 %v249
  %v1399 = vpop.f32.mrf.mxu0
  %v1400 = vadd.f32 0.0, %v1399
  %v1401 = vpop.f32.mrf.mxu0
  %v1402 = vadd.f32 0.0, %v1401
  %1403 = vmatprep.mubr.f32.mxu0 0.0
  %1404 = vmatmul.mubr.f32.gmra.mxu0 %v252
  %v1405 = vpop.f32.mrf.mxu0
  %v1406 = vadd.f32 0.0, %v1405
  %v1407 = vpop.f32.mrf.mxu0
  %v1408 = vadd.f32 0.0, %v1407
  %1409 = vmatprep.mubr.f32.mxu0 0.0
  %1410 = vmatmul.mubr.f32.gmra.mxu0 %v255
  %v1411 = vpop.f32.mrf.mxu0
  %v1412 = vadd.f32 0.0, %v1411
  %v1413 = vpop.f32.mrf.mxu0
  %v1414 = vadd.f32 0.0, %v1413
  %1415 = vmatprep.mubr.f32.mxu0 0.0
  %1416 = vmatmul.mubr.f32.gmra.mxu0 %v258
  %v1417 = vpop.f32.mrf.mxu0
  %v1418 = vadd.f32 0.0, %v1417
  %v1419 = vpop.f32.mrf.mxu0
  %v1420 = vadd.f32 0.0, %v1419
  %1421 = vmatprep.mubr.f32.mxu0 0.0
  %1422 = vmatmul.mubr.f32.gmra.mxu0 %v261
  %v1423 = vpop.f32.mrf.mxu0
  %v1424 = vadd.f32 0.0, %v1423
  %v1425 = vpop.f32.mrf.mxu0
  %v1426 = vadd.f32 0.0, %v1425
  %1427 = vmatprep.mubr.f32.mxu0 0.0
  %1428 = vmatmul.mubr.f32.gmra.mxu0 %v264
  %v1429 = vpop.f32.mrf.mxu0
  %v1430 = vadd.f32 0.0, %v1429
  %v1431 = vpop.f32.mrf.mxu0
  %v1432 = vadd.f32 0.0, %v1431
  %1433 = vmatprep.mubr.f32.mxu0 0.0
  %1434 = vmatmul.mubr.f32.gmra.mxu0 %v267
  %v1435 = vpop.f32.mrf.mxu0
  %v1436 = vadd.f32 0.0, %v1435
  %v1437 = vpop.f32.mrf.mxu0
  %v1438 = vadd.f32 0.0, %v1437
  %1439 = vmatprep.mubr.f32.mxu0 0.0
  %1440 = vmatmul.mubr.f32.gmra.mxu0 %v270
  %v1441 = vpop.f32.mrf.mxu0
  %v1442 = vadd.f32 0.0, %v1441
  %v1443 = vpop.f32.mrf.mxu0
  %v1444 = vadd.f32 0.0, %v1443
  %1445 = vmatprep.mubr.f32.mxu0 0.0
  %1446 = vmatmul.mubr.f32.gmra.mxu0 %v273
  %v1447 = vpop.f32.mrf.mxu0
  %v1448 = vadd.f32 0.0, %v1447
  %v1449 = vpop.f32.mrf.mxu0
  %v1450 = vadd.f32 0.0, %v1449
  %1451 = vmatprep.mubr.f32.mxu0 0.0
  %1452 = vmatmul.mubr.f32.gmra.mxu0 %v276
  %v1453 = vpop.f32.mrf.mxu0
  %v1454 = vadd.f32 0.0, %v1453
  %v1455 = vpop.f32.mrf.mxu0
  %v1456 = vadd.f32 0.0, %v1455
  %1457 = vmatprep.mubr.f32.mxu0 0.0
  %1458 = vmatmul.mubr.f32.gmra.mxu0 %v279
  %v1459 = vpop.f32.mrf.mxu0
  %v1460 = vadd.f32 0.0, %v1459
  %v1461 = vpop.f32.mrf.mxu0
  %v1462 = vadd.f32 0.0, %v1461
  %1463 = vmatprep.mubr.f32.mxu0 0.0
  %1464 = vmatmul.mubr.f32.gmra.mxu0 %v282
  %v1465 = vpop.f32.mrf.mxu0
  %v1466 = vadd.f32 0.0, %v1465
  %v1467 = vpop.f32.mrf.mxu0
  %v1468 = vadd.f32 0.0, %v1467
  %1469 = vmatprep.mubr.f32.mxu0 0.0
  %1470 = vmatmul.mubr.f32.gmra.mxu0 %v285
  %v1471 = vpop.f32.mrf.mxu0
  %v1472 = vadd.f32 0.0, %v1471
  %v1473 = vpop.f32.mrf.mxu0
  %v1474 = vadd.f32 0.0, %v1473
  %1475 = vmatprep.mubr.f32.mxu0 0.0
  %1476 = vmatmul.mubr.f32.gmra.mxu0 %v288
  %v1477 = vpop.f32.mrf.mxu0
  %v1478 = vadd.f32 0.0, %v1477
  %v1479 = vpop.f32.mrf.mxu0
  %v1480 = vadd.f32 0.0, %v1479
  %1481 = vmatprep.mubr.f32.mxu0 0.0
  %1482 = vmatmul.mubr.f32.gmra.mxu0 %v291
  %v1483 = vpop.f32.mrf.mxu0
  %v1484 = vadd.f32 0.0, %v1483
  %v1485 = vpop.f32.mrf.mxu0
  %v1486 = vadd.f32 0.0, %v1485
  %1487 = vmatprep.mubr.f32.mxu0 0.0
  %1488 = vmatmul.mubr.f32.gmra.mxu0 %v294
  %v1489 = vpop.f32.mrf.mxu0
  %v1490 = vadd.f32 0.0, %v1489
  %v1491 = vpop.f32.mrf.mxu0
  %v1492 = vadd.f32 0.0, %v1491
  %1493 = vmatprep.mubr.f32.mxu0 0.0
  %1494 = vmatmul.mubr.f32.gmra.mxu0 %v297
  %v1495 = vpop.f32.mrf.mxu0
  %v1496 = vadd.f32 0.0, %v1495
  %v1497 = vpop.f32.mrf.mxu0
  %v1498 = vadd.f32 0.0, %v1497
  %1499 = vmatprep.mubr.f32.mxu0 0.0
  %1500 = vmatmul.mubr.f32.gmra.mxu0 %v300
  %v1501 = vpop.f32.mrf.mxu0
  %v1502 = vadd.f32 0.0, %v1501
  %v1503 = vpop.f32.mrf.mxu0
  %v1504 = vadd.f32 0.0, %v1503
  %1505 = vmatprep.mubr.f32.mxu0 0.0
  %1506 = vmatmul.mubr.f32.gmra.mxu0 %v303
  %v1507 = vpop.f32.mrf.mxu0
  %v1508 = vadd.f32 0.0, %v1507
  %v1509 = vpop.f32.mrf.mxu0
  %v1510 = vadd.f32 0.0, %v1509
  %1511 = vmatprep.mubr.f32.mxu0 0.0
  %1512 = vmatmul.mubr.f32.gmra.mxu0 %v306
  %v1513 = vpop.f32.mrf.mxu0
  %v1514 = vadd.f32 0.0, %v1513
  %v1515 = vpop.f32.mrf.mxu0
  %v1516 = vadd.f32 0.0, %v1515
  %1517 = vmatprep.mubr.f32.mxu0 0.0
  %1518 = vmatmul.mubr.f32.gmra.mxu0 %v309
  %v1519 = vpop.f32.mrf.mxu0
  %v1520 = vadd.f32 0.0, %v1519
  %v1521 = vpop.f32.mrf.mxu0
  %v1522 = vadd.f32 0.0, %v1521
  %1523 = vmatprep.mubr.f32.mxu0 0.0
  %1524 = vmatmul.mubr.f32.gmra.mxu0 %v312
  %v1525 = vpop.f32.mrf.mxu0
  %v1526 = vadd.f32 0.0, %v1525
  %v1527 = vpop.f32.mrf.mxu0
  %v1528 = vadd.f32 0.0, %v1527
  %1529 = vmatprep.mubr.f32.mxu0 0.0
  %1530 = vmatmul.mubr.f32.gmra.mxu0 %v315
  %v1531 = vpop.f32.mrf.mxu0
  %v1532 = vadd.f32 0.0, %v1531
  %v1533 = vpop.f32.mrf.mxu0
  %v1534 = vadd.f32 0.0, %v1533
  %1535 = vmatprep.mubr.f32.mxu0 0.0
  %1536 = vmatmul.mubr.f32.gmra.mxu0 %v318
  %v1537 = vpop.f32.mrf.mxu0
  %v1538 = vadd.f32 0.0, %v1537
  %v1539 = vpop.f32.mrf.mxu0
  %v1540 = vadd.f32 0.0, %v1539
  %1541 = vmatprep.mubr.f32.mxu0 0.0
  %1542 = vmatmul.mubr.f32.gmra.mxu0 %v321
  %v1543 = vpop.f32.mrf.mxu0
  %v1544 = vadd.f32 0.0, %v1543
  %v1545 = vpop.f32.mrf.mxu0
  %v1546 = vadd.f32 0.0, %v1545
  %1547 = vmatprep.mubr.f32.mxu0 0.0
  %1548 = vmatmul.mubr.f32.gmra.mxu0 %v324
  %v1549 = vpop.f32.mrf.mxu0
  %v1550 = vadd.f32 0.0, %v1549
  %v1551 = vpop.f32.mrf.mxu0
  %v1552 = vadd.f32 0.0, %v1551
  %1553 = vmatprep.mubr.f32.mxu0 0.0
  %1554 = vmatmul.mubr.f32.gmra.mxu0 %v1160
  %v1555 = vpop.f32.mrf.mxu0
  %v1556 = vadd.f32 0.0, %v1555
  %v1557 = vpop.f32.mrf.mxu0
  %v1558 = vadd.f32 0.0, %v1557
  %1559 = vmatprep.mubr.f32.mxu0 0.0
  %1560 = vmatmul.mubr.f32.gmra.mxu0 %v1163
  %v1561 = vpop.f32.mrf.mxu0
  %v1562 = vadd.f32 0.0, %v1561
  %v1563 = vpop.f32.mrf.mxu0
  %v1564 = vadd.f32 0.0, %v1563
  %1565 = vdwg.mxu0
  %v1566 = vadd.f32 %v800, %v1232
  %v1567 = vadd.f32 %v802, %v1234
  %v1568 = vadd.f32 %v806, %v1238
  %v1569 = vadd.f32 %v808, %v1240
  %v1570 = vadd.f32 %v812, %v1244
  %v1571 = vadd.f32 %v814, %v1246
  %v1572 = vadd.f32 %v818, %v1250
  %v1573 = vadd.f32 %v820, %v1252
  %v1574 = vadd.f32 %v824, %v1256
  %v1575 = vadd.f32 %v826, %v1258
  %v1576 = vadd.f32 %v830, %v1262
  %v1577 = vadd.f32 %v832, %v1264
  %v1578 = vadd.f32 %v836, %v1268
  %v1579 = vadd.f32 %v838, %v1270
  %v1580 = vadd.f32 %v842, %v1274
  %v1581 = vadd.f32 %v844, %v1276
  %v1582 = vadd.f32 %v848, %v1280
  %v1583 = vadd.f32 %v850, %v1282
  %v1584 = vadd.f32 %v854, %v1286
  %v1585 = vadd.f32 %v856, %v1288
  %v1586 = vadd.f32 %v860, %v1292
  %v1587 = vadd.f32 %v862, %v1294
  %v1588 = vadd.f32 %v866, %v1298
  %v1589 = vadd.f32 %v868, %v1300
  %v1590 = vadd.f32 %v872, %v1304
  %v1591 = vadd.f32 %v874, %v1306
  %v1592 = vadd.f32 %v878, %v1310
  %v1593 = vadd.f32 %v880, %v1312
  %v1594 = vadd.f32 %v884, %v1316
  %v1595 = vadd.f32 %v886, %v1318
  %v1596 = vadd.f32 %v890, %v1322
  %v1597 = vadd.f32 %v892, %v1324
  %v1598 = vadd.f32 %v896, %v1328
  %v1599 = vadd.f32 %v898, %v1330
  %v1600 = vadd.f32 %v902, %v1334
  %v1601 = vadd.f32 %v904, %v1336
  %v1602 = vadd.f32 %v908, %v1340
  %v1603 = vadd.f32 %v910, %v1342
  %v1604 = vadd.f32 %v914, %v1346
  %v1605 = vadd.f32 %v916, %v1348
  %v1606 = vadd.f32 %v920, %v1352
  %v1607 = vadd.f32 %v922, %v1354
  %v1608 = vadd.f32 %v926, %v1358
  %v1609 = vadd.f32 %v928, %v1360
  %v1610 = vadd.f32 %v932, %v1364
  %v1611 = vadd.f32 %v934, %v1366
  %v1612 = vadd.f32 %v938, %v1370
  %v1613 = vadd.f32 %v940, %v1372
  %v1614 = vadd.f32 %v944, %v1376
  %v1615 = vadd.f32 %v946, %v1378
  %v1616 = vadd.f32 %v950, %v1382
  %v1617 = vadd.f32 %v952, %v1384
  %v1618 = vadd.f32 %v956, %v1388
  %v1619 = vadd.f32 %v958, %v1390
  %v1620 = vadd.f32 %v962, %v1394
  %v1621 = vadd.f32 %v964, %v1396
  %v1622 = vadd.f32 %v968, %v1400
  %v1623 = vadd.f32 %v970, %v1402
  %v1624 = vadd.f32 %v974, %v1406
  %v1625 = vadd.f32 %v976, %v1408
  %v1626 = vadd.f32 %v980, %v1412
  %v1627 = vadd.f32 %v982, %v1414
  %v1628 = vadd.f32 %v986, %v1418
  %v1629 = vadd.f32 %v988, %v1420
  %v1630 = vadd.f32 %v992, %v1424
  %v1631 = vadd.f32 %v994, %v1426
  %v1632 = vadd.f32 %v998, %v1430
  %v1633 = vadd.f32 %v1000, %v1432
  %v1634 = vadd.f32 %v1004, %v1436
  %v1635 = vadd.f32 %v1006, %v1438
  %v1636 = vadd.f32 %v1010, %v1442
  %v1637 = vadd.f32 %v1012, %v1444
  %v1638 = vadd.f32 %v1016, %v1448
  %v1639 = vadd.f32 %v1018, %v1450
  %v1640 = vadd.f32 %v1022, %v1454
  %v1641 = vadd.f32 %v1024, %v1456
  %v1642 = vadd.f32 %v1028, %v1460
  %v1643 = vadd.f32 %v1030, %v1462
  %v1644 = vadd.f32 %v1034, %v1466
  %v1645 = vadd.f32 %v1036, %v1468
  %v1646 = vadd.f32 %v1040, %v1472
  %v1647 = vadd.f32 %v1042, %v1474
  %v1648 = vadd.f32 %v1046, %v1478
  %v1649 = vadd.f32 %v1048, %v1480
  %v1650 = vadd.f32 %v1052, %v1484
  %v1651 = vadd.f32 %v1054, %v1486
  %v1652 = vadd.f32 %v1058, %v1490
  %v1653 = vadd.f32 %v1060, %v1492
  %v1654 = vadd.f32 %v1064, %v1496
  %v1655 = vadd.f32 %v1066, %v1498
  %v1656 = vadd.f32 %v1070, %v1502
  %v1657 = vadd.f32 %v1072, %v1504
  %v1658 = vadd.f32 %v1076, %v1508
  %v1659 = vadd.f32 %v1078, %v1510
  %v1660 = vadd.f32 %v1082, %v1514
  %v1661 = vadd.f32 %v1084, %v1516
  %v1662 = vadd.f32 %v1088, %v1520
  %v1663 = vadd.f32 %v1090, %v1522
  %v1664 = vadd.f32 %v1094, %v1526
  %v1665 = vadd.f32 %v1096, %v1528
  %v1666 = vadd.f32 %v1100, %v1532
  %v1667 = vadd.f32 %v1102, %v1534
  %v1668 = vadd.f32 %v1106, %v1538
  %v1669 = vadd.f32 %v1108, %v1540
  %v1670 = vadd.f32 %v1112, %v1544
  %v1671 = vadd.f32 %v1114, %v1546
  %v1672 = vadd.f32 %v1118, %v1550
  %v1673 = vadd.f32 %v1120, %v1552
  %v1674 = vadd.f32 %v1124, %v1556
  %v1675 = vadd.f32 %v1126, %v1558
  %v1676 = vadd.f32 %v1130, %v1562
  %v1677 = vadd.f32 %v1132, %v1564
  %s1678 = scalar_lea.vmem %s1, 576
  %v1679 = vld [vmem:[%s1678] sm:$0xff]
  %v1680 = vld [vmem:[%s1678 + $0x8] sm:$0xff]
  %v1681 = vld [vmem:[%s1678 + $0x10] sm:$0xff]
  %v1682 = vld [vmem:[%s1678 + $0x18] sm:$0xff]
  %v1683 = vld [vmem:[%s1678 + $0x20] sm:$0xff]
  %v1684 = vld [vmem:[%s1678 + $0x28] sm:$0xff]
  %v1685 = vld [vmem:[%s1678 + $0x30] sm:$0xff]
  %v1686 = vld [vmem:[%s1678 + $0x38] sm:$0xff]
  %v1687 = vld [vmem:[%s1678 + $0x40] sm:$0xff]
  %v1688 = vld [vmem:[%s1678 + $0x48] sm:$0xff]
  %v1689 = vld [vmem:[%s1678 + $0x50] sm:$0xff]
  %v1690 = vld [vmem:[%s1678 + $0x58] sm:$0xff]
  %v1691 = vld [vmem:[%s1678 + $0x60] sm:$0xff]
  %v1692 = vld [vmem:[%s1678 + $0x68] sm:$0xff]
  %v1693 = vld [vmem:[%s1678 + $0x70] sm:$0xff]
  %v1694 = vld [vmem:[%s1678 + $0x78] sm:$0xff]
  %v1695 = vld [vmem:[%s1678 + $0x80] sm:$0xff]
  %v1696 = vld [vmem:[%s1678 + $0x88] sm:$0xff]
  %v1697 = vld [vmem:[%s1678 + $0x90] sm:$0xff]
  %v1698 = vld [vmem:[%s1678 + $0x98] sm:$0xff]
  %v1699 = vld [vmem:[%s1678 + $0xa0] sm:$0xff]
  %v1700 = vld [vmem:[%s1678 + $0xa8] sm:$0xff]
  %v1701 = vld [vmem:[%s1678 + $0xb0] sm:$0xff]
  %v1702 = vld [vmem:[%s1678 + $0xb8] sm:$0xff]
  %v1704 = vsel %vm157, %v104, 0
  %v1707 = vsel %vm157, %v105, 0
  %1709 = vmatprep.subr.mxu0 0.0
  %1710 = vmatpush1.msra.mxu0 0.0
  %1711 = vmatprep.subr.mxu0 0.0
  %1712 = vmatpush1.msra.mxu0 0.0
  %1713 = vmatprep.subr.mxu0 0.0
  %1714 = vmatpush1.msra.mxu0 0.0
  %1715 = vmatprep.subr.mxu0 0.0
  %1716 = vmatpush1.msra.mxu0 0.0
  %1717 = vmatprep.subr.mxu0 %v1702
  %1718 = vmatpush1.msra.mxu0 %v1701
  %1719 = vmatprep.subr.mxu0 %v1700
  %1720 = vmatpush1.msra.mxu0 %v1699
  %1721 = vmatprep.subr.mxu0 %v1698
  %1722 = vmatpush1.msra.mxu0 %v1697
  %1723 = vmatprep.subr.mxu0 %v1696
  %1724 = vmatpush1.msra.mxu0 %v1695
  %1725 = vmatprep.subr.mxu0 %v1694
  %1726 = vmatpush1.msra.mxu0 %v1693
  %1727 = vmatprep.subr.mxu0 %v1692
  %1728 = vmatpush1.msra.mxu0 %v1691
  %1729 = vmatprep.subr.mxu0 %v1690
  %1730 = vmatpush1.msra.mxu0 %v1689
  %1731 = vmatprep.subr.mxu0 %v1688
  %1732 = vmatpush1.msra.mxu0 %v1687
  %1733 = vmatprep.subr.mxu0 %v1686
  %1734 = vmatpush1.msra.mxu0 %v1685
  %1735 = vmatprep.subr.mxu0 %v1684
  %1736 = vmatpush1.msra.mxu0 %v1683
  %1737 = vmatprep.subr.mxu0 %v1682
  %1738 = vmatpush1.msra.mxu0 %v1681
  %1739 = vmatprep.subr.mxu0 %v1680
  %1740 = vmatpush1.msra.mxu0 %v1679
  %1741 = vmatprep.subr.mxu0 0.0
  %1742 = vmatpush2.msra.mxu0 0.0
  %1743 = vmatprep.subr.mxu0 0.0
  %1744 = vmatpush2.msra.mxu0 0.0
  %1745 = vmatprep.subr.mxu0 0.0
  %1746 = vmatpush2.msra.mxu0 0.0
  %1747 = vmatprep.subr.mxu0 0.0
  %1748 = vmatpush2.msra.mxu0 0.0
  %1749 = vmatprep.subr.mxu0 0.0
  %1750 = vmatpush2.msra.mxu0 0.0
  %1751 = vmatprep.subr.mxu0 0.0
  %1752 = vmatpush2.msra.mxu0 0.0
  %1753 = vmatprep.subr.mxu0 0.0
  %1754 = vmatpush2.msra.mxu0 0.0
  %1755 = vmatprep.subr.mxu0 0.0
  %1756 = vmatpush2.msra.mxu0 0.0
  %1757 = vmatprep.subr.mxu0 0.0
  %1758 = vmatpush2.msra.mxu0 0.0
  %1759 = vmatprep.subr.mxu0 0.0
  %1760 = vmatpush2.msra.mxu0 0.0
  %1761 = vmatprep.subr.mxu0 0.0
  %1762 = vmatpush2.msra.mxu0 0.0
  %1763 = vmatprep.subr.mxu0 0.0
  %1764 = vmatpush2.msra.mxu0 0.0
  %1765 = vmatprep.subr.mxu0 0.0
  %1766 = vmatpush2.msra.mxu0 0.0
  %1767 = vmatprep.subr.mxu0 0.0
  %1768 = vmatpush2.msra.mxu0 0.0
  %1769 = vmatprep.subr.mxu0 0.0
  %1770 = vmatpush2.msra.mxu0 0.0
  %1771 = vmatprep.subr.mxu0 0.0
  %1772 = vmatpush2.msra.mxu0 0.0
  %1773 = vmatprep.mubr.f32.mxu0 0.0
  %1774 = vmatmul.mubr.f32.gmra.mxu0 %v171
  %v1775 = vpop.f32.mrf.mxu0
  %v1776 = vadd.f32 0.0, %v1775
  %v1777 = vpop.f32.mrf.mxu0
  %v1778 = vadd.f32 0.0, %v1777
  %1779 = vmatprep.mubr.f32.mxu0 0.0
  %1780 = vmatmul.mubr.f32.gmra.mxu0 %v174
  %v1781 = vpop.f32.mrf.mxu0
  %v1782 = vadd.f32 0.0, %v1781
  %v1783 = vpop.f32.mrf.mxu0
  %v1784 = vadd.f32 0.0, %v1783
  %1785 = vmatprep.mubr.f32.mxu0 0.0
  %1786 = vmatmul.mubr.f32.gmra.mxu0 %v177
  %v1787 = vpop.f32.mrf.mxu0
  %v1788 = vadd.f32 0.0, %v1787
  %v1789 = vpop.f32.mrf.mxu0
  %v1790 = vadd.f32 0.0, %v1789
  %1791 = vmatprep.mubr.f32.mxu0 0.0
  %1792 = vmatmul.mubr.f32.gmra.mxu0 %v180
  %v1793 = vpop.f32.mrf.mxu0
  %v1794 = vadd.f32 0.0, %v1793
  %v1795 = vpop.f32.mrf.mxu0
  %v1796 = vadd.f32 0.0, %v1795
  %1797 = vmatprep.mubr.f32.mxu0 0.0
  %1798 = vmatmul.mubr.f32.gmra.mxu0 %v183
  %v1799 = vpop.f32.mrf.mxu0
  %v1800 = vadd.f32 0.0, %v1799
  %v1801 = vpop.f32.mrf.mxu0
  %v1802 = vadd.f32 0.0, %v1801
  %1803 = vmatprep.mubr.f32.mxu0 0.0
  %1804 = vmatmul.mubr.f32.gmra.mxu0 %v186
  %v1805 = vpop.f32.mrf.mxu0
  %v1806 = vadd.f32 0.0, %v1805
  %v1807 = vpop.f32.mrf.mxu0
  %v1808 = vadd.f32 0.0, %v1807
  %1809 = vmatprep.mubr.f32.mxu0 0.0
  %1810 = vmatmul.mubr.f32.gmra.mxu0 %v189
  %v1811 = vpop.f32.mrf.mxu0
  %v1812 = vadd.f32 0.0, %v1811
  %v1813 = vpop.f32.mrf.mxu0
  %v1814 = vadd.f32 0.0, %v1813
  %1815 = vmatprep.mubr.f32.mxu0 0.0
  %1816 = vmatmul.mubr.f32.gmra.mxu0 %v192
  %v1817 = vpop.f32.mrf.mxu0
  %v1818 = vadd.f32 0.0, %v1817
  %v1819 = vpop.f32.mrf.mxu0
  %v1820 = vadd.f32 0.0, %v1819
  %1821 = vmatprep.mubr.f32.mxu0 0.0
  %1822 = vmatmul.mubr.f32.gmra.mxu0 %v195
  %v1823 = vpop.f32.mrf.mxu0
  %v1824 = vadd.f32 0.0, %v1823
  %v1825 = vpop.f32.mrf.mxu0
  %v1826 = vadd.f32 0.0, %v1825
  %1827 = vmatprep.mubr.f32.mxu0 0.0
  %1828 = vmatmul.mubr.f32.gmra.mxu0 %v198
  %v1829 = vpop.f32.mrf.mxu0
  %v1830 = vadd.f32 0.0, %v1829
  %v1831 = vpop.f32.mrf.mxu0
  %v1832 = vadd.f32 0.0, %v1831
  %1833 = vmatprep.mubr.f32.mxu0 0.0
  %1834 = vmatmul.mubr.f32.gmra.mxu0 %v201
  %v1835 = vpop.f32.mrf.mxu0
  %v1836 = vadd.f32 0.0, %v1835
  %v1837 = vpop.f32.mrf.mxu0
  %v1838 = vadd.f32 0.0, %v1837
  %1839 = vmatprep.mubr.f32.mxu0 0.0
  %1840 = vmatmul.mubr.f32.gmra.mxu0 %v204
  %v1841 = vpop.f32.mrf.mxu0
  %v1842 = vadd.f32 0.0, %v1841
  %v1843 = vpop.f32.mrf.mxu0
  %v1844 = vadd.f32 0.0, %v1843
  %1845 = vmatprep.mubr.f32.mxu0 0.0
  %1846 = vmatmul.mubr.f32.gmra.mxu0 %v207
  %v1847 = vpop.f32.mrf.mxu0
  %v1848 = vadd.f32 0.0, %v1847
  %v1849 = vpop.f32.mrf.mxu0
  %v1850 = vadd.f32 0.0, %v1849
  %1851 = vmatprep.mubr.f32.mxu0 0.0
  %1852 = vmatmul.mubr.f32.gmra.mxu0 %v210
  %v1853 = vpop.f32.mrf.mxu0
  %v1854 = vadd.f32 0.0, %v1853
  %v1855 = vpop.f32.mrf.mxu0
  %v1856 = vadd.f32 0.0, %v1855
  %1857 = vmatprep.mubr.f32.mxu0 0.0
  %1858 = vmatmul.mubr.f32.gmra.mxu0 %v213
  %v1859 = vpop.f32.mrf.mxu0
  %v1860 = vadd.f32 0.0, %v1859
  %v1861 = vpop.f32.mrf.mxu0
  %v1862 = vadd.f32 0.0, %v1861
  %1863 = vmatprep.mubr.f32.mxu0 0.0
  %1864 = vmatmul.mubr.f32.gmra.mxu0 %v216
  %v1865 = vpop.f32.mrf.mxu0
  %v1866 = vadd.f32 0.0, %v1865
  %v1867 = vpop.f32.mrf.mxu0
  %v1868 = vadd.f32 0.0, %v1867
  %1869 = vmatprep.mubr.f32.mxu0 0.0
  %1870 = vmatmul.mubr.f32.gmra.mxu0 %v219
  %v1871 = vpop.f32.mrf.mxu0
  %v1872 = vadd.f32 0.0, %v1871
  %v1873 = vpop.f32.mrf.mxu0
  %v1874 = vadd.f32 0.0, %v1873
  %1875 = vmatprep.mubr.f32.mxu0 0.0
  %1876 = vmatmul.mubr.f32.gmra.mxu0 %v222
  %v1877 = vpop.f32.mrf.mxu0
  %v1878 = vadd.f32 0.0, %v1877
  %v1879 = vpop.f32.mrf.mxu0
  %v1880 = vadd.f32 0.0, %v1879
  %1881 = vmatprep.mubr.f32.mxu0 0.0
  %1882 = vmatmul.mubr.f32.gmra.mxu0 %v225
  %v1883 = vpop.f32.mrf.mxu0
  %v1884 = vadd.f32 0.0, %v1883
  %v1885 = vpop.f32.mrf.mxu0
  %v1886 = vadd.f32 0.0, %v1885
  %1887 = vmatprep.mubr.f32.mxu0 0.0
  %1888 = vmatmul.mubr.f32.gmra.mxu0 %v228
  %v1889 = vpop.f32.mrf.mxu0
  %v1890 = vadd.f32 0.0, %v1889
  %v1891 = vpop.f32.mrf.mxu0
  %v1892 = vadd.f32 0.0, %v1891
  %1893 = vmatprep.mubr.f32.mxu0 0.0
  %1894 = vmatmul.mubr.f32.gmra.mxu0 %v231
  %v1895 = vpop.f32.mrf.mxu0
  %v1896 = vadd.f32 0.0, %v1895
  %v1897 = vpop.f32.mrf.mxu0
  %v1898 = vadd.f32 0.0, %v1897
  %1899 = vmatprep.mubr.f32.mxu0 0.0
  %1900 = vmatmul.mubr.f32.gmra.mxu0 %v234
  %v1901 = vpop.f32.mrf.mxu0
  %v1902 = vadd.f32 0.0, %v1901
  %v1903 = vpop.f32.mrf.mxu0
  %v1904 = vadd.f32 0.0, %v1903
  %1905 = vmatprep.mubr.f32.mxu0 0.0
  %1906 = vmatmul.mubr.f32.gmra.mxu0 %v237
  %v1907 = vpop.f32.mrf.mxu0
  %v1908 = vadd.f32 0.0, %v1907
  %v1909 = vpop.f32.mrf.mxu0
  %v1910 = vadd.f32 0.0, %v1909
  %1911 = vmatprep.mubr.f32.mxu0 0.0
  %1912 = vmatmul.mubr.f32.gmra.mxu0 %v240
  %v1913 = vpop.f32.mrf.mxu0
  %v1914 = vadd.f32 0.0, %v1913
  %v1915 = vpop.f32.mrf.mxu0
  %v1916 = vadd.f32 0.0, %v1915
  %1917 = vmatprep.mubr.f32.mxu0 0.0
  %1918 = vmatmul.mubr.f32.gmra.mxu0 %v243
  %v1919 = vpop.f32.mrf.mxu0
  %v1920 = vadd.f32 0.0, %v1919
  %v1921 = vpop.f32.mrf.mxu0
  %v1922 = vadd.f32 0.0, %v1921
  %1923 = vmatprep.mubr.f32.mxu0 0.0
  %1924 = vmatmul.mubr.f32.gmra.mxu0 %v246
  %v1925 = vpop.f32.mrf.mxu0
  %v1926 = vadd.f32 0.0, %v1925
  %v1927 = vpop.f32.mrf.mxu0
  %v1928 = vadd.f32 0.0, %v1927
  %1929 = vmatprep.mubr.f32.mxu0 0.0
  %1930 = vmatmul.mubr.f32.gmra.mxu0 %v249
  %v1931 = vpop.f32.mrf.mxu0
  %v1932 = vadd.f32 0.0, %v1931
  %v1933 = vpop.f32.mrf.mxu0
  %v1934 = vadd.f32 0.0, %v1933
  %1935 = vmatprep.mubr.f32.mxu0 0.0
  %1936 = vmatmul.mubr.f32.gmra.mxu0 %v252
  %v1937 = vpop.f32.mrf.mxu0
  %v1938 = vadd.f32 0.0, %v1937
  %v1939 = vpop.f32.mrf.mxu0
  %v1940 = vadd.f32 0.0, %v1939
  %1941 = vmatprep.mubr.f32.mxu0 0.0
  %1942 = vmatmul.mubr.f32.gmra.mxu0 %v255
  %v1943 = vpop.f32.mrf.mxu0
  %v1944 = vadd.f32 0.0, %v1943
  %v1945 = vpop.f32.mrf.mxu0
  %v1946 = vadd.f32 0.0, %v1945
  %1947 = vmatprep.mubr.f32.mxu0 0.0
  %1948 = vmatmul.mubr.f32.gmra.mxu0 %v258
  %v1949 = vpop.f32.mrf.mxu0
  %v1950 = vadd.f32 0.0, %v1949
  %v1951 = vpop.f32.mrf.mxu0
  %v1952 = vadd.f32 0.0, %v1951
  %1953 = vmatprep.mubr.f32.mxu0 0.0
  %1954 = vmatmul.mubr.f32.gmra.mxu0 %v261
  %v1955 = vpop.f32.mrf.mxu0
  %v1956 = vadd.f32 0.0, %v1955
  %v1957 = vpop.f32.mrf.mxu0
  %v1958 = vadd.f32 0.0, %v1957
  %1959 = vmatprep.mubr.f32.mxu0 0.0
  %1960 = vmatmul.mubr.f32.gmra.mxu0 %v264
  %v1961 = vpop.f32.mrf.mxu0
  %v1962 = vadd.f32 0.0, %v1961
  %v1963 = vpop.f32.mrf.mxu0
  %v1964 = vadd.f32 0.0, %v1963
  %1965 = vmatprep.mubr.f32.mxu0 0.0
  %1966 = vmatmul.mubr.f32.gmra.mxu0 %v267
  %v1967 = vpop.f32.mrf.mxu0
  %v1968 = vadd.f32 0.0, %v1967
  %v1969 = vpop.f32.mrf.mxu0
  %v1970 = vadd.f32 0.0, %v1969
  %1971 = vmatprep.mubr.f32.mxu0 0.0
  %1972 = vmatmul.mubr.f32.gmra.mxu0 %v270
  %v1973 = vpop.f32.mrf.mxu0
  %v1974 = vadd.f32 0.0, %v1973
  %v1975 = vpop.f32.mrf.mxu0
  %v1976 = vadd.f32 0.0, %v1975
  %1977 = vmatprep.mubr.f32.mxu0 0.0
  %1978 = vmatmul.mubr.f32.gmra.mxu0 %v273
  %v1979 = vpop.f32.mrf.mxu0
  %v1980 = vadd.f32 0.0, %v1979
  %v1981 = vpop.f32.mrf.mxu0
  %v1982 = vadd.f32 0.0, %v1981
  %1983 = vmatprep.mubr.f32.mxu0 0.0
  %1984 = vmatmul.mubr.f32.gmra.mxu0 %v276
  %v1985 = vpop.f32.mrf.mxu0
  %v1986 = vadd.f32 0.0, %v1985
  %v1987 = vpop.f32.mrf.mxu0
  %v1988 = vadd.f32 0.0, %v1987
  %1989 = vmatprep.mubr.f32.mxu0 0.0
  %1990 = vmatmul.mubr.f32.gmra.mxu0 %v279
  %v1991 = vpop.f32.mrf.mxu0
  %v1992 = vadd.f32 0.0, %v1991
  %v1993 = vpop.f32.mrf.mxu0
  %v1994 = vadd.f32 0.0, %v1993
  %1995 = vmatprep.mubr.f32.mxu0 0.0
  %1996 = vmatmul.mubr.f32.gmra.mxu0 %v282
  %v1997 = vpop.f32.mrf.mxu0
  %v1998 = vadd.f32 0.0, %v1997
  %v1999 = vpop.f32.mrf.mxu0
  %v2000 = vadd.f32 0.0, %v1999
  %2001 = vmatprep.mubr.f32.mxu0 0.0
  %2002 = vmatmul.mubr.f32.gmra.mxu0 %v285
  %v2003 = vpop.f32.mrf.mxu0
  %v2004 = vadd.f32 0.0, %v2003
  %v2005 = vpop.f32.mrf.mxu0
  %v2006 = vadd.f32 0.0, %v2005
  %2007 = vmatprep.mubr.f32.mxu0 0.0
  %2008 = vmatmul.mubr.f32.gmra.mxu0 %v288
  %v2009 = vpop.f32.mrf.mxu0
  %v2010 = vadd.f32 0.0, %v2009
  %v2011 = vpop.f32.mrf.mxu0
  %v2012 = vadd.f32 0.0, %v2011
  %2013 = vmatprep.mubr.f32.mxu0 0.0
  %2014 = vmatmul.mubr.f32.gmra.mxu0 %v291
  %v2015 = vpop.f32.mrf.mxu0
  %v2016 = vadd.f32 0.0, %v2015
  %v2017 = vpop.f32.mrf.mxu0
  %v2018 = vadd.f32 0.0, %v2017
  %2019 = vmatprep.mubr.f32.mxu0 0.0
  %2020 = vmatmul.mubr.f32.gmra.mxu0 %v294
  %v2021 = vpop.f32.mrf.mxu0
  %v2022 = vadd.f32 0.0, %v2021
  %v2023 = vpop.f32.mrf.mxu0
  %v2024 = vadd.f32 0.0, %v2023
  %2025 = vmatprep.mubr.f32.mxu0 0.0
  %2026 = vmatmul.mubr.f32.gmra.mxu0 %v297
  %v2027 = vpop.f32.mrf.mxu0
  %v2028 = vadd.f32 0.0, %v2027
  %v2029 = vpop.f32.mrf.mxu0
  %v2030 = vadd.f32 0.0, %v2029
  %2031 = vmatprep.mubr.f32.mxu0 0.0
  %2032 = vmatmul.mubr.f32.gmra.mxu0 %v300
  %v2033 = vpop.f32.mrf.mxu0
  %v2034 = vadd.f32 0.0, %v2033
  %v2035 = vpop.f32.mrf.mxu0
  %v2036 = vadd.f32 0.0, %v2035
  %2037 = vmatprep.mubr.f32.mxu0 0.0
  %2038 = vmatmul.mubr.f32.gmra.mxu0 %v303
  %v2039 = vpop.f32.mrf.mxu0
  %v2040 = vadd.f32 0.0, %v2039
  %v2041 = vpop.f32.mrf.mxu0
  %v2042 = vadd.f32 0.0, %v2041
  %2043 = vmatprep.mubr.f32.mxu0 0.0
  %2044 = vmatmul.mubr.f32.gmra.mxu0 %v306
  %v2045 = vpop.f32.mrf.mxu0
  %v2046 = vadd.f32 0.0, %v2045
  %v2047 = vpop.f32.mrf.mxu0
  %v2048 = vadd.f32 0.0, %v2047
  %2049 = vmatprep.mubr.f32.mxu0 0.0
  %2050 = vmatmul.mubr.f32.gmra.mxu0 %v309
  %v2051 = vpop.f32.mrf.mxu0
  %v2052 = vadd.f32 0.0, %v2051
  %v2053 = vpop.f32.mrf.mxu0
  %v2054 = vadd.f32 0.0, %v2053
  %2055 = vmatprep.mubr.f32.mxu0 0.0
  %2056 = vmatmul.mubr.f32.gmra.mxu0 %v312
  %v2057 = vpop.f32.mrf.mxu0
  %v2058 = vadd.f32 0.0, %v2057
  %v2059 = vpop.f32.mrf.mxu0
  %v2060 = vadd.f32 0.0, %v2059
  %2061 = vmatprep.mubr.f32.mxu0 0.0
  %2062 = vmatmul.mubr.f32.gmra.mxu0 %v315
  %v2063 = vpop.f32.mrf.mxu0
  %v2064 = vadd.f32 0.0, %v2063
  %v2065 = vpop.f32.mrf.mxu0
  %v2066 = vadd.f32 0.0, %v2065
  %2067 = vmatprep.mubr.f32.mxu0 0.0
  %2068 = vmatmul.mubr.f32.gmra.mxu0 %v318
  %v2069 = vpop.f32.mrf.mxu0
  %v2070 = vadd.f32 0.0, %v2069
  %v2071 = vpop.f32.mrf.mxu0
  %v2072 = vadd.f32 0.0, %v2071
  %2073 = vmatprep.mubr.f32.mxu0 0.0
  %2074 = vmatmul.mubr.f32.gmra.mxu0 %v321
  %v2075 = vpop.f32.mrf.mxu0
  %v2076 = vadd.f32 0.0, %v2075
  %v2077 = vpop.f32.mrf.mxu0
  %v2078 = vadd.f32 0.0, %v2077
  %2079 = vmatprep.mubr.f32.mxu0 0.0
  %2080 = vmatmul.mubr.f32.gmra.mxu0 %v324
  %v2081 = vpop.f32.mrf.mxu0
  %v2082 = vadd.f32 0.0, %v2081
  %v2083 = vpop.f32.mrf.mxu0
  %v2084 = vadd.f32 0.0, %v2083
  %2085 = vmatprep.mubr.f32.mxu0 0.0
  %2086 = vmatmul.mubr.f32.gmra.mxu0 %v1160
  %v2087 = vpop.f32.mrf.mxu0
  %v2088 = vadd.f32 0.0, %v2087
  %v2089 = vpop.f32.mrf.mxu0
  %v2090 = vadd.f32 0.0, %v2089
  %2091 = vmatprep.mubr.f32.mxu0 0.0
  %2092 = vmatmul.mubr.f32.gmra.mxu0 %v1163
  %v2093 = vpop.f32.mrf.mxu0
  %v2094 = vadd.f32 0.0, %v2093
  %v2095 = vpop.f32.mrf.mxu0
  %v2096 = vadd.f32 0.0, %v2095
  %2097 = vmatprep.mubr.f32.mxu0 0.0
  %2098 = vmatmul.mubr.f32.gmra.mxu0 %v1704
  %v2099 = vpop.f32.mrf.mxu0
  %v2100 = vadd.f32 0.0, %v2099
  %v2101 = vpop.f32.mrf.mxu0
  %v2102 = vadd.f32 0.0, %v2101
  %2103 = vmatprep.mubr.f32.mxu0 0.0
  %2104 = vmatmul.mubr.f32.gmra.mxu0 %v1707
  %v2105 = vpop.f32.mrf.mxu0
  %v2106 = vadd.f32 0.0, %v2105
  %v2107 = vpop.f32.mrf.mxu0
  %v2108 = vadd.f32 0.0, %v2107
  %2109 = vdwg.mxu0
  %v2110 = vadd.f32 %v1566, %v1776
  %v2111 = vadd.f32 %v1567, %v1778
  %v2112 = vadd.f32 %v1568, %v1782
  %v2113 = vadd.f32 %v1569, %v1784
  %v2114 = vadd.f32 %v1570, %v1788
  %v2115 = vadd.f32 %v1571, %v1790
  %v2116 = vadd.f32 %v1572, %v1794
  %v2117 = vadd.f32 %v1573, %v1796
  %v2118 = vadd.f32 %v1574, %v1800
  %v2119 = vadd.f32 %v1575, %v1802
  %v2120 = vadd.f32 %v1576, %v1806
  %v2121 = vadd.f32 %v1577, %v1808
  %v2122 = vadd.f32 %v1578, %v1812
  %v2123 = vadd.f32 %v1579, %v1814
  %v2124 = vadd.f32 %v1580, %v1818
  %v2125 = vadd.f32 %v1581, %v1820
  %v2126 = vadd.f32 %v1582, %v1824
  %v2127 = vadd.f32 %v1583, %v1826
  %v2128 = vadd.f32 %v1584, %v1830
  %v2129 = vadd.f32 %v1585, %v1832
  %v2130 = vadd.f32 %v1586, %v1836
  %v2131 = vadd.f32 %v1587, %v1838
  %v2132 = vadd.f32 %v1588, %v1842
  %v2133 = vadd.f32 %v1589, %v1844
  %v2134 = vadd.f32 %v1590, %v1848
  %v2135 = vadd.f32 %v1591, %v1850
  %v2136 = vadd.f32 %v1592, %v1854
  %v2137 = vadd.f32 %v1593, %v1856
  %v2138 = vadd.f32 %v1594, %v1860
  %v2139 = vadd.f32 %v1595, %v1862
  %v2140 = vadd.f32 %v1596, %v1866
  %v2141 = vadd.f32 %v1597, %v1868
  %v2142 = vadd.f32 %v1598, %v1872
  %v2143 = vadd.f32 %v1599, %v1874
  %v2144 = vadd.f32 %v1600, %v1878
  %v2145 = vadd.f32 %v1601, %v1880
  %v2146 = vadd.f32 %v1602, %v1884
  %v2147 = vadd.f32 %v1603, %v1886
  %v2148 = vadd.f32 %v1604, %v1890
  %v2149 = vadd.f32 %v1605, %v1892
  %v2150 = vadd.f32 %v1606, %v1896
  %v2151 = vadd.f32 %v1607, %v1898
  %v2152 = vadd.f32 %v1608, %v1902
  %v2153 = vadd.f32 %v1609, %v1904
  %v2154 = vadd.f32 %v1610, %v1908
  %v2155 = vadd.f32 %v1611, %v1910
  %v2156 = vadd.f32 %v1612, %v1914
  %v2157 = vadd.f32 %v1613, %v1916
  %v2158 = vadd.f32 %v1614, %v1920
  %v2159 = vadd.f32 %v1615, %v1922
  %v2160 = vadd.f32 %v1616, %v1926
  %v2161 = vadd.f32 %v1617, %v1928
  %v2162 = vadd.f32 %v1618, %v1932
  %v2163 = vadd.f32 %v1619, %v1934
  %v2164 = vadd.f32 %v1620, %v1938
  %v2165 = vadd.f32 %v1621, %v1940
  %v2166 = vadd.f32 %v1622, %v1944
  %v2167 = vadd.f32 %v1623, %v1946
  %v2168 = vadd.f32 %v1624, %v1950
  %v2169 = vadd.f32 %v1625, %v1952
  %v2170 = vadd.f32 %v1626, %v1956
  %v2171 = vadd.f32 %v1627, %v1958
  %v2172 = vadd.f32 %v1628, %v1962
  %v2173 = vadd.f32 %v1629, %v1964
  %v2174 = vadd.f32 %v1630, %v1968
  %v2175 = vadd.f32 %v1631, %v1970
  %v2176 = vadd.f32 %v1632, %v1974
  %v2177 = vadd.f32 %v1633, %v1976
  %v2178 = vadd.f32 %v1634, %v1980
  %v2179 = vadd.f32 %v1635, %v1982
  %v2180 = vadd.f32 %v1636, %v1986
  %v2181 = vadd.f32 %v1637, %v1988
  %v2182 = vadd.f32 %v1638, %v1992
  %v2183 = vadd.f32 %v1639, %v1994
  %v2184 = vadd.f32 %v1640, %v1998
  %v2185 = vadd.f32 %v1641, %v2000
  %v2186 = vadd.f32 %v1642, %v2004
  %v2187 = vadd.f32 %v1643, %v2006
  %v2188 = vadd.f32 %v1644, %v2010
  %v2189 = vadd.f32 %v1645, %v2012
  %v2190 = vadd.f32 %v1646, %v2016
  %v2191 = vadd.f32 %v1647, %v2018
  %v2192 = vadd.f32 %v1648, %v2022
  %v2193 = vadd.f32 %v1649, %v2024
  %v2194 = vadd.f32 %v1650, %v2028
  %v2195 = vadd.f32 %v1651, %v2030
  %v2196 = vadd.f32 %v1652, %v2034
  %v2197 = vadd.f32 %v1653, %v2036
  %v2198 = vadd.f32 %v1654, %v2040
  %v2199 = vadd.f32 %v1655, %v2042
  %v2200 = vadd.f32 %v1656, %v2046
  %v2201 = vadd.f32 %v1657, %v2048
  %v2202 = vadd.f32 %v1658, %v2052
  %v2203 = vadd.f32 %v1659, %v2054
  %v2204 = vadd.f32 %v1660, %v2058
  %v2205 = vadd.f32 %v1661, %v2060
  %v2206 = vadd.f32 %v1662, %v2064
  %v2207 = vadd.f32 %v1663, %v2066
  %v2208 = vadd.f32 %v1664, %v2070
  %v2209 = vadd.f32 %v1665, %v2072
  %v2210 = vadd.f32 %v1666, %v2076
  %v2211 = vadd.f32 %v1667, %v2078
  %v2212 = vadd.f32 %v1668, %v2082
  %v2213 = vadd.f32 %v1669, %v2084
  %v2214 = vadd.f32 %v1670, %v2088
  %v2215 = vadd.f32 %v1671, %v2090
  %v2216 = vadd.f32 %v1672, %v2094
  %v2217 = vadd.f32 %v1673, %v2096
  %v2218 = vadd.f32 %v1674, %v2100
  %v2219 = vadd.f32 %v1675, %v2102
  %v2220 = vadd.f32 %v1676, %v2106
  %v2221 = vadd.f32 %v1677, %v2108
  %s2222 = scalar_lea.vmem %s1, 768
  %v2223 = vld [vmem:[%s2222] sm:$0xff]
  %v2224 = vld [vmem:[%s2222 + $0x8] sm:$0xff]
  %v2225 = vld [vmem:[%s2222 + $0x10] sm:$0xff]
  %v2226 = vld [vmem:[%s2222 + $0x18] sm:$0xff]
  %v2227 = vld [vmem:[%s2222 + $0x20] sm:$0xff]
  %v2228 = vld [vmem:[%s2222 + $0x28] sm:$0xff]
  %v2229 = vld [vmem:[%s2222 + $0x30] sm:$0xff]
  %v2230 = vld [vmem:[%s2222 + $0x38] sm:$0xff]
  %v2231 = vld [vmem:[%s2222 + $0x40] sm:$0xff]
  %v2232 = vld [vmem:[%s2222 + $0x48] sm:$0xff]
  %v2233 = vld [vmem:[%s2222 + $0x50] sm:$0xff]
  %v2234 = vld [vmem:[%s2222 + $0x58] sm:$0xff]
  %v2235 = vld [vmem:[%s2222 + $0x60] sm:$0xff]
  %v2236 = vld [vmem:[%s2222 + $0x68] sm:$0xff]
  %v2237 = vld [vmem:[%s2222 + $0x70] sm:$0xff]
  %v2238 = vld [vmem:[%s2222 + $0x78] sm:$0xff]
  %v2239 = vld [vmem:[%s2222 + $0x80] sm:$0xff]
  %v2240 = vld [vmem:[%s2222 + $0x88] sm:$0xff]
  %v2241 = vld [vmem:[%s2222 + $0x90] sm:$0xff]
  %v2242 = vld [vmem:[%s2222 + $0x98] sm:$0xff]
  %v2243 = vld [vmem:[%s2222 + $0xa0] sm:$0xff]
  %v2244 = vld [vmem:[%s2222 + $0xa8] sm:$0xff]
  %v2245 = vld [vmem:[%s2222 + $0xb0] sm:$0xff]
  %v2246 = vld [vmem:[%s2222 + $0xb8] sm:$0xff]
  %v2248 = vsel %vm157, %v106, 0
  %v2251 = vsel %vm157, %v107, 0
  %2253 = vmatprep.subr.mxu0 0.0
  %2254 = vmatpush1.msra.mxu0 0.0
  %2255 = vmatprep.subr.mxu0 0.0
  %2256 = vmatpush1.msra.mxu0 0.0
  %2257 = vmatprep.subr.mxu0 0.0
  %2258 = vmatpush1.msra.mxu0 0.0
  %2259 = vmatprep.subr.mxu0 0.0
  %2260 = vmatpush1.msra.mxu0 0.0
  %2261 = vmatprep.subr.mxu0 %v2246
  %2262 = vmatpush1.msra.mxu0 %v2245
  %2263 = vmatprep.subr.mxu0 %v2244
  %2264 = vmatpush1.msra.mxu0 %v2243
  %2265 = vmatprep.subr.mxu0 %v2242
  %2266 = vmatpush1.msra.mxu0 %v2241
  %2267 = vmatprep.subr.mxu0 %v2240
  %2268 = vmatpush1.msra.mxu0 %v2239
  %2269 = vmatprep.subr.mxu0 %v2238
  %2270 = vmatpush1.msra.mxu0 %v2237
  %2271 = vmatprep.subr.mxu0 %v2236
  %2272 = vmatpush1.msra.mxu0 %v2235
  %2273 = vmatprep.subr.mxu0 %v2234
  %2274 = vmatpush1.msra.mxu0 %v2233
  %2275 = vmatprep.subr.mxu0 %v2232
  %2276 = vmatpush1.msra.mxu0 %v2231
  %2277 = vmatprep.subr.mxu0 %v2230
  %2278 = vmatpush1.msra.mxu0 %v2229
  %2279 = vmatprep.subr.mxu0 %v2228
  %2280 = vmatpush1.msra.mxu0 %v2227
  %2281 = vmatprep.subr.mxu0 %v2226
  %2282 = vmatpush1.msra.mxu0 %v2225
  %2283 = vmatprep.subr.mxu0 %v2224
  %2284 = vmatpush1.msra.mxu0 %v2223
  %2285 = vmatprep.subr.mxu0 0.0
  %2286 = vmatpush2.msra.mxu0 0.0
  %2287 = vmatprep.subr.mxu0 0.0
  %2288 = vmatpush2.msra.mxu0 0.0
  %2289 = vmatprep.subr.mxu0 0.0
  %2290 = vmatpush2.msra.mxu0 0.0
  %2291 = vmatprep.subr.mxu0 0.0
  %2292 = vmatpush2.msra.mxu0 0.0
  %2293 = vmatprep.subr.mxu0 0.0
  %2294 = vmatpush2.msra.mxu0 0.0
  %2295 = vmatprep.subr.mxu0 0.0
  %2296 = vmatpush2.msra.mxu0 0.0
  %2297 = vmatprep.subr.mxu0 0.0
  %2298 = vmatpush2.msra.mxu0 0.0
  %2299 = vmatprep.subr.mxu0 0.0
  %2300 = vmatpush2.msra.mxu0 0.0
  %2301 = vmatprep.subr.mxu0 0.0
  %2302 = vmatpush2.msra.mxu0 0.0
  %2303 = vmatprep.subr.mxu0 0.0
  %2304 = vmatpush2.msra.mxu0 0.0
  %2305 = vmatprep.subr.mxu0 0.0
  %2306 = vmatpush2.msra.mxu0 0.0
  %2307 = vmatprep.subr.mxu0 0.0
  %2308 = vmatpush2.msra.mxu0 0.0
  %2309 = vmatprep.subr.mxu0 0.0
  %2310 = vmatpush2.msra.mxu0 0.0
  %2311 = vmatprep.subr.mxu0 0.0
  %2312 = vmatpush2.msra.mxu0 0.0
  %2313 = vmatprep.subr.mxu0 0.0
  %2314 = vmatpush2.msra.mxu0 0.0
  %2315 = vmatprep.subr.mxu0 0.0
  %2316 = vmatpush2.msra.mxu0 0.0
  %2317 = vmatprep.mubr.f32.mxu0 0.0
  %2318 = vmatmul.mubr.f32.gmra.mxu0 %v177
  %v2319 = vpop.f32.mrf.mxu0
  %v2320 = vadd.f32 0.0, %v2319
  %v2321 = vpop.f32.mrf.mxu0
  %v2322 = vadd.f32 0.0, %v2321
  %2323 = vmatprep.mubr.f32.mxu0 0.0
  %2324 = vmatmul.mubr.f32.gmra.mxu0 %v180
  %v2325 = vpop.f32.mrf.mxu0
  %v2326 = vadd.f32 0.0, %v2325
  %v2327 = vpop.f32.mrf.mxu0
  %v2328 = vadd.f32 0.0, %v2327
  %2329 = vmatprep.mubr.f32.mxu0 0.0
  %2330 = vmatmul.mubr.f32.gmra.mxu0 %v183
  %v2331 = vpop.f32.mrf.mxu0
  %v2332 = vadd.f32 0.0, %v2331
  %v2333 = vpop.f32.mrf.mxu0
  %v2334 = vadd.f32 0.0, %v2333
  %2335 = vmatprep.mubr.f32.mxu0 0.0
  %2336 = vmatmul.mubr.f32.gmra.mxu0 %v186
  %v2337 = vpop.f32.mrf.mxu0
  %v2338 = vadd.f32 0.0, %v2337
  %v2339 = vpop.f32.mrf.mxu0
  %v2340 = vadd.f32 0.0, %v2339
  %2341 = vmatprep.mubr.f32.mxu0 0.0
  %2342 = vmatmul.mubr.f32.gmra.mxu0 %v189
  %v2343 = vpop.f32.mrf.mxu0
  %v2344 = vadd.f32 0.0, %v2343
  %v2345 = vpop.f32.mrf.mxu0
  %v2346 = vadd.f32 0.0, %v2345
  %2347 = vmatprep.mubr.f32.mxu0 0.0
  %2348 = vmatmul.mubr.f32.gmra.mxu0 %v192
  %v2349 = vpop.f32.mrf.mxu0
  %v2350 = vadd.f32 0.0, %v2349
  %v2351 = vpop.f32.mrf.mxu0
  %v2352 = vadd.f32 0.0, %v2351
  %2353 = vmatprep.mubr.f32.mxu0 0.0
  %2354 = vmatmul.mubr.f32.gmra.mxu0 %v195
  %v2355 = vpop.f32.mrf.mxu0
  %v2356 = vadd.f32 0.0, %v2355
  %v2357 = vpop.f32.mrf.mxu0
  %v2358 = vadd.f32 0.0, %v2357
  %2359 = vmatprep.mubr.f32.mxu0 0.0
  %2360 = vmatmul.mubr.f32.gmra.mxu0 %v198
  %v2361 = vpop.f32.mrf.mxu0
  %v2362 = vadd.f32 0.0, %v2361
  %v2363 = vpop.f32.mrf.mxu0
  %v2364 = vadd.f32 0.0, %v2363
  %2365 = vmatprep.mubr.f32.mxu0 0.0
  %2366 = vmatmul.mubr.f32.gmra.mxu0 %v201
  %v2367 = vpop.f32.mrf.mxu0
  %v2368 = vadd.f32 0.0, %v2367
  %v2369 = vpop.f32.mrf.mxu0
  %v2370 = vadd.f32 0.0, %v2369
  %2371 = vmatprep.mubr.f32.mxu0 0.0
  %2372 = vmatmul.mubr.f32.gmra.mxu0 %v204
  %v2373 = vpop.f32.mrf.mxu0
  %v2374 = vadd.f32 0.0, %v2373
  %v2375 = vpop.f32.mrf.mxu0
  %v2376 = vadd.f32 0.0, %v2375
  %2377 = vmatprep.mubr.f32.mxu0 0.0
  %2378 = vmatmul.mubr.f32.gmra.mxu0 %v207
  %v2379 = vpop.f32.mrf.mxu0
  %v2380 = vadd.f32 0.0, %v2379
  %v2381 = vpop.f32.mrf.mxu0
  %v2382 = vadd.f32 0.0, %v2381
  %2383 = vmatprep.mubr.f32.mxu0 0.0
  %2384 = vmatmul.mubr.f32.gmra.mxu0 %v210
  %v2385 = vpop.f32.mrf.mxu0
  %v2386 = vadd.f32 0.0, %v2385
  %v2387 = vpop.f32.mrf.mxu0
  %v2388 = vadd.f32 0.0, %v2387
  %2389 = vmatprep.mubr.f32.mxu0 0.0
  %2390 = vmatmul.mubr.f32.gmra.mxu0 %v213
  %v2391 = vpop.f32.mrf.mxu0
  %v2392 = vadd.f32 0.0, %v2391
  %v2393 = vpop.f32.mrf.mxu0
  %v2394 = vadd.f32 0.0, %v2393
  %2395 = vmatprep.mubr.f32.mxu0 0.0
  %2396 = vmatmul.mubr.f32.gmra.mxu0 %v216
  %v2397 = vpop.f32.mrf.mxu0
  %v2398 = vadd.f32 0.0, %v2397
  %v2399 = vpop.f32.mrf.mxu0
  %v2400 = vadd.f32 0.0, %v2399
  %2401 = vmatprep.mubr.f32.mxu0 0.0
  %2402 = vmatmul.mubr.f32.gmra.mxu0 %v219
  %v2403 = vpop.f32.mrf.mxu0
  %v2404 = vadd.f32 0.0, %v2403
  %v2405 = vpop.f32.mrf.mxu0
  %v2406 = vadd.f32 0.0, %v2405
  %2407 = vmatprep.mubr.f32.mxu0 0.0
  %2408 = vmatmul.mubr.f32.gmra.mxu0 %v222
  %v2409 = vpop.f32.mrf.mxu0
  %v2410 = vadd.f32 0.0, %v2409
  %v2411 = vpop.f32.mrf.mxu0
  %v2412 = vadd.f32 0.0, %v2411
  %2413 = vmatprep.mubr.f32.mxu0 0.0
  %2414 = vmatmul.mubr.f32.gmra.mxu0 %v225
  %v2415 = vpop.f32.mrf.mxu0
  %v2416 = vadd.f32 0.0, %v2415
  %v2417 = vpop.f32.mrf.mxu0
  %v2418 = vadd.f32 0.0, %v2417
  %2419 = vmatprep.mubr.f32.mxu0 0.0
  %2420 = vmatmul.mubr.f32.gmra.mxu0 %v228
  %v2421 = vpop.f32.mrf.mxu0
  %v2422 = vadd.f32 0.0, %v2421
  %v2423 = vpop.f32.mrf.mxu0
  %v2424 = vadd.f32 0.0, %v2423
  %2425 = vmatprep.mubr.f32.mxu0 0.0
  %2426 = vmatmul.mubr.f32.gmra.mxu0 %v231
  %v2427 = vpop.f32.mrf.mxu0
  %v2428 = vadd.f32 0.0, %v2427
  %v2429 = vpop.f32.mrf.mxu0
  %v2430 = vadd.f32 0.0, %v2429
  %2431 = vmatprep.mubr.f32.mxu0 0.0
  %2432 = vmatmul.mubr.f32.gmra.mxu0 %v234
  %v2433 = vpop.f32.mrf.mxu0
  %v2434 = vadd.f32 0.0, %v2433
  %v2435 = vpop.f32.mrf.mxu0
  %v2436 = vadd.f32 0.0, %v2435
  %2437 = vmatprep.mubr.f32.mxu0 0.0
  %2438 = vmatmul.mubr.f32.gmra.mxu0 %v237
  %v2439 = vpop.f32.mrf.mxu0
  %v2440 = vadd.f32 0.0, %v2439
  %v2441 = vpop.f32.mrf.mxu0
  %v2442 = vadd.f32 0.0, %v2441
  %2443 = vmatprep.mubr.f32.mxu0 0.0
  %2444 = vmatmul.mubr.f32.gmra.mxu0 %v240
  %v2445 = vpop.f32.mrf.mxu0
  %v2446 = vadd.f32 0.0, %v2445
  %v2447 = vpop.f32.mrf.mxu0
  %v2448 = vadd.f32 0.0, %v2447
  %2449 = vmatprep.mubr.f32.mxu0 0.0
  %2450 = vmatmul.mubr.f32.gmra.mxu0 %v243
  %v2451 = vpop.f32.mrf.mxu0
  %v2452 = vadd.f32 0.0, %v2451
  %v2453 = vpop.f32.mrf.mxu0
  %v2454 = vadd.f32 0.0, %v2453
  %2455 = vmatprep.mubr.f32.mxu0 0.0
  %2456 = vmatmul.mubr.f32.gmra.mxu0 %v246
  %v2457 = vpop.f32.mrf.mxu0
  %v2458 = vadd.f32 0.0, %v2457
  %v2459 = vpop.f32.mrf.mxu0
  %v2460 = vadd.f32 0.0, %v2459
  %2461 = vmatprep.mubr.f32.mxu0 0.0
  %2462 = vmatmul.mubr.f32.gmra.mxu0 %v249
  %v2463 = vpop.f32.mrf.mxu0
  %v2464 = vadd.f32 0.0, %v2463
  %v2465 = vpop.f32.mrf.mxu0
  %v2466 = vadd.f32 0.0, %v2465
  %2467 = vmatprep.mubr.f32.mxu0 0.0
  %2468 = vmatmul.mubr.f32.gmra.mxu0 %v252
  %v2469 = vpop.f32.mrf.mxu0
  %v2470 = vadd.f32 0.0, %v2469
  %v2471 = vpop.f32.mrf.mxu0
  %v2472 = vadd.f32 0.0, %v2471
  %2473 = vmatprep.mubr.f32.mxu0 0.0
  %2474 = vmatmul.mubr.f32.gmra.mxu0 %v255
  %v2475 = vpop.f32.mrf.mxu0
  %v2476 = vadd.f32 0.0, %v2475
  %v2477 = vpop.f32.mrf.mxu0
  %v2478 = vadd.f32 0.0, %v2477
  %2479 = vmatprep.mubr.f32.mxu0 0.0
  %2480 = vmatmul.mubr.f32.gmra.mxu0 %v258
  %v2481 = vpop.f32.mrf.mxu0
  %v2482 = vadd.f32 0.0, %v2481
  %v2483 = vpop.f32.mrf.mxu0
  %v2484 = vadd.f32 0.0, %v2483
  %2485 = vmatprep.mubr.f32.mxu0 0.0
  %2486 = vmatmul.mubr.f32.gmra.mxu0 %v261
  %v2487 = vpop.f32.mrf.mxu0
  %v2488 = vadd.f32 0.0, %v2487
  %v2489 = vpop.f32.mrf.mxu0
  %v2490 = vadd.f32 0.0, %v2489
  %2491 = vmatprep.mubr.f32.mxu0 0.0
  %2492 = vmatmul.mubr.f32.gmra.mxu0 %v264
  %v2493 = vpop.f32.mrf.mxu0
  %v2494 = vadd.f32 0.0, %v2493
  %v2495 = vpop.f32.mrf.mxu0
  %v2496 = vadd.f32 0.0, %v2495
  %2497 = vmatprep.mubr.f32.mxu0 0.0
  %2498 = vmatmul.mubr.f32.gmra.mxu0 %v267
  %v2499 = vpop.f32.mrf.mxu0
  %v2500 = vadd.f32 0.0, %v2499
  %v2501 = vpop.f32.mrf.mxu0
  %v2502 = vadd.f32 0.0, %v2501
  %2503 = vmatprep.mubr.f32.mxu0 0.0
  %2504 = vmatmul.mubr.f32.gmra.mxu0 %v270
  %v2505 = vpop.f32.mrf.mxu0
  %v2506 = vadd.f32 0.0, %v2505
  %v2507 = vpop.f32.mrf.mxu0
  %v2508 = vadd.f32 0.0, %v2507
  %2509 = vmatprep.mubr.f32.mxu0 0.0
  %2510 = vmatmul.mubr.f32.gmra.mxu0 %v273
  %v2511 = vpop.f32.mrf.mxu0
  %v2512 = vadd.f32 0.0, %v2511
  %v2513 = vpop.f32.mrf.mxu0
  %v2514 = vadd.f32 0.0, %v2513
  %2515 = vmatprep.mubr.f32.mxu0 0.0
  %2516 = vmatmul.mubr.f32.gmra.mxu0 %v276
  %v2517 = vpop.f32.mrf.mxu0
  %v2518 = vadd.f32 0.0, %v2517
  %v2519 = vpop.f32.mrf.mxu0
  %v2520 = vadd.f32 0.0, %v2519
  %2521 = vmatprep.mubr.f32.mxu0 0.0
  %2522 = vmatmul.mubr.f32.gmra.mxu0 %v279
  %v2523 = vpop.f32.mrf.mxu0
  %v2524 = vadd.f32 0.0, %v2523
  %v2525 = vpop.f32.mrf.mxu0
  %v2526 = vadd.f32 0.0, %v2525
  %2527 = vmatprep.mubr.f32.mxu0 0.0
  %2528 = vmatmul.mubr.f32.gmra.mxu0 %v282
  %v2529 = vpop.f32.mrf.mxu0
  %v2530 = vadd.f32 0.0, %v2529
  %v2531 = vpop.f32.mrf.mxu0
  %v2532 = vadd.f32 0.0, %v2531
  %2533 = vmatprep.mubr.f32.mxu0 0.0
  %2534 = vmatmul.mubr.f32.gmra.mxu0 %v285
  %v2535 = vpop.f32.mrf.mxu0
  %v2536 = vadd.f32 0.0, %v2535
  %v2537 = vpop.f32.mrf.mxu0
  %v2538 = vadd.f32 0.0, %v2537
  %2539 = vmatprep.mubr.f32.mxu0 0.0
  %2540 = vmatmul.mubr.f32.gmra.mxu0 %v288
  %v2541 = vpop.f32.mrf.mxu0
  %v2542 = vadd.f32 0.0, %v2541
  %v2543 = vpop.f32.mrf.mxu0
  %v2544 = vadd.f32 0.0, %v2543
  %2545 = vmatprep.mubr.f32.mxu0 0.0
  %2546 = vmatmul.mubr.f32.gmra.mxu0 %v291
  %v2547 = vpop.f32.mrf.mxu0
  %v2548 = vadd.f32 0.0, %v2547
  %v2549 = vpop.f32.mrf.mxu0
  %v2550 = vadd.f32 0.0, %v2549
  %2551 = vmatprep.mubr.f32.mxu0 0.0
  %2552 = vmatmul.mubr.f32.gmra.mxu0 %v294
  %v2553 = vpop.f32.mrf.mxu0
  %v2554 = vadd.f32 0.0, %v2553
  %v2555 = vpop.f32.mrf.mxu0
  %v2556 = vadd.f32 0.0, %v2555
  %2557 = vmatprep.mubr.f32.mxu0 0.0
  %2558 = vmatmul.mubr.f32.gmra.mxu0 %v297
  %v2559 = vpop.f32.mrf.mxu0
  %v2560 = vadd.f32 0.0, %v2559
  %v2561 = vpop.f32.mrf.mxu0
  %v2562 = vadd.f32 0.0, %v2561
  %2563 = vmatprep.mubr.f32.mxu0 0.0
  %2564 = vmatmul.mubr.f32.gmra.mxu0 %v300
  %v2565 = vpop.f32.mrf.mxu0
  %v2566 = vadd.f32 0.0, %v2565
  %v2567 = vpop.f32.mrf.mxu0
  %v2568 = vadd.f32 0.0, %v2567
  %2569 = vmatprep.mubr.f32.mxu0 0.0
  %2570 = vmatmul.mubr.f32.gmra.mxu0 %v303
  %v2571 = vpop.f32.mrf.mxu0
  %v2572 = vadd.f32 0.0, %v2571
  %v2573 = vpop.f32.mrf.mxu0
  %v2574 = vadd.f32 0.0, %v2573
  %2575 = vmatprep.mubr.f32.mxu0 0.0
  %2576 = vmatmul.mubr.f32.gmra.mxu0 %v306
  %v2577 = vpop.f32.mrf.mxu0
  %v2578 = vadd.f32 0.0, %v2577
  %v2579 = vpop.f32.mrf.mxu0
  %v2580 = vadd.f32 0.0, %v2579
  %2581 = vmatprep.mubr.f32.mxu0 0.0
  %2582 = vmatmul.mubr.f32.gmra.mxu0 %v309
  %v2583 = vpop.f32.mrf.mxu0
  %v2584 = vadd.f32 0.0, %v2583
  %v2585 = vpop.f32.mrf.mxu0
  %v2586 = vadd.f32 0.0, %v2585
  %2587 = vmatprep.mubr.f32.mxu0 0.0
  %2588 = vmatmul.mubr.f32.gmra.mxu0 %v312
  %v2589 = vpop.f32.mrf.mxu0
  %v2590 = vadd.f32 0.0, %v2589
  %v2591 = vpop.f32.mrf.mxu0
  %v2592 = vadd.f32 0.0, %v2591
  %2593 = vmatprep.mubr.f32.mxu0 0.0
  %2594 = vmatmul.mubr.f32.gmra.mxu0 %v315
  %v2595 = vpop.f32.mrf.mxu0
  %v2596 = vadd.f32 0.0, %v2595
  %v2597 = vpop.f32.mrf.mxu0
  %v2598 = vadd.f32 0.0, %v2597
  %2599 = vmatprep.mubr.f32.mxu0 0.0
  %2600 = vmatmul.mubr.f32.gmra.mxu0 %v318
  %v2601 = vpop.f32.mrf.mxu0
  %v2602 = vadd.f32 0.0, %v2601
  %v2603 = vpop.f32.mrf.mxu0
  %v2604 = vadd.f32 0.0, %v2603
  %2605 = vmatprep.mubr.f32.mxu0 0.0
  %2606 = vmatmul.mubr.f32.gmra.mxu0 %v321
  %v2607 = vpop.f32.mrf.mxu0
  %v2608 = vadd.f32 0.0, %v2607
  %v2609 = vpop.f32.mrf.mxu0
  %v2610 = vadd.f32 0.0, %v2609
  %2611 = vmatprep.mubr.f32.mxu0 0.0
  %2612 = vmatmul.mubr.f32.gmra.mxu0 %v324
  %v2613 = vpop.f32.mrf.mxu0
  %v2614 = vadd.f32 0.0, %v2613
  %v2615 = vpop.f32.mrf.mxu0
  %v2616 = vadd.f32 0.0, %v2615
  %2617 = vmatprep.mubr.f32.mxu0 0.0
  %2618 = vmatmul.mubr.f32.gmra.mxu0 %v1160
  %v2619 = vpop.f32.mrf.mxu0
  %v2620 = vadd.f32 0.0, %v2619
  %v2621 = vpop.f32.mrf.mxu0
  %v2622 = vadd.f32 0.0, %v2621
  %2623 = vmatprep.mubr.f32.mxu0 0.0
  %2624 = vmatmul.mubr.f32.gmra.mxu0 %v1163
  %v2625 = vpop.f32.mrf.mxu0
  %v2626 = vadd.f32 0.0, %v2625
  %v2627 = vpop.f32.mrf.mxu0
  %v2628 = vadd.f32 0.0, %v2627
  %2629 = vmatprep.mubr.f32.mxu0 0.0
  %2630 = vmatmul.mubr.f32.gmra.mxu0 %v1704
  %v2631 = vpop.f32.mrf.mxu0
  %v2632 = vadd.f32 0.0, %v2631
  %v2633 = vpop.f32.mrf.mxu0
  %v2634 = vadd.f32 0.0, %v2633
  %2635 = vmatprep.mubr.f32.mxu0 0.0
  %2636 = vmatmul.mubr.f32.gmra.mxu0 %v1707
  %v2637 = vpop.f32.mrf.mxu0
  %v2638 = vadd.f32 0.0, %v2637
  %v2639 = vpop.f32.mrf.mxu0
  %v2640 = vadd.f32 0.0, %v2639
  %2641 = vmatprep.mubr.f32.mxu0 0.0
  %2642 = vmatmul.mubr.f32.gmra.mxu0 %v2248
  %v2643 = vpop.f32.mrf.mxu0
  %v2644 = vadd.f32 0.0, %v2643
  %v2645 = vpop.f32.mrf.mxu0
  %v2646 = vadd.f32 0.0, %v2645
  %2647 = vmatprep.mubr.f32.mxu0 0.0
  %2648 = vmatmul.mubr.f32.gmra.mxu0 %v2251
  %v2649 = vpop.f32.mrf.mxu0
  %v2650 = vadd.f32 0.0, %v2649
  %v2651 = vpop.f32.mrf.mxu0
  %v2652 = vadd.f32 0.0, %v2651
  %2653 = vdwg.mxu0
  %v2654 = vadd.f32 %v2110, %v2320
  %v2655 = vadd.f32 %v2111, %v2322
  %v2656 = vadd.f32 %v2112, %v2326
  %v2657 = vadd.f32 %v2113, %v2328
  %v2658 = vadd.f32 %v2114, %v2332
  %v2659 = vadd.f32 %v2115, %v2334
  %v2660 = vadd.f32 %v2116, %v2338
  %v2661 = vadd.f32 %v2117, %v2340
  %v2662 = vadd.f32 %v2118, %v2344
  %v2663 = vadd.f32 %v2119, %v2346
  %v2664 = vadd.f32 %v2120, %v2350
  %v2665 = vadd.f32 %v2121, %v2352
  %v2666 = vadd.f32 %v2122, %v2356
  %v2667 = vadd.f32 %v2123, %v2358
  %v2668 = vadd.f32 %v2124, %v2362
  %v2669 = vadd.f32 %v2125, %v2364
  %v2670 = vadd.f32 %v2126, %v2368
  %v2671 = vadd.f32 %v2127, %v2370
  %v2672 = vadd.f32 %v2128, %v2374
  %v2673 = vadd.f32 %v2129, %v2376
  %v2674 = vadd.f32 %v2130, %v2380
  %v2675 = vadd.f32 %v2131, %v2382
  %v2676 = vadd.f32 %v2132, %v2386
  %v2677 = vadd.f32 %v2133, %v2388
  %v2678 = vadd.f32 %v2134, %v2392
  %v2679 = vadd.f32 %v2135, %v2394
  %v2680 = vadd.f32 %v2136, %v2398
  %v2681 = vadd.f32 %v2137, %v2400
  %v2682 = vadd.f32 %v2138, %v2404
  %v2683 = vadd.f32 %v2139, %v2406
  %v2684 = vadd.f32 %v2140, %v2410
  %v2685 = vadd.f32 %v2141, %v2412
  %v2686 = vadd.f32 %v2142, %v2416
  %v2687 = vadd.f32 %v2143, %v2418
  %v2688 = vadd.f32 %v2144, %v2422
  %v2689 = vadd.f32 %v2145, %v2424
  %v2690 = vadd.f32 %v2146, %v2428
  %v2691 = vadd.f32 %v2147, %v2430
  %v2692 = vadd.f32 %v2148, %v2434
  %v2693 = vadd.f32 %v2149, %v2436
  %v2694 = vadd.f32 %v2150, %v2440
  %v2695 = vadd.f32 %v2151, %v2442
  %v2696 = vadd.f32 %v2152, %v2446
  %v2697 = vadd.f32 %v2153, %v2448
  %v2698 = vadd.f32 %v2154, %v2452
  %v2699 = vadd.f32 %v2155, %v2454
  %v2700 = vadd.f32 %v2156, %v2458
  %v2701 = vadd.f32 %v2157, %v2460
  %v2702 = vadd.f32 %v2158, %v2464
  %v2703 = vadd.f32 %v2159, %v2466
  %v2704 = vadd.f32 %v2160, %v2470
  %v2705 = vadd.f32 %v2161, %v2472
  %v2706 = vadd.f32 %v2162, %v2476
  %v2707 = vadd.f32 %v2163, %v2478
  %v2708 = vadd.f32 %v2164, %v2482
  %v2709 = vadd.f32 %v2165, %v2484
  %v2710 = vadd.f32 %v2166, %v2488
  %v2711 = vadd.f32 %v2167, %v2490
  %v2712 = vadd.f32 %v2168, %v2494
  %v2713 = vadd.f32 %v2169, %v2496
  %v2714 = vadd.f32 %v2170, %v2500
  %v2715 = vadd.f32 %v2171, %v2502
  %v2716 = vadd.f32 %v2172, %v2506
  %v2717 = vadd.f32 %v2173, %v2508
  %v2718 = vadd.f32 %v2174, %v2512
  %v2719 = vadd.f32 %v2175, %v2514
  %v2720 = vadd.f32 %v2176, %v2518
  %v2721 = vadd.f32 %v2177, %v2520
  %v2722 = vadd.f32 %v2178, %v2524
  %v2723 = vadd.f32 %v2179, %v2526
  %v2724 = vadd.f32 %v2180, %v2530
  %v2725 = vadd.f32 %v2181, %v2532
  %v2726 = vadd.f32 %v2182, %v2536
  %v2727 = vadd.f32 %v2183, %v2538
  %v2728 = vadd.f32 %v2184, %v2542
  %v2729 = vadd.f32 %v2185, %v2544
  %v2730 = vadd.f32 %v2186, %v2548
  %v2731 = vadd.f32 %v2187, %v2550
  %v2732 = vadd.f32 %v2188, %v2554
  %v2733 = vadd.f32 %v2189, %v2556
  %v2734 = vadd.f32 %v2190, %v2560
  %v2735 = vadd.f32 %v2191, %v2562
  %v2736 = vadd.f32 %v2192, %v2566
  %v2737 = vadd.f32 %v2193, %v2568
  %v2738 = vadd.f32 %v2194, %v2572
  %v2739 = vadd.f32 %v2195, %v2574
  %v2740 = vadd.f32 %v2196, %v2578
  %v2741 = vadd.f32 %v2197, %v2580
  %v2742 = vadd.f32 %v2198, %v2584
  %v2743 = vadd.f32 %v2199, %v2586
  %v2744 = vadd.f32 %v2200, %v2590
  %v2745 = vadd.f32 %v2201, %v2592
  %v2746 = vadd.f32 %v2202, %v2596
  %v2747 = vadd.f32 %v2203, %v2598
  %v2748 = vadd.f32 %v2204, %v2602
  %v2749 = vadd.f32 %v2205, %v2604
  %v2750 = vadd.f32 %v2206, %v2608
  %v2751 = vadd.f32 %v2207, %v2610
  %v2752 = vadd.f32 %v2208, %v2614
  %v2753 = vadd.f32 %v2209, %v2616
  %v2754 = vadd.f32 %v2210, %v2620
  %v2755 = vadd.f32 %v2211, %v2622
  %v2756 = vadd.f32 %v2212, %v2626
  %v2757 = vadd.f32 %v2213, %v2628
  %v2758 = vadd.f32 %v2214, %v2632
  %v2759 = vadd.f32 %v2215, %v2634
  %v2760 = vadd.f32 %v2216, %v2638
  %v2761 = vadd.f32 %v2217, %v2640
  %v2762 = vadd.f32 %v2218, %v2644
  %v2763 = vadd.f32 %v2219, %v2646
  %v2764 = vadd.f32 %v2220, %v2650
  %v2765 = vadd.f32 %v2221, %v2652
  %v2766 = vld [vmem:[%s2] sm:$0x3]
  %v2768 = vlaneseq
  %v2769 = vshrl.u32 %v2768, 7
  %v2770 = vsub.s32 0, %v2769
  %v2771 = vrot.slane %v2766, %v2770
  %v2772 = vlaneseq
  %v2773 = vshrl.u32 %v2772, 7
  %v2774 = vsub.s32 1, %v2773
  %v2775 = vrot.slane %v2766, %v2774
  %v2778 = vadd.f32 %v2654, %v2771
  %v2779 = vadd.f32 %v2655, %v2775
  %v2780 = vadd.f32 %v2656, %v2771
  %v2781 = vadd.f32 %v2657, %v2775
  %v2782 = vadd.f32 %v2658, %v2771
  %v2783 = vadd.f32 %v2659, %v2775
  %v2784 = vadd.f32 %v2660, %v2771
  %v2785 = vadd.f32 %v2661, %v2775
  %v2786 = vadd.f32 %v2662, %v2771
  %v2787 = vadd.f32 %v2663, %v2775
  %v2788 = vadd.f32 %v2664, %v2771
  %v2789 = vadd.f32 %v2665, %v2775
  %v2790 = vadd.f32 %v2666, %v2771
  %v2791 = vadd.f32 %v2667, %v2775
  %v2792 = vadd.f32 %v2668, %v2771
  %v2793 = vadd.f32 %v2669, %v2775
  %v2794 = vadd.f32 %v2670, %v2771
  %v2795 = vadd.f32 %v2671, %v2775
  %v2796 = vadd.f32 %v2672, %v2771
  %v2797 = vadd.f32 %v2673, %v2775
  %v2798 = vadd.f32 %v2674, %v2771
  %v2799 = vadd.f32 %v2675, %v2775
  %v2800 = vadd.f32 %v2676, %v2771
  %v2801 = vadd.f32 %v2677, %v2775
  %v2802 = vadd.f32 %v2678, %v2771
  %v2803 = vadd.f32 %v2679, %v2775
  %v2804 = vadd.f32 %v2680, %v2771
  %v2805 = vadd.f32 %v2681, %v2775
  %v2806 = vadd.f32 %v2682, %v2771
  %v2807 = vadd.f32 %v2683, %v2775
  %v2808 = vadd.f32 %v2684, %v2771
  %v2809 = vadd.f32 %v2685, %v2775
  %v2810 = vadd.f32 %v2686, %v2771
  %v2811 = vadd.f32 %v2687, %v2775
  %v2812 = vadd.f32 %v2688, %v2771
  %v2813 = vadd.f32 %v2689, %v2775
  %v2814 = vadd.f32 %v2690, %v2771
  %v2815 = vadd.f32 %v2691, %v2775
  %v2816 = vadd.f32 %v2692, %v2771
  %v2817 = vadd.f32 %v2693, %v2775
  %v2818 = vadd.f32 %v2694, %v2771
  %v2819 = vadd.f32 %v2695, %v2775
  %v2820 = vadd.f32 %v2696, %v2771
  %v2821 = vadd.f32 %v2697, %v2775
  %v2822 = vadd.f32 %v2698, %v2771
  %v2823 = vadd.f32 %v2699, %v2775
  %v2824 = vadd.f32 %v2700, %v2771
  %v2825 = vadd.f32 %v2701, %v2775
  %v2826 = vadd.f32 %v2702, %v2771
  %v2827 = vadd.f32 %v2703, %v2775
  %v2828 = vadd.f32 %v2704, %v2771
  %v2829 = vadd.f32 %v2705, %v2775
  %v2830 = vadd.f32 %v2706, %v2771
  %v2831 = vadd.f32 %v2707, %v2775
  %v2832 = vadd.f32 %v2708, %v2771
  %v2833 = vadd.f32 %v2709, %v2775
  %v2834 = vadd.f32 %v2710, %v2771
  %v2835 = vadd.f32 %v2711, %v2775
  %v2836 = vadd.f32 %v2712, %v2771
  %v2837 = vadd.f32 %v2713, %v2775
  %v2838 = vadd.f32 %v2714, %v2771
  %v2839 = vadd.f32 %v2715, %v2775
  %v2840 = vadd.f32 %v2716, %v2771
  %v2841 = vadd.f32 %v2717, %v2775
  %v2842 = vadd.f32 %v2718, %v2771
  %v2843 = vadd.f32 %v2719, %v2775
  %v2844 = vadd.f32 %v2720, %v2771
  %v2845 = vadd.f32 %v2721, %v2775
  %v2846 = vadd.f32 %v2722, %v2771
  %v2847 = vadd.f32 %v2723, %v2775
  %v2848 = vadd.f32 %v2724, %v2771
  %v2849 = vadd.f32 %v2725, %v2775
  %v2850 = vadd.f32 %v2726, %v2771
  %v2851 = vadd.f32 %v2727, %v2775
  %v2852 = vadd.f32 %v2728, %v2771
  %v2853 = vadd.f32 %v2729, %v2775
  %v2854 = vadd.f32 %v2730, %v2771
  %v2855 = vadd.f32 %v2731, %v2775
  %v2856 = vadd.f32 %v2732, %v2771
  %v2857 = vadd.f32 %v2733, %v2775
  %v2858 = vadd.f32 %v2734, %v2771
  %v2859 = vadd.f32 %v2735, %v2775
  %v2860 = vadd.f32 %v2736, %v2771
  %v2861 = vadd.f32 %v2737, %v2775
  %v2862 = vadd.f32 %v2738, %v2771
  %v2863 = vadd.f32 %v2739, %v2775
  %v2864 = vadd.f32 %v2740, %v2771
  %v2865 = vadd.f32 %v2741, %v2775
  %v2866 = vadd.f32 %v2742, %v2771
  %v2867 = vadd.f32 %v2743, %v2775
  %v2868 = vadd.f32 %v2744, %v2771
  %v2869 = vadd.f32 %v2745, %v2775
  %v2870 = vadd.f32 %v2746, %v2771
  %v2871 = vadd.f32 %v2747, %v2775
  %v2872 = vadd.f32 %v2748, %v2771
  %v2873 = vadd.f32 %v2749, %v2775
  %v2874 = vadd.f32 %v2750, %v2771
  %v2875 = vadd.f32 %v2751, %v2775
  %v2876 = vadd.f32 %v2752, %v2771
  %v2877 = vadd.f32 %v2753, %v2775
  %v2878 = vadd.f32 %v2754, %v2771
  %v2879 = vadd.f32 %v2755, %v2775
  %v2880 = vadd.f32 %v2756, %v2771
  %v2881 = vadd.f32 %v2757, %v2775
  %v2882 = vadd.f32 %v2758, %v2771
  %v2883 = vadd.f32 %v2759, %v2775
  %v2884 = vadd.f32 %v2760, %v2771
  %v2885 = vadd.f32 %v2761, %v2775
  %v2886 = vadd.f32 %v2762, %v2771
  %v2887 = vadd.f32 %v2763, %v2775
  %v2888 = vadd.f32 %v2764, %v2771
  %v2889 = vadd.f32 %v2765, %v2775
  %v2890 = vmax.f32 %v2778, 0.0
  %v2891 = vmax.f32 %v2779, 0.0
  %v2892 = vmax.f32 %v2780, 0.0
  %v2893 = vmax.f32 %v2781, 0.0
  %v2894 = vmax.f32 %v2782, 0.0
  %v2895 = vmax.f32 %v2783, 0.0
  %v2896 = vmax.f32 %v2784, 0.0
  %v2897 = vmax.f32 %v2785, 0.0
  %v2898 = vmax.f32 %v2786, 0.0
  %v2899 = vmax.f32 %v2787, 0.0
  %v2900 = vmax.f32 %v2788, 0.0
  %v2901 = vmax.f32 %v2789, 0.0
  %v2902 = vmax.f32 %v2790, 0.0
  %v2903 = vmax.f32 %v2791, 0.0
  %v2904 = vmax.f32 %v2792, 0.0
  %v2905 = vmax.f32 %v2793, 0.0
  %v2906 = vmax.f32 %v2794, 0.0
  %v2907 = vmax.f32 %v2795, 0.0
  %v2908 = vmax.f32 %v2796, 0.0
  %v2909 = vmax.f32 %v2797, 0.0
  %v2910 = vmax.f32 %v2798, 0.0
  %v2911 = vmax.f32 %v2799, 0.0
  %v2912 = vmax.f32 %v2800, 0.0
  %v2913 = vmax.f32 %v2801, 0.0
  %v2914 = vmax.f32 %v2802, 0.0
  %v2915 = vmax.f32 %v2803, 0.0
  %v2916 = vmax.f32 %v2804, 0.0
  %v2917 = vmax.f32 %v2805, 0.0
  %v2918 = vmax.f32 %v2806, 0.0
  %v2919 = vmax.f32 %v2807, 0.0
  %v2920 = vmax.f32 %v2808, 0.0
  %v2921 = vmax.f32 %v2809, 0.0
  %v2922 = vmax.f32 %v2810, 0.0
  %v2923 = vmax.f32 %v2811, 0.0
  %v2924 = vmax.f32 %v2812, 0.0
  %v2925 = vmax.f32 %v2813, 0.0
  %v2926 = vmax.f32 %v2814, 0.0
  %v2927 = vmax.f32 %v2815, 0.0
  %v2928 = vmax.f32 %v2816, 0.0
  %v2929 = vmax.f32 %v2817, 0.0
  %v2930 = vmax.f32 %v2818, 0.0
  %v2931 = vmax.f32 %v2819, 0.0
  %v2932 = vmax.f32 %v2820, 0.0
  %v2933 = vmax.f32 %v2821, 0.0
  %v2934 = vmax.f32 %v2822, 0.0
  %v2935 = vmax.f32 %v2823, 0.0
  %v2936 = vmax.f32 %v2824, 0.0
  %v2937 = vmax.f32 %v2825, 0.0
  %v2938 = vmax.f32 %v2826, 0.0
  %v2939 = vmax.f32 %v2827, 0.0
  %v2940 = vmax.f32 %v2828, 0.0
  %v2941 = vmax.f32 %v2829, 0.0
  %v2942 = vmax.f32 %v2830, 0.0
  %v2943 = vmax.f32 %v2831, 0.0
  %v2944 = vmax.f32 %v2832, 0.0
  %v2945 = vmax.f32 %v2833, 0.0
  %v2946 = vmax.f32 %v2834, 0.0
  %v2947 = vmax.f32 %v2835, 0.0
  %v2948 = vmax.f32 %v2836, 0.0
  %v2949 = vmax.f32 %v2837, 0.0
  %v2950 = vmax.f32 %v2838, 0.0
  %v2951 = vmax.f32 %v2839, 0.0
  %v2952 = vmax.f32 %v2840, 0.0
  %v2953 = vmax.f32 %v2841, 0.0
  %v2954 = vmax.f32 %v2842, 0.0
  %v2955 = vmax.f32 %v2843, 0.0
  %v2956 = vmax.f32 %v2844, 0.0
  %v2957 = vmax.f32 %v2845, 0.0
  %v2958 = vmax.f32 %v2846, 0.0
  %v2959 = vmax.f32 %v2847, 0.0
  %v2960 = vmax.f32 %v2848, 0.0
  %v2961 = vmax.f32 %v2849, 0.0
  %v2962 = vmax.f32 %v2850, 0.0
  %v2963 = vmax.f32 %v2851, 0.0
  %v2964 = vmax.f32 %v2852, 0.0
  %v2965 = vmax.f32 %v2853, 0.0
  %v2966 = vmax.f32 %v2854, 0.0
  %v2967 = vmax.f32 %v2855, 0.0
  %v2968 = vmax.f32 %v2856, 0.0
  %v2969 = vmax.f32 %v2857, 0.0
  %v2970 = vmax.f32 %v2858, 0.0
  %v2971 = vmax.f32 %v2859, 0.0
  %v2972 = vmax.f32 %v2860, 0.0
  %v2973 = vmax.f32 %v2861, 0.0
  %v2974 = vmax.f32 %v2862, 0.0
  %v2975 = vmax.f32 %v2863, 0.0
  %v2976 = vmax.f32 %v2864, 0.0
  %v2977 = vmax.f32 %v2865, 0.0
  %v2978 = vmax.f32 %v2866, 0.0
  %v2979 = vmax.f32 %v2867, 0.0
  %v2980 = vmax.f32 %v2868, 0.0
  %v2981 = vmax.f32 %v2869, 0.0
  %v2982 = vmax.f32 %v2870, 0.0
  %v2983 = vmax.f32 %v2871, 0.0
  %v2984 = vmax.f32 %v2872, 0.0
  %v2985 = vmax.f32 %v2873, 0.0
  %v2986 = vmax.f32 %v2874, 0.0
  %v2987 = vmax.f32 %v2875, 0.0
  %v2988 = vmax.f32 %v2876, 0.0
  %v2989 = vmax.f32 %v2877, 0.0
  %v2990 = vmax.f32 %v2878, 0.0
  %v2991 = vmax.f32 %v2879, 0.0
  %v2992 = vmax.f32 %v2880, 0.0
  %v2993 = vmax.f32 %v2881, 0.0
  %v2994 = vmax.f32 %v2882, 0.0
  %v2995 = vmax.f32 %v2883, 0.0
  %v2996 = vmax.f32 %v2884, 0.0
  %v2997 = vmax.f32 %v2885, 0.0
  %v2998 = vmax.f32 %v2886, 0.0
  %v2999 = vmax.f32 %v2887, 0.0
  %v3000 = vmax.f32 %v2888, 0.0
  %v3001 = vmax.f32 %v2889, 0.0
  %v3002 = vmax.f32 %v2890, %v2894
  %v3003 = vmax.f32 %v2891, %v2895
  %v3004 = vmax.f32 %v2892, %v2896
  %v3005 = vmax.f32 %v2893, %v2897
  %v3006 = vmax.f32 %v2894, %v2898
  %v3007 = vmax.f32 %v2895, %v2899
  %v3008 = vmax.f32 %v2896, %v2900
  %v3009 = vmax.f32 %v2897, %v2901
  %v3010 = vmax.f32 %v2898, %v2902
  %v3011 = vmax.f32 %v2899, %v2903
  %v3012 = vmax.f32 %v2900, %v2904
  %v3013 = vmax.f32 %v2901, %v2905
  %v3014 = vmax.f32 %v2902, %v2906
  %v3015 = vmax.f32 %v2903, %v2907
  %v3016 = vmax.f32 %v2904, %v2908
  %v3017 = vmax.f32 %v2905, %v2909
  %v3018 = vmax.f32 %v2906, %v2910
  %v3019 = vmax.f32 %v2907, %v2911
  %v3020 = vmax.f32 %v2908, %v2912
  %v3021 = vmax.f32 %v2909, %v2913
  %v3022 = vmax.f32 %v2910, %v2914
  %v3023 = vmax.f32 %v2911, %v2915
  %v3024 = vmax.f32 %v2912, %v2916
  %v3025 = vmax.f32 %v2913, %v2917
  %v3026 = vmax.f32 %v2914, %v2918
  %v3027 = vmax.f32 %v2915, %v2919
  %v3028 = vmax.f32 %v2916, %v2920
  %v3029 = vmax.f32 %v2917, %v2921
  %v3030 = vmax.f32 %v2918, %v2922
  %v3031 = vmax.f32 %v2919, %v2923
  %v3032 = vmax.f32 %v2920, %v2924
  %v3033 = vmax.f32 %v2921, %v2925
  %v3034 = vmax.f32 %v2922, %v2926
  %v3035 = vmax.f32 %v2923, %v2927
  %v3036 = vmax.f32 %v2924, %v2928
  %v3037 = vmax.f32 %v2925, %v2929
  %v3038 = vmax.f32 %v2926, %v2930
  %v3039 = vmax.f32 %v2927, %v2931
  %v3040 = vmax.f32 %v2928, %v2932
  %v3041 = vmax.f32 %v2929, %v2933
  %v3042 = vmax.f32 %v2930, %v2934
  %v3043 = vmax.f32 %v2931, %v2935
  %v3044 = vmax.f32 %v2932, %v2936
  %v3045 = vmax.f32 %v2933, %v2937
  %v3046 = vmax.f32 %v2934, %v2938
  %v3047 = vmax.f32 %v2935, %v2939
  %v3048 = vmax.f32 %v2936, %v2940
  %v3049 = vmax.f32 %v2937, %v2941
  %v3050 = vmax.f32 %v2938, %v2942
  %v3051 = vmax.f32 %v2939, %v2943
  %v3052 = vmax.f32 %v2940, %v2944
  %v3053 = vmax.f32 %v2941, %v2945
  %v3054 = vmax.f32 %v2942, %v2946
  %v3055 = vmax.f32 %v2943, %v2947
  %v3056 = vmax.f32 %v2944, %v2948
  %v3057 = vmax.f32 %v2945, %v2949
  %v3058 = vmax.f32 %v2946, %v2950
  %v3059 = vmax.f32 %v2947, %v2951
  %v3060 = vmax.f32 %v2948, %v2952
  %v3061 = vmax.f32 %v2949, %v2953
  %v3062 = vmax.f32 %v2950, %v2954
  %v3063 = vmax.f32 %v2951, %v2955
  %v3064 = vmax.f32 %v2952, %v2956
  %v3065 = vmax.f32 %v2953, %v2957
  %v3066 = vmax.f32 %v2954, %v2958
  %v3067 = vmax.f32 %v2955, %v2959
  %v3068 = vmax.f32 %v2956, %v2960
  %v3069 = vmax.f32 %v2957, %v2961
  %v3070 = vmax.f32 %v2958, %v2962
  %v3071 = vmax.f32 %v2959, %v2963
  %v3072 = vmax.f32 %v2960, %v2964
  %v3073 = vmax.f32 %v2961, %v2965
  %v3074 = vmax.f32 %v2962, %v2966
  %v3075 = vmax.f32 %v2963, %v2967
  %v3076 = vmax.f32 %v2964, %v2968
  %v3077 = vmax.f32 %v2965, %v2969
  %v3078 = vmax.f32 %v2966, %v2970
  %v3079 = vmax.f32 %v2967, %v2971
  %v3080 = vmax.f32 %v2968, %v2972
  %v3081 = vmax.f32 %v2969, %v2973
  %v3082 = vmax.f32 %v2970, %v2974
  %v3083 = vmax.f32 %v2971, %v2975
  %v3084 = vmax.f32 %v2972, %v2976
  %v3085 = vmax.f32 %v2973, %v2977
  %v3086 = vmax.f32 %v2974, %v2978
  %v3087 = vmax.f32 %v2975, %v2979
  %v3088 = vmax.f32 %v2976, %v2980
  %v3089 = vmax.f32 %v2977, %v2981
  %v3090 = vmax.f32 %v2978, %v2982
  %v3091 = vmax.f32 %v2979, %v2983
  %v3092 = vmax.f32 %v2980, %v2984
  %v3093 = vmax.f32 %v2981, %v2985
  %v3094 = vmax.f32 %v2982, %v2986
  %v3095 = vmax.f32 %v2983, %v2987
  %v3096 = vmax.f32 %v2984, %v2988
  %v3097 = vmax.f32 %v2985, %v2989
  %v3098 = vmax.f32 %v2986, %v2990
  %v3099 = vmax.f32 %v2987, %v2991
  %v3100 = vmax.f32 %v2988, %v2992
  %v3101 = vmax.f32 %v2989, %v2993
  %v3102 = vmax.f32 %v2990, %v2994
  %v3103 = vmax.f32 %v2991, %v2995
  %v3104 = vmax.f32 %v2992, %v2996
  %v3105 = vmax.f32 %v2993, %v2997
  %v3106 = vmax.f32 %v2994, %v2998
  %v3107 = vmax.f32 %v2995, %v2999
  %v3108 = vmax.f32 %v2996, %v3000
  %v3109 = vmax.f32 %v2997, %v3001
  %v3110 = vld [vmem:[%s3] sm:$0xff]
  %v3111 = vld [vmem:[%s3 + $0x8] sm:$0xff]
  %v3112 = vld [vmem:[%s3 + $0x10] sm:$0xff]
  %v3113 = vld [vmem:[%s3 + $0x18] sm:$0xff]
  %v3114 = vld [vmem:[%s3 + $0x20] sm:$0xff]
  %v3115 = vld [vmem:[%s3 + $0x28] sm:$0xff]
  %v3116 = vld [vmem:[%s3 + $0x30] sm:$0xff]
  %v3117 = vld [vmem:[%s3 + $0x38] sm:$0xff]
  %v3118 = vld [vmem:[%s3 + $0x40] sm:$0xff]
  %v3119 = vld [vmem:[%s3 + $0x48] sm:$0xff]
  %v3120 = vld [vmem:[%s3 + $0x50] sm:$0xff]
  %v3121 = vld [vmem:[%s3 + $0x58] sm:$0xff]
  %v3122 = vld [vmem:[%s3 + $0x60] sm:$0xff]
  %v3123 = vld [vmem:[%s3 + $0x68] sm:$0xff]
  %v3124 = vld [vmem:[%s3 + $0x70] sm:$0xff]
  %v3125 = vld [vmem:[%s3 + $0x78] sm:$0xff]
  %v3126 = vld [vmem:[%s3 + $0x80] sm:$0xff]
  %v3127 = vld [vmem:[%s3 + $0x88] sm:$0xff]
  %v3128 = vld [vmem:[%s3 + $0x90] sm:$0xff]
  %v3129 = vld [vmem:[%s3 + $0x98] sm:$0xff]
  %v3130 = vld [vmem:[%s3 + $0xa0] sm:$0xff]
  %vm3131 = vcmask 326656
  %v3133 = vsel %vm3131, %v3003, 0
  %v3136 = vsel %vm3131, %v3005, 0
  %v3139 = vsel %vm3131, %v3007, 0
  %v3142 = vsel %vm3131, %v3009, 0
  %v3145 = vsel %vm3131, %v3011, 0
  %v3148 = vsel %vm3131, %v3013, 0
  %v3151 = vsel %vm3131, %v3015, 0
  %v3154 = vsel %vm3131, %v3017, 0
  %v3157 = vsel %vm3131, %v3019, 0
  %v3160 = vsel %vm3131, %v3021, 0
  %v3163 = vsel %vm3131, %v3023, 0
  %v3166 = vsel %vm3131, %v3025, 0
  %v3169 = vsel %vm3131, %v3027, 0
  %v3172 = vsel %vm3131, %v3029, 0
  %v3175 = vsel %vm3131, %v3031, 0
  %v3178 = vsel %vm3131, %v3033, 0
  %v3181 = vsel %vm3131, %v3035, 0
  %v3184 = vsel %vm3131, %v3037, 0
  %v3187 = vsel %vm3131, %v3039, 0
  %v3190 = vsel %vm3131, %v3041, 0
  %v3193 = vsel %vm3131, %v3043, 0
  %v3196 = vsel %vm3131, %v3045, 0
  %v3199 = vsel %vm3131, %v3047, 0
  %v3202 = vsel %vm3131, %v3049, 0
  %v3205 = vsel %vm3131, %v3051, 0
  %v3208 = vsel %vm3131, %v3053, 0
  %v3211 = vsel %vm3131, %v3055, 0
  %v3214 = vsel %vm3131, %v3057, 0
  %v3217 = vsel %vm3131, %v3059, 0
  %v3220 = vsel %vm3131, %v3061, 0
  %v3223 = vsel %vm3131, %v3063, 0
  %v3226 = vsel %vm3131, %v3065, 0
  %v3229 = vsel %vm3131, %v3067, 0
  %v3232 = vsel %vm3131, %v3069, 0
  %v3235 = vsel %vm3131, %v3071, 0
  %v3238 = vsel %vm3131, %v3073, 0
  %v3241 = vsel %vm3131, %v3075, 0
  %v3244 = vsel %vm3131, %v3077, 0
  %v3247 = vsel %vm3131, %v3079, 0
  %v3250 = vsel %vm3131, %v3081, 0
  %v3253 = vsel %vm3131, %v3083, 0
  %v3256 = vsel %vm3131, %v3085, 0
  %v3259 = vsel %vm3131, %v3087, 0
  %v3262 = vsel %vm3131, %v3089, 0
  %v3265 = vsel %vm3131, %v3091, 0
  %v3268 = vsel %vm3131, %v3093, 0
  %v3271 = vsel %vm3131, %v3095, 0
  %v3274 = vsel %vm3131, %v3097, 0
  %v3277 = vsel %vm3131, %v3099, 0
  %v3280 = vsel %vm3131, %v3101, 0
  %v3283 = vsel %vm3131, %v3103, 0
  %v3286 = vsel %vm3131, %v3105, 0
  %v3289 = vsel %vm3131, %v3107, 0
  %v3292 = vsel %vm3131, %v3109, 0
  %3294 = vmatprep.subr.mxu0 0.0
  %3295 = vmatpush1.msra.mxu0 %v3125
  %3296 = vmatprep.subr.mxu0 0.0
  %3297 = vmatpush1.msra.mxu0 %v3124
  %3298 = vmatprep.subr.mxu0 0.0
  %3299 = vmatpush1.msra.mxu0 %v3123
  %3300 = vmatprep.subr.mxu0 0.0
  %3301 = vmatpush1.msra.mxu0 %v3122
  %3302 = vmatprep.subr.mxu0 0.0
  %3303 = vmatpush1.msra.mxu0 %v3121
  %3304 = vmatprep.subr.mxu0 0.0
  %3305 = vmatpush1.msra.mxu0 %v3120
  %3306 = vmatprep.subr.mxu0 0.0
  %3307 = vmatpush1.msra.mxu0 %v3119
  %3308 = vmatprep.subr.mxu0 0.0
  %3309 = vmatpush1.msra.mxu0 %v3118
  %3310 = vmatprep.subr.mxu0 0.0
  %3311 = vmatpush1.msra.mxu0 %v3117
  %3312 = vmatprep.subr.mxu0 0.0
  %3313 = vmatpush1.msra.mxu0 %v3116
  %3314 = vmatprep.subr.mxu0 0.0
  %3315 = vmatpush1.msra.mxu0 %v3115
  %3316 = vmatprep.subr.mxu0 0.0
  %3317 = vmatpush1.msra.mxu0 %v3114
  %3318 = vmatprep.subr.mxu0 0.0
  %3319 = vmatpush1.msra.mxu0 %v3113
  %3320 = vmatprep.subr.mxu0 0.0
  %3321 = vmatpush1.msra.mxu0 %v3112
  %3322 = vmatprep.subr.mxu0 0.0
  %3323 = vmatpush1.msra.mxu0 %v3111
  %3324 = vmatprep.subr.mxu0 0.0
  %3325 = vmatpush1.msra.mxu0 %v3110
  %3326 = vmatprep.subr.mxu0 0.0
  %3327 = vmatpush2.msra.mxu0 0.0
  %3328 = vmatprep.subr.mxu0 0.0
  %3329 = vmatpush2.msra.mxu0 0.0
  %3330 = vmatprep.subr.mxu0 0.0
  %3331 = vmatpush2.msra.mxu0 0.0
  %3332 = vmatprep.subr.mxu0 0.0
  %3333 = vmatpush2.msra.mxu0 0.0
  %3334 = vmatprep.subr.mxu0 0.0
  %3335 = vmatpush2.msra.mxu0 0.0
  %3336 = vmatprep.subr.mxu0 0.0
  %3337 = vmatpush2.msra.mxu0 0.0
  %3338 = vmatprep.subr.mxu0 0.0
  %3339 = vmatpush2.msra.mxu0 0.0
  %3340 = vmatprep.subr.mxu0 0.0
  %3341 = vmatpush2.msra.mxu0 0.0
  %3342 = vmatprep.subr.mxu0 0.0
  %3343 = vmatpush2.msra.mxu0 0.0
  %3344 = vmatprep.subr.mxu0 0.0
  %3345 = vmatpush2.msra.mxu0 0.0
  %3346 = vmatprep.subr.mxu0 0.0
  %3347 = vmatpush2.msra.mxu0 0.0
  %3348 = vmatprep.subr.mxu0 0.0
  %3349 = vmatpush2.msra.mxu0 %v3130
  %3350 = vmatprep.subr.mxu0 0.0
  %3351 = vmatpush2.msra.mxu0 %v3129
  %3352 = vmatprep.subr.mxu0 0.0
  %3353 = vmatpush2.msra.mxu0 %v3128
  %3354 = vmatprep.subr.mxu0 0.0
  %3355 = vmatpush2.msra.mxu0 %v3127
  %3356 = vmatprep.subr.mxu0 0.0
  %3357 = vmatpush2.msra.mxu0 %v3126
  %3358 = vmatprep.mubr.f32.mxu0 %v3133
  %3359 = vmatmul.mubr.f32.gmra.mxu0 %v3002
  %v3360 = vpop.f32.mrf.mxu0
  %v3361 = vadd.f32 0.0, %v3360
  %v3362 = vpop.f32.mrf.mxu0
  %3363 = vmatprep.mubr.f32.mxu0 %v3136
  %3364 = vmatmul.mubr.f32.gmra.mxu0 %v3004
  %v3365 = vpop.f32.mrf.mxu0
  %v3366 = vadd.f32 0.0, %v3365
  %v3367 = vpop.f32.mrf.mxu0
  %3368 = vmatprep.mubr.f32.mxu0 %v3139
  %3369 = vmatmul.mubr.f32.gmra.mxu0 %v3006
  %v3370 = vpop.f32.mrf.mxu0
  %v3371 = vadd.f32 0.0, %v3370
  %v3372 = vpop.f32.mrf.mxu0
  %3373 = vmatprep.mubr.f32.mxu0 %v3142
  %3374 = vmatmul.mubr.f32.gmra.mxu0 %v3008
  %v3375 = vpop.f32.mrf.mxu0
  %v3376 = vadd.f32 0.0, %v3375
  %v3377 = vpop.f32.mrf.mxu0
  %3378 = vmatprep.mubr.f32.mxu0 %v3145
  %3379 = vmatmul.mubr.f32.gmra.mxu0 %v3010
  %v3380 = vpop.f32.mrf.mxu0
  %v3381 = vadd.f32 0.0, %v3380
  %v3382 = vpop.f32.mrf.mxu0
  %3383 = vmatprep.mubr.f32.mxu0 %v3148
  %3384 = vmatmul.mubr.f32.gmra.mxu0 %v3012
  %v3385 = vpop.f32.mrf.mxu0
  %v3386 = vadd.f32 0.0, %v3385
  %v3387 = vpop.f32.mrf.mxu0
  %3388 = vmatprep.mubr.f32.mxu0 %v3151
  %3389 = vmatmul.mubr.f32.gmra.mxu0 %v3014
  %v3390 = vpop.f32.mrf.mxu0
  %v3391 = vadd.f32 0.0, %v3390
  %v3392 = vpop.f32.mrf.mxu0
  %3393 = vmatprep.mubr.f32.mxu0 %v3154
  %3394 = vmatmul.mubr.f32.gmra.mxu0 %v3016
  %v3395 = vpop.f32.mrf.mxu0
  %v3396 = vadd.f32 0.0, %v3395
  %v3397 = vpop.f32.mrf.mxu0
  %3398 = vmatprep.mubr.f32.mxu0 %v3157
  %3399 = vmatmul.mubr.f32.gmra.mxu0 %v3018
  %v3400 = vpop.f32.mrf.mxu0
  %v3401 = vadd.f32 0.0, %v3400
  %v3402 = vpop.f32.mrf.mxu0
  %3403 = vmatprep.mubr.f32.mxu0 %v3160
  %3404 = vmatmul.mubr.f32.gmra.mxu0 %v3020
  %v3405 = vpop.f32.mrf.mxu0
  %v3406 = vadd.f32 0.0, %v3405
  %v3407 = vpop.f32.mrf.mxu0
  %3408 = vmatprep.mubr.f32.mxu0 %v3163
  %3409 = vmatmul.mubr.f32.gmra.mxu0 %v3022
  %v3410 = vpop.f32.mrf.mxu0
  %v3411 = vadd.f32 0.0, %v3410
  %v3412 = vpop.f32.mrf.mxu0
  %3413 = vmatprep.mubr.f32.mxu0 %v3166
  %3414 = vmatmul.mubr.f32.gmra.mxu0 %v3024
  %v3415 = vpop.f32.mrf.mxu0
  %v3416 = vadd.f32 0.0, %v3415
  %v3417 = vpop.f32.mrf.mxu0
  %3418 = vmatprep.mubr.f32.mxu0 %v3169
  %3419 = vmatmul.mubr.f32.gmra.mxu0 %v3026
  %v3420 = vpop.f32.mrf.mxu0
  %v3421 = vadd.f32 0.0, %v3420
  %v3422 = vpop.f32.mrf.mxu0
  %3423 = vmatprep.mubr.f32.mxu0 %v3172
  %3424 = vmatmul.mubr.f32.gmra.mxu0 %v3028
  %v3425 = vpop.f32.mrf.mxu0
  %v3426 = vadd.f32 0.0, %v3425
  %v3427 = vpop.f32.mrf.mxu0
  %3428 = vmatprep.mubr.f32.mxu0 %v3175
  %3429 = vmatmul.mubr.f32.gmra.mxu0 %v3030
  %v3430 = vpop.f32.mrf.mxu0
  %v3431 = vadd.f32 0.0, %v3430
  %v3432 = vpop.f32.mrf.mxu0
  %3433 = vmatprep.mubr.f32.mxu0 %v3178
  %3434 = vmatmul.mubr.f32.gmra.mxu0 %v3032
  %v3435 = vpop.f32.mrf.mxu0
  %v3436 = vadd.f32 0.0, %v3435
  %v3437 = vpop.f32.mrf.mxu0
  %3438 = vmatprep.mubr.f32.mxu0 %v3181
  %3439 = vmatmul.mubr.f32.gmra.mxu0 %v3034
  %v3440 = vpop.f32.mrf.mxu0
  %v3441 = vadd.f32 0.0, %v3440
  %v3442 = vpop.f32.mrf.mxu0
  %3443 = vmatprep.mubr.f32.mxu0 %v3184
  %3444 = vmatmul.mubr.f32.gmra.mxu0 %v3036
  %v3445 = vpop.f32.mrf.mxu0
  %v3446 = vadd.f32 0.0, %v3445
  %v3447 = vpop.f32.mrf.mxu0
  %3448 = vmatprep.mubr.f32.mxu0 %v3187
  %3449 = vmatmul.mubr.f32.gmra.mxu0 %v3038
  %v3450 = vpop.f32.mrf.mxu0
  %v3451 = vadd.f32 0.0, %v3450
  %v3452 = vpop.f32.mrf.mxu0
  %3453 = vmatprep.mubr.f32.mxu0 %v3190
  %3454 = vmatmul.mubr.f32.gmra.mxu0 %v3040
  %v3455 = vpop.f32.mrf.mxu0
  %v3456 = vadd.f32 0.0, %v3455
  %v3457 = vpop.f32.mrf.mxu0
  %3458 = vmatprep.mubr.f32.mxu0 %v3193
  %3459 = vmatmul.mubr.f32.gmra.mxu0 %v3042
  %v3460 = vpop.f32.mrf.mxu0
  %v3461 = vadd.f32 0.0, %v3460
  %v3462 = vpop.f32.mrf.mxu0
  %3463 = vmatprep.mubr.f32.mxu0 %v3196
  %3464 = vmatmul.mubr.f32.gmra.mxu0 %v3044
  %v3465 = vpop.f32.mrf.mxu0
  %v3466 = vadd.f32 0.0, %v3465
  %v3467 = vpop.f32.mrf.mxu0
  %3468 = vmatprep.mubr.f32.mxu0 %v3199
  %3469 = vmatmul.mubr.f32.gmra.mxu0 %v3046
  %v3470 = vpop.f32.mrf.mxu0
  %v3471 = vadd.f32 0.0, %v3470
  %v3472 = vpop.f32.mrf.mxu0
  %3473 = vmatprep.mubr.f32.mxu0 %v3202
  %3474 = vmatmul.mubr.f32.gmra.mxu0 %v3048
  %v3475 = vpop.f32.mrf.mxu0
  %v3476 = vadd.f32 0.0, %v3475
  %v3477 = vpop.f32.mrf.mxu0
  %3478 = vmatprep.mubr.f32.mxu0 %v3205
  %3479 = vmatmul.mubr.f32.gmra.mxu0 %v3050
  %v3480 = vpop.f32.mrf.mxu0
  %v3481 = vadd.f32 0.0, %v3480
  %v3482 = vpop.f32.mrf.mxu0
  %3483 = vmatprep.mubr.f32.mxu0 %v3208
  %3484 = vmatmul.mubr.f32.gmra.mxu0 %v3052
  %v3485 = vpop.f32.mrf.mxu0
  %v3486 = vadd.f32 0.0, %v3485
  %v3487 = vpop.f32.mrf.mxu0
  %3488 = vmatprep.mubr.f32.mxu0 %v3211
  %3489 = vmatmul.mubr.f32.gmra.mxu0 %v3054
  %v3490 = vpop.f32.mrf.mxu0
  %v3491 = vadd.f32 0.0, %v3490
  %v3492 = vpop.f32.mrf.mxu0
  %3493 = vmatprep.mubr.f32.mxu0 %v3214
  %3494 = vmatmul.mubr.f32.gmra.mxu0 %v3056
  %v3495 = vpop.f32.mrf.mxu0
  %v3496 = vadd.f32 0.0, %v3495
  %v3497 = vpop.f32.mrf.mxu0
  %3498 = vmatprep.mubr.f32.mxu0 %v3217
  %3499 = vmatmul.mubr.f32.gmra.mxu0 %v3058
  %v3500 = vpop.f32.mrf.mxu0
  %v3501 = vadd.f32 0.0, %v3500
  %v3502 = vpop.f32.mrf.mxu0
  %3503 = vmatprep.mubr.f32.mxu0 %v3220
  %3504 = vmatmul.mubr.f32.gmra.mxu0 %v3060
  %v3505 = vpop.f32.mrf.mxu0
  %v3506 = vadd.f32 0.0, %v3505
  %v3507 = vpop.f32.mrf.mxu0
  %3508 = vmatprep.mubr.f32.mxu0 %v3223
  %3509 = vmatmul.mubr.f32.gmra.mxu0 %v3062
  %v3510 = vpop.f32.mrf.mxu0
  %v3511 = vadd.f32 0.0, %v3510
  %v3512 = vpop.f32.mrf.mxu0
  %3513 = vmatprep.mubr.f32.mxu0 %v3226
  %3514 = vmatmul.mubr.f32.gmra.mxu0 %v3064
  %v3515 = vpop.f32.mrf.mxu0
  %v3516 = vadd.f32 0.0, %v3515
  %v3517 = vpop.f32.mrf.mxu0
  %3518 = vmatprep.mubr.f32.mxu0 %v3229
  %3519 = vmatmul.mubr.f32.gmra.mxu0 %v3066
  %v3520 = vpop.f32.mrf.mxu0
  %v3521 = vadd.f32 0.0, %v3520
  %v3522 = vpop.f32.mrf.mxu0
  %3523 = vmatprep.mubr.f32.mxu0 %v3232
  %3524 = vmatmul.mubr.f32.gmra.mxu0 %v3068
  %v3525 = vpop.f32.mrf.mxu0
  %v3526 = vadd.f32 0.0, %v3525
  %v3527 = vpop.f32.mrf.mxu0
  %3528 = vmatprep.mubr.f32.mxu0 %v3235
  %3529 = vmatmul.mubr.f32.gmra.mxu0 %v3070
  %v3530 = vpop.f32.mrf.mxu0
  %v3531 = vadd.f32 0.0, %v3530
  %v3532 = vpop.f32.mrf.mxu0
  %3533 = vmatprep.mubr.f32.mxu0 %v3238
  %3534 = vmatmul.mubr.f32.gmra.mxu0 %v3072
  %v3535 = vpop.f32.mrf.mxu0
  %v3536 = vadd.f32 0.0, %v3535
  %v3537 = vpop.f32.mrf.mxu0
  %3538 = vmatprep.mubr.f32.mxu0 %v3241
  %3539 = vmatmul.mubr.f32.gmra.mxu0 %v3074
  %v3540 = vpop.f32.mrf.mxu0
  %v3541 = vadd.f32 0.0, %v3540
  %v3542 = vpop.f32.mrf.mxu0
  %3543 = vmatprep.mubr.f32.mxu0 %v3244
  %3544 = vmatmul.mubr.f32.gmra.mxu0 %v3076
  %v3545 = vpop.f32.mrf.mxu0
  %v3546 = vadd.f32 0.0, %v3545
  %v3547 = vpop.f32.mrf.mxu0
  %3548 = vmatprep.mubr.f32.mxu0 %v3247
  %3549 = vmatmul.mubr.f32.gmra.mxu0 %v3078
  %v3550 = vpop.f32.mrf.mxu0
  %v3551 = vadd.f32 0.0, %v3550
  %v3552 = vpop.f32.mrf.mxu0
  %3553 = vmatprep.mubr.f32.mxu0 %v3250
  %3554 = vmatmul.mubr.f32.gmra.mxu0 %v3080
  %v3555 = vpop.f32.mrf.mxu0
  %v3556 = vadd.f32 0.0, %v3555
  %v3557 = vpop.f32.mrf.mxu0
  %3558 = vmatprep.mubr.f32.mxu0 %v3253
  %3559 = vmatmul.mubr.f32.gmra.mxu0 %v3082
  %v3560 = vpop.f32.mrf.mxu0
  %v3561 = vadd.f32 0.0, %v3560
  %v3562 = vpop.f32.mrf.mxu0
  %3563 = vmatprep.mubr.f32.mxu0 %v3256
  %3564 = vmatmul.mubr.f32.gmra.mxu0 %v3084
  %v3565 = vpop.f32.mrf.mxu0
  %v3566 = vadd.f32 0.0, %v3565
  %v3567 = vpop.f32.mrf.mxu0
  %3568 = vmatprep.mubr.f32.mxu0 %v3259
  %3569 = vmatmul.mubr.f32.gmra.mxu0 %v3086
  %v3570 = vpop.f32.mrf.mxu0
  %v3571 = vadd.f32 0.0, %v3570
  %v3572 = vpop.f32.mrf.mxu0
  %3573 = vmatprep.mubr.f32.mxu0 %v3262
  %3574 = vmatmul.mubr.f32.gmra.mxu0 %v3088
  %v3575 = vpop.f32.mrf.mxu0
  %v3576 = vadd.f32 0.0, %v3575
  %v3577 = vpop.f32.mrf.mxu0
  %3578 = vmatprep.mubr.f32.mxu0 %v3265
  %3579 = vmatmul.mubr.f32.gmra.mxu0 %v3090
  %v3580 = vpop.f32.mrf.mxu0
  %v3581 = vadd.f32 0.0, %v3580
  %v3582 = vpop.f32.mrf.mxu0
  %3583 = vmatprep.mubr.f32.mxu0 %v3268
  %3584 = vmatmul.mubr.f32.gmra.mxu0 %v3092
  %v3585 = vpop.f32.mrf.mxu0
  %v3586 = vadd.f32 0.0, %v3585
  %v3587 = vpop.f32.mrf.mxu0
  %3588 = vmatprep.mubr.f32.mxu0 %v3271
  %3589 = vmatmul.mubr.f32.gmra.mxu0 %v3094
  %v3590 = vpop.f32.mrf.mxu0
  %v3591 = vadd.f32 0.0, %v3590
  %v3592 = vpop.f32.mrf.mxu0
  %3593 = vmatprep.mubr.f32.mxu0 %v3274
  %3594 = vmatmul.mubr.f32.gmra.mxu0 %v3096
  %v3595 = vpop.f32.mrf.mxu0
  %v3596 = vadd.f32 0.0, %v3595
  %v3597 = vpop.f32.mrf.mxu0
  %3598 = vmatprep.mubr.f32.mxu0 %v3277
  %3599 = vmatmul.mubr.f32.gmra.mxu0 %v3098
  %v3600 = vpop.f32.mrf.mxu0
  %v3601 = vadd.f32 0.0, %v3600
  %v3602 = vpop.f32.mrf.mxu0
  %3603 = vmatprep.mubr.f32.mxu0 %v3280
  %3604 = vmatmul.mubr.f32.gmra.mxu0 %v3100
  %v3605 = vpop.f32.mrf.mxu0
  %v3606 = vadd.f32 0.0, %v3605
  %v3607 = vpop.f32.mrf.mxu0
  %3608 = vmatprep.mubr.f32.mxu0 %v3283
  %3609 = vmatmul.mubr.f32.gmra.mxu0 %v3102
  %v3610 = vpop.f32.mrf.mxu0
  %v3611 = vadd.f32 0.0, %v3610
  %v3612 = vpop.f32.mrf.mxu0
  %3613 = vmatprep.mubr.f32.mxu0 %v3286
  %3614 = vmatmul.mubr.f32.gmra.mxu0 %v3104
  %v3615 = vpop.f32.mrf.mxu0
  %v3616 = vadd.f32 0.0, %v3615
  %v3617 = vpop.f32.mrf.mxu0
  %3618 = vmatprep.mubr.f32.mxu0 %v3289
  %3619 = vmatmul.mubr.f32.gmra.mxu0 %v3106
  %v3620 = vpop.f32.mrf.mxu0
  %v3621 = vadd.f32 0.0, %v3620
  %v3622 = vpop.f32.mrf.mxu0
  %3623 = vmatprep.mubr.f32.mxu0 %v3292
  %3624 = vmatmul.mubr.f32.gmra.mxu0 %v3108
  %v3625 = vpop.f32.mrf.mxu0
  %v3626 = vadd.f32 0.0, %v3625
  %v3627 = vpop.f32.mrf.mxu0
  %3628 = vdwg.mxu0
  %s3629 = scalar_lea.vmem %s3, 168
  %v3630 = vld [vmem:[%s3629] sm:$0xff]
  %v3631 = vld [vmem:[%s3629 + $0x8] sm:$0xff]
  %v3632 = vld [vmem:[%s3629 + $0x10] sm:$0xff]
  %v3633 = vld [vmem:[%s3629 + $0x18] sm:$0xff]
  %v3634 = vld [vmem:[%s3629 + $0x20] sm:$0xff]
  %v3635 = vld [vmem:[%s3629 + $0x28] sm:$0xff]
  %v3636 = vld [vmem:[%s3629 + $0x30] sm:$0xff]
  %v3637 = vld [vmem:[%s3629 + $0x38] sm:$0xff]
  %v3638 = vld [vmem:[%s3629 + $0x40] sm:$0xff]
  %v3639 = vld [vmem:[%s3629 + $0x48] sm:$0xff]
  %v3640 = vld [vmem:[%s3629 + $0x50] sm:$0xff]
  %v3641 = vld [vmem:[%s3629 + $0x58] sm:$0xff]
  %v3642 = vld [vmem:[%s3629 + $0x60] sm:$0xff]
  %v3643 = vld [vmem:[%s3629 + $0x68] sm:$0xff]
  %v3644 = vld [vmem:[%s3629 + $0x70] sm:$0xff]
  %v3645 = vld [vmem:[%s3629 + $0x78] sm:$0xff]
  %v3646 = vld [vmem:[%s3629 + $0x80] sm:$0xff]
  %v3647 = vld [vmem:[%s3629 + $0x88] sm:$0xff]
  %v3648 = vld [vmem:[%s3629 + $0x90] sm:$0xff]
  %v3649 = vld [vmem:[%s3629 + $0x98] sm:$0xff]
  %v3650 = vld [vmem:[%s3629 + $0xa0] sm:$0xff]
  %3651 = vmatprep.subr.mxu0 0.0
  %3652 = vmatpush1.msra.mxu0 %v3645
  %3653 = vmatprep.subr.mxu0 0.0
  %3654 = vmatpush1.msra.mxu0 %v3644
  %3655 = vmatprep.subr.mxu0 0.0
  %3656 = vmatpush1.msra.mxu0 %v3643
  %3657 = vmatprep.subr.mxu0 0.0
  %3658 = vmatpush1.msra.mxu0 %v3642
  %3659 = vmatprep.subr.mxu0 0.0
  %3660 = vmatpush1.msra.mxu0 %v3641
  %3661 = vmatprep.subr.mxu0 0.0
  %3662 = vmatpush1.msra.mxu0 %v3640
  %3663 = vmatprep.subr.mxu0 0.0
  %3664 = vmatpush1.msra.mxu0 %v3639
  %3665 = vmatprep.subr.mxu0 0.0
  %3666 = vmatpush1.msra.mxu0 %v3638
  %3667 = vmatprep.subr.mxu0 0.0
  %3668 = vmatpush1.msra.mxu0 %v3637
  %3669 = vmatprep.subr.mxu0 0.0
  %3670 = vmatpush1.msra.mxu0 %v3636
  %3671 = vmatprep.subr.mxu0 0.0
  %3672 = vmatpush1.msra.mxu0 %v3635
  %3673 = vmatprep.subr.mxu0 0.0
  %3674 = vmatpush1.msra.mxu0 %v3634
  %3675 = vmatprep.subr.mxu0 0.0
  %3676 = vmatpush1.msra.mxu0 %v3633
  %3677 = vmatprep.subr.mxu0 0.0
  %3678 = vmatpush1.msra.mxu0 %v3632
  %3679 = vmatprep.subr.mxu0 0.0
  %3680 = vmatpush1.msra.mxu0 %v3631
  %3681 = vmatprep.subr.mxu0 0.0
  %3682 = vmatpush1.msra.mxu0 %v3630
  %3683 = vmatprep.subr.mxu0 0.0
  %3684 = vmatpush2.msra.mxu0 0.0
  %3685 = vmatprep.subr.mxu0 0.0
  %3686 = vmatpush2.msra.mxu0 0.0
  %3687 = vmatprep.subr.mxu0 0.0
  %3688 = vmatpush2.msra.mxu0 0.0
  %3689 = vmatprep.subr.mxu0 0.0
  %3690 = vmatpush2.msra.mxu0 0.0
  %3691 = vmatprep.subr.mxu0 0.0
  %3692 = vmatpush2.msra.mxu0 0.0
  %3693 = vmatprep.subr.mxu0 0.0
  %3694 = vmatpush2.msra.mxu0 0.0
  %3695 = vmatprep.subr.mxu0 0.0
  %3696 = vmatpush2.msra.mxu0 0.0
  %3697 = vmatprep.subr.mxu0 0.0
  %3698 = vmatpush2.msra.mxu0 0.0
  %3699 = vmatprep.subr.mxu0 0.0
  %3700 = vmatpush2.msra.mxu0 0.0
  %3701 = vmatprep.subr.mxu0 0.0
  %3702 = vmatpush2.msra.mxu0 0.0
  %3703 = vmatprep.subr.mxu0 0.0
  %3704 = vmatpush2.msra.mxu0 0.0
  %3705 = vmatprep.subr.mxu0 0.0
  %3706 = vmatpush2.msra.mxu0 %v3650
  %3707 = vmatprep.subr.mxu0 0.0
  %3708 = vmatpush2.msra.mxu0 %v3649
  %3709 = vmatprep.subr.mxu0 0.0
  %3710 = vmatpush2.msra.mxu0 %v3648
  %3711 = vmatprep.subr.mxu0 0.0
  %3712 = vmatpush2.msra.mxu0 %v3647
  %3713 = vmatprep.subr.mxu0 0.0
  %3714 = vmatpush2.msra.mxu0 %v3646
  %3715 = vmatprep.mubr.f32.mxu0 %v3133
  %3716 = vmatmul.mubr.f32.gmra.mxu0 %v3002
  %v3717 = vpop.f32.mrf.mxu0
  %v3718 = vadd.f32 0.0, %v3717
  %v3719 = vpop.f32.mrf.mxu0
  %3720 = vmatprep.mubr.f32.mxu0 %v3136
  %3721 = vmatmul.mubr.f32.gmra.mxu0 %v3004
  %v3722 = vpop.f32.mrf.mxu0
  %v3723 = vadd.f32 0.0, %v3722
  %v3724 = vpop.f32.mrf.mxu0
  %3725 = vmatprep.mubr.f32.mxu0 %v3139
  %3726 = vmatmul.mubr.f32.gmra.mxu0 %v3006
  %v3727 = vpop.f32.mrf.mxu0
  %v3728 = vadd.f32 0.0, %v3727
  %v3729 = vpop.f32.mrf.mxu0
  %3730 = vmatprep.mubr.f32.mxu0 %v3142
  %3731 = vmatmul.mubr.f32.gmra.mxu0 %v3008
  %v3732 = vpop.f32.mrf.mxu0
  %v3733 = vadd.f32 0.0, %v3732
  %v3734 = vpop.f32.mrf.mxu0
  %3735 = vmatprep.mubr.f32.mxu0 %v3145
  %3736 = vmatmul.mubr.f32.gmra.mxu0 %v3010
  %v3737 = vpop.f32.mrf.mxu0
  %v3738 = vadd.f32 0.0, %v3737
  %v3739 = vpop.f32.mrf.mxu0
  %3740 = vmatprep.mubr.f32.mxu0 %v3148
  %3741 = vmatmul.mubr.f32.gmra.mxu0 %v3012
  %v3742 = vpop.f32.mrf.mxu0
  %v3743 = vadd.f32 0.0, %v3742
  %v3744 = vpop.f32.mrf.mxu0
  %3745 = vmatprep.mubr.f32.mxu0 %v3151
  %3746 = vmatmul.mubr.f32.gmra.mxu0 %v3014
  %v3747 = vpop.f32.mrf.mxu0
  %v3748 = vadd.f32 0.0, %v3747
  %v3749 = vpop.f32.mrf.mxu0
  %3750 = vmatprep.mubr.f32.mxu0 %v3154
  %3751 = vmatmul.mubr.f32.gmra.mxu0 %v3016
  %v3752 = vpop.f32.mrf.mxu0
  %v3753 = vadd.f32 0.0, %v3752
  %v3754 = vpop.f32.mrf.mxu0
  %3755 = vmatprep.mubr.f32.mxu0 %v3157
  %3756 = vmatmul.mubr.f32.gmra.mxu0 %v3018
  %v3757 = vpop.f32.mrf.mxu0
  %v3758 = vadd.f32 0.0, %v3757
  %v3759 = vpop.f32.mrf.mxu0
  %3760 = vmatprep.mubr.f32.mxu0 %v3160
  %3761 = vmatmul.mubr.f32.gmra.mxu0 %v3020
  %v3762 = vpop.f32.mrf.mxu0
  %v3763 = vadd.f32 0.0, %v3762
  %v3764 = vpop.f32.mrf.mxu0
  %3765 = vmatprep.mubr.f32.mxu0 %v3163
  %3766 = vmatmul.mubr.f32.gmra.mxu0 %v3022
  %v3767 = vpop.f32.mrf.mxu0
  %v3768 = vadd.f32 0.0, %v3767
  %v3769 = vpop.f32.mrf.mxu0
  %3770 = vmatprep.mubr.f32.mxu0 %v3166
  %3771 = vmatmul.mubr.f32.gmra.mxu0 %v3024
  %v3772 = vpop.f32.mrf.mxu0
  %v3773 = vadd.f32 0.0, %v3772
  %v3774 = vpop.f32.mrf.mxu0
  %3775 = vmatprep.mubr.f32.mxu0 %v3169
  %3776 = vmatmul.mubr.f32.gmra.mxu0 %v3026
  %v3777 = vpop.f32.mrf.mxu0
  %v3778 = vadd.f32 0.0, %v3777
  %v3779 = vpop.f32.mrf.mxu0
  %3780 = vmatprep.mubr.f32.mxu0 %v3172
  %3781 = vmatmul.mubr.f32.gmra.mxu0 %v3028
  %v3782 = vpop.f32.mrf.mxu0
  %v3783 = vadd.f32 0.0, %v3782
  %v3784 = vpop.f32.mrf.mxu0
  %3785 = vmatprep.mubr.f32.mxu0 %v3175
  %3786 = vmatmul.mubr.f32.gmra.mxu0 %v3030
  %v3787 = vpop.f32.mrf.mxu0
  %v3788 = vadd.f32 0.0, %v3787
  %v3789 = vpop.f32.mrf.mxu0
  %3790 = vmatprep.mubr.f32.mxu0 %v3178
  %3791 = vmatmul.mubr.f32.gmra.mxu0 %v3032
  %v3792 = vpop.f32.mrf.mxu0
  %v3793 = vadd.f32 0.0, %v3792
  %v3794 = vpop.f32.mrf.mxu0
  %3795 = vmatprep.mubr.f32.mxu0 %v3181
  %3796 = vmatmul.mubr.f32.gmra.mxu0 %v3034
  %v3797 = vpop.f32.mrf.mxu0
  %v3798 = vadd.f32 0.0, %v3797
  %v3799 = vpop.f32.mrf.mxu0
  %3800 = vmatprep.mubr.f32.mxu0 %v3184
  %3801 = vmatmul.mubr.f32.gmra.mxu0 %v3036
  %v3802 = vpop.f32.mrf.mxu0
  %v3803 = vadd.f32 0.0, %v3802
  %v3804 = vpop.f32.mrf.mxu0
  %3805 = vmatprep.mubr.f32.mxu0 %v3187
  %3806 = vmatmul.mubr.f32.gmra.mxu0 %v3038
  %v3807 = vpop.f32.mrf.mxu0
  %v3808 = vadd.f32 0.0, %v3807
  %v3809 = vpop.f32.mrf.mxu0
  %3810 = vmatprep.mubr.f32.mxu0 %v3190
  %3811 = vmatmul.mubr.f32.gmra.mxu0 %v3040
  %v3812 = vpop.f32.mrf.mxu0
  %v3813 = vadd.f32 0.0, %v3812
  %v3814 = vpop.f32.mrf.mxu0
  %3815 = vmatprep.mubr.f32.mxu0 %v3193
  %3816 = vmatmul.mubr.f32.gmra.mxu0 %v3042
  %v3817 = vpop.f32.mrf.mxu0
  %v3818 = vadd.f32 0.0, %v3817
  %v3819 = vpop.f32.mrf.mxu0
  %3820 = vmatprep.mubr.f32.mxu0 %v3196
  %3821 = vmatmul.mubr.f32.gmra.mxu0 %v3044
  %v3822 = vpop.f32.mrf.mxu0
  %v3823 = vadd.f32 0.0, %v3822
  %v3824 = vpop.f32.mrf.mxu0
  %3825 = vmatprep.mubr.f32.mxu0 %v3199
  %3826 = vmatmul.mubr.f32.gmra.mxu0 %v3046
  %v3827 = vpop.f32.mrf.mxu0
  %v3828 = vadd.f32 0.0, %v3827
  %v3829 = vpop.f32.mrf.mxu0
  %3830 = vmatprep.mubr.f32.mxu0 %v3202
  %3831 = vmatmul.mubr.f32.gmra.mxu0 %v3048
  %v3832 = vpop.f32.mrf.mxu0
  %v3833 = vadd.f32 0.0, %v3832
  %v3834 = vpop.f32.mrf.mxu0
  %3835 = vmatprep.mubr.f32.mxu0 %v3205
  %3836 = vmatmul.mubr.f32.gmra.mxu0 %v3050
  %v3837 = vpop.f32.mrf.mxu0
  %v3838 = vadd.f32 0.0, %v3837
  %v3839 = vpop.f32.mrf.mxu0
  %3840 = vmatprep.mubr.f32.mxu0 %v3208
  %3841 = vmatmul.mubr.f32.gmra.mxu0 %v3052
  %v3842 = vpop.f32.mrf.mxu0
  %v3843 = vadd.f32 0.0, %v3842
  %v3844 = vpop.f32.mrf.mxu0
  %3845 = vmatprep.mubr.f32.mxu0 %v3211
  %3846 = vmatmul.mubr.f32.gmra.mxu0 %v3054
  %v3847 = vpop.f32.mrf.mxu0
  %v3848 = vadd.f32 0.0, %v3847
  %v3849 = vpop.f32.mrf.mxu0
  %3850 = vmatprep.mubr.f32.mxu0 %v3214
  %3851 = vmatmul.mubr.f32.gmra.mxu0 %v3056
  %v3852 = vpop.f32.mrf.mxu0
  %v3853 = vadd.f32 0.0, %v3852
  %v3854 = vpop.f32.mrf.mxu0
  %3855 = vmatprep.mubr.f32.mxu0 %v3217
  %3856 = vmatmul.mubr.f32.gmra.mxu0 %v3058
  %v3857 = vpop.f32.mrf.mxu0
  %v3858 = vadd.f32 0.0, %v3857
  %v3859 = vpop.f32.mrf.mxu0
  %3860 = vmatprep.mubr.f32.mxu0 %v3220
  %3861 = vmatmul.mubr.f32.gmra.mxu0 %v3060
  %v3862 = vpop.f32.mrf.mxu0
  %v3863 = vadd.f32 0.0, %v3862
  %v3864 = vpop.f32.mrf.mxu0
  %3865 = vmatprep.mubr.f32.mxu0 %v3223
  %3866 = vmatmul.mubr.f32.gmra.mxu0 %v3062
  %v3867 = vpop.f32.mrf.mxu0
  %v3868 = vadd.f32 0.0, %v3867
  %v3869 = vpop.f32.mrf.mxu0
  %3870 = vmatprep.mubr.f32.mxu0 %v3226
  %3871 = vmatmul.mubr.f32.gmra.mxu0 %v3064
  %v3872 = vpop.f32.mrf.mxu0
  %v3873 = vadd.f32 0.0, %v3872
  %v3874 = vpop.f32.mrf.mxu0
  %3875 = vmatprep.mubr.f32.mxu0 %v3229
  %3876 = vmatmul.mubr.f32.gmra.mxu0 %v3066
  %v3877 = vpop.f32.mrf.mxu0
  %v3878 = vadd.f32 0.0, %v3877
  %v3879 = vpop.f32.mrf.mxu0
  %3880 = vmatprep.mubr.f32.mxu0 %v3232
  %3881 = vmatmul.mubr.f32.gmra.mxu0 %v3068
  %v3882 = vpop.f32.mrf.mxu0
  %v3883 = vadd.f32 0.0, %v3882
  %v3884 = vpop.f32.mrf.mxu0
  %3885 = vmatprep.mubr.f32.mxu0 %v3235
  %3886 = vmatmul.mubr.f32.gmra.mxu0 %v3070
  %v3887 = vpop.f32.mrf.mxu0
  %v3888 = vadd.f32 0.0, %v3887
  %v3889 = vpop.f32.mrf.mxu0
  %3890 = vmatprep.mubr.f32.mxu0 %v3238
  %3891 = vmatmul.mubr.f32.gmra.mxu0 %v3072
  %v3892 = vpop.f32.mrf.mxu0
  %v3893 = vadd.f32 0.0, %v3892
  %v3894 = vpop.f32.mrf.mxu0
  %3895 = vmatprep.mubr.f32.mxu0 %v3241
  %3896 = vmatmul.mubr.f32.gmra.mxu0 %v3074
  %v3897 = vpop.f32.mrf.mxu0
  %v3898 = vadd.f32 0.0, %v3897
  %v3899 = vpop.f32.mrf.mxu0
  %3900 = vmatprep.mubr.f32.mxu0 %v3244
  %3901 = vmatmul.mubr.f32.gmra.mxu0 %v3076
  %v3902 = vpop.f32.mrf.mxu0
  %v3903 = vadd.f32 0.0, %v3902
  %v3904 = vpop.f32.mrf.mxu0
  %3905 = vmatprep.mubr.f32.mxu0 %v3247
  %3906 = vmatmul.mubr.f32.gmra.mxu0 %v3078
  %v3907 = vpop.f32.mrf.mxu0
  %v3908 = vadd.f32 0.0, %v3907
  %v3909 = vpop.f32.mrf.mxu0
  %3910 = vmatprep.mubr.f32.mxu0 %v3250
  %3911 = vmatmul.mubr.f32.gmra.mxu0 %v3080
  %v3912 = vpop.f32.mrf.mxu0
  %v3913 = vadd.f32 0.0, %v3912
  %v3914 = vpop.f32.mrf.mxu0
  %3915 = vmatprep.mubr.f32.mxu0 %v3253
  %3916 = vmatmul.mubr.f32.gmra.mxu0 %v3082
  %v3917 = vpop.f32.mrf.mxu0
  %v3918 = vadd.f32 0.0, %v3917
  %v3919 = vpop.f32.mrf.mxu0
  %3920 = vmatprep.mubr.f32.mxu0 %v3256
  %3921 = vmatmul.mubr.f32.gmra.mxu0 %v3084
  %v3922 = vpop.f32.mrf.mxu0
  %v3923 = vadd.f32 0.0, %v3922
  %v3924 = vpop.f32.mrf.mxu0
  %3925 = vmatprep.mubr.f32.mxu0 %v3259
  %3926 = vmatmul.mubr.f32.gmra.mxu0 %v3086
  %v3927 = vpop.f32.mrf.mxu0
  %v3928 = vadd.f32 0.0, %v3927
  %v3929 = vpop.f32.mrf.mxu0
  %3930 = vmatprep.mubr.f32.mxu0 %v3262
  %3931 = vmatmul.mubr.f32.gmra.mxu0 %v3088
  %v3932 = vpop.f32.mrf.mxu0
  %v3933 = vadd.f32 0.0, %v3932
  %v3934 = vpop.f32.mrf.mxu0
  %3935 = vmatprep.mubr.f32.mxu0 %v3265
  %3936 = vmatmul.mubr.f32.gmra.mxu0 %v3090
  %v3937 = vpop.f32.mrf.mxu0
  %v3938 = vadd.f32 0.0, %v3937
  %v3939 = vpop.f32.mrf.mxu0
  %3940 = vmatprep.mubr.f32.mxu0 %v3268
  %3941 = vmatmul.mubr.f32.gmra.mxu0 %v3092
  %v3942 = vpop.f32.mrf.mxu0
  %v3943 = vadd.f32 0.0, %v3942
  %v3944 = vpop.f32.mrf.mxu0
  %3945 = vmatprep.mubr.f32.mxu0 %v3271
  %3946 = vmatmul.mubr.f32.gmra.mxu0 %v3094
  %v3947 = vpop.f32.mrf.mxu0
  %v3948 = vadd.f32 0.0, %v3947
  %v3949 = vpop.f32.mrf.mxu0
  %3950 = vmatprep.mubr.f32.mxu0 %v3274
  %3951 = vmatmul.mubr.f32.gmra.mxu0 %v3096
  %v3952 = vpop.f32.mrf.mxu0
  %v3953 = vadd.f32 0.0, %v3952
  %v3954 = vpop.f32.mrf.mxu0
  %3955 = vmatprep.mubr.f32.mxu0 %v3277
  %3956 = vmatmul.mubr.f32.gmra.mxu0 %v3098
  %v3957 = vpop.f32.mrf.mxu0
  %v3958 = vadd.f32 0.0, %v3957
  %v3959 = vpop.f32.mrf.mxu0
  %3960 = vmatprep.mubr.f32.mxu0 %v3280
  %3961 = vmatmul.mubr.f32.gmra.mxu0 %v3100
  %v3962 = vpop.f32.mrf.mxu0
  %v3963 = vadd.f32 0.0, %v3962
  %v3964 = vpop.f32.mrf.mxu0
  %3965 = vmatprep.mubr.f32.mxu0 %v3283
  %3966 = vmatmul.mubr.f32.gmra.mxu0 %v3102
  %v3967 = vpop.f32.mrf.mxu0
  %v3968 = vadd.f32 0.0, %v3967
  %v3969 = vpop.f32.mrf.mxu0
  %3970 = vmatprep.mubr.f32.mxu0 %v3286
  %3971 = vmatmul.mubr.f32.gmra.mxu0 %v3104
  %v3972 = vpop.f32.mrf.mxu0
  %v3973 = vadd.f32 0.0, %v3972
  %v3974 = vpop.f32.mrf.mxu0
  %3975 = vmatprep.mubr.f32.mxu0 %v3289
  %3976 = vmatmul.mubr.f32.gmra.mxu0 %v3106
  %v3977 = vpop.f32.mrf.mxu0
  %v3978 = vadd.f32 0.0, %v3977
  %v3979 = vpop.f32.mrf.mxu0
  %3980 = vmatprep.mubr.f32.mxu0 %v3292
  %3981 = vmatmul.mubr.f32.gmra.mxu0 %v3108
  %v3982 = vpop.f32.mrf.mxu0
  %v3983 = vadd.f32 0.0, %v3982
  %v3984 = vpop.f32.mrf.mxu0
  %3985 = vdwg.mxu0
  %v3986 = vmax.f32 %v3361, %v3718
  %v3987 = vmax.f32 %v3366, %v3723
  %v3988 = vmax.f32 %v3371, %v3728
  %v3989 = vmax.f32 %v3376, %v3733
  %v3990 = vmax.f32 %v3381, %v3738
  %v3991 = vmax.f32 %v3386, %v3743
  %v3992 = vmax.f32 %v3391, %v3748
  %v3993 = vmax.f32 %v3396, %v3753
  %v3994 = vmax.f32 %v3401, %v3758
  %v3995 = vmax.f32 %v3406, %v3763
  %v3996 = vmax.f32 %v3411, %v3768
  %v3997 = vmax.f32 %v3416, %v3773
  %v3998 = vmax.f32 %v3421, %v3778
  %v3999 = vmax.f32 %v3426, %v3783
  %v4000 = vmax.f32 %v3431, %v3788
  %v4001 = vmax.f32 %v3436, %v3793
  %v4002 = vmax.f32 %v3441, %v3798
  %v4003 = vmax.f32 %v3446, %v3803
  %v4004 = vmax.f32 %v3451, %v3808
  %v4005 = vmax.f32 %v3456, %v3813
  %v4006 = vmax.f32 %v3461, %v3818
  %v4007 = vmax.f32 %v3466, %v3823
  %v4008 = vmax.f32 %v3471, %v3828
  %v4009 = vmax.f32 %v3476, %v3833
  %v4010 = vmax.f32 %v3481, %v3838
  %v4011 = vmax.f32 %v3486, %v3843
  %v4012 = vmax.f32 %v3491, %v3848
  %v4013 = vmax.f32 %v3496, %v3853
  %v4014 = vmax.f32 %v3501, %v3858
  %v4015 = vmax.f32 %v3506, %v3863
  %v4016 = vmax.f32 %v3511, %v3868
  %v4017 = vmax.f32 %v3516, %v3873
  %v4018 = vmax.f32 %v3521, %v3878
  %v4019 = vmax.f32 %v3526, %v3883
  %v4020 = vmax.f32 %v3531, %v3888
  %v4021 = vmax.f32 %v3536, %v3893
  %v4022 = vmax.f32 %v3541, %v3898
  %v4023 = vmax.f32 %v3546, %v3903
  %v4024 = vmax.f32 %v3551, %v3908
  %v4025 = vmax.f32 %v3556, %v3913
  %v4026 = vmax.f32 %v3561, %v3918
  %v4027 = vmax.f32 %v3566, %v3923
  %v4028 = vmax.f32 %v3571, %v3928
  %v4029 = vmax.f32 %v3576, %v3933
  %v4030 = vmax.f32 %v3581, %v3938
  %v4031 = vmax.f32 %v3586, %v3943
  %v4032 = vmax.f32 %v3591, %v3948
  %v4033 = vmax.f32 %v3596, %v3953
  %v4034 = vmax.f32 %v3601, %v3958
  %v4035 = vmax.f32 %v3606, %v3963
  %v4036 = vmax.f32 %v3611, %v3968
  %v4037 = vmax.f32 %v3616, %v3973
  %v4038 = vmax.f32 %v3621, %v3978
  %v4039 = vmax.f32 %v3626, %v3983
  %v4040 = vld [vmem:[%s4] sm:$0xff]
  %v4041 = vld [vmem:[%s4 + $0x8] sm:$0xff]
  %v4042 = vld [vmem:[%s4 + $0x10] sm:$0xff]
  %v4043 = vld [vmem:[%s4 + $0x18] sm:$0xff]
  %v4044 = vld [vmem:[%s4 + $0x20] sm:$0xff]
  %v4045 = vld [vmem:[%s4 + $0x28] sm:$0xff]
  %v4046 = vld [vmem:[%s4 + $0x30] sm:$0xff]
  %v4047 = vld [vmem:[%s4 + $0x38] sm:$0xff]
  %v4048 = vld [vmem:[%s4 + $0x40] sm:$0xff]
  %v4049 = vld [vmem:[%s4 + $0x48] sm:$0xff]
  %v4050 = vld [vmem:[%s4 + $0x50] sm:$0xff]
  %v4051 = vld [vmem:[%s4 + $0x58] sm:$0xff]
  %v4052 = vld [vmem:[%s4 + $0x60] sm:$0xff]
  %v4053 = vld [vmem:[%s4 + $0x68] sm:$0xff]
  %v4054 = vld [vmem:[%s4 + $0x70] sm:$0xff]
  %v4055 = vld [vmem:[%s4 + $0x78] sm:$0xff]
  %v4056 = vld [vmem:[%s4 + $0x80] sm:$0xff]
  %v4057 = vld [vmem:[%s4 + $0x88] sm:$0xff]
  %v4058 = vld [vmem:[%s4 + $0x90] sm:$0xff]
  %v4059 = vld [vmem:[%s4 + $0x98] sm:$0xff]
  %v4060 = vld [vmem:[%s4 + $0xa0] sm:$0xf]
  %v4061 = vld [vmem:[%s4 + $0xa8] sm:$0xf]
  %s4062 = scalar_lea.vmem %s4, 176
  %v4063 = vld [vmem:[%s4062] sm:$0xff]
  %v4064 = vld [vmem:[%s4062 + $0x8] sm:$0xff]
  %v4065 = vld [vmem:[%s4062 + $0x10] sm:$0xff]
  %v4066 = vld [vmem:[%s4062 + $0x18] sm:$0xff]
  %v4067 = vld [vmem:[%s4062 + $0x20] sm:$0xff]
  %v4068 = vld [vmem:[%s4062 + $0x28] sm:$0xff]
  %v4069 = vld [vmem:[%s4062 + $0x30] sm:$0xff]
  %v4070 = vld [vmem:[%s4062 + $0x38] sm:$0xff]
  %v4071 = vld [vmem:[%s4062 + $0x40] sm:$0xff]
  %v4072 = vld [vmem:[%s4062 + $0x48] sm:$0xff]
  %v4073 = vld [vmem:[%s4062 + $0x50] sm:$0xff]
  %v4074 = vld [vmem:[%s4062 + $0x58] sm:$0xff]
  %v4075 = vld [vmem:[%s4062 + $0x60] sm:$0xff]
  %v4076 = vld [vmem:[%s4062 + $0x68] sm:$0xff]
  %v4077 = vld [vmem:[%s4062 + $0x70] sm:$0xff]
  %v4078 = vld [vmem:[%s4062 + $0x78] sm:$0xff]
  %v4079 = vld [vmem:[%s4062 + $0x80] sm:$0xff]
  %v4080 = vld [vmem:[%s4062 + $0x88] sm:$0xff]
  %v4081 = vld [vmem:[%s4062 + $0x90] sm:$0xff]
  %v4082 = vld [vmem:[%s4062 + $0x98] sm:$0xff]
  %v4083 = vld [vmem:[%s4062 + $0xa0] sm:$0xf]
  %v4084 = vld [vmem:[%s4062 + $0xa8] sm:$0xf]
  %vm4085 = vcmask 687104
  %v4087 = vsel %vm4085, %v3990, 0
  %v4090 = vsel %vm4085, %v3991, 0
  %v4093 = vsel %vm4085, %v3992, 0
  %v4096 = vsel %vm4085, %v3993, 0
  %v4099 = vsel %vm4085, %v3994, 0
  %v4102 = vsel %vm4085, %v3995, 0
  %v4105 = vsel %vm4085, %v3996, 0
  %v4108 = vsel %vm4085, %v3997, 0
  %v4111 = vsel %vm4085, %v3998, 0
  %v4114 = vsel %vm4085, %v3999, 0
  %v4117 = vsel %vm4085, %v4000, 0
  %v4120 = vsel %vm4085, %v4001, 0
  %v4123 = vsel %vm4085, %v4002, 0
  %v4126 = vsel %vm4085, %v4003, 0
  %v4129 = vsel %vm4085, %v4004, 0
  %v4132 = vsel %vm4085, %v4005, 0
  %v4135 = vsel %vm4085, %v4006, 0
  %v4138 = vsel %vm4085, %v4007, 0
  %v4141 = vsel %vm4085, %v4008, 0
  %v4144 = vsel %vm4085, %v4009, 0
  %v4147 = vsel %vm4085, %v4010, 0
  %v4150 = vsel %vm4085, %v4011, 0
  %v4153 = vsel %vm4085, %v4012, 0
  %v4156 = vsel %vm4085, %v4013, 0
  %v4159 = vsel %vm4085, %v4014, 0
  %v4162 = vsel %vm4085, %v4015, 0
  %v4165 = vsel %vm4085, %v4016, 0
  %v4168 = vsel %vm4085, %v4017, 0
  %v4171 = vsel %vm4085, %v4018, 0
  %v4174 = vsel %vm4085, %v4019, 0
  %v4177 = vsel %vm4085, %v4020, 0
  %v4180 = vsel %vm4085, %v4021, 0
  %v4183 = vsel %vm4085, %v4022, 0
  %v4186 = vsel %vm4085, %v4023, 0
  %v4189 = vsel %vm4085, %v4024, 0
  %v4192 = vsel %vm4085, %v4025, 0
  %v4195 = vsel %vm4085, %v4026, 0
  %v4198 = vsel %vm4085, %v4027, 0
  %vm4200 = vcmask 1043456
  %v4202 = vsel %vm4200, %v4083, 0
  %v4205 = vsel %vm4200, %v4084, 0
  %4207 = vmatprep.subr.mxu0 0.0
  %4208 = vmatpush1.msra.mxu0 0.0
  %4209 = vmatprep.subr.mxu0 0.0
  %4210 = vmatpush1.msra.mxu0 0.0
  %4211 = vmatprep.subr.mxu0 0.0
  %4212 = vmatpush1.msra.mxu0 0.0
  %4213 = vmatprep.subr.mxu0 0.0
  %4214 = vmatpush1.msra.mxu0 0.0
  %4215 = vmatprep.subr.mxu0 0.0
  %4216 = vmatpush1.msra.mxu0 0.0
  %4217 = vmatprep.subr.mxu0 %v4205
  %4218 = vmatpush1.msra.mxu0 %v4202
  %4219 = vmatprep.subr.mxu0 %v4082
  %4220 = vmatpush1.msra.mxu0 %v4081
  %4221 = vmatprep.subr.mxu0 %v4080
  %4222 = vmatpush1.msra.mxu0 %v4079
  %4223 = vmatprep.subr.mxu0 %v4078
  %4224 = vmatpush1.msra.mxu0 %v4077
  %4225 = vmatprep.subr.mxu0 %v4076
  %4226 = vmatpush1.msra.mxu0 %v4075
  %4227 = vmatprep.subr.mxu0 %v4074
  %4228 = vmatpush1.msra.mxu0 %v4073
  %4229 = vmatprep.subr.mxu0 %v4072
  %4230 = vmatpush1.msra.mxu0 %v4071
  %4231 = vmatprep.subr.mxu0 %v4070
  %4232 = vmatpush1.msra.mxu0 %v4069
  %4233 = vmatprep.subr.mxu0 %v4068
  %4234 = vmatpush1.msra.mxu0 %v4067
  %4235 = vmatprep.subr.mxu0 %v4066
  %4236 = vmatpush1.msra.mxu0 %v4065
  %4237 = vmatprep.subr.mxu0 %v4064
  %4238 = vmatpush1.msra.mxu0 %v4063
  %4239 = vmatprep.subr.mxu0 0.0
  %4240 = vmatpush2.msra.mxu0 0.0
  %4241 = vmatprep.subr.mxu0 0.0
  %4242 = vmatpush2.msra.mxu0 0.0
  %4243 = vmatprep.subr.mxu0 0.0
  %4244 = vmatpush2.msra.mxu0 0.0
  %4245 = vmatprep.subr.mxu0 0.0
  %4246 = vmatpush2.msra.mxu0 0.0
  %4247 = vmatprep.subr.mxu0 0.0
  %4248 = vmatpush2.msra.mxu0 0.0
  %4249 = vmatprep.subr.mxu0 0.0
  %4250 = vmatpush2.msra.mxu0 0.0
  %4251 = vmatprep.subr.mxu0 0.0
  %4252 = vmatpush2.msra.mxu0 0.0
  %4253 = vmatprep.subr.mxu0 0.0
  %4254 = vmatpush2.msra.mxu0 0.0
  %4255 = vmatprep.subr.mxu0 0.0
  %4256 = vmatpush2.msra.mxu0 0.0
  %4257 = vmatprep.subr.mxu0 0.0
  %4258 = vmatpush2.msra.mxu0 0.0
  %4259 = vmatprep.subr.mxu0 0.0
  %4260 = vmatpush2.msra.mxu0 0.0
  %4261 = vmatprep.subr.mxu0 0.0
  %4262 = vmatpush2.msra.mxu0 0.0
  %4263 = vmatprep.subr.mxu0 0.0
  %4264 = vmatpush2.msra.mxu0 0.0
  %4265 = vmatprep.subr.mxu0 0.0
  %4266 = vmatpush2.msra.mxu0 0.0
  %4267 = vmatprep.subr.mxu0 0.0
  %4268 = vmatpush2.msra.mxu0 0.0
  %4269 = vmatprep.subr.mxu0 0.0
  %4270 = vmatpush2.msra.mxu0 0.0
  %4271 = vmatprep.mubr.f32.mxu0 0.0
  %4272 = vmatmul.mubr.f32.gmra.mxu0 %v4087
  %v4273 = vpop.f32.mrf.mxu0
  %v4274 = vadd.f32 0.0, %v4273
  %v4275 = vpop.f32.mrf.mxu0
  %v4276 = vadd.f32 0.0, %v4275
  %4277 = vmatprep.mubr.f32.mxu0 0.0
  %4278 = vmatmul.mubr.f32.gmra.mxu0 %v4090
  %v4279 = vpop.f32.mrf.mxu0
  %v4280 = vadd.f32 0.0, %v4279
  %v4281 = vpop.f32.mrf.mxu0
  %v4282 = vadd.f32 0.0, %v4281
  %4283 = vmatprep.mubr.f32.mxu0 0.0
  %4284 = vmatmul.mubr.f32.gmra.mxu0 %v4093
  %v4285 = vpop.f32.mrf.mxu0
  %v4286 = vadd.f32 0.0, %v4285
  %v4287 = vpop.f32.mrf.mxu0
  %v4288 = vadd.f32 0.0, %v4287
  %4289 = vmatprep.mubr.f32.mxu0 0.0
  %4290 = vmatmul.mubr.f32.gmra.mxu0 %v4096
  %v4291 = vpop.f32.mrf.mxu0
  %v4292 = vadd.f32 0.0, %v4291
  %v4293 = vpop.f32.mrf.mxu0
  %v4294 = vadd.f32 0.0, %v4293
  %4295 = vmatprep.mubr.f32.mxu0 0.0
  %4296 = vmatmul.mubr.f32.gmra.mxu0 %v4099
  %v4297 = vpop.f32.mrf.mxu0
  %v4298 = vadd.f32 0.0, %v4297
  %v4299 = vpop.f32.mrf.mxu0
  %v4300 = vadd.f32 0.0, %v4299
  %4301 = vmatprep.mubr.f32.mxu0 0.0
  %4302 = vmatmul.mubr.f32.gmra.mxu0 %v4102
  %v4303 = vpop.f32.mrf.mxu0
  %v4304 = vadd.f32 0.0, %v4303
  %v4305 = vpop.f32.mrf.mxu0
  %v4306 = vadd.f32 0.0, %v4305
  %4307 = vmatprep.mubr.f32.mxu0 0.0
  %4308 = vmatmul.mubr.f32.gmra.mxu0 %v4105
  %v4309 = vpop.f32.mrf.mxu0
  %v4310 = vadd.f32 0.0, %v4309
  %v4311 = vpop.f32.mrf.mxu0
  %v4312 = vadd.f32 0.0, %v4311
  %4313 = vmatprep.mubr.f32.mxu0 0.0
  %4314 = vmatmul.mubr.f32.gmra.mxu0 %v4108
  %v4315 = vpop.f32.mrf.mxu0
  %v4316 = vadd.f32 0.0, %v4315
  %v4317 = vpop.f32.mrf.mxu0
  %v4318 = vadd.f32 0.0, %v4317
  %4319 = vmatprep.mubr.f32.mxu0 0.0
  %4320 = vmatmul.mubr.f32.gmra.mxu0 %v4111
  %v4321 = vpop.f32.mrf.mxu0
  %v4322 = vadd.f32 0.0, %v4321
  %v4323 = vpop.f32.mrf.mxu0
  %v4324 = vadd.f32 0.0, %v4323
  %4325 = vmatprep.mubr.f32.mxu0 0.0
  %4326 = vmatmul.mubr.f32.gmra.mxu0 %v4114
  %v4327 = vpop.f32.mrf.mxu0
  %v4328 = vadd.f32 0.0, %v4327
  %v4329 = vpop.f32.mrf.mxu0
  %v4330 = vadd.f32 0.0, %v4329
  %4331 = vmatprep.mubr.f32.mxu0 0.0
  %4332 = vmatmul.mubr.f32.gmra.mxu0 %v4117
  %v4333 = vpop.f32.mrf.mxu0
  %v4334 = vadd.f32 0.0, %v4333
  %v4335 = vpop.f32.mrf.mxu0
  %v4336 = vadd.f32 0.0, %v4335
  %4337 = vmatprep.mubr.f32.mxu0 0.0
  %4338 = vmatmul.mubr.f32.gmra.mxu0 %v4120
  %v4339 = vpop.f32.mrf.mxu0
  %v4340 = vadd.f32 0.0, %v4339
  %v4341 = vpop.f32.mrf.mxu0
  %v4342 = vadd.f32 0.0, %v4341
  %4343 = vmatprep.mubr.f32.mxu0 0.0
  %4344 = vmatmul.mubr.f32.gmra.mxu0 %v4123
  %v4345 = vpop.f32.mrf.mxu0
  %v4346 = vadd.f32 0.0, %v4345
  %v4347 = vpop.f32.mrf.mxu0
  %v4348 = vadd.f32 0.0, %v4347
  %4349 = vmatprep.mubr.f32.mxu0 0.0
  %4350 = vmatmul.mubr.f32.gmra.mxu0 %v4126
  %v4351 = vpop.f32.mrf.mxu0
  %v4352 = vadd.f32 0.0, %v4351
  %v4353 = vpop.f32.mrf.mxu0
  %v4354 = vadd.f32 0.0, %v4353
  %4355 = vmatprep.mubr.f32.mxu0 0.0
  %4356 = vmatmul.mubr.f32.gmra.mxu0 %v4129
  %v4357 = vpop.f32.mrf.mxu0
  %v4358 = vadd.f32 0.0, %v4357
  %v4359 = vpop.f32.mrf.mxu0
  %v4360 = vadd.f32 0.0, %v4359
  %4361 = vmatprep.mubr.f32.mxu0 0.0
  %4362 = vmatmul.mubr.f32.gmra.mxu0 %v4132
  %v4363 = vpop.f32.mrf.mxu0
  %v4364 = vadd.f32 0.0, %v4363
  %v4365 = vpop.f32.mrf.mxu0
  %v4366 = vadd.f32 0.0, %v4365
  %4367 = vmatprep.mubr.f32.mxu0 0.0
  %4368 = vmatmul.mubr.f32.gmra.mxu0 %v4135
  %v4369 = vpop.f32.mrf.mxu0
  %v4370 = vadd.f32 0.0, %v4369
  %v4371 = vpop.f32.mrf.mxu0
  %v4372 = vadd.f32 0.0, %v4371
  %4373 = vmatprep.mubr.f32.mxu0 0.0
  %4374 = vmatmul.mubr.f32.gmra.mxu0 %v4138
  %v4375 = vpop.f32.mrf.mxu0
  %v4376 = vadd.f32 0.0, %v4375
  %v4377 = vpop.f32.mrf.mxu0
  %v4378 = vadd.f32 0.0, %v4377
  %4379 = vmatprep.mubr.f32.mxu0 0.0
  %4380 = vmatmul.mubr.f32.gmra.mxu0 %v4141
  %v4381 = vpop.f32.mrf.mxu0
  %v4382 = vadd.f32 0.0, %v4381
  %v4383 = vpop.f32.mrf.mxu0
  %v4384 = vadd.f32 0.0, %v4383
  %4385 = vmatprep.mubr.f32.mxu0 0.0
  %4386 = vmatmul.mubr.f32.gmra.mxu0 %v4144
  %v4387 = vpop.f32.mrf.mxu0
  %v4388 = vadd.f32 0.0, %v4387
  %v4389 = vpop.f32.mrf.mxu0
  %v4390 = vadd.f32 0.0, %v4389
  %4391 = vmatprep.mubr.f32.mxu0 0.0
  %4392 = vmatmul.mubr.f32.gmra.mxu0 %v4147
  %v4393 = vpop.f32.mrf.mxu0
  %v4394 = vadd.f32 0.0, %v4393
  %v4395 = vpop.f32.mrf.mxu0
  %v4396 = vadd.f32 0.0, %v4395
  %4397 = vmatprep.mubr.f32.mxu0 0.0
  %4398 = vmatmul.mubr.f32.gmra.mxu0 %v4150
  %v4399 = vpop.f32.mrf.mxu0
  %v4400 = vadd.f32 0.0, %v4399
  %v4401 = vpop.f32.mrf.mxu0
  %v4402 = vadd.f32 0.0, %v4401
  %4403 = vmatprep.mubr.f32.mxu0 0.0
  %4404 = vmatmul.mubr.f32.gmra.mxu0 %v4153
  %v4405 = vpop.f32.mrf.mxu0
  %v4406 = vadd.f32 0.0, %v4405
  %v4407 = vpop.f32.mrf.mxu0
  %v4408 = vadd.f32 0.0, %v4407
  %4409 = vmatprep.mubr.f32.mxu0 0.0
  %4410 = vmatmul.mubr.f32.gmra.mxu0 %v4156
  %v4411 = vpop.f32.mrf.mxu0
  %v4412 = vadd.f32 0.0, %v4411
  %v4413 = vpop.f32.mrf.mxu0
  %v4414 = vadd.f32 0.0, %v4413
  %4415 = vmatprep.mubr.f32.mxu0 0.0
  %4416 = vmatmul.mubr.f32.gmra.mxu0 %v4159
  %v4417 = vpop.f32.mrf.mxu0
  %v4418 = vadd.f32 0.0, %v4417
  %v4419 = vpop.f32.mrf.mxu0
  %v4420 = vadd.f32 0.0, %v4419
  %4421 = vmatprep.mubr.f32.mxu0 0.0
  %4422 = vmatmul.mubr.f32.gmra.mxu0 %v4162
  %v4423 = vpop.f32.mrf.mxu0
  %v4424 = vadd.f32 0.0, %v4423
  %v4425 = vpop.f32.mrf.mxu0
  %v4426 = vadd.f32 0.0, %v4425
  %4427 = vmatprep.mubr.f32.mxu0 0.0
  %4428 = vmatmul.mubr.f32.gmra.mxu0 %v4165
  %v4429 = vpop.f32.mrf.mxu0
  %v4430 = vadd.f32 0.0, %v4429
  %v4431 = vpop.f32.mrf.mxu0
  %v4432 = vadd.f32 0.0, %v4431
  %4433 = vmatprep.mubr.f32.mxu0 0.0
  %4434 = vmatmul.mubr.f32.gmra.mxu0 %v4168
  %v4435 = vpop.f32.mrf.mxu0
  %v4436 = vadd.f32 0.0, %v4435
  %v4437 = vpop.f32.mrf.mxu0
  %v4438 = vadd.f32 0.0, %v4437
  %4439 = vmatprep.mubr.f32.mxu0 0.0
  %4440 = vmatmul.mubr.f32.gmra.mxu0 %v4171
  %v4441 = vpop.f32.mrf.mxu0
  %v4442 = vadd.f32 0.0, %v4441
  %v4443 = vpop.f32.mrf.mxu0
  %v4444 = vadd.f32 0.0, %v4443
  %4445 = vmatprep.mubr.f32.mxu0 0.0
  %4446 = vmatmul.mubr.f32.gmra.mxu0 %v4174
  %v4447 = vpop.f32.mrf.mxu0
  %v4448 = vadd.f32 0.0, %v4447
  %v4449 = vpop.f32.mrf.mxu0
  %v4450 = vadd.f32 0.0, %v4449
  %4451 = vmatprep.mubr.f32.mxu0 0.0
  %4452 = vmatmul.mubr.f32.gmra.mxu0 %v4177
  %v4453 = vpop.f32.mrf.mxu0
  %v4454 = vadd.f32 0.0, %v4453
  %v4455 = vpop.f32.mrf.mxu0
  %v4456 = vadd.f32 0.0, %v4455
  %4457 = vmatprep.mubr.f32.mxu0 0.0
  %4458 = vmatmul.mubr.f32.gmra.mxu0 %v4180
  %v4459 = vpop.f32.mrf.mxu0
  %v4460 = vadd.f32 0.0, %v4459
  %v4461 = vpop.f32.mrf.mxu0
  %v4462 = vadd.f32 0.0, %v4461
  %4463 = vmatprep.mubr.f32.mxu0 0.0
  %4464 = vmatmul.mubr.f32.gmra.mxu0 %v4183
  %v4465 = vpop.f32.mrf.mxu0
  %v4466 = vadd.f32 0.0, %v4465
  %v4467 = vpop.f32.mrf.mxu0
  %v4468 = vadd.f32 0.0, %v4467
  %4469 = vmatprep.mubr.f32.mxu0 0.0
  %4470 = vmatmul.mubr.f32.gmra.mxu0 %v4186
  %v4471 = vpop.f32.mrf.mxu0
  %v4472 = vadd.f32 0.0, %v4471
  %v4473 = vpop.f32.mrf.mxu0
  %v4474 = vadd.f32 0.0, %v4473
  %4475 = vmatprep.mubr.f32.mxu0 0.0
  %4476 = vmatmul.mubr.f32.gmra.mxu0 %v4189
  %v4477 = vpop.f32.mrf.mxu0
  %v4478 = vadd.f32 0.0, %v4477
  %v4479 = vpop.f32.mrf.mxu0
  %v4480 = vadd.f32 0.0, %v4479
  %4481 = vmatprep.mubr.f32.mxu0 0.0
  %4482 = vmatmul.mubr.f32.gmra.mxu0 %v4192
  %v4483 = vpop.f32.mrf.mxu0
  %v4484 = vadd.f32 0.0, %v4483
  %v4485 = vpop.f32.mrf.mxu0
  %v4486 = vadd.f32 0.0, %v4485
  %4487 = vmatprep.mubr.f32.mxu0 0.0
  %4488 = vmatmul.mubr.f32.gmra.mxu0 %v4195
  %v4489 = vpop.f32.mrf.mxu0
  %v4490 = vadd.f32 0.0, %v4489
  %v4491 = vpop.f32.mrf.mxu0
  %v4492 = vadd.f32 0.0, %v4491
  %4493 = vmatprep.mubr.f32.mxu0 0.0
  %4494 = vmatmul.mubr.f32.gmra.mxu0 %v4198
  %v4495 = vpop.f32.mrf.mxu0
  %v4496 = vadd.f32 0.0, %v4495
  %v4497 = vpop.f32.mrf.mxu0
  %v4498 = vadd.f32 0.0, %v4497
  %4499 = vdwg.mxu0
  %v4501 = vsel %vm4085, %v3986, 0
  %v4504 = vsel %vm4085, %v3987, 0
  %v4507 = vsel %vm4085, %v3988, 0
  %v4510 = vsel %vm4085, %v3989, 0
  %v4513 = vsel %vm4200, %v4060, 0
  %v4516 = vsel %vm4200, %v4061, 0
  %4518 = vmatprep.subr.mxu0 0.0
  %4519 = vmatpush1.msra.mxu0 0.0
  %4520 = vmatprep.subr.mxu0 0.0
  %4521 = vmatpush1.msra.mxu0 0.0
  %4522 = vmatprep.subr.mxu0 0.0
  %4523 = vmatpush1.msra.mxu0 0.0
  %4524 = vmatprep.subr.mxu0 0.0
  %4525 = vmatpush1.msra.mxu0 0.0
  %4526 = vmatprep.subr.mxu0 0.0
  %4527 = vmatpush1.msra.mxu0 0.0
  %4528 = vmatprep.subr.mxu0 %v4516
  %4529 = vmatpush1.msra.mxu0 %v4513
  %4530 = vmatprep.subr.mxu0 %v4059
  %4531 = vmatpush1.msra.mxu0 %v4058
  %4532 = vmatprep.subr.mxu0 %v4057
  %4533 = vmatpush1.msra.mxu0 %v4056
  %4534 = vmatprep.subr.mxu0 %v4055
  %4535 = vmatpush1.msra.mxu0 %v4054
  %4536 = vmatprep.subr.mxu0 %v4053
  %4537 = vmatpush1.msra.mxu0 %v4052
  %4538 = vmatprep.subr.mxu0 %v4051
  %4539 = vmatpush1.msra.mxu0 %v4050
  %4540 = vmatprep.subr.mxu0 %v4049
  %4541 = vmatpush1.msra.mxu0 %v4048
  %4542 = vmatprep.subr.mxu0 %v4047
  %4543 = vmatpush1.msra.mxu0 %v4046
  %4544 = vmatprep.subr.mxu0 %v4045
  %4545 = vmatpush1.msra.mxu0 %v4044
  %4546 = vmatprep.subr.mxu0 %v4043
  %4547 = vmatpush1.msra.mxu0 %v4042
  %4548 = vmatprep.subr.mxu0 %v4041
  %4549 = vmatpush1.msra.mxu0 %v4040
  %4550 = vmatprep.subr.mxu0 0.0
  %4551 = vmatpush2.msra.mxu0 0.0
  %4552 = vmatprep.subr.mxu0 0.0
  %4553 = vmatpush2.msra.mxu0 0.0
  %4554 = vmatprep.subr.mxu0 0.0
  %4555 = vmatpush2.msra.mxu0 0.0
  %4556 = vmatprep.subr.mxu0 0.0
  %4557 = vmatpush2.msra.mxu0 0.0
  %4558 = vmatprep.subr.mxu0 0.0
  %4559 = vmatpush2.msra.mxu0 0.0
  %4560 = vmatprep.subr.mxu0 0.0
  %4561 = vmatpush2.msra.mxu0 0.0
  %4562 = vmatprep.subr.mxu0 0.0
  %4563 = vmatpush2.msra.mxu0 0.0
  %4564 = vmatprep.subr.mxu0 0.0
  %4565 = vmatpush2.msra.mxu0 0.0
  %4566 = vmatprep.subr.mxu0 0.0
  %4567 = vmatpush2.msra.mxu0 0.0
  %4568 = vmatprep.subr.mxu0 0.0
  %4569 = vmatpush2.msra.mxu0 0.0
  %4570 = vmatprep.subr.mxu0 0.0
  %4571 = vmatpush2.msra.mxu0 0.0
  %4572 = vmatprep.subr.mxu0 0.0
  %4573 = vmatpush2.msra.mxu0 0.0
  %4574 = vmatprep.subr.mxu0 0.0
  %4575 = vmatpush2.msra.mxu0 0.0
  %4576 = vmatprep.subr.mxu0 0.0
  %4577 = vmatpush2.msra.mxu0 0.0
  %4578 = vmatprep.subr.mxu0 0.0
  %4579 = vmatpush2.msra.mxu0 0.0
  %4580 = vmatprep.subr.mxu0 0.0
  %4581 = vmatpush2.msra.mxu0 0.0
  %4582 = vmatprep.mubr.f32.mxu0 0.0
  %4583 = vmatmul.mubr.f32.gmra.mxu0 %v4501
  %v4584 = vpop.f32.mrf.mxu0
  %v4585 = vadd.f32 %v4274, %v4584
  %v4586 = vpop.f32.mrf.mxu0
  %v4587 = vadd.f32 %v4276, %v4586
  %4588 = vmatprep.mubr.f32.mxu0 0.0
  %4589 = vmatmul.mubr.f32.gmra.mxu0 %v4504
  %v4590 = vpop.f32.mrf.mxu0
  %v4591 = vadd.f32 %v4280, %v4590
  %v4592 = vpop.f32.mrf.mxu0
  %v4593 = vadd.f32 %v4282, %v4592
  %4594 = vmatprep.mubr.f32.mxu0 0.0
  %4595 = vmatmul.mubr.f32.gmra.mxu0 %v4507
  %v4596 = vpop.f32.mrf.mxu0
  %v4597 = vadd.f32 %v4286, %v4596
  %v4598 = vpop.f32.mrf.mxu0
  %v4599 = vadd.f32 %v4288, %v4598
  %4600 = vmatprep.mubr.f32.mxu0 0.0
  %4601 = vmatmul.mubr.f32.gmra.mxu0 %v4510
  %v4602 = vpop.f32.mrf.mxu0
  %v4603 = vadd.f32 %v4292, %v4602
  %v4604 = vpop.f32.mrf.mxu0
  %v4605 = vadd.f32 %v4294, %v4604
  %4606 = vmatprep.mubr.f32.mxu0 0.0
  %4607 = vmatmul.mubr.f32.gmra.mxu0 %v4087
  %v4608 = vpop.f32.mrf.mxu0
  %v4609 = vadd.f32 %v4298, %v4608
  %v4610 = vpop.f32.mrf.mxu0
  %v4611 = vadd.f32 %v4300, %v4610
  %4612 = vmatprep.mubr.f32.mxu0 0.0
  %4613 = vmatmul.mubr.f32.gmra.mxu0 %v4090
  %v4614 = vpop.f32.mrf.mxu0
  %v4615 = vadd.f32 %v4304, %v4614
  %v4616 = vpop.f32.mrf.mxu0
  %v4617 = vadd.f32 %v4306, %v4616
  %4618 = vmatprep.mubr.f32.mxu0 0.0
  %4619 = vmatmul.mubr.f32.gmra.mxu0 %v4093
  %v4620 = vpop.f32.mrf.mxu0
  %v4621 = vadd.f32 %v4310, %v4620
  %v4622 = vpop.f32.mrf.mxu0
  %v4623 = vadd.f32 %v4312, %v4622
  %4624 = vmatprep.mubr.f32.mxu0 0.0
  %4625 = vmatmul.mubr.f32.gmra.mxu0 %v4096
  %v4626 = vpop.f32.mrf.mxu0
  %v4627 = vadd.f32 %v4316, %v4626
  %v4628 = vpop.f32.mrf.mxu0
  %v4629 = vadd.f32 %v4318, %v4628
  %4630 = vmatprep.mubr.f32.mxu0 0.0
  %4631 = vmatmul.mubr.f32.gmra.mxu0 %v4099
  %v4632 = vpop.f32.mrf.mxu0
  %v4633 = vadd.f32 %v4322, %v4632
  %v4634 = vpop.f32.mrf.mxu0
  %v4635 = vadd.f32 %v4324, %v4634
  %4636 = vmatprep.mubr.f32.mxu0 0.0
  %4637 = vmatmul.mubr.f32.gmra.mxu0 %v4102
  %v4638 = vpop.f32.mrf.mxu0
  %v4639 = vadd.f32 %v4328, %v4638
  %v4640 = vpop.f32.mrf.mxu0
  %v4641 = vadd.f32 %v4330, %v4640
  %4642 = vmatprep.mubr.f32.mxu0 0.0
  %4643 = vmatmul.mubr.f32.gmra.mxu0 %v4105
  %v4644 = vpop.f32.mrf.mxu0
  %v4645 = vadd.f32 %v4334, %v4644
  %v4646 = vpop.f32.mrf.mxu0
  %v4647 = vadd.f32 %v4336, %v4646
  %4648 = vmatprep.mubr.f32.mxu0 0.0
  %4649 = vmatmul.mubr.f32.gmra.mxu0 %v4108
  %v4650 = vpop.f32.mrf.mxu0
  %v4651 = vadd.f32 %v4340, %v4650
  %v4652 = vpop.f32.mrf.mxu0
  %v4653 = vadd.f32 %v4342, %v4652
  %4654 = vmatprep.mubr.f32.mxu0 0.0
  %4655 = vmatmul.mubr.f32.gmra.mxu0 %v4111
  %v4656 = vpop.f32.mrf.mxu0
  %v4657 = vadd.f32 %v4346, %v4656
  %v4658 = vpop.f32.mrf.mxu0
  %v4659 = vadd.f32 %v4348, %v4658
  %4660 = vmatprep.mubr.f32.mxu0 0.0
  %4661 = vmatmul.mubr.f32.gmra.mxu0 %v4114
  %v4662 = vpop.f32.mrf.mxu0
  %v4663 = vadd.f32 %v4352, %v4662
  %v4664 = vpop.f32.mrf.mxu0
  %v4665 = vadd.f32 %v4354, %v4664
  %4666 = vmatprep.mubr.f32.mxu0 0.0
  %4667 = vmatmul.mubr.f32.gmra.mxu0 %v4117
  %v4668 = vpop.f32.mrf.mxu0
  %v4669 = vadd.f32 %v4358, %v4668
  %v4670 = vpop.f32.mrf.mxu0
  %v4671 = vadd.f32 %v4360, %v4670
  %4672 = vmatprep.mubr.f32.mxu0 0.0
  %4673 = vmatmul.mubr.f32.gmra.mxu0 %v4120
  %v4674 = vpop.f32.mrf.mxu0
  %v4675 = vadd.f32 %v4364, %v4674
  %v4676 = vpop.f32.mrf.mxu0
  %v4677 = vadd.f32 %v4366, %v4676
  %4678 = vmatprep.mubr.f32.mxu0 0.0
  %4679 = vmatmul.mubr.f32.gmra.mxu0 %v4123
  %v4680 = vpop.f32.mrf.mxu0
  %v4681 = vadd.f32 %v4370, %v4680
  %v4682 = vpop.f32.mrf.mxu0
  %v4683 = vadd.f32 %v4372, %v4682
  %4684 = vmatprep.mubr.f32.mxu0 0.0
  %4685 = vmatmul.mubr.f32.gmra.mxu0 %v4126
  %v4686 = vpop.f32.mrf.mxu0
  %v4687 = vadd.f32 %v4376, %v4686
  %v4688 = vpop.f32.mrf.mxu0
  %v4689 = vadd.f32 %v4378, %v4688
  %4690 = vmatprep.mubr.f32.mxu0 0.0
  %4691 = vmatmul.mubr.f32.gmra.mxu0 %v4129
  %v4692 = vpop.f32.mrf.mxu0
  %v4693 = vadd.f32 %v4382, %v4692
  %v4694 = vpop.f32.mrf.mxu0
  %v4695 = vadd.f32 %v4384, %v4694
  %4696 = vmatprep.mubr.f32.mxu0 0.0
  %4697 = vmatmul.mubr.f32.gmra.mxu0 %v4132
  %v4698 = vpop.f32.mrf.mxu0
  %v4699 = vadd.f32 %v4388, %v4698
  %v4700 = vpop.f32.mrf.mxu0
  %v4701 = vadd.f32 %v4390, %v4700
  %4702 = vmatprep.mubr.f32.mxu0 0.0
  %4703 = vmatmul.mubr.f32.gmra.mxu0 %v4135
  %v4704 = vpop.f32.mrf.mxu0
  %v4705 = vadd.f32 %v4394, %v4704
  %v4706 = vpop.f32.mrf.mxu0
  %v4707 = vadd.f32 %v4396, %v4706
  %4708 = vmatprep.mubr.f32.mxu0 0.0
  %4709 = vmatmul.mubr.f32.gmra.mxu0 %v4138
  %v4710 = vpop.f32.mrf.mxu0
  %v4711 = vadd.f32 %v4400, %v4710
  %v4712 = vpop.f32.mrf.mxu0
  %v4713 = vadd.f32 %v4402, %v4712
  %4714 = vmatprep.mubr.f32.mxu0 0.0
  %4715 = vmatmul.mubr.f32.gmra.mxu0 %v4141
  %v4716 = vpop.f32.mrf.mxu0
  %v4717 = vadd.f32 %v4406, %v4716
  %v4718 = vpop.f32.mrf.mxu0
  %v4719 = vadd.f32 %v4408, %v4718
  %4720 = vmatprep.mubr.f32.mxu0 0.0
  %4721 = vmatmul.mubr.f32.gmra.mxu0 %v4144
  %v4722 = vpop.f32.mrf.mxu0
  %v4723 = vadd.f32 %v4412, %v4722
  %v4724 = vpop.f32.mrf.mxu0
  %v4725 = vadd.f32 %v4414, %v4724
  %4726 = vmatprep.mubr.f32.mxu0 0.0
  %4727 = vmatmul.mubr.f32.gmra.mxu0 %v4147
  %v4728 = vpop.f32.mrf.mxu0
  %v4729 = vadd.f32 %v4418, %v4728
  %v4730 = vpop.f32.mrf.mxu0
  %v4731 = vadd.f32 %v4420, %v4730
  %4732 = vmatprep.mubr.f32.mxu0 0.0
  %4733 = vmatmul.mubr.f32.gmra.mxu0 %v4150
  %v4734 = vpop.f32.mrf.mxu0
  %v4735 = vadd.f32 %v4424, %v4734
  %v4736 = vpop.f32.mrf.mxu0
  %v4737 = vadd.f32 %v4426, %v4736
  %4738 = vmatprep.mubr.f32.mxu0 0.0
  %4739 = vmatmul.mubr.f32.gmra.mxu0 %v4153
  %v4740 = vpop.f32.mrf.mxu0
  %v4741 = vadd.f32 %v4430, %v4740
  %v4742 = vpop.f32.mrf.mxu0
  %v4743 = vadd.f32 %v4432, %v4742
  %4744 = vmatprep.mubr.f32.mxu0 0.0
  %4745 = vmatmul.mubr.f32.gmra.mxu0 %v4156
  %v4746 = vpop.f32.mrf.mxu0
  %v4747 = vadd.f32 %v4436, %v4746
  %v4748 = vpop.f32.mrf.mxu0
  %v4749 = vadd.f32 %v4438, %v4748
  %4750 = vmatprep.mubr.f32.mxu0 0.0
  %4751 = vmatmul.mubr.f32.gmra.mxu0 %v4159
  %v4752 = vpop.f32.mrf.mxu0
  %v4753 = vadd.f32 %v4442, %v4752
  %v4754 = vpop.f32.mrf.mxu0
  %v4755 = vadd.f32 %v4444, %v4754
  %4756 = vmatprep.mubr.f32.mxu0 0.0
  %4757 = vmatmul.mubr.f32.gmra.mxu0 %v4162
  %v4758 = vpop.f32.mrf.mxu0
  %v4759 = vadd.f32 %v4448, %v4758
  %v4760 = vpop.f32.mrf.mxu0
  %v4761 = vadd.f32 %v4450, %v4760
  %4762 = vmatprep.mubr.f32.mxu0 0.0
  %4763 = vmatmul.mubr.f32.gmra.mxu0 %v4165
  %v4764 = vpop.f32.mrf.mxu0
  %v4765 = vadd.f32 %v4454, %v4764
  %v4766 = vpop.f32.mrf.mxu0
  %v4767 = vadd.f32 %v4456, %v4766
  %4768 = vmatprep.mubr.f32.mxu0 0.0
  %4769 = vmatmul.mubr.f32.gmra.mxu0 %v4168
  %v4770 = vpop.f32.mrf.mxu0
  %v4771 = vadd.f32 %v4460, %v4770
  %v4772 = vpop.f32.mrf.mxu0
  %v4773 = vadd.f32 %v4462, %v4772
  %4774 = vmatprep.mubr.f32.mxu0 0.0
  %4775 = vmatmul.mubr.f32.gmra.mxu0 %v4171
  %v4776 = vpop.f32.mrf.mxu0
  %v4777 = vadd.f32 %v4466, %v4776
  %v4778 = vpop.f32.mrf.mxu0
  %v4779 = vadd.f32 %v4468, %v4778
  %4780 = vmatprep.mubr.f32.mxu0 0.0
  %4781 = vmatmul.mubr.f32.gmra.mxu0 %v4174
  %v4782 = vpop.f32.mrf.mxu0
  %v4783 = vadd.f32 %v4472, %v4782
  %v4784 = vpop.f32.mrf.mxu0
  %v4785 = vadd.f32 %v4474, %v4784
  %4786 = vmatprep.mubr.f32.mxu0 0.0
  %4787 = vmatmul.mubr.f32.gmra.mxu0 %v4177
  %v4788 = vpop.f32.mrf.mxu0
  %v4789 = vadd.f32 %v4478, %v4788
  %v4790 = vpop.f32.mrf.mxu0
  %v4791 = vadd.f32 %v4480, %v4790
  %4792 = vmatprep.mubr.f32.mxu0 0.0
  %4793 = vmatmul.mubr.f32.gmra.mxu0 %v4180
  %v4794 = vpop.f32.mrf.mxu0
  %v4795 = vadd.f32 %v4484, %v4794
  %v4796 = vpop.f32.mrf.mxu0
  %v4797 = vadd.f32 %v4486, %v4796
  %4798 = vmatprep.mubr.f32.mxu0 0.0
  %4799 = vmatmul.mubr.f32.gmra.mxu0 %v4183
  %v4800 = vpop.f32.mrf.mxu0
  %v4801 = vadd.f32 %v4490, %v4800
  %v4802 = vpop.f32.mrf.mxu0
  %v4803 = vadd.f32 %v4492, %v4802
  %4804 = vmatprep.mubr.f32.mxu0 0.0
  %4805 = vmatmul.mubr.f32.gmra.mxu0 %v4186
  %v4806 = vpop.f32.mrf.mxu0
  %v4807 = vadd.f32 %v4496, %v4806
  %v4808 = vpop.f32.mrf.mxu0
  %v4809 = vadd.f32 %v4498, %v4808
  %4810 = vdwg.mxu0
  %s4811 = scalar_lea.vmem %s4, 352
  %v4812 = vld [vmem:[%s4811] sm:$0xff]
  %v4813 = vld [vmem:[%s4811 + $0x8] sm:$0xff]
  %v4814 = vld [vmem:[%s4811 + $0x10] sm:$0xff]
  %v4815 = vld [vmem:[%s4811 + $0x18] sm:$0xff]
  %v4816 = vld [vmem:[%s4811 + $0x20] sm:$0xff]
  %v4817 = vld [vmem:[%s4811 + $0x28] sm:$0xff]
  %v4818 = vld [vmem:[%s4811 + $0x30] sm:$0xff]
  %v4819 = vld [vmem:[%s4811 + $0x38] sm:$0xff]
  %v4820 = vld [vmem:[%s4811 + $0x40] sm:$0xff]
  %v4821 = vld [vmem:[%s4811 + $0x48] sm:$0xff]
  %v4822 = vld [vmem:[%s4811 + $0x50] sm:$0xff]
  %v4823 = vld [vmem:[%s4811 + $0x58] sm:$0xff]
  %v4824 = vld [vmem:[%s4811 + $0x60] sm:$0xff]
  %v4825 = vld [vmem:[%s4811 + $0x68] sm:$0xff]
  %v4826 = vld [vmem:[%s4811 + $0x70] sm:$0xff]
  %v4827 = vld [vmem:[%s4811 + $0x78] sm:$0xff]
  %v4828 = vld [vmem:[%s4811 + $0x80] sm:$0xff]
  %v4829 = vld [vmem:[%s4811 + $0x88] sm:$0xff]
  %v4830 = vld [vmem:[%s4811 + $0x90] sm:$0xff]
  %v4831 = vld [vmem:[%s4811 + $0x98] sm:$0xff]
  %v4832 = vld [vmem:[%s4811 + $0xa0] sm:$0xf]
  %v4833 = vld [vmem:[%s4811 + $0xa8] sm:$0xf]
  %v4835 = vsel %vm4085, %v4028, 0
  %v4838 = vsel %vm4085, %v4029, 0
  %v4841 = vsel %vm4085, %v4030, 0
  %v4844 = vsel %vm4085, %v4031, 0
  %v4847 = vsel %vm4200, %v4832, 0
  %v4850 = vsel %vm4200, %v4833, 0
  %4852 = vmatprep.subr.mxu0 0.0
  %4853 = vmatpush1.msra.mxu0 0.0
  %4854 = vmatprep.subr.mxu0 0.0
  %4855 = vmatpush1.msra.mxu0 0.0
  %4856 = vmatprep.subr.mxu0 0.0
  %4857 = vmatpush1.msra.mxu0 0.0
  %4858 = vmatprep.subr.mxu0 0.0
  %4859 = vmatpush1.msra.mxu0 0.0
  %4860 = vmatprep.subr.mxu0 0.0
  %4861 = vmatpush1.msra.mxu0 0.0
  %4862 = vmatprep.subr.mxu0 %v4850
  %4863 = vmatpush1.msra.mxu0 %v4847
  %4864 = vmatprep.subr.mxu0 %v4831
  %4865 = vmatpush1.msra.mxu0 %v4830
  %4866 = vmatprep.subr.mxu0 %v4829
  %4867 = vmatpush1.msra.mxu0 %v4828
  %4868 = vmatprep.subr.mxu0 %v4827
  %4869 = vmatpush1.msra.mxu0 %v4826
  %4870 = vmatprep.subr.mxu0 %v4825
  %4871 = vmatpush1.msra.mxu0 %v4824
  %4872 = vmatprep.subr.mxu0 %v4823
  %4873 = vmatpush1.msra.mxu0 %v4822
  %4874 = vmatprep.subr.mxu0 %v4821
  %4875 = vmatpush1.msra.mxu0 %v4820
  %4876 = vmatprep.subr.mxu0 %v4819
  %4877 = vmatpush1.msra.mxu0 %v4818
  %4878 = vmatprep.subr.mxu0 %v4817
  %4879 = vmatpush1.msra.mxu0 %v4816
  %4880 = vmatprep.subr.mxu0 %v4815
  %4881 = vmatpush1.msra.mxu0 %v4814
  %4882 = vmatprep.subr.mxu0 %v4813
  %4883 = vmatpush1.msra.mxu0 %v4812
  %4884 = vmatprep.subr.mxu0 0.0
  %4885 = vmatpush2.msra.mxu0 0.0
  %4886 = vmatprep.subr.mxu0 0.0
  %4887 = vmatpush2.msra.mxu0 0.0
  %4888 = vmatprep.subr.mxu0 0.0
  %4889 = vmatpush2.msra.mxu0 0.0
  %4890 = vmatprep.subr.mxu0 0.0
  %4891 = vmatpush2.msra.mxu0 0.0
  %4892 = vmatprep.subr.mxu0 0.0
  %4893 = vmatpush2.msra.mxu0 0.0
  %4894 = vmatprep.subr.mxu0 0.0
  %4895 = vmatpush2.msra.mxu0 0.0
  %4896 = vmatprep.subr.mxu0 0.0
  %4897 = vmatpush2.msra.mxu0 0.0
  %4898 = vmatprep.subr.mxu0 0.0
  %4899 = vmatpush2.msra.mxu0 0.0
  %4900 = vmatprep.subr.mxu0 0.0
  %4901 = vmatpush2.msra.mxu0 0.0
  %4902 = vmatprep.subr.mxu0 0.0
  %4903 = vmatpush2.msra.mxu0 0.0
  %4904 = vmatprep.subr.mxu0 0.0
  %4905 = vmatpush2.msra.mxu0 0.0
  %4906 = vmatprep.subr.mxu0 0.0
  %4907 = vmatpush2.msra.mxu0 0.0
  %4908 = vmatprep.subr.mxu0 0.0
  %4909 = vmatpush2.msra.mxu0 0.0
  %4910 = vmatprep.subr.mxu0 0.0
  %4911 = vmatpush2.msra.mxu0 0.0
  %4912 = vmatprep.subr.mxu0 0.0
  %4913 = vmatpush2.msra.mxu0 0.0
  %4914 = vmatprep.subr.mxu0 0.0
  %4915 = vmatpush2.msra.mxu0 0.0
  %4916 = vmatprep.mubr.f32.mxu0 0.0
  %4917 = vmatmul.mubr.f32.gmra.mxu0 %v4099
  %v4918 = vpop.f32.mrf.mxu0
  %v4919 = vadd.f32 0.0, %v4918
  %v4920 = vpop.f32.mrf.mxu0
  %v4921 = vadd.f32 0.0, %v4920
  %4922 = vmatprep.mubr.f32.mxu0 0.0
  %4923 = vmatmul.mubr.f32.gmra.mxu0 %v4102
  %v4924 = vpop.f32.mrf.mxu0
  %v4925 = vadd.f32 0.0, %v4924
  %v4926 = vpop.f32.mrf.mxu0
  %v4927 = vadd.f32 0.0, %v4926
  %4928 = vmatprep.mubr.f32.mxu0 0.0
  %4929 = vmatmul.mubr.f32.gmra.mxu0 %v4105
  %v4930 = vpop.f32.mrf.mxu0
  %v4931 = vadd.f32 0.0, %v4930
  %v4932 = vpop.f32.mrf.mxu0
  %v4933 = vadd.f32 0.0, %v4932
  %4934 = vmatprep.mubr.f32.mxu0 0.0
  %4935 = vmatmul.mubr.f32.gmra.mxu0 %v4108
  %v4936 = vpop.f32.mrf.mxu0
  %v4937 = vadd.f32 0.0, %v4936
  %v4938 = vpop.f32.mrf.mxu0
  %v4939 = vadd.f32 0.0, %v4938
  %4940 = vmatprep.mubr.f32.mxu0 0.0
  %4941 = vmatmul.mubr.f32.gmra.mxu0 %v4111
  %v4942 = vpop.f32.mrf.mxu0
  %v4943 = vadd.f32 0.0, %v4942
  %v4944 = vpop.f32.mrf.mxu0
  %v4945 = vadd.f32 0.0, %v4944
  %4946 = vmatprep.mubr.f32.mxu0 0.0
  %4947 = vmatmul.mubr.f32.gmra.mxu0 %v4114
  %v4948 = vpop.f32.mrf.mxu0
  %v4949 = vadd.f32 0.0, %v4948
  %v4950 = vpop.f32.mrf.mxu0
  %v4951 = vadd.f32 0.0, %v4950
  %4952 = vmatprep.mubr.f32.mxu0 0.0
  %4953 = vmatmul.mubr.f32.gmra.mxu0 %v4117
  %v4954 = vpop.f32.mrf.mxu0
  %v4955 = vadd.f32 0.0, %v4954
  %v4956 = vpop.f32.mrf.mxu0
  %v4957 = vadd.f32 0.0, %v4956
  %4958 = vmatprep.mubr.f32.mxu0 0.0
  %4959 = vmatmul.mubr.f32.gmra.mxu0 %v4120
  %v4960 = vpop.f32.mrf.mxu0
  %v4961 = vadd.f32 0.0, %v4960
  %v4962 = vpop.f32.mrf.mxu0
  %v4963 = vadd.f32 0.0, %v4962
  %4964 = vmatprep.mubr.f32.mxu0 0.0
  %4965 = vmatmul.mubr.f32.gmra.mxu0 %v4123
  %v4966 = vpop.f32.mrf.mxu0
  %v4967 = vadd.f32 0.0, %v4966
  %v4968 = vpop.f32.mrf.mxu0
  %v4969 = vadd.f32 0.0, %v4968
  %4970 = vmatprep.mubr.f32.mxu0 0.0
  %4971 = vmatmul.mubr.f32.gmra.mxu0 %v4126
  %v4972 = vpop.f32.mrf.mxu0
  %v4973 = vadd.f32 0.0, %v4972
  %v4974 = vpop.f32.mrf.mxu0
  %v4975 = vadd.f32 0.0, %v4974
  %4976 = vmatprep.mubr.f32.mxu0 0.0
  %4977 = vmatmul.mubr.f32.gmra.mxu0 %v4129
  %v4978 = vpop.f32.mrf.mxu0
  %v4979 = vadd.f32 0.0, %v4978
  %v4980 = vpop.f32.mrf.mxu0
  %v4981 = vadd.f32 0.0, %v4980
  %4982 = vmatprep.mubr.f32.mxu0 0.0
  %4983 = vmatmul.mubr.f32.gmra.mxu0 %v4132
  %v4984 = vpop.f32.mrf.mxu0
  %v4985 = vadd.f32 0.0, %v4984
  %v4986 = vpop.f32.mrf.mxu0
  %v4987 = vadd.f32 0.0, %v4986
  %4988 = vmatprep.mubr.f32.mxu0 0.0
  %4989 = vmatmul.mubr.f32.gmra.mxu0 %v4135
  %v4990 = vpop.f32.mrf.mxu0
  %v4991 = vadd.f32 0.0, %v4990
  %v4992 = vpop.f32.mrf.mxu0
  %v4993 = vadd.f32 0.0, %v4992
  %4994 = vmatprep.mubr.f32.mxu0 0.0
  %4995 = vmatmul.mubr.f32.gmra.mxu0 %v4138
  %v4996 = vpop.f32.mrf.mxu0
  %v4997 = vadd.f32 0.0, %v4996
  %v4998 = vpop.f32.mrf.mxu0
  %v4999 = vadd.f32 0.0, %v4998
  %5000 = vmatprep.mubr.f32.mxu0 0.0
  %5001 = vmatmul.mubr.f32.gmra.mxu0 %v4141
  %v5002 = vpop.f32.mrf.mxu0
  %v5003 = vadd.f32 0.0, %v5002
  %v5004 = vpop.f32.mrf.mxu0
  %v5005 = vadd.f32 0.0, %v5004
  %5006 = vmatprep.mubr.f32.mxu0 0.0
  %5007 = vmatmul.mubr.f32.gmra.mxu0 %v4144
  %v5008 = vpop.f32.mrf.mxu0
  %v5009 = vadd.f32 0.0, %v5008
  %v5010 = vpop.f32.mrf.mxu0
  %v5011 = vadd.f32 0.0, %v5010
  %5012 = vmatprep.mubr.f32.mxu0 0.0
  %5013 = vmatmul.mubr.f32.gmra.mxu0 %v4147
  %v5014 = vpop.f32.mrf.mxu0
  %v5015 = vadd.f32 0.0, %v5014
  %v5016 = vpop.f32.mrf.mxu0
  %v5017 = vadd.f32 0.0, %v5016
  %5018 = vmatprep.mubr.f32.mxu0 0.0
  %5019 = vmatmul.mubr.f32.gmra.mxu0 %v4150
  %v5020 = vpop.f32.mrf.mxu0
  %v5021 = vadd.f32 0.0, %v5020
  %v5022 = vpop.f32.mrf.mxu0
  %v5023 = vadd.f32 0.0, %v5022
  %5024 = vmatprep.mubr.f32.mxu0 0.0
  %5025 = vmatmul.mubr.f32.gmra.mxu0 %v4153
  %v5026 = vpop.f32.mrf.mxu0
  %v5027 = vadd.f32 0.0, %v5026
  %v5028 = vpop.f32.mrf.mxu0
  %v5029 = vadd.f32 0.0, %v5028
  %5030 = vmatprep.mubr.f32.mxu0 0.0
  %5031 = vmatmul.mubr.f32.gmra.mxu0 %v4156
  %v5032 = vpop.f32.mrf.mxu0
  %v5033 = vadd.f32 0.0, %v5032
  %v5034 = vpop.f32.mrf.mxu0
  %v5035 = vadd.f32 0.0, %v5034
  %5036 = vmatprep.mubr.f32.mxu0 0.0
  %5037 = vmatmul.mubr.f32.gmra.mxu0 %v4159
  %v5038 = vpop.f32.mrf.mxu0
  %v5039 = vadd.f32 0.0, %v5038
  %v5040 = vpop.f32.mrf.mxu0
  %v5041 = vadd.f32 0.0, %v5040
  %5042 = vmatprep.mubr.f32.mxu0 0.0
  %5043 = vmatmul.mubr.f32.gmra.mxu0 %v4162
  %v5044 = vpop.f32.mrf.mxu0
  %v5045 = vadd.f32 0.0, %v5044
  %v5046 = vpop.f32.mrf.mxu0
  %v5047 = vadd.f32 0.0, %v5046
  %5048 = vmatprep.mubr.f32.mxu0 0.0
  %5049 = vmatmul.mubr.f32.gmra.mxu0 %v4165
  %v5050 = vpop.f32.mrf.mxu0
  %v5051 = vadd.f32 0.0, %v5050
  %v5052 = vpop.f32.mrf.mxu0
  %v5053 = vadd.f32 0.0, %v5052
  %5054 = vmatprep.mubr.f32.mxu0 0.0
  %5055 = vmatmul.mubr.f32.gmra.mxu0 %v4168
  %v5056 = vpop.f32.mrf.mxu0
  %v5057 = vadd.f32 0.0, %v5056
  %v5058 = vpop.f32.mrf.mxu0
  %v5059 = vadd.f32 0.0, %v5058
  %5060 = vmatprep.mubr.f32.mxu0 0.0
  %5061 = vmatmul.mubr.f32.gmra.mxu0 %v4171
  %v5062 = vpop.f32.mrf.mxu0
  %v5063 = vadd.f32 0.0, %v5062
  %v5064 = vpop.f32.mrf.mxu0
  %v5065 = vadd.f32 0.0, %v5064
  %5066 = vmatprep.mubr.f32.mxu0 0.0
  %5067 = vmatmul.mubr.f32.gmra.mxu0 %v4174
  %v5068 = vpop.f32.mrf.mxu0
  %v5069 = vadd.f32 0.0, %v5068
  %v5070 = vpop.f32.mrf.mxu0
  %v5071 = vadd.f32 0.0, %v5070
  %5072 = vmatprep.mubr.f32.mxu0 0.0
  %5073 = vmatmul.mubr.f32.gmra.mxu0 %v4177
  %v5074 = vpop.f32.mrf.mxu0
  %v5075 = vadd.f32 0.0, %v5074
  %v5076 = vpop.f32.mrf.mxu0
  %v5077 = vadd.f32 0.0, %v5076
  %5078 = vmatprep.mubr.f32.mxu0 0.0
  %5079 = vmatmul.mubr.f32.gmra.mxu0 %v4180
  %v5080 = vpop.f32.mrf.mxu0
  %v5081 = vadd.f32 0.0, %v5080
  %v5082 = vpop.f32.mrf.mxu0
  %v5083 = vadd.f32 0.0, %v5082
  %5084 = vmatprep.mubr.f32.mxu0 0.0
  %5085 = vmatmul.mubr.f32.gmra.mxu0 %v4183
  %v5086 = vpop.f32.mrf.mxu0
  %v5087 = vadd.f32 0.0, %v5086
  %v5088 = vpop.f32.mrf.mxu0
  %v5089 = vadd.f32 0.0, %v5088
  %5090 = vmatprep.mubr.f32.mxu0 0.0
  %5091 = vmatmul.mubr.f32.gmra.mxu0 %v4186
  %v5092 = vpop.f32.mrf.mxu0
  %v5093 = vadd.f32 0.0, %v5092
  %v5094 = vpop.f32.mrf.mxu0
  %v5095 = vadd.f32 0.0, %v5094
  %5096 = vmatprep.mubr.f32.mxu0 0.0
  %5097 = vmatmul.mubr.f32.gmra.mxu0 %v4189
  %v5098 = vpop.f32.mrf.mxu0
  %v5099 = vadd.f32 0.0, %v5098
  %v5100 = vpop.f32.mrf.mxu0
  %v5101 = vadd.f32 0.0, %v5100
  %5102 = vmatprep.mubr.f32.mxu0 0.0
  %5103 = vmatmul.mubr.f32.gmra.mxu0 %v4192
  %v5104 = vpop.f32.mrf.mxu0
  %v5105 = vadd.f32 0.0, %v5104
  %v5106 = vpop.f32.mrf.mxu0
  %v5107 = vadd.f32 0.0, %v5106
  %5108 = vmatprep.mubr.f32.mxu0 0.0
  %5109 = vmatmul.mubr.f32.gmra.mxu0 %v4195
  %v5110 = vpop.f32.mrf.mxu0
  %v5111 = vadd.f32 0.0, %v5110
  %v5112 = vpop.f32.mrf.mxu0
  %v5113 = vadd.f32 0.0, %v5112
  %5114 = vmatprep.mubr.f32.mxu0 0.0
  %5115 = vmatmul.mubr.f32.gmra.mxu0 %v4198
  %v5116 = vpop.f32.mrf.mxu0
  %v5117 = vadd.f32 0.0, %v5116
  %v5118 = vpop.f32.mrf.mxu0
  %v5119 = vadd.f32 0.0, %v5118
  %5120 = vmatprep.mubr.f32.mxu0 0.0
  %5121 = vmatmul.mubr.f32.gmra.mxu0 %v4835
  %v5122 = vpop.f32.mrf.mxu0
  %v5123 = vadd.f32 0.0, %v5122
  %v5124 = vpop.f32.mrf.mxu0
  %v5125 = vadd.f32 0.0, %v5124
  %5126 = vmatprep.mubr.f32.mxu0 0.0
  %5127 = vmatmul.mubr.f32.gmra.mxu0 %v4838
  %v5128 = vpop.f32.mrf.mxu0
  %v5129 = vadd.f32 0.0, %v5128
  %v5130 = vpop.f32.mrf.mxu0
  %v5131 = vadd.f32 0.0, %v5130
  %5132 = vmatprep.mubr.f32.mxu0 0.0
  %5133 = vmatmul.mubr.f32.gmra.mxu0 %v4841
  %v5134 = vpop.f32.mrf.mxu0
  %v5135 = vadd.f32 0.0, %v5134
  %v5136 = vpop.f32.mrf.mxu0
  %v5137 = vadd.f32 0.0, %v5136
  %5138 = vmatprep.mubr.f32.mxu0 0.0
  %5139 = vmatmul.mubr.f32.gmra.mxu0 %v4844
  %v5140 = vpop.f32.mrf.mxu0
  %v5141 = vadd.f32 0.0, %v5140
  %v5142 = vpop.f32.mrf.mxu0
  %v5143 = vadd.f32 0.0, %v5142
  %5144 = vdwg.mxu0
  %v5145 = vadd.f32 %v4585, %v4919
  %v5146 = vadd.f32 %v4587, %v4921
  %v5147 = vadd.f32 %v4591, %v4925
  %v5148 = vadd.f32 %v4593, %v4927
  %v5149 = vadd.f32 %v4597, %v4931
  %v5150 = vadd.f32 %v4599, %v4933
  %v5151 = vadd.f32 %v4603, %v4937
  %v5152 = vadd.f32 %v4605, %v4939
  %v5153 = vadd.f32 %v4609, %v4943
  %v5154 = vadd.f32 %v4611, %v4945
  %v5155 = vadd.f32 %v4615, %v4949
  %v5156 = vadd.f32 %v4617, %v4951
  %v5157 = vadd.f32 %v4621, %v4955
  %v5158 = vadd.f32 %v4623, %v4957
  %v5159 = vadd.f32 %v4627, %v4961
  %v5160 = vadd.f32 %v4629, %v4963
  %v5161 = vadd.f32 %v4633, %v4967
  %v5162 = vadd.f32 %v4635, %v4969
  %v5163 = vadd.f32 %v4639, %v4973
  %v5164 = vadd.f32 %v4641, %v4975
  %v5165 = vadd.f32 %v4645, %v4979
  %v5166 = vadd.f32 %v4647, %v4981
  %v5167 = vadd.f32 %v4651, %v4985
  %v5168 = vadd.f32 %v4653, %v4987
  %v5169 = vadd.f32 %v4657, %v4991
  %v5170 = vadd.f32 %v4659, %v4993
  %v5171 = vadd.f32 %v4663, %v4997
  %v5172 = vadd.f32 %v4665, %v4999
  %v5173 = vadd.f32 %v4669, %v5003
  %v5174 = vadd.f32 %v4671, %v5005
  %v5175 = vadd.f32 %v4675, %v5009
  %v5176 = vadd.f32 %v4677, %v5011
  %v5177 = vadd.f32 %v4681, %v5015
  %v5178 = vadd.f32 %v4683, %v5017
  %v5179 = vadd.f32 %v4687, %v5021
  %v5180 = vadd.f32 %v4689, %v5023
  %v5181 = vadd.f32 %v4693, %v5027
  %v5182 = vadd.f32 %v4695, %v5029
  %v5183 = vadd.f32 %v4699, %v5033
  %v5184 = vadd.f32 %v4701, %v5035
  %v5185 = vadd.f32 %v4705, %v5039
  %v5186 = vadd.f32 %v4707, %v5041
  %v5187 = vadd.f32 %v4711, %v5045
  %v5188 = vadd.f32 %v4713, %v5047
  %v5189 = vadd.f32 %v4717, %v5051
  %v5190 = vadd.f32 %v4719, %v5053
  %v5191 = vadd.f32 %v4723, %v5057
  %v5192 = vadd.f32 %v4725, %v5059
  %v5193 = vadd.f32 %v4729, %v5063
  %v5194 = vadd.f32 %v4731, %v5065
  %v5195 = vadd.f32 %v4735, %v5069
  %v5196 = vadd.f32 %v4737, %v5071
  %v5197 = vadd.f32 %v4741, %v5075
  %v5198 = vadd.f32 %v4743, %v5077
  %v5199 = vadd.f32 %v4747, %v5081
  %v5200 = vadd.f32 %v4749, %v5083
  %v5201 = vadd.f32 %v4753, %v5087
  %v5202 = vadd.f32 %v4755, %v5089
  %v5203 = vadd.f32 %v4759, %v5093
  %v5204 = vadd.f32 %v4761, %v5095
  %v5205 = vadd.f32 %v4765, %v5099
  %v5206 = vadd.f32 %v4767, %v5101
  %v5207 = vadd.f32 %v4771, %v5105
  %v5208 = vadd.f32 %v4773, %v5107
  %v5209 = vadd.f32 %v4777, %v5111
  %v5210 = vadd.f32 %v4779, %v5113
  %v5211 = vadd.f32 %v4783, %v5117
  %v5212 = vadd.f32 %v4785, %v5119
  %v5213 = vadd.f32 %v4789, %v5123
  %v5214 = vadd.f32 %v4791, %v5125
  %v5215 = vadd.f32 %v4795, %v5129
  %v5216 = vadd.f32 %v4797, %v5131
  %v5217 = vadd.f32 %v4801, %v5135
  %v5218 = vadd.f32 %v4803, %v5137
  %v5219 = vadd.f32 %v4807, %v5141
  %v5220 = vadd.f32 %v4809, %v5143
  %s5221 = scalar_lea.vmem %s4, 528
  %v5222 = vld [vmem:[%s5221] sm:$0xff]
  %v5223 = vld [vmem:[%s5221 + $0x8] sm:$0xff]
  %v5224 = vld [vmem:[%s5221 + $0x10] sm:$0xff]
  %v5225 = vld [vmem:[%s5221 + $0x18] sm:$0xff]
  %v5226 = vld [vmem:[%s5221 + $0x20] sm:$0xff]
  %v5227 = vld [vmem:[%s5221 + $0x28] sm:$0xff]
  %v5228 = vld [vmem:[%s5221 + $0x30] sm:$0xff]
  %v5229 = vld [vmem:[%s5221 + $0x38] sm:$0xff]
  %v5230 = vld [vmem:[%s5221 + $0x40] sm:$0xff]
  %v5231 = vld [vmem:[%s5221 + $0x48] sm:$0xff]
  %v5232 = vld [vmem:[%s5221 + $0x50] sm:$0xff]
  %v5233 = vld [vmem:[%s5221 + $0x58] sm:$0xff]
  %v5234 = vld [vmem:[%s5221 + $0x60] sm:$0xff]
  %v5235 = vld [vmem:[%s5221 + $0x68] sm:$0xff]
  %v5236 = vld [vmem:[%s5221 + $0x70] sm:$0xff]
  %v5237 = vld [vmem:[%s5221 + $0x78] sm:$0xff]
  %v5238 = vld [vmem:[%s5221 + $0x80] sm:$0xff]
  %v5239 = vld [vmem:[%s5221 + $0x88] sm:$0xff]
  %v5240 = vld [vmem:[%s5221 + $0x90] sm:$0xff]
  %v5241 = vld [vmem:[%s5221 + $0x98] sm:$0xff]
  %v5242 = vld [vmem:[%s5221 + $0xa0] sm:$0xf]
  %v5243 = vld [vmem:[%s5221 + $0xa8] sm:$0xf]
  %v5245 = vsel %vm4085, %v4032, 0
  %v5248 = vsel %vm4085, %v4033, 0
  %v5251 = vsel %vm4085, %v4034, 0
  %v5254 = vsel %vm4085, %v4035, 0
  %v5257 = vsel %vm4200, %v5242, 0
  %v5260 = vsel %vm4200, %v5243, 0
  %5262 = vmatprep.subr.mxu0 0.0
  %5263 = vmatpush1.msra.mxu0 0.0
  %5264 = vmatprep.subr.mxu0 0.0
  %5265 = vmatpush1.msra.mxu0 0.0
  %5266 = vmatprep.subr.mxu0 0.0
  %5267 = vmatpush1.msra.mxu0 0.0
  %5268 = vmatprep.subr.mxu0 0.0
  %5269 = vmatpush1.msra.mxu0 0.0
  %5270 = vmatprep.subr.mxu0 0.0
  %5271 = vmatpush1.msra.mxu0 0.0
  %5272 = vmatprep.subr.mxu0 %v5260
  %5273 = vmatpush1.msra.mxu0 %v5257
  %5274 = vmatprep.subr.mxu0 %v5241
  %5275 = vmatpush1.msra.mxu0 %v5240
  %5276 = vmatprep.subr.mxu0 %v5239
  %5277 = vmatpush1.msra.mxu0 %v5238
  %5278 = vmatprep.subr.mxu0 %v5237
  %5279 = vmatpush1.msra.mxu0 %v5236
  %5280 = vmatprep.subr.mxu0 %v5235
  %5281 = vmatpush1.msra.mxu0 %v5234
  %5282 = vmatprep.subr.mxu0 %v5233
  %5283 = vmatpush1.msra.mxu0 %v5232
  %5284 = vmatprep.subr.mxu0 %v5231
  %5285 = vmatpush1.msra.mxu0 %v5230
  %5286 = vmatprep.subr.mxu0 %v5229
  %5287 = vmatpush1.msra.mxu0 %v5228
  %5288 = vmatprep.subr.mxu0 %v5227
  %5289 = vmatpush1.msra.mxu0 %v5226
  %5290 = vmatprep.subr.mxu0 %v5225
  %5291 = vmatpush1.msra.mxu0 %v5224
  %5292 = vmatprep.subr.mxu0 %v5223
  %5293 = vmatpush1.msra.mxu0 %v5222
  %5294 = vmatprep.subr.mxu0 0.0
  %5295 = vmatpush2.msra.mxu0 0.0
  %5296 = vmatprep.subr.mxu0 0.0
  %5297 = vmatpush2.msra.mxu0 0.0
  %5298 = vmatprep.subr.mxu0 0.0
  %5299 = vmatpush2.msra.mxu0 0.0
  %5300 = vmatprep.subr.mxu0 0.0
  %5301 = vmatpush2.msra.mxu0 0.0
  %5302 = vmatprep.subr.mxu0 0.0
  %5303 = vmatpush2.msra.mxu0 0.0
  %5304 = vmatprep.subr.mxu0 0.0
  %5305 = vmatpush2.msra.mxu0 0.0
  %5306 = vmatprep.subr.mxu0 0.0
  %5307 = vmatpush2.msra.mxu0 0.0
  %5308 = vmatprep.subr.mxu0 0.0
  %5309 = vmatpush2.msra.mxu0 0.0
  %5310 = vmatprep.subr.mxu0 0.0
  %5311 = vmatpush2.msra.mxu0 0.0
  %5312 = vmatprep.subr.mxu0 0.0
  %5313 = vmatpush2.msra.mxu0 0.0
  %5314 = vmatprep.subr.mxu0 0.0
  %5315 = vmatpush2.msra.mxu0 0.0
  %5316 = vmatprep.subr.mxu0 0.0
  %5317 = vmatpush2.msra.mxu0 0.0
  %5318 = vmatprep.subr.mxu0 0.0
  %5319 = vmatpush2.msra.mxu0 0.0
  %5320 = vmatprep.subr.mxu0 0.0
  %5321 = vmatpush2.msra.mxu0 0.0
  %5322 = vmatprep.subr.mxu0 0.0
  %5323 = vmatpush2.msra.mxu0 0.0
  %5324 = vmatprep.subr.mxu0 0.0
  %5325 = vmatpush2.msra.mxu0 0.0
  %5326 = vmatprep.mubr.f32.mxu0 0.0
  %5327 = vmatmul.mubr.f32.gmra.mxu0 %v4111
  %v5328 = vpop.f32.mrf.mxu0
  %v5329 = vadd.f32 0.0, %v5328
  %v5330 = vpop.f32.mrf.mxu0
  %v5331 = vadd.f32 0.0, %v5330
  %5332 = vmatprep.mubr.f32.mxu0 0.0
  %5333 = vmatmul.mubr.f32.gmra.mxu0 %v4114
  %v5334 = vpop.f32.mrf.mxu0
  %v5335 = vadd.f32 0.0, %v5334
  %v5336 = vpop.f32.mrf.mxu0
  %v5337 = vadd.f32 0.0, %v5336
  %5338 = vmatprep.mubr.f32.mxu0 0.0
  %5339 = vmatmul.mubr.f32.gmra.mxu0 %v4117
  %v5340 = vpop.f32.mrf.mxu0
  %v5341 = vadd.f32 0.0, %v5340
  %v5342 = vpop.f32.mrf.mxu0
  %v5343 = vadd.f32 0.0, %v5342
  %5344 = vmatprep.mubr.f32.mxu0 0.0
  %5345 = vmatmul.mubr.f32.gmra.mxu0 %v4120
  %v5346 = vpop.f32.mrf.mxu0
  %v5347 = vadd.f32 0.0, %v5346
  %v5348 = vpop.f32.mrf.mxu0
  %v5349 = vadd.f32 0.0, %v5348
  %5350 = vmatprep.mubr.f32.mxu0 0.0
  %5351 = vmatmul.mubr.f32.gmra.mxu0 %v4123
  %v5352 = vpop.f32.mrf.mxu0
  %v5353 = vadd.f32 0.0, %v5352
  %v5354 = vpop.f32.mrf.mxu0
  %v5355 = vadd.f32 0.0, %v5354
  %5356 = vmatprep.mubr.f32.mxu0 0.0
  %5357 = vmatmul.mubr.f32.gmra.mxu0 %v4126
  %v5358 = vpop.f32.mrf.mxu0
  %v5359 = vadd.f32 0.0, %v5358
  %v5360 = vpop.f32.mrf.mxu0
  %v5361 = vadd.f32 0.0, %v5360
  %5362 = vmatprep.mubr.f32.mxu0 0.0
  %5363 = vmatmul.mubr.f32.gmra.mxu0 %v4129
  %v5364 = vpop.f32.mrf.mxu0
  %v5365 = vadd.f32 0.0, %v5364
  %v5366 = vpop.f32.mrf.mxu0
  %v5367 = vadd.f32 0.0, %v5366
  %5368 = vmatprep.mubr.f32.mxu0 0.0
  %5369 = vmatmul.mubr.f32.gmra.mxu0 %v4132
  %v5370 = vpop.f32.mrf.mxu0
  %v5371 = vadd.f32 0.0, %v5370
  %v5372 = vpop.f32.mrf.mxu0
  %v5373 = vadd.f32 0.0, %v5372
  %5374 = vmatprep.mubr.f32.mxu0 0.0
  %5375 = vmatmul.mubr.f32.gmra.mxu0 %v4135
  %v5376 = vpop.f32.mrf.mxu0
  %v5377 = vadd.f32 0.0, %v5376
  %v5378 = vpop.f32.mrf.mxu0
  %v5379 = vadd.f32 0.0, %v5378
  %5380 = vmatprep.mubr.f32.mxu0 0.0
  %5381 = vmatmul.mubr.f32.gmra.mxu0 %v4138
  %v5382 = vpop.f32.mrf.mxu0
  %v5383 = vadd.f32 0.0, %v5382
  %v5384 = vpop.f32.mrf.mxu0
  %v5385 = vadd.f32 0.0, %v5384
  %5386 = vmatprep.mubr.f32.mxu0 0.0
  %5387 = vmatmul.mubr.f32.gmra.mxu0 %v4141
  %v5388 = vpop.f32.mrf.mxu0
  %v5389 = vadd.f32 0.0, %v5388
  %v5390 = vpop.f32.mrf.mxu0
  %v5391 = vadd.f32 0.0, %v5390
  %5392 = vmatprep.mubr.f32.mxu0 0.0
  %5393 = vmatmul.mubr.f32.gmra.mxu0 %v4144
  %v5394 = vpop.f32.mrf.mxu0
  %v5395 = vadd.f32 0.0, %v5394
  %v5396 = vpop.f32.mrf.mxu0
  %v5397 = vadd.f32 0.0, %v5396
  %5398 = vmatprep.mubr.f32.mxu0 0.0
  %5399 = vmatmul.mubr.f32.gmra.mxu0 %v4147
  %v5400 = vpop.f32.mrf.mxu0
  %v5401 = vadd.f32 0.0, %v5400
  %v5402 = vpop.f32.mrf.mxu0
  %v5403 = vadd.f32 0.0, %v5402
  %5404 = vmatprep.mubr.f32.mxu0 0.0
  %5405 = vmatmul.mubr.f32.gmra.mxu0 %v4150
  %v5406 = vpop.f32.mrf.mxu0
  %v5407 = vadd.f32 0.0, %v5406
  %v5408 = vpop.f32.mrf.mxu0
  %v5409 = vadd.f32 0.0, %v5408
  %5410 = vmatprep.mubr.f32.mxu0 0.0
  %5411 = vmatmul.mubr.f32.gmra.mxu0 %v4153
  %v5412 = vpop.f32.mrf.mxu0
  %v5413 = vadd.f32 0.0, %v5412
  %v5414 = vpop.f32.mrf.mxu0
  %v5415 = vadd.f32 0.0, %v5414
  %5416 = vmatprep.mubr.f32.mxu0 0.0
  %5417 = vmatmul.mubr.f32.gmra.mxu0 %v4156
  %v5418 = vpop.f32.mrf.mxu0
  %v5419 = vadd.f32 0.0, %v5418
  %v5420 = vpop.f32.mrf.mxu0
  %v5421 = vadd.f32 0.0, %v5420
  %5422 = vmatprep.mubr.f32.mxu0 0.0
  %5423 = vmatmul.mubr.f32.gmra.mxu0 %v4159
  %v5424 = vpop.f32.mrf.mxu0
  %v5425 = vadd.f32 0.0, %v5424
  %v5426 = vpop.f32.mrf.mxu0
  %v5427 = vadd.f32 0.0, %v5426
  %5428 = vmatprep.mubr.f32.mxu0 0.0
  %5429 = vmatmul.mubr.f32.gmra.mxu0 %v4162
  %v5430 = vpop.f32.mrf.mxu0
  %v5431 = vadd.f32 0.0, %v5430
  %v5432 = vpop.f32.mrf.mxu0
  %v5433 = vadd.f32 0.0, %v5432
  %5434 = vmatprep.mubr.f32.mxu0 0.0
  %5435 = vmatmul.mubr.f32.gmra.mxu0 %v4165
  %v5436 = vpop.f32.mrf.mxu0
  %v5437 = vadd.f32 0.0, %v5436
  %v5438 = vpop.f32.mrf.mxu0
  %v5439 = vadd.f32 0.0, %v5438
  %5440 = vmatprep.mubr.f32.mxu0 0.0
  %5441 = vmatmul.mubr.f32.gmra.mxu0 %v4168
  %v5442 = vpop.f32.mrf.mxu0
  %v5443 = vadd.f32 0.0, %v5442
  %v5444 = vpop.f32.mrf.mxu0
  %v5445 = vadd.f32 0.0, %v5444
  %5446 = vmatprep.mubr.f32.mxu0 0.0
  %5447 = vmatmul.mubr.f32.gmra.mxu0 %v4171
  %v5448 = vpop.f32.mrf.mxu0
  %v5449 = vadd.f32 0.0, %v5448
  %v5450 = vpop.f32.mrf.mxu0
  %v5451 = vadd.f32 0.0, %v5450
  %5452 = vmatprep.mubr.f32.mxu0 0.0
  %5453 = vmatmul.mubr.f32.gmra.mxu0 %v4174
  %v5454 = vpop.f32.mrf.mxu0
  %v5455 = vadd.f32 0.0, %v5454
  %v5456 = vpop.f32.mrf.mxu0
  %v5457 = vadd.f32 0.0, %v5456
  %5458 = vmatprep.mubr.f32.mxu0 0.0
  %5459 = vmatmul.mubr.f32.gmra.mxu0 %v4177
  %v5460 = vpop.f32.mrf.mxu0
  %v5461 = vadd.f32 0.0, %v5460
  %v5462 = vpop.f32.mrf.mxu0
  %v5463 = vadd.f32 0.0, %v5462
  %5464 = vmatprep.mubr.f32.mxu0 0.0
  %5465 = vmatmul.mubr.f32.gmra.mxu0 %v4180
  %v5466 = vpop.f32.mrf.mxu0
  %v5467 = vadd.f32 0.0, %v5466
  %v5468 = vpop.f32.mrf.mxu0
  %v5469 = vadd.f32 0.0, %v5468
  %5470 = vmatprep.mubr.f32.mxu0 0.0
  %5471 = vmatmul.mubr.f32.gmra.mxu0 %v4183
  %v5472 = vpop.f32.mrf.mxu0
  %v5473 = vadd.f32 0.0, %v5472
  %v5474 = vpop.f32.mrf.mxu0
  %v5475 = vadd.f32 0.0, %v5474
  %5476 = vmatprep.mubr.f32.mxu0 0.0
  %5477 = vmatmul.mubr.f32.gmra.mxu0 %v4186
  %v5478 = vpop.f32.mrf.mxu0
  %v5479 = vadd.f32 0.0, %v5478
  %v5480 = vpop.f32.mrf.mxu0
  %v5481 = vadd.f32 0.0, %v5480
  %5482 = vmatprep.mubr.f32.mxu0 0.0
  %5483 = vmatmul.mubr.f32.gmra.mxu0 %v4189
  %v5484 = vpop.f32.mrf.mxu0
  %v5485 = vadd.f32 0.0, %v5484
  %v5486 = vpop.f32.mrf.mxu0
  %v5487 = vadd.f32 0.0, %v5486
  %5488 = vmatprep.mubr.f32.mxu0 0.0
  %5489 = vmatmul.mubr.f32.gmra.mxu0 %v4192
  %v5490 = vpop.f32.mrf.mxu0
  %v5491 = vadd.f32 0.0, %v5490
  %v5492 = vpop.f32.mrf.mxu0
  %v5493 = vadd.f32 0.0, %v5492
  %5494 = vmatprep.mubr.f32.mxu0 0.0
  %5495 = vmatmul.mubr.f32.gmra.mxu0 %v4195
  %v5496 = vpop.f32.mrf.mxu0
  %v5497 = vadd.f32 0.0, %v5496
  %v5498 = vpop.f32.mrf.mxu0
  %v5499 = vadd.f32 0.0, %v5498
  %5500 = vmatprep.mubr.f32.mxu0 0.0
  %5501 = vmatmul.mubr.f32.gmra.mxu0 %v4198
  %v5502 = vpop.f32.mrf.mxu0
  %v5503 = vadd.f32 0.0, %v5502
  %v5504 = vpop.f32.mrf.mxu0
  %v5505 = vadd.f32 0.0, %v5504
  %5506 = vmatprep.mubr.f32.mxu0 0.0
  %5507 = vmatmul.mubr.f32.gmra.mxu0 %v4835
  %v5508 = vpop.f32.mrf.mxu0
  %v5509 = vadd.f32 0.0, %v5508
  %v5510 = vpop.f32.mrf.mxu0
  %v5511 = vadd.f32 0.0, %v5510
  %5512 = vmatprep.mubr.f32.mxu0 0.0
  %5513 = vmatmul.mubr.f32.gmra.mxu0 %v4838
  %v5514 = vpop.f32.mrf.mxu0
  %v5515 = vadd.f32 0.0, %v5514
  %v5516 = vpop.f32.mrf.mxu0
  %v5517 = vadd.f32 0.0, %v5516
  %5518 = vmatprep.mubr.f32.mxu0 0.0
  %5519 = vmatmul.mubr.f32.gmra.mxu0 %v4841
  %v5520 = vpop.f32.mrf.mxu0
  %v5521 = vadd.f32 0.0, %v5520
  %v5522 = vpop.f32.mrf.mxu0
  %v5523 = vadd.f32 0.0, %v5522
  %5524 = vmatprep.mubr.f32.mxu0 0.0
  %5525 = vmatmul.mubr.f32.gmra.mxu0 %v4844
  %v5526 = vpop.f32.mrf.mxu0
  %v5527 = vadd.f32 0.0, %v5526
  %v5528 = vpop.f32.mrf.mxu0
  %v5529 = vadd.f32 0.0, %v5528
  %5530 = vmatprep.mubr.f32.mxu0 0.0
  %5531 = vmatmul.mubr.f32.gmra.mxu0 %v5245
  %v5532 = vpop.f32.mrf.mxu0
  %v5533 = vadd.f32 0.0, %v5532
  %v5534 = vpop.f32.mrf.mxu0
  %v5535 = vadd.f32 0.0, %v5534
  %5536 = vmatprep.mubr.f32.mxu0 0.0
  %5537 = vmatmul.mubr.f32.gmra.mxu0 %v5248
  %v5538 = vpop.f32.mrf.mxu0
  %v5539 = vadd.f32 0.0, %v5538
  %v5540 = vpop.f32.mrf.mxu0
  %v5541 = vadd.f32 0.0, %v5540
  %5542 = vmatprep.mubr.f32.mxu0 0.0
  %5543 = vmatmul.mubr.f32.gmra.mxu0 %v5251
  %v5544 = vpop.f32.mrf.mxu0
  %v5545 = vadd.f32 0.0, %v5544
  %v5546 = vpop.f32.mrf.mxu0
  %v5547 = vadd.f32 0.0, %v5546
  %5548 = vmatprep.mubr.f32.mxu0 0.0
  %5549 = vmatmul.mubr.f32.gmra.mxu0 %v5254
  %v5550 = vpop.f32.mrf.mxu0
  %v5551 = vadd.f32 0.0, %v5550
  %v5552 = vpop.f32.mrf.mxu0
  %v5553 = vadd.f32 0.0, %v5552
  %5554 = vdwg.mxu0
  %v5555 = vadd.f32 %v5145, %v5329
  %v5556 = vadd.f32 %v5146, %v5331
  %v5557 = vadd.f32 %v5147, %v5335
  %v5558 = vadd.f32 %v5148, %v5337
  %v5559 = vadd.f32 %v5149, %v5341
  %v5560 = vadd.f32 %v5150, %v5343
  %v5561 = vadd.f32 %v5151, %v5347
  %v5562 = vadd.f32 %v5152, %v5349
  %v5563 = vadd.f32 %v5153, %v5353
  %v5564 = vadd.f32 %v5154, %v5355
  %v5565 = vadd.f32 %v5155, %v5359
  %v5566 = vadd.f32 %v5156, %v5361
  %v5567 = vadd.f32 %v5157, %v5365
  %v5568 = vadd.f32 %v5158, %v5367
  %v5569 = vadd.f32 %v5159, %v5371
  %v5570 = vadd.f32 %v5160, %v5373
  %v5571 = vadd.f32 %v5161, %v5377
  %v5572 = vadd.f32 %v5162, %v5379
  %v5573 = vadd.f32 %v5163, %v5383
  %v5574 = vadd.f32 %v5164, %v5385
  %v5575 = vadd.f32 %v5165, %v5389
  %v5576 = vadd.f32 %v5166, %v5391
  %v5577 = vadd.f32 %v5167, %v5395
  %v5578 = vadd.f32 %v5168, %v5397
  %v5579 = vadd.f32 %v5169, %v5401
  %v5580 = vadd.f32 %v5170, %v5403
  %v5581 = vadd.f32 %v5171, %v5407
  %v5582 = vadd.f32 %v5172, %v5409
  %v5583 = vadd.f32 %v5173, %v5413
  %v5584 = vadd.f32 %v5174, %v5415
  %v5585 = vadd.f32 %v5175, %v5419
  %v5586 = vadd.f32 %v5176, %v5421
  %v5587 = vadd.f32 %v5177, %v5425
  %v5588 = vadd.f32 %v5178, %v5427
  %v5589 = vadd.f32 %v5179, %v5431
  %v5590 = vadd.f32 %v5180, %v5433
  %v5591 = vadd.f32 %v5181, %v5437
  %v5592 = vadd.f32 %v5182, %v5439
  %v5593 = vadd.f32 %v5183, %v5443
  %v5594 = vadd.f32 %v5184, %v5445
  %v5595 = vadd.f32 %v5185, %v5449
  %v5596 = vadd.f32 %v5186, %v5451
  %v5597 = vadd.f32 %v5187, %v5455
  %v5598 = vadd.f32 %v5188, %v5457
  %v5599 = vadd.f32 %v5189, %v5461
  %v5600 = vadd.f32 %v5190, %v5463
  %v5601 = vadd.f32 %v5191, %v5467
  %v5602 = vadd.f32 %v5192, %v5469
  %v5603 = vadd.f32 %v5193, %v5473
  %v5604 = vadd.f32 %v5194, %v5475
  %v5605 = vadd.f32 %v5195, %v5479
  %v5606 = vadd.f32 %v5196, %v5481
  %v5607 = vadd.f32 %v5197, %v5485
  %v5608 = vadd.f32 %v5198, %v5487
  %v5609 = vadd.f32 %v5199, %v5491
  %v5610 = vadd.f32 %v5200, %v5493
  %v5611 = vadd.f32 %v5201, %v5497
  %v5612 = vadd.f32 %v5202, %v5499
  %v5613 = vadd.f32 %v5203, %v5503
  %v5614 = vadd.f32 %v5204, %v5505
  %v5615 = vadd.f32 %v5205, %v5509
  %v5616 = vadd.f32 %v5206, %v5511
  %v5617 = vadd.f32 %v5207, %v5515
  %v5618 = vadd.f32 %v5208, %v5517
  %v5619 = vadd.f32 %v5209, %v5521
  %v5620 = vadd.f32 %v5210, %v5523
  %v5621 = vadd.f32 %v5211, %v5527
  %v5622 = vadd.f32 %v5212, %v5529
  %v5623 = vadd.f32 %v5213, %v5533
  %v5624 = vadd.f32 %v5214, %v5535
  %v5625 = vadd.f32 %v5215, %v5539
  %v5626 = vadd.f32 %v5216, %v5541
  %v5627 = vadd.f32 %v5217, %v5545
  %v5628 = vadd.f32 %v5218, %v5547
  %v5629 = vadd.f32 %v5219, %v5551
  %v5630 = vadd.f32 %v5220, %v5553
  %s5631 = scalar_lea.vmem %s4, 704
  %v5632 = vld [vmem:[%s5631] sm:$0xff]
  %v5633 = vld [vmem:[%s5631 + $0x8] sm:$0xff]
  %v5634 = vld [vmem:[%s5631 + $0x10] sm:$0xff]
  %v5635 = vld [vmem:[%s5631 + $0x18] sm:$0xff]
  %v5636 = vld [vmem:[%s5631 + $0x20] sm:$0xff]
  %v5637 = vld [vmem:[%s5631 + $0x28] sm:$0xff]
  %v5638 = vld [vmem:[%s5631 + $0x30] sm:$0xff]
  %v5639 = vld [vmem:[%s5631 + $0x38] sm:$0xff]
  %v5640 = vld [vmem:[%s5631 + $0x40] sm:$0xff]
  %v5641 = vld [vmem:[%s5631 + $0x48] sm:$0xff]
  %v5642 = vld [vmem:[%s5631 + $0x50] sm:$0xff]
  %v5643 = vld [vmem:[%s5631 + $0x58] sm:$0xff]
  %v5644 = vld [vmem:[%s5631 + $0x60] sm:$0xff]
  %v5645 = vld [vmem:[%s5631 + $0x68] sm:$0xff]
  %v5646 = vld [vmem:[%s5631 + $0x70] sm:$0xff]
  %v5647 = vld [vmem:[%s5631 + $0x78] sm:$0xff]
  %v5648 = vld [vmem:[%s5631 + $0x80] sm:$0xff]
  %v5649 = vld [vmem:[%s5631 + $0x88] sm:$0xff]
  %v5650 = vld [vmem:[%s5631 + $0x90] sm:$0xff]
  %v5651 = vld [vmem:[%s5631 + $0x98] sm:$0xff]
  %v5652 = vld [vmem:[%s5631 + $0xa0] sm:$0xf]
  %v5653 = vld [vmem:[%s5631 + $0xa8] sm:$0xf]
  %v5655 = vsel %vm4085, %v4036, 0
  %v5658 = vsel %vm4085, %v4037, 0
  %v5661 = vsel %vm4085, %v4038, 0
  %v5664 = vsel %vm4085, %v4039, 0
  %v5667 = vsel %vm4200, %v5652, 0
  %v5670 = vsel %vm4200, %v5653, 0
  %5672 = vmatprep.subr.mxu0 0.0
  %5673 = vmatpush1.msra.mxu0 0.0
  %5674 = vmatprep.subr.mxu0 0.0
  %5675 = vmatpush1.msra.mxu0 0.0
  %5676 = vmatprep.subr.mxu0 0.0
  %5677 = vmatpush1.msra.mxu0 0.0
  %5678 = vmatprep.subr.mxu0 0.0
  %5679 = vmatpush1.msra.mxu0 0.0
  %5680 = vmatprep.subr.mxu0 0.0
  %5681 = vmatpush1.msra.mxu0 0.0
  %5682 = vmatprep.subr.mxu0 %v5670
  %5683 = vmatpush1.msra.mxu0 %v5667
  %5684 = vmatprep.subr.mxu0 %v5651
  %5685 = vmatpush1.msra.mxu0 %v5650
  %5686 = vmatprep.subr.mxu0 %v5649
  %5687 = vmatpush1.msra.mxu0 %v5648
  %5688 = vmatprep.subr.mxu0 %v5647
  %5689 = vmatpush1.msra.mxu0 %v5646
  %5690 = vmatprep.subr.mxu0 %v5645
  %5691 = vmatpush1.msra.mxu0 %v5644
  %5692 = vmatprep.subr.mxu0 %v5643
  %5693 = vmatpush1.msra.mxu0 %v5642
  %5694 = vmatprep.subr.mxu0 %v5641
  %5695 = vmatpush1.msra.mxu0 %v5640
  %5696 = vmatprep.subr.mxu0 %v5639
  %5697 = vmatpush1.msra.mxu0 %v5638
  %5698 = vmatprep.subr.mxu0 %v5637
  %5699 = vmatpush1.msra.mxu0 %v5636
  %5700 = vmatprep.subr.mxu0 %v5635
  %5701 = vmatpush1.msra.mxu0 %v5634
  %5702 = vmatprep.subr.mxu0 %v5633
  %5703 = vmatpush1.msra.mxu0 %v5632
  %5704 = vmatprep.subr.mxu0 0.0
  %5705 = vmatpush2.msra.mxu0 0.0
  %5706 = vmatprep.subr.mxu0 0.0
  %5707 = vmatpush2.msra.mxu0 0.0
  %5708 = vmatprep.subr.mxu0 0.0
  %5709 = vmatpush2.msra.mxu0 0.0
  %5710 = vmatprep.subr.mxu0 0.0
  %5711 = vmatpush2.msra.mxu0 0.0
  %5712 = vmatprep.subr.mxu0 0.0
  %5713 = vmatpush2.msra.mxu0 0.0
  %5714 = vmatprep.subr.mxu0 0.0
  %5715 = vmatpush2.msra.mxu0 0.0
  %5716 = vmatprep.subr.mxu0 0.0
  %5717 = vmatpush2.msra.mxu0 0.0
  %5718 = vmatprep.subr.mxu0 0.0
  %5719 = vmatpush2.msra.mxu0 0.0
  %5720 = vmatprep.subr.mxu0 0.0
  %5721 = vmatpush2.msra.mxu0 0.0
  %5722 = vmatprep.subr.mxu0 0.0
  %5723 = vmatpush2.msra.mxu0 0.0
  %5724 = vmatprep.subr.mxu0 0.0
  %5725 = vmatpush2.msra.mxu0 0.0
  %5726 = vmatprep.subr.mxu0 0.0
  %5727 = vmatpush2.msra.mxu0 0.0
  %5728 = vmatprep.subr.mxu0 0.0
  %5729 = vmatpush2.msra.mxu0 0.0
  %5730 = vmatprep.subr.mxu0 0.0
  %5731 = vmatpush2.msra.mxu0 0.0
  %5732 = vmatprep.subr.mxu0 0.0
  %5733 = vmatpush2.msra.mxu0 0.0
  %5734 = vmatprep.subr.mxu0 0.0
  %5735 = vmatpush2.msra.mxu0 0.0
  %5736 = vmatprep.mubr.f32.mxu0 0.0
  %5737 = vmatmul.mubr.f32.gmra.mxu0 %v4123
  %v5738 = vpop.f32.mrf.mxu0
  %v5739 = vadd.f32 0.0, %v5738
  %v5740 = vpop.f32.mrf.mxu0
  %v5741 = vadd.f32 0.0, %v5740
  %5742 = vmatprep.mubr.f32.mxu0 0.0
  %5743 = vmatmul.mubr.f32.gmra.mxu0 %v4126
  %v5744 = vpop.f32.mrf.mxu0
  %v5745 = vadd.f32 0.0, %v5744
  %v5746 = vpop.f32.mrf.mxu0
  %v5747 = vadd.f32 0.0, %v5746
  %5748 = vmatprep.mubr.f32.mxu0 0.0
  %5749 = vmatmul.mubr.f32.gmra.mxu0 %v4129
  %v5750 = vpop.f32.mrf.mxu0
  %v5751 = vadd.f32 0.0, %v5750
  %v5752 = vpop.f32.mrf.mxu0
  %v5753 = vadd.f32 0.0, %v5752
  %5754 = vmatprep.mubr.f32.mxu0 0.0
  %5755 = vmatmul.mubr.f32.gmra.mxu0 %v4132
  %v5756 = vpop.f32.mrf.mxu0
  %v5757 = vadd.f32 0.0, %v5756
  %v5758 = vpop.f32.mrf.mxu0
  %v5759 = vadd.f32 0.0, %v5758
  %5760 = vmatprep.mubr.f32.mxu0 0.0
  %5761 = vmatmul.mubr.f32.gmra.mxu0 %v4135
  %v5762 = vpop.f32.mrf.mxu0
  %v5763 = vadd.f32 0.0, %v5762
  %v5764 = vpop.f32.mrf.mxu0
  %v5765 = vadd.f32 0.0, %v5764
  %5766 = vmatprep.mubr.f32.mxu0 0.0
  %5767 = vmatmul.mubr.f32.gmra.mxu0 %v4138
  %v5768 = vpop.f32.mrf.mxu0
  %v5769 = vadd.f32 0.0, %v5768
  %v5770 = vpop.f32.mrf.mxu0
  %v5771 = vadd.f32 0.0, %v5770
  %5772 = vmatprep.mubr.f32.mxu0 0.0
  %5773 = vmatmul.mubr.f32.gmra.mxu0 %v4141
  %v5774 = vpop.f32.mrf.mxu0
  %v5775 = vadd.f32 0.0, %v5774
  %v5776 = vpop.f32.mrf.mxu0
  %v5777 = vadd.f32 0.0, %v5776
  %5778 = vmatprep.mubr.f32.mxu0 0.0
  %5779 = vmatmul.mubr.f32.gmra.mxu0 %v4144
  %v5780 = vpop.f32.mrf.mxu0
  %v5781 = vadd.f32 0.0, %v5780
  %v5782 = vpop.f32.mrf.mxu0
  %v5783 = vadd.f32 0.0, %v5782
  %5784 = vmatprep.mubr.f32.mxu0 0.0
  %5785 = vmatmul.mubr.f32.gmra.mxu0 %v4147
  %v5786 = vpop.f32.mrf.mxu0
  %v5787 = vadd.f32 0.0, %v5786
  %v5788 = vpop.f32.mrf.mxu0
  %v5789 = vadd.f32 0.0, %v5788
  %5790 = vmatprep.mubr.f32.mxu0 0.0
  %5791 = vmatmul.mubr.f32.gmra.mxu0 %v4150
  %v5792 = vpop.f32.mrf.mxu0
  %v5793 = vadd.f32 0.0, %v5792
  %v5794 = vpop.f32.mrf.mxu0
  %v5795 = vadd.f32 0.0, %v5794
  %5796 = vmatprep.mubr.f32.mxu0 0.0
  %5797 = vmatmul.mubr.f32.gmra.mxu0 %v4153
  %v5798 = vpop.f32.mrf.mxu0
  %v5799 = vadd.f32 0.0, %v5798
  %v5800 = vpop.f32.mrf.mxu0
  %v5801 = vadd.f32 0.0, %v5800
  %5802 = vmatprep.mubr.f32.mxu0 0.0
  %5803 = vmatmul.mubr.f32.gmra.mxu0 %v4156
  %v5804 = vpop.f32.mrf.mxu0
  %v5805 = vadd.f32 0.0, %v5804
  %v5806 = vpop.f32.mrf.mxu0
  %v5807 = vadd.f32 0.0, %v5806
  %5808 = vmatprep.mubr.f32.mxu0 0.0
  %5809 = vmatmul.mubr.f32.gmra.mxu0 %v4159
  %v5810 = vpop.f32.mrf.mxu0
  %v5811 = vadd.f32 0.0, %v5810
  %v5812 = vpop.f32.mrf.mxu0
  %v5813 = vadd.f32 0.0, %v5812
  %5814 = vmatprep.mubr.f32.mxu0 0.0
  %5815 = vmatmul.mubr.f32.gmra.mxu0 %v4162
  %v5816 = vpop.f32.mrf.mxu0
  %v5817 = vadd.f32 0.0, %v5816
  %v5818 = vpop.f32.mrf.mxu0
  %v5819 = vadd.f32 0.0, %v5818
  %5820 = vmatprep.mubr.f32.mxu0 0.0
  %5821 = vmatmul.mubr.f32.gmra.mxu0 %v4165
  %v5822 = vpop.f32.mrf.mxu0
  %v5823 = vadd.f32 0.0, %v5822
  %v5824 = vpop.f32.mrf.mxu0
  %v5825 = vadd.f32 0.0, %v5824
  %5826 = vmatprep.mubr.f32.mxu0 0.0
  %5827 = vmatmul.mubr.f32.gmra.mxu0 %v4168
  %v5828 = vpop.f32.mrf.mxu0
  %v5829 = vadd.f32 0.0, %v5828
  %v5830 = vpop.f32.mrf.mxu0
  %v5831 = vadd.f32 0.0, %v5830
  %5832 = vmatprep.mubr.f32.mxu0 0.0
  %5833 = vmatmul.mubr.f32.gmra.mxu0 %v4171
  %v5834 = vpop.f32.mrf.mxu0
  %v5835 = vadd.f32 0.0, %v5834
  %v5836 = vpop.f32.mrf.mxu0
  %v5837 = vadd.f32 0.0, %v5836
  %5838 = vmatprep.mubr.f32.mxu0 0.0
  %5839 = vmatmul.mubr.f32.gmra.mxu0 %v4174
  %v5840 = vpop.f32.mrf.mxu0
  %v5841 = vadd.f32 0.0, %v5840
  %v5842 = vpop.f32.mrf.mxu0
  %v5843 = vadd.f32 0.0, %v5842
  %5844 = vmatprep.mubr.f32.mxu0 0.0
  %5845 = vmatmul.mubr.f32.gmra.mxu0 %v4177
  %v5846 = vpop.f32.mrf.mxu0
  %v5847 = vadd.f32 0.0, %v5846
  %v5848 = vpop.f32.mrf.mxu0
  %v5849 = vadd.f32 0.0, %v5848
  %5850 = vmatprep.mubr.f32.mxu0 0.0
  %5851 = vmatmul.mubr.f32.gmra.mxu0 %v4180
  %v5852 = vpop.f32.mrf.mxu0
  %v5853 = vadd.f32 0.0, %v5852
  %v5854 = vpop.f32.mrf.mxu0
  %v5855 = vadd.f32 0.0, %v5854
  %5856 = vmatprep.mubr.f32.mxu0 0.0
  %5857 = vmatmul.mubr.f32.gmra.mxu0 %v4183
  %v5858 = vpop.f32.mrf.mxu0
  %v5859 = vadd.f32 0.0, %v5858
  %v5860 = vpop.f32.mrf.mxu0
  %v5861 = vadd.f32 0.0, %v5860
  %5862 = vmatprep.mubr.f32.mxu0 0.0
  %5863 = vmatmul.mubr.f32.gmra.mxu0 %v4186
  %v5864 = vpop.f32.mrf.mxu0
  %v5865 = vadd.f32 0.0, %v5864
  %v5866 = vpop.f32.mrf.mxu0
  %v5867 = vadd.f32 0.0, %v5866
  %5868 = vmatprep.mubr.f32.mxu0 0.0
  %5869 = vmatmul.mubr.f32.gmra.mxu0 %v4189
  %v5870 = vpop.f32.mrf.mxu0
  %v5871 = vadd.f32 0.0, %v5870
  %v5872 = vpop.f32.mrf.mxu0
  %v5873 = vadd.f32 0.0, %v5872
  %5874 = vmatprep.mubr.f32.mxu0 0.0
  %5875 = vmatmul.mubr.f32.gmra.mxu0 %v4192
  %v5876 = vpop.f32.mrf.mxu0
  %v5877 = vadd.f32 0.0, %v5876
  %v5878 = vpop.f32.mrf.mxu0
  %v5879 = vadd.f32 0.0, %v5878
  %5880 = vmatprep.mubr.f32.mxu0 0.0
  %5881 = vmatmul.mubr.f32.gmra.mxu0 %v4195
  %v5882 = vpop.f32.mrf.mxu0
  %v5883 = vadd.f32 0.0, %v5882
  %v5884 = vpop.f32.mrf.mxu0
  %v5885 = vadd.f32 0.0, %v5884
  %5886 = vmatprep.mubr.f32.mxu0 0.0
  %5887 = vmatmul.mubr.f32.gmra.mxu0 %v4198
  %v5888 = vpop.f32.mrf.mxu0
  %v5889 = vadd.f32 0.0, %v5888
  %v5890 = vpop.f32.mrf.mxu0
  %v5891 = vadd.f32 0.0, %v5890
  %5892 = vmatprep.mubr.f32.mxu0 0.0
  %5893 = vmatmul.mubr.f32.gmra.mxu0 %v4835
  %v5894 = vpop.f32.mrf.mxu0
  %v5895 = vadd.f32 0.0, %v5894
  %v5896 = vpop.f32.mrf.mxu0
  %v5897 = vadd.f32 0.0, %v5896
  %5898 = vmatprep.mubr.f32.mxu0 0.0
  %5899 = vmatmul.mubr.f32.gmra.mxu0 %v4838
  %v5900 = vpop.f32.mrf.mxu0
  %v5901 = vadd.f32 0.0, %v5900
  %v5902 = vpop.f32.mrf.mxu0
  %v5903 = vadd.f32 0.0, %v5902
  %5904 = vmatprep.mubr.f32.mxu0 0.0
  %5905 = vmatmul.mubr.f32.gmra.mxu0 %v4841
  %v5906 = vpop.f32.mrf.mxu0
  %v5907 = vadd.f32 0.0, %v5906
  %v5908 = vpop.f32.mrf.mxu0
  %v5909 = vadd.f32 0.0, %v5908
  %5910 = vmatprep.mubr.f32.mxu0 0.0
  %5911 = vmatmul.mubr.f32.gmra.mxu0 %v4844
  %v5912 = vpop.f32.mrf.mxu0
  %v5913 = vadd.f32 0.0, %v5912
  %v5914 = vpop.f32.mrf.mxu0
  %v5915 = vadd.f32 0.0, %v5914
  %5916 = vmatprep.mubr.f32.mxu0 0.0
  %5917 = vmatmul.mubr.f32.gmra.mxu0 %v5245
  %v5918 = vpop.f32.mrf.mxu0
  %v5919 = vadd.f32 0.0, %v5918
  %v5920 = vpop.f32.mrf.mxu0
  %v5921 = vadd.f32 0.0, %v5920
  %5922 = vmatprep.mubr.f32.mxu0 0.0
  %5923 = vmatmul.mubr.f32.gmra.mxu0 %v5248
  %v5924 = vpop.f32.mrf.mxu0
  %v5925 = vadd.f32 0.0, %v5924
  %v5926 = vpop.f32.mrf.mxu0
  %v5927 = vadd.f32 0.0, %v5926
  %5928 = vmatprep.mubr.f32.mxu0 0.0
  %5929 = vmatmul.mubr.f32.gmra.mxu0 %v5251
  %v5930 = vpop.f32.mrf.mxu0
  %v5931 = vadd.f32 0.0, %v5930
  %v5932 = vpop.f32.mrf.mxu0
  %v5933 = vadd.f32 0.0, %v5932
  %5934 = vmatprep.mubr.f32.mxu0 0.0
  %5935 = vmatmul.mubr.f32.gmra.mxu0 %v5254
  %v5936 = vpop.f32.mrf.mxu0
  %v5937 = vadd.f32 0.0, %v5936
  %v5938 = vpop.f32.mrf.mxu0
  %v5939 = vadd.f32 0.0, %v5938
  %5940 = vmatprep.mubr.f32.mxu0 0.0
  %5941 = vmatmul.mubr.f32.gmra.mxu0 %v5655
  %v5942 = vpop.f32.mrf.mxu0
  %v5943 = vadd.f32 0.0, %v5942
  %v5944 = vpop.f32.mrf.mxu0
  %v5945 = vadd.f32 0.0, %v5944
  %5946 = vmatprep.mubr.f32.mxu0 0.0
  %5947 = vmatmul.mubr.f32.gmra.mxu0 %v5658
  %v5948 = vpop.f32.mrf.mxu0
  %v5949 = vadd.f32 0.0, %v5948
  %v5950 = vpop.f32.mrf.mxu0
  %v5951 = vadd.f32 0.0, %v5950
  %5952 = vmatprep.mubr.f32.mxu0 0.0
  %5953 = vmatmul.mubr.f32.gmra.mxu0 %v5661
  %v5954 = vpop.f32.mrf.mxu0
  %v5955 = vadd.f32 0.0, %v5954
  %v5956 = vpop.f32.mrf.mxu0
  %v5957 = vadd.f32 0.0, %v5956
  %5958 = vmatprep.mubr.f32.mxu0 0.0
  %5959 = vmatmul.mubr.f32.gmra.mxu0 %v5664
  %v5960 = vpop.f32.mrf.mxu0
  %v5961 = vadd.f32 0.0, %v5960
  %v5962 = vpop.f32.mrf.mxu0
  %v5963 = vadd.f32 0.0, %v5962
  %5964 = vdwg.mxu0
  %v5965 = vadd.f32 %v5555, %v5739
  %v5966 = vadd.f32 %v5556, %v5741
  %v5967 = vadd.f32 %v5557, %v5745
  %v5968 = vadd.f32 %v5558, %v5747
  %v5969 = vadd.f32 %v5559, %v5751
  %v5970 = vadd.f32 %v5560, %v5753
  %v5971 = vadd.f32 %v5561, %v5757
  %v5972 = vadd.f32 %v5562, %v5759
  %v5973 = vadd.f32 %v5563, %v5763
  %v5974 = vadd.f32 %v5564, %v5765
  %v5975 = vadd.f32 %v5565, %v5769
  %v5976 = vadd.f32 %v5566, %v5771
  %v5977 = vadd.f32 %v5567, %v5775
  %v5978 = vadd.f32 %v5568, %v5777
  %v5979 = vadd.f32 %v5569, %v5781
  %v5980 = vadd.f32 %v5570, %v5783
  %v5981 = vadd.f32 %v5571, %v5787
  %v5982 = vadd.f32 %v5572, %v5789
  %v5983 = vadd.f32 %v5573, %v5793
  %v5984 = vadd.f32 %v5574, %v5795
  %v5985 = vadd.f32 %v5575, %v5799
  %v5986 = vadd.f32 %v5576, %v5801
  %v5987 = vadd.f32 %v5577, %v5805
  %v5988 = vadd.f32 %v5578, %v5807
  %v5989 = vadd.f32 %v5579, %v5811
  %v5990 = vadd.f32 %v5580, %v5813
  %v5991 = vadd.f32 %v5581, %v5817
  %v5992 = vadd.f32 %v5582, %v5819
  %v5993 = vadd.f32 %v5583, %v5823
  %v5994 = vadd.f32 %v5584, %v5825
  %v5995 = vadd.f32 %v5585, %v5829
  %v5996 = vadd.f32 %v5586, %v5831
  %v5997 = vadd.f32 %v5587, %v5835
  %v5998 = vadd.f32 %v5588, %v5837
  %v5999 = vadd.f32 %v5589, %v5841
  %v6000 = vadd.f32 %v5590, %v5843
  %v6001 = vadd.f32 %v5591, %v5847
  %v6002 = vadd.f32 %v5592, %v5849
  %v6003 = vadd.f32 %v5593, %v5853
  %v6004 = vadd.f32 %v5594, %v5855
  %v6005 = vadd.f32 %v5595, %v5859
  %v6006 = vadd.f32 %v5596, %v5861
  %v6007 = vadd.f32 %v5597, %v5865
  %v6008 = vadd.f32 %v5598, %v5867
  %v6009 = vadd.f32 %v5599, %v5871
  %v6010 = vadd.f32 %v5600, %v5873
  %v6011 = vadd.f32 %v5601, %v5877
  %v6012 = vadd.f32 %v5602, %v5879
  %v6013 = vadd.f32 %v5603, %v5883
  %v6014 = vadd.f32 %v5604, %v5885
  %v6015 = vadd.f32 %v5605, %v5889
  %v6016 = vadd.f32 %v5606, %v5891
  %v6017 = vadd.f32 %v5607, %v5895
  %v6018 = vadd.f32 %v5608, %v5897
  %v6019 = vadd.f32 %v5609, %v5901
  %v6020 = vadd.f32 %v5610, %v5903
  %v6021 = vadd.f32 %v5611, %v5907
  %v6022 = vadd.f32 %v5612, %v5909
  %v6023 = vadd.f32 %v5613, %v5913
  %v6024 = vadd.f32 %v5614, %v5915
  %v6025 = vadd.f32 %v5615, %v5919
  %v6026 = vadd.f32 %v5616, %v5921
  %v6027 = vadd.f32 %v5617, %v5925
  %v6028 = vadd.f32 %v5618, %v5927
  %v6029 = vadd.f32 %v5619, %v5931
  %v6030 = vadd.f32 %v5620, %v5933
  %v6031 = vadd.f32 %v5621, %v5937
  %v6032 = vadd.f32 %v5622, %v5939
  %v6033 = vadd.f32 %v5623, %v5943
  %v6034 = vadd.f32 %v5624, %v5945
  %v6035 = vadd.f32 %v5625, %v5949
  %v6036 = vadd.f32 %v5626, %v5951
  %v6037 = vadd.f32 %v5627, %v5955
  %v6038 = vadd.f32 %v5628, %v5957
  %v6039 = vadd.f32 %v5629, %v5961
  %v6040 = vadd.f32 %v5630, %v5963
  %v6041 = vld [vmem:[%s5] sm:$0x3]
  %v6043 = vlaneseq
  %v6044 = vshrl.u32 %v6043, 7
  %v6045 = vsub.s32 0, %v6044
  %v6046 = vrot.slane %v6041, %v6045
  %v6047 = vlaneseq
  %v6048 = vshrl.u32 %v6047, 7
  %v6049 = vsub.s32 1, %v6048
  %v6050 = vrot.slane %v6041, %v6049
  %v6053 = vadd.f32 %v5965, %v6046
  %v6054 = vadd.f32 %v5966, %v6050
  %v6055 = vadd.f32 %v5967, %v6046
  %v6056 = vadd.f32 %v5968, %v6050
  %v6057 = vadd.f32 %v5969, %v6046
  %v6058 = vadd.f32 %v5970, %v6050
  %v6059 = vadd.f32 %v5971, %v6046
  %v6060 = vadd.f32 %v5972, %v6050
  %v6061 = vadd.f32 %v5973, %v6046
  %v6062 = vadd.f32 %v5974, %v6050
  %v6063 = vadd.f32 %v5975, %v6046
  %v6064 = vadd.f32 %v5976, %v6050
  %v6065 = vadd.f32 %v5977, %v6046
  %v6066 = vadd.f32 %v5978, %v6050
  %v6067 = vadd.f32 %v5979, %v6046
  %v6068 = vadd.f32 %v5980, %v6050
  %v6069 = vadd.f32 %v5981, %v6046
  %v6070 = vadd.f32 %v5982, %v6050
  %v6071 = vadd.f32 %v5983, %v6046
  %v6072 = vadd.f32 %v5984, %v6050
  %v6073 = vadd.f32 %v5985, %v6046
  %v6074 = vadd.f32 %v5986, %v6050
  %v6075 = vadd.f32 %v5987, %v6046
  %v6076 = vadd.f32 %v5988, %v6050
  %v6077 = vadd.f32 %v5989, %v6046
  %v6078 = vadd.f32 %v5990, %v6050
  %v6079 = vadd.f32 %v5991, %v6046
  %v6080 = vadd.f32 %v5992, %v6050
  %v6081 = vadd.f32 %v5993, %v6046
  %v6082 = vadd.f32 %v5994, %v6050
  %v6083 = vadd.f32 %v5995, %v6046
  %v6084 = vadd.f32 %v5996, %v6050
  %v6085 = vadd.f32 %v5997, %v6046
  %v6086 = vadd.f32 %v5998, %v6050
  %v6087 = vadd.f32 %v5999, %v6046
  %v6088 = vadd.f32 %v6000, %v6050
  %v6089 = vadd.f32 %v6001, %v6046
  %v6090 = vadd.f32 %v6002, %v6050
  %v6091 = vadd.f32 %v6003, %v6046
  %v6092 = vadd.f32 %v6004, %v6050
  %v6093 = vadd.f32 %v6005, %v6046
  %v6094 = vadd.f32 %v6006, %v6050
  %v6095 = vadd.f32 %v6007, %v6046
  %v6096 = vadd.f32 %v6008, %v6050
  %v6097 = vadd.f32 %v6009, %v6046
  %v6098 = vadd.f32 %v6010, %v6050
  %v6099 = vadd.f32 %v6011, %v6046
  %v6100 = vadd.f32 %v6012, %v6050
  %v6101 = vadd.f32 %v6013, %v6046
  %v6102 = vadd.f32 %v6014, %v6050
  %v6103 = vadd.f32 %v6015, %v6046
  %v6104 = vadd.f32 %v6016, %v6050
  %v6105 = vadd.f32 %v6017, %v6046
  %v6106 = vadd.f32 %v6018, %v6050
  %v6107 = vadd.f32 %v6019, %v6046
  %v6108 = vadd.f32 %v6020, %v6050
  %v6109 = vadd.f32 %v6021, %v6046
  %v6110 = vadd.f32 %v6022, %v6050
  %v6111 = vadd.f32 %v6023, %v6046
  %v6112 = vadd.f32 %v6024, %v6050
  %v6113 = vadd.f32 %v6025, %v6046
  %v6114 = vadd.f32 %v6026, %v6050
  %v6115 = vadd.f32 %v6027, %v6046
  %v6116 = vadd.f32 %v6028, %v6050
  %v6117 = vadd.f32 %v6029, %v6046
  %v6118 = vadd.f32 %v6030, %v6050
  %v6119 = vadd.f32 %v6031, %v6046
  %v6120 = vadd.f32 %v6032, %v6050
  %v6121 = vadd.f32 %v6033, %v6046
  %v6122 = vadd.f32 %v6034, %v6050
  %v6123 = vadd.f32 %v6035, %v6046
  %v6124 = vadd.f32 %v6036, %v6050
  %v6125 = vadd.f32 %v6037, %v6046
  %v6126 = vadd.f32 %v6038, %v6050
  %v6127 = vadd.f32 %v6039, %v6046
  %v6128 = vadd.f32 %v6040, %v6050
  %v6129 = vmax.f32 %v6053, 0.0
  %v6130 = vmax.f32 %v6054, 0.0
  %v6131 = vmax.f32 %v6055, 0.0
  %v6132 = vmax.f32 %v6056, 0.0
  %v6133 = vmax.f32 %v6057, 0.0
  %v6134 = vmax.f32 %v6058, 0.0
  %v6135 = vmax.f32 %v6059, 0.0
  %v6136 = vmax.f32 %v6060, 0.0
  %v6137 = vmax.f32 %v6061, 0.0
  %v6138 = vmax.f32 %v6062, 0.0
  %v6139 = vmax.f32 %v6063, 0.0
  %v6140 = vmax.f32 %v6064, 0.0
  %v6141 = vmax.f32 %v6065, 0.0
  %v6142 = vmax.f32 %v6066, 0.0
  %v6143 = vmax.f32 %v6067, 0.0
  %v6144 = vmax.f32 %v6068, 0.0
  %v6145 = vmax.f32 %v6069, 0.0
  %v6146 = vmax.f32 %v6070, 0.0
  %v6147 = vmax.f32 %v6071, 0.0
  %v6148 = vmax.f32 %v6072, 0.0
  %v6149 = vmax.f32 %v6073, 0.0
  %v6150 = vmax.f32 %v6074, 0.0
  %v6151 = vmax.f32 %v6075, 0.0
  %v6152 = vmax.f32 %v6076, 0.0
  %v6153 = vmax.f32 %v6077, 0.0
  %v6154 = vmax.f32 %v6078, 0.0
  %v6155 = vmax.f32 %v6079, 0.0
  %v6156 = vmax.f32 %v6080, 0.0
  %v6157 = vmax.f32 %v6081, 0.0
  %v6158 = vmax.f32 %v6082, 0.0
  %v6159 = vmax.f32 %v6083, 0.0
  %v6160 = vmax.f32 %v6084, 0.0
  %v6161 = vmax.f32 %v6085, 0.0
  %v6162 = vmax.f32 %v6086, 0.0
  %v6163 = vmax.f32 %v6087, 0.0
  %v6164 = vmax.f32 %v6088, 0.0
  %v6165 = vmax.f32 %v6089, 0.0
  %v6166 = vmax.f32 %v6090, 0.0
  %v6167 = vmax.f32 %v6091, 0.0
  %v6168 = vmax.f32 %v6092, 0.0
  %v6169 = vmax.f32 %v6093, 0.0
  %v6170 = vmax.f32 %v6094, 0.0
  %v6171 = vmax.f32 %v6095, 0.0
  %v6172 = vmax.f32 %v6096, 0.0
  %v6173 = vmax.f32 %v6097, 0.0
  %v6174 = vmax.f32 %v6098, 0.0
  %v6175 = vmax.f32 %v6099, 0.0
  %v6176 = vmax.f32 %v6100, 0.0
  %v6177 = vmax.f32 %v6101, 0.0
  %v6178 = vmax.f32 %v6102, 0.0
  %v6179 = vmax.f32 %v6103, 0.0
  %v6180 = vmax.f32 %v6104, 0.0
  %v6181 = vmax.f32 %v6105, 0.0
  %v6182 = vmax.f32 %v6106, 0.0
  %v6183 = vmax.f32 %v6107, 0.0
  %v6184 = vmax.f32 %v6108, 0.0
  %v6185 = vmax.f32 %v6109, 0.0
  %v6186 = vmax.f32 %v6110, 0.0
  %v6187 = vmax.f32 %v6111, 0.0
  %v6188 = vmax.f32 %v6112, 0.0
  %v6189 = vmax.f32 %v6113, 0.0
  %v6190 = vmax.f32 %v6114, 0.0
  %v6191 = vmax.f32 %v6115, 0.0
  %v6192 = vmax.f32 %v6116, 0.0
  %v6193 = vmax.f32 %v6117, 0.0
  %v6194 = vmax.f32 %v6118, 0.0
  %v6195 = vmax.f32 %v6119, 0.0
  %v6196 = vmax.f32 %v6120, 0.0
  %v6197 = vmax.f32 %v6121, 0.0
  %v6198 = vmax.f32 %v6122, 0.0
  %v6199 = vmax.f32 %v6123, 0.0
  %v6200 = vmax.f32 %v6124, 0.0
  %v6201 = vmax.f32 %v6125, 0.0
  %v6202 = vmax.f32 %v6126, 0.0
  %v6203 = vmax.f32 %v6127, 0.0
  %v6204 = vmax.f32 %v6128, 0.0
  %v6205 = vmax.f32 %v6129, %v6137
  %v6206 = vmax.f32 %v6130, %v6138
  %v6207 = vmax.f32 %v6131, %v6139
  %v6208 = vmax.f32 %v6132, %v6140
  %v6209 = vmax.f32 %v6133, %v6141
  %v6210 = vmax.f32 %v6134, %v6142
  %v6211 = vmax.f32 %v6135, %v6143
  %v6212 = vmax.f32 %v6136, %v6144
  %v6213 = vmax.f32 %v6137, %v6145
  %v6214 = vmax.f32 %v6138, %v6146
  %v6215 = vmax.f32 %v6139, %v6147
  %v6216 = vmax.f32 %v6140, %v6148
  %v6217 = vmax.f32 %v6141, %v6149
  %v6218 = vmax.f32 %v6142, %v6150
  %v6219 = vmax.f32 %v6143, %v6151
  %v6220 = vmax.f32 %v6144, %v6152
  %v6221 = vmax.f32 %v6145, %v6153
  %v6222 = vmax.f32 %v6146, %v6154
  %v6223 = vmax.f32 %v6147, %v6155
  %v6224 = vmax.f32 %v6148, %v6156
  %v6225 = vmax.f32 %v6149, %v6157
  %v6226 = vmax.f32 %v6150, %v6158
  %v6227 = vmax.f32 %v6151, %v6159
  %v6228 = vmax.f32 %v6152, %v6160
  %v6229 = vmax.f32 %v6153, %v6161
  %v6230 = vmax.f32 %v6154, %v6162
  %v6231 = vmax.f32 %v6155, %v6163
  %v6232 = vmax.f32 %v6156, %v6164
  %v6233 = vmax.f32 %v6157, %v6165
  %v6234 = vmax.f32 %v6158, %v6166
  %v6235 = vmax.f32 %v6159, %v6167
  %v6236 = vmax.f32 %v6160, %v6168
  %v6237 = vmax.f32 %v6161, %v6169
  %v6238 = vmax.f32 %v6162, %v6170
  %v6239 = vmax.f32 %v6163, %v6171
  %v6240 = vmax.f32 %v6164, %v6172
  %v6241 = vmax.f32 %v6165, %v6173
  %v6242 = vmax.f32 %v6166, %v6174
  %v6243 = vmax.f32 %v6167, %v6175
  %v6244 = vmax.f32 %v6168, %v6176
  %v6245 = vmax.f32 %v6169, %v6177
  %v6246 = vmax.f32 %v6170, %v6178
  %v6247 = vmax.f32 %v6171, %v6179
  %v6248 = vmax.f32 %v6172, %v6180
  %v6249 = vmax.f32 %v6173, %v6181
  %v6250 = vmax.f32 %v6174, %v6182
  %v6251 = vmax.f32 %v6175, %v6183
  %v6252 = vmax.f32 %v6176, %v6184
  %v6253 = vmax.f32 %v6177, %v6185
  %v6254 = vmax.f32 %v6178, %v6186
  %v6255 = vmax.f32 %v6179, %v6187
  %v6256 = vmax.f32 %v6180, %v6188
  %v6257 = vmax.f32 %v6181, %v6189
  %v6258 = vmax.f32 %v6182, %v6190
  %v6259 = vmax.f32 %v6183, %v6191
  %v6260 = vmax.f32 %v6184, %v6192
  %v6261 = vmax.f32 %v6185, %v6193
  %v6262 = vmax.f32 %v6186, %v6194
  %v6263 = vmax.f32 %v6187, %v6195
  %v6264 = vmax.f32 %v6188, %v6196
  %v6265 = vmax.f32 %v6189, %v6197
  %v6266 = vmax.f32 %v6190, %v6198
  %v6267 = vmax.f32 %v6191, %v6199
  %v6268 = vmax.f32 %v6192, %v6200
  %v6269 = vmax.f32 %v6193, %v6201
  %v6270 = vmax.f32 %v6194, %v6202
  %v6271 = vmax.f32 %v6195, %v6203
  %v6272 = vmax.f32 %v6196, %v6204
  %v6273 = vld [vmem:[%s6] sm:$0xff]
  %v6274 = vld [vmem:[%s6 + $0x8] sm:$0xff]
  %v6275 = vld [vmem:[%s6 + $0x10] sm:$0xff]
  %v6276 = vld [vmem:[%s6 + $0x18] sm:$0xff]
  %v6277 = vld [vmem:[%s6 + $0x20] sm:$0xff]
  %v6278 = vld [vmem:[%s6 + $0x28] sm:$0xff]
  %v6279 = vld [vmem:[%s6 + $0x30] sm:$0xff]
  %v6280 = vld [vmem:[%s6 + $0x38] sm:$0xff]
  %v6281 = vld [vmem:[%s6 + $0x40] sm:$0xff]
  %v6282 = vld [vmem:[%s6 + $0x48] sm:$0xff]
  %v6283 = vld [vmem:[%s6 + $0x50] sm:$0xff]
  %v6284 = vld [vmem:[%s6 + $0x58] sm:$0xff]
  %v6285 = vld [vmem:[%s6 + $0x60] sm:$0xff]
  %v6286 = vld [vmem:[%s6 + $0x68] sm:$0xff]
  %v6287 = vld [vmem:[%s6 + $0x70] sm:$0xff]
  %v6288 = vld [vmem:[%s6 + $0x78] sm:$0xff]
  %v6289 = vld [vmem:[%s6 + $0x80] sm:$0xff]
  %v6290 = vld [vmem:[%s6 + $0x88] sm:$0xff]
  %v6291 = vld [vmem:[%s6 + $0x90] sm:$0xff]
  %v6292 = vld [vmem:[%s6 + $0x98] sm:$0xff]
  %vm6293 = vcmask 261120
  %v6295 = vsel %vm6293, %v6206, 0
  %v6298 = vsel %vm6293, %v6208, 0
  %v6301 = vsel %vm6293, %v6210, 0
  %v6304 = vsel %vm6293, %v6212, 0
  %v6307 = vsel %vm6293, %v6214, 0
  %v6310 = vsel %vm6293, %v6216, 0
  %v6313 = vsel %vm6293, %v6218, 0
  %v6316 = vsel %vm6293, %v6220, 0
  %v6319 = vsel %vm6293, %v6222, 0
  %v6322 = vsel %vm6293, %v6224, 0
  %v6325 = vsel %vm6293, %v6226, 0
  %v6328 = vsel %vm6293, %v6228, 0
  %v6331 = vsel %vm6293, %v6230, 0
  %v6334 = vsel %vm6293, %v6232, 0
  %v6337 = vsel %vm6293, %v6234, 0
  %v6340 = vsel %vm6293, %v6236, 0
  %v6343 = vsel %vm6293, %v6238, 0
  %v6346 = vsel %vm6293, %v6240, 0
  %v6349 = vsel %vm6293, %v6242, 0
  %v6352 = vsel %vm6293, %v6244, 0
  %v6355 = vsel %vm6293, %v6246, 0
  %v6358 = vsel %vm6293, %v6248, 0
  %v6361 = vsel %vm6293, %v6250, 0
  %v6364 = vsel %vm6293, %v6252, 0
  %v6367 = vsel %vm6293, %v6254, 0
  %v6370 = vsel %vm6293, %v6256, 0
  %v6373 = vsel %vm6293, %v6258, 0
  %v6376 = vsel %vm6293, %v6260, 0
  %v6379 = vsel %vm6293, %v6262, 0
  %v6382 = vsel %vm6293, %v6264, 0
  %v6385 = vsel %vm6293, %v6266, 0
  %v6388 = vsel %vm6293, %v6268, 0
  %v6391 = vsel %vm6293, %v6270, 0
  %v6394 = vsel %vm6293, %v6272, 0
  %6396 = vmatprep.subr.mxu0 0.0
  %6397 = vmatpush1.msra.mxu0 %v6288
  %6398 = vmatprep.subr.mxu0 0.0
  %6399 = vmatpush1.msra.mxu0 %v6287
  %6400 = vmatprep.subr.mxu0 0.0
  %6401 = vmatpush1.msra.mxu0 %v6286
  %6402 = vmatprep.subr.mxu0 0.0
  %6403 = vmatpush1.msra.mxu0 %v6285
  %6404 = vmatprep.subr.mxu0 0.0
  %6405 = vmatpush1.msra.mxu0 %v6284
  %6406 = vmatprep.subr.mxu0 0.0
  %6407 = vmatpush1.msra.mxu0 %v6283
  %6408 = vmatprep.subr.mxu0 0.0
  %6409 = vmatpush1.msra.mxu0 %v6282
  %6410 = vmatprep.subr.mxu0 0.0
  %6411 = vmatpush1.msra.mxu0 %v6281
  %6412 = vmatprep.subr.mxu0 0.0
  %6413 = vmatpush1.msra.mxu0 %v6280
  %6414 = vmatprep.subr.mxu0 0.0
  %6415 = vmatpush1.msra.mxu0 %v6279
  %6416 = vmatprep.subr.mxu0 0.0
  %6417 = vmatpush1.msra.mxu0 %v6278
  %6418 = vmatprep.subr.mxu0 0.0
  %6419 = vmatpush1.msra.mxu0 %v6277
  %6420 = vmatprep.subr.mxu0 0.0
  %6421 = vmatpush1.msra.mxu0 %v6276
  %6422 = vmatprep.subr.mxu0 0.0
  %6423 = vmatpush1.msra.mxu0 %v6275
  %6424 = vmatprep.subr.mxu0 0.0
  %6425 = vmatpush1.msra.mxu0 %v6274
  %6426 = vmatprep.subr.mxu0 0.0
  %6427 = vmatpush1.msra.mxu0 %v6273
  %6428 = vmatprep.subr.mxu0 0.0
  %6429 = vmatpush2.msra.mxu0 0.0
  %6430 = vmatprep.subr.mxu0 0.0
  %6431 = vmatpush2.msra.mxu0 0.0
  %6432 = vmatprep.subr.mxu0 0.0
  %6433 = vmatpush2.msra.mxu0 0.0
  %6434 = vmatprep.subr.mxu0 0.0
  %6435 = vmatpush2.msra.mxu0 0.0
  %6436 = vmatprep.subr.mxu0 0.0
  %6437 = vmatpush2.msra.mxu0 0.0
  %6438 = vmatprep.subr.mxu0 0.0
  %6439 = vmatpush2.msra.mxu0 0.0
  %6440 = vmatprep.subr.mxu0 0.0
  %6441 = vmatpush2.msra.mxu0 0.0
  %6442 = vmatprep.subr.mxu0 0.0
  %6443 = vmatpush2.msra.mxu0 0.0
  %6444 = vmatprep.subr.mxu0 0.0
  %6445 = vmatpush2.msra.mxu0 0.0
  %6446 = vmatprep.subr.mxu0 0.0
  %6447 = vmatpush2.msra.mxu0 0.0
  %6448 = vmatprep.subr.mxu0 0.0
  %6449 = vmatpush2.msra.mxu0 0.0
  %6450 = vmatprep.subr.mxu0 0.0
  %6451 = vmatpush2.msra.mxu0 0.0
  %6452 = vmatprep.subr.mxu0 0.0
  %6453 = vmatpush2.msra.mxu0 %v6292
  %6454 = vmatprep.subr.mxu0 0.0
  %6455 = vmatpush2.msra.mxu0 %v6291
  %6456 = vmatprep.subr.mxu0 0.0
  %6457 = vmatpush2.msra.mxu0 %v6290
  %6458 = vmatprep.subr.mxu0 0.0
  %6459 = vmatpush2.msra.mxu0 %v6289
  %6460 = vmatprep.mubr.f32.mxu0 %v6295
  %6461 = vmatmul.mubr.f32.gmra.mxu0 %v6205
  %v6462 = vpop.f32.mrf.mxu0
  %v6463 = vadd.f32 0.0, %v6462
  %v6464 = vpop.f32.mrf.mxu0
  %6465 = vmatprep.mubr.f32.mxu0 %v6298
  %6466 = vmatmul.mubr.f32.gmra.mxu0 %v6207
  %v6467 = vpop.f32.mrf.mxu0
  %v6468 = vadd.f32 0.0, %v6467
  %v6469 = vpop.f32.mrf.mxu0
  %6470 = vmatprep.mubr.f32.mxu0 %v6301
  %6471 = vmatmul.mubr.f32.gmra.mxu0 %v6209
  %v6472 = vpop.f32.mrf.mxu0
  %v6473 = vpop.f32.mrf.mxu0
  %6474 = vmatprep.mubr.f32.mxu0 %v6304
  %6475 = vmatmul.mubr.f32.gmra.mxu0 %v6211
  %v6476 = vpop.f32.mrf.mxu0
  %v6477 = vpop.f32.mrf.mxu0
  %6478 = vmatprep.mubr.f32.mxu0 %v6307
  %6479 = vmatmul.mubr.f32.gmra.mxu0 %v6213
  %v6480 = vpop.f32.mrf.mxu0
  %v6481 = vpop.f32.mrf.mxu0
  %6482 = vmatprep.mubr.f32.mxu0 %v6310
  %6483 = vmatmul.mubr.f32.gmra.mxu0 %v6215
  %v6484 = vpop.f32.mrf.mxu0
  %v6485 = vpop.f32.mrf.mxu0
  %6486 = vmatprep.mubr.f32.mxu0 %v6313
  %6487 = vmatmul.mubr.f32.gmra.mxu0 %v6217
  %v6488 = vpop.f32.mrf.mxu0
  %v6489 = vpop.f32.mrf.mxu0
  %6490 = vmatprep.mubr.f32.mxu0 %v6316
  %6491 = vmatmul.mubr.f32.gmra.mxu0 %v6219
  %v6492 = vpop.f32.mrf.mxu0
  %v6493 = vpop.f32.mrf.mxu0
  %6494 = vmatprep.mubr.f32.mxu0 %v6319
  %6495 = vmatmul.mubr.f32.gmra.mxu0 %v6221
  %v6496 = vpop.f32.mrf.mxu0
  %v6497 = vadd.f32 0.0, %v6496
  %v6498 = vpop.f32.mrf.mxu0
  %6499 = vmatprep.mubr.f32.mxu0 %v6322
  %6500 = vmatmul.mubr.f32.gmra.mxu0 %v6223
  %v6501 = vpop.f32.mrf.mxu0
  %v6502 = vadd.f32 0.0, %v6501
  %v6503 = vpop.f32.mrf.mxu0
  %6504 = vmatprep.mubr.f32.mxu0 %v6325
  %6505 = vmatmul.mubr.f32.gmra.mxu0 %v6225
  %v6506 = vpop.f32.mrf.mxu0
  %v6507 = vpop.f32.mrf.mxu0
  %6508 = vmatprep.mubr.f32.mxu0 %v6328
  %6509 = vmatmul.mubr.f32.gmra.mxu0 %v6227
  %v6510 = vpop.f32.mrf.mxu0
  %v6511 = vpop.f32.mrf.mxu0
  %6512 = vmatprep.mubr.f32.mxu0 %v6331
  %6513 = vmatmul.mubr.f32.gmra.mxu0 %v6229
  %v6514 = vpop.f32.mrf.mxu0
  %v6515 = vpop.f32.mrf.mxu0
  %6516 = vmatprep.mubr.f32.mxu0 %v6334
  %6517 = vmatmul.mubr.f32.gmra.mxu0 %v6231
  %v6518 = vpop.f32.mrf.mxu0
  %v6519 = vpop.f32.mrf.mxu0
  %6520 = vmatprep.mubr.f32.mxu0 %v6337
  %6521 = vmatmul.mubr.f32.gmra.mxu0 %v6233
  %v6522 = vpop.f32.mrf.mxu0
  %v6523 = vpop.f32.mrf.mxu0
  %6524 = vmatprep.mubr.f32.mxu0 %v6340
  %6525 = vmatmul.mubr.f32.gmra.mxu0 %v6235
  %v6526 = vpop.f32.mrf.mxu0
  %v6527 = vpop.f32.mrf.mxu0
  %6528 = vmatprep.mubr.f32.mxu0 %v6343
  %6529 = vmatmul.mubr.f32.gmra.mxu0 %v6237
  %v6530 = vpop.f32.mrf.mxu0
  %v6531 = vadd.f32 0.0, %v6530
  %v6532 = vpop.f32.mrf.mxu0
  %6533 = vmatprep.mubr.f32.mxu0 %v6346
  %6534 = vmatmul.mubr.f32.gmra.mxu0 %v6239
  %v6535 = vpop.f32.mrf.mxu0
  %v6536 = vadd.f32 0.0, %v6535
  %v6537 = vpop.f32.mrf.mxu0
  %6538 = vmatprep.mubr.f32.mxu0 %v6349
  %6539 = vmatmul.mubr.f32.gmra.mxu0 %v6241
  %v6540 = vpop.f32.mrf.mxu0
  %v6541 = vpop.f32.mrf.mxu0
  %6542 = vmatprep.mubr.f32.mxu0 %v6352
  %6543 = vmatmul.mubr.f32.gmra.mxu0 %v6243
  %v6544 = vpop.f32.mrf.mxu0
  %v6545 = vpop.f32.mrf.mxu0
  %6546 = vmatprep.mubr.f32.mxu0 %v6355
  %6547 = vmatmul.mubr.f32.gmra.mxu0 %v6245
  %v6548 = vpop.f32.mrf.mxu0
  %v6549 = vpop.f32.mrf.mxu0
  %6550 = vmatprep.mubr.f32.mxu0 %v6358
  %6551 = vmatmul.mubr.f32.gmra.mxu0 %v6247
  %v6552 = vpop.f32.mrf.mxu0
  %v6553 = vpop.f32.mrf.mxu0
  %6554 = vmatprep.mubr.f32.mxu0 %v6361
  %6555 = vmatmul.mubr.f32.gmra.mxu0 %v6249
  %v6556 = vpop.f32.mrf.mxu0
  %v6557 = vpop.f32.mrf.mxu0
  %6558 = vmatprep.mubr.f32.mxu0 %v6364
  %6559 = vmatmul.mubr.f32.gmra.mxu0 %v6251
  %v6560 = vpop.f32.mrf.mxu0
  %v6561 = vpop.f32.mrf.mxu0
  %6562 = vmatprep.mubr.f32.mxu0 %v6367
  %6563 = vmatmul.mubr.f32.gmra.mxu0 %v6253
  %v6564 = vpop.f32.mrf.mxu0
  %v6565 = vadd.f32 0.0, %v6564
  %v6566 = vpop.f32.mrf.mxu0
  %6567 = vmatprep.mubr.f32.mxu0 %v6370
  %6568 = vmatmul.mubr.f32.gmra.mxu0 %v6255
  %v6569 = vpop.f32.mrf.mxu0
  %v6570 = vadd.f32 0.0, %v6569
  %v6571 = vpop.f32.mrf.mxu0
  %6572 = vmatprep.mubr.f32.mxu0 %v6373
  %6573 = vmatmul.mubr.f32.gmra.mxu0 %v6257
  %v6574 = vpop.f32.mrf.mxu0
  %v6575 = vpop.f32.mrf.mxu0
  %6576 = vmatprep.mubr.f32.mxu0 %v6376
  %6577 = vmatmul.mubr.f32.gmra.mxu0 %v6259
  %v6578 = vpop.f32.mrf.mxu0
  %v6579 = vpop.f32.mrf.mxu0
  %6580 = vmatprep.mubr.f32.mxu0 %v6379
  %6581 = vmatmul.mubr.f32.gmra.mxu0 %v6261
  %v6582 = vpop.f32.mrf.mxu0
  %v6583 = vpop.f32.mrf.mxu0
  %6584 = vmatprep.mubr.f32.mxu0 %v6382
  %6585 = vmatmul.mubr.f32.gmra.mxu0 %v6263
  %v6586 = vpop.f32.mrf.mxu0
  %v6587 = vpop.f32.mrf.mxu0
  %6588 = vmatprep.mubr.f32.mxu0 %v6385
  %6589 = vmatmul.mubr.f32.gmra.mxu0 %v6265
  %v6590 = vpop.f32.mrf.mxu0
  %v6591 = vpop.f32.mrf.mxu0
  %6592 = vmatprep.mubr.f32.mxu0 %v6388
  %6593 = vmatmul.mubr.f32.gmra.mxu0 %v6267
  %v6594 = vpop.f32.mrf.mxu0
  %v6595 = vpop.f32.mrf.mxu0
  %6596 = vmatprep.mubr.f32.mxu0 %v6391
  %6597 = vmatmul.mubr.f32.gmra.mxu0 %v6269
  %v6598 = vpop.f32.mrf.mxu0
  %v6599 = vadd.f32 0.0, %v6598
  %v6600 = vpop.f32.mrf.mxu0
  %6601 = vmatprep.mubr.f32.mxu0 %v6394
  %6602 = vmatmul.mubr.f32.gmra.mxu0 %v6271
  %v6603 = vpop.f32.mrf.mxu0
  %v6604 = vadd.f32 0.0, %v6603
  %v6605 = vpop.f32.mrf.mxu0
  %6606 = vdwg.mxu0
  %s6607 = scalar_lea.vmem %s6, 160
  %v6608 = vld [vmem:[%s6607] sm:$0xff]
  %v6609 = vld [vmem:[%s6607 + $0x8] sm:$0xff]
  %v6610 = vld [vmem:[%s6607 + $0x10] sm:$0xff]
  %v6611 = vld [vmem:[%s6607 + $0x18] sm:$0xff]
  %v6612 = vld [vmem:[%s6607 + $0x20] sm:$0xff]
  %v6613 = vld [vmem:[%s6607 + $0x28] sm:$0xff]
  %v6614 = vld [vmem:[%s6607 + $0x30] sm:$0xff]
  %v6615 = vld [vmem:[%s6607 + $0x38] sm:$0xff]
  %v6616 = vld [vmem:[%s6607 + $0x40] sm:$0xff]
  %v6617 = vld [vmem:[%s6607 + $0x48] sm:$0xff]
  %v6618 = vld [vmem:[%s6607 + $0x50] sm:$0xff]
  %v6619 = vld [vmem:[%s6607 + $0x58] sm:$0xff]
  %v6620 = vld [vmem:[%s6607 + $0x60] sm:$0xff]
  %v6621 = vld [vmem:[%s6607 + $0x68] sm:$0xff]
  %v6622 = vld [vmem:[%s6607 + $0x70] sm:$0xff]
  %v6623 = vld [vmem:[%s6607 + $0x78] sm:$0xff]
  %v6624 = vld [vmem:[%s6607 + $0x80] sm:$0xff]
  %v6625 = vld [vmem:[%s6607 + $0x88] sm:$0xff]
  %v6626 = vld [vmem:[%s6607 + $0x90] sm:$0xff]
  %v6627 = vld [vmem:[%s6607 + $0x98] sm:$0xff]
  %6628 = vmatprep.subr.mxu0 0.0
  %6629 = vmatpush1.msra.mxu0 %v6623
  %6630 = vmatprep.subr.mxu0 0.0
  %6631 = vmatpush1.msra.mxu0 %v6622
  %6632 = vmatprep.subr.mxu0 0.0
  %6633 = vmatpush1.msra.mxu0 %v6621
  %6634 = vmatprep.subr.mxu0 0.0
  %6635 = vmatpush1.msra.mxu0 %v6620
  %6636 = vmatprep.subr.mxu0 0.0
  %6637 = vmatpush1.msra.mxu0 %v6619
  %6638 = vmatprep.subr.mxu0 0.0
  %6639 = vmatpush1.msra.mxu0 %v6618
  %6640 = vmatprep.subr.mxu0 0.0
  %6641 = vmatpush1.msra.mxu0 %v6617
  %6642 = vmatprep.subr.mxu0 0.0
  %6643 = vmatpush1.msra.mxu0 %v6616
  %6644 = vmatprep.subr.mxu0 0.0
  %6645 = vmatpush1.msra.mxu0 %v6615
  %6646 = vmatprep.subr.mxu0 0.0
  %6647 = vmatpush1.msra.mxu0 %v6614
  %6648 = vmatprep.subr.mxu0 0.0
  %6649 = vmatpush1.msra.mxu0 %v6613
  %6650 = vmatprep.subr.mxu0 0.0
  %6651 = vmatpush1.msra.mxu0 %v6612
  %6652 = vmatprep.subr.mxu0 0.0
  %6653 = vmatpush1.msra.mxu0 %v6611
  %6654 = vmatprep.subr.mxu0 0.0
  %6655 = vmatpush1.msra.mxu0 %v6610
  %6656 = vmatprep.subr.mxu0 0.0
  %6657 = vmatpush1.msra.mxu0 %v6609
  %6658 = vmatprep.subr.mxu0 0.0
  %6659 = vmatpush1.msra.mxu0 %v6608
  %6660 = vmatprep.subr.mxu0 0.0
  %6661 = vmatpush2.msra.mxu0 0.0
  %6662 = vmatprep.subr.mxu0 0.0
  %6663 = vmatpush2.msra.mxu0 0.0
  %6664 = vmatprep.subr.mxu0 0.0
  %6665 = vmatpush2.msra.mxu0 0.0
  %6666 = vmatprep.subr.mxu0 0.0
  %6667 = vmatpush2.msra.mxu0 0.0
  %6668 = vmatprep.subr.mxu0 0.0
  %6669 = vmatpush2.msra.mxu0 0.0
  %6670 = vmatprep.subr.mxu0 0.0
  %6671 = vmatpush2.msra.mxu0 0.0
  %6672 = vmatprep.subr.mxu0 0.0
  %6673 = vmatpush2.msra.mxu0 0.0
  %6674 = vmatprep.subr.mxu0 0.0
  %6675 = vmatpush2.msra.mxu0 0.0
  %6676 = vmatprep.subr.mxu0 0.0
  %6677 = vmatpush2.msra.mxu0 0.0
  %6678 = vmatprep.subr.mxu0 0.0
  %6679 = vmatpush2.msra.mxu0 0.0
  %6680 = vmatprep.subr.mxu0 0.0
  %6681 = vmatpush2.msra.mxu0 0.0
  %6682 = vmatprep.subr.mxu0 0.0
  %6683 = vmatpush2.msra.mxu0 0.0
  %6684 = vmatprep.subr.mxu0 0.0
  %6685 = vmatpush2.msra.mxu0 %v6627
  %6686 = vmatprep.subr.mxu0 0.0
  %6687 = vmatpush2.msra.mxu0 %v6626
  %6688 = vmatprep.subr.mxu0 0.0
  %6689 = vmatpush2.msra.mxu0 %v6625
  %6690 = vmatprep.subr.mxu0 0.0
  %6691 = vmatpush2.msra.mxu0 %v6624
  %6692 = vmatprep.mubr.f32.mxu0 %v6295
  %6693 = vmatmul.mubr.f32.gmra.mxu0 %v6205
  %v6694 = vpop.f32.mrf.mxu0
  %v6695 = vadd.f32 0.0, %v6694
  %v6696 = vpop.f32.mrf.mxu0
  %6697 = vmatprep.mubr.f32.mxu0 %v6298
  %6698 = vmatmul.mubr.f32.gmra.mxu0 %v6207
  %v6699 = vpop.f32.mrf.mxu0
  %v6700 = vadd.f32 0.0, %v6699
  %v6701 = vpop.f32.mrf.mxu0
  %6702 = vmatprep.mubr.f32.mxu0 %v6301
  %6703 = vmatmul.mubr.f32.gmra.mxu0 %v6209
  %v6704 = vpop.f32.mrf.mxu0
  %v6705 = vpop.f32.mrf.mxu0
  %6706 = vmatprep.mubr.f32.mxu0 %v6304
  %6707 = vmatmul.mubr.f32.gmra.mxu0 %v6211
  %v6708 = vpop.f32.mrf.mxu0
  %v6709 = vpop.f32.mrf.mxu0
  %6710 = vmatprep.mubr.f32.mxu0 %v6307
  %6711 = vmatmul.mubr.f32.gmra.mxu0 %v6213
  %v6712 = vpop.f32.mrf.mxu0
  %v6713 = vpop.f32.mrf.mxu0
  %6714 = vmatprep.mubr.f32.mxu0 %v6310
  %6715 = vmatmul.mubr.f32.gmra.mxu0 %v6215
  %v6716 = vpop.f32.mrf.mxu0
  %v6717 = vpop.f32.mrf.mxu0
  %6718 = vmatprep.mubr.f32.mxu0 %v6313
  %6719 = vmatmul.mubr.f32.gmra.mxu0 %v6217
  %v6720 = vpop.f32.mrf.mxu0
  %v6721 = vpop.f32.mrf.mxu0
  %6722 = vmatprep.mubr.f32.mxu0 %v6316
  %6723 = vmatmul.mubr.f32.gmra.mxu0 %v6219
  %v6724 = vpop.f32.mrf.mxu0
  %v6725 = vpop.f32.mrf.mxu0
  %6726 = vmatprep.mubr.f32.mxu0 %v6319
  %6727 = vmatmul.mubr.f32.gmra.mxu0 %v6221
  %v6728 = vpop.f32.mrf.mxu0
  %v6729 = vadd.f32 0.0, %v6728
  %v6730 = vpop.f32.mrf.mxu0
  %6731 = vmatprep.mubr.f32.mxu0 %v6322
  %6732 = vmatmul.mubr.f32.gmra.mxu0 %v6223
  %v6733 = vpop.f32.mrf.mxu0
  %v6734 = vadd.f32 0.0, %v6733
  %v6735 = vpop.f32.mrf.mxu0
  %6736 = vmatprep.mubr.f32.mxu0 %v6325
  %6737 = vmatmul.mubr.f32.gmra.mxu0 %v6225
  %v6738 = vpop.f32.mrf.mxu0
  %v6739 = vpop.f32.mrf.mxu0
  %6740 = vmatprep.mubr.f32.mxu0 %v6328
  %6741 = vmatmul.mubr.f32.gmra.mxu0 %v6227
  %v6742 = vpop.f32.mrf.mxu0
  %v6743 = vpop.f32.mrf.mxu0
  %6744 = vmatprep.mubr.f32.mxu0 %v6331
  %6745 = vmatmul.mubr.f32.gmra.mxu0 %v6229
  %v6746 = vpop.f32.mrf.mxu0
  %v6747 = vpop.f32.mrf.mxu0
  %6748 = vmatprep.mubr.f32.mxu0 %v6334
  %6749 = vmatmul.mubr.f32.gmra.mxu0 %v6231
  %v6750 = vpop.f32.mrf.mxu0
  %v6751 = vpop.f32.mrf.mxu0
  %6752 = vmatprep.mubr.f32.mxu0 %v6337
  %6753 = vmatmul.mubr.f32.gmra.mxu0 %v6233
  %v6754 = vpop.f32.mrf.mxu0
  %v6755 = vpop.f32.mrf.mxu0
  %6756 = vmatprep.mubr.f32.mxu0 %v6340
  %6757 = vmatmul.mubr.f32.gmra.mxu0 %v6235
  %v6758 = vpop.f32.mrf.mxu0
  %v6759 = vpop.f32.mrf.mxu0
  %6760 = vmatprep.mubr.f32.mxu0 %v6343
  %6761 = vmatmul.mubr.f32.gmra.mxu0 %v6237
  %v6762 = vpop.f32.mrf.mxu0
  %v6763 = vadd.f32 0.0, %v6762
  %v6764 = vpop.f32.mrf.mxu0
  %6765 = vmatprep.mubr.f32.mxu0 %v6346
  %6766 = vmatmul.mubr.f32.gmra.mxu0 %v6239
  %v6767 = vpop.f32.mrf.mxu0
  %v6768 = vadd.f32 0.0, %v6767
  %v6769 = vpop.f32.mrf.mxu0
  %6770 = vmatprep.mubr.f32.mxu0 %v6349
  %6771 = vmatmul.mubr.f32.gmra.mxu0 %v6241
  %v6772 = vpop.f32.mrf.mxu0
  %v6773 = vpop.f32.mrf.mxu0
  %6774 = vmatprep.mubr.f32.mxu0 %v6352
  %6775 = vmatmul.mubr.f32.gmra.mxu0 %v6243
  %v6776 = vpop.f32.mrf.mxu0
  %v6777 = vpop.f32.mrf.mxu0
  %6778 = vmatprep.mubr.f32.mxu0 %v6355
  %6779 = vmatmul.mubr.f32.gmra.mxu0 %v6245
  %v6780 = vpop.f32.mrf.mxu0
  %v6781 = vpop.f32.mrf.mxu0
  %6782 = vmatprep.mubr.f32.mxu0 %v6358
  %6783 = vmatmul.mubr.f32.gmra.mxu0 %v6247
  %v6784 = vpop.f32.mrf.mxu0
  %v6785 = vpop.f32.mrf.mxu0
  %6786 = vmatprep.mubr.f32.mxu0 %v6361
  %6787 = vmatmul.mubr.f32.gmra.mxu0 %v6249
  %v6788 = vpop.f32.mrf.mxu0
  %v6789 = vpop.f32.mrf.mxu0
  %6790 = vmatprep.mubr.f32.mxu0 %v6364
  %6791 = vmatmul.mubr.f32.gmra.mxu0 %v6251
  %v6792 = vpop.f32.mrf.mxu0
  %v6793 = vpop.f32.mrf.mxu0
  %6794 = vmatprep.mubr.f32.mxu0 %v6367
  %6795 = vmatmul.mubr.f32.gmra.mxu0 %v6253
  %v6796 = vpop.f32.mrf.mxu0
  %v6797 = vadd.f32 0.0, %v6796
  %v6798 = vpop.f32.mrf.mxu0
  %6799 = vmatprep.mubr.f32.mxu0 %v6370
  %6800 = vmatmul.mubr.f32.gmra.mxu0 %v6255
  %v6801 = vpop.f32.mrf.mxu0
  %v6802 = vadd.f32 0.0, %v6801
  %v6803 = vpop.f32.mrf.mxu0
  %6804 = vmatprep.mubr.f32.mxu0 %v6373
  %6805 = vmatmul.mubr.f32.gmra.mxu0 %v6257
  %v6806 = vpop.f32.mrf.mxu0
  %v6807 = vpop.f32.mrf.mxu0
  %6808 = vmatprep.mubr.f32.mxu0 %v6376
  %6809 = vmatmul.mubr.f32.gmra.mxu0 %v6259
  %v6810 = vpop.f32.mrf.mxu0
  %v6811 = vpop.f32.mrf.mxu0
  %6812 = vmatprep.mubr.f32.mxu0 %v6379
  %6813 = vmatmul.mubr.f32.gmra.mxu0 %v6261
  %v6814 = vpop.f32.mrf.mxu0
  %v6815 = vpop.f32.mrf.mxu0
  %6816 = vmatprep.mubr.f32.mxu0 %v6382
  %6817 = vmatmul.mubr.f32.gmra.mxu0 %v6263
  %v6818 = vpop.f32.mrf.mxu0
  %v6819 = vpop.f32.mrf.mxu0
  %6820 = vmatprep.mubr.f32.mxu0 %v6385
  %6821 = vmatmul.mubr.f32.gmra.mxu0 %v6265
  %v6822 = vpop.f32.mrf.mxu0
  %v6823 = vpop.f32.mrf.mxu0
  %6824 = vmatprep.mubr.f32.mxu0 %v6388
  %6825 = vmatmul.mubr.f32.gmra.mxu0 %v6267
  %v6826 = vpop.f32.mrf.mxu0
  %v6827 = vpop.f32.mrf.mxu0
  %6828 = vmatprep.mubr.f32.mxu0 %v6391
  %6829 = vmatmul.mubr.f32.gmra.mxu0 %v6269
  %v6830 = vpop.f32.mrf.mxu0
  %v6831 = vadd.f32 0.0, %v6830
  %v6832 = vpop.f32.mrf.mxu0
  %6833 = vmatprep.mubr.f32.mxu0 %v6394
  %6834 = vmatmul.mubr.f32.gmra.mxu0 %v6271
  %v6835 = vpop.f32.mrf.mxu0
  %v6836 = vadd.f32 0.0, %v6835
  %v6837 = vpop.f32.mrf.mxu0
  %6838 = vdwg.mxu0
  %v6839 = vmax.f32 %v6463, %v6695
  %v6840 = vmax.f32 %v6468, %v6700
  %v6841 = vmax.f32 %v6497, %v6729
  %v6842 = vmax.f32 %v6502, %v6734
  %v6843 = vmax.f32 %v6531, %v6763
  %v6844 = vmax.f32 %v6536, %v6768
  %v6845 = vmax.f32 %v6565, %v6797
  %v6846 = vmax.f32 %v6570, %v6802
  %v6847 = vmax.f32 %v6599, %v6831
  %v6848 = vmax.f32 %v6604, %v6836
  %v6849 = vld [vmem:[%s7] sm:$0xff]
  %v6850 = vld [vmem:[%s7 + $0x8] sm:$0xff]
  %v6851 = vld [vmem:[%s7 + $0x10] sm:$0xff]
  %v6852 = vld [vmem:[%s7 + $0x18] sm:$0xff]
  %v6853 = vld [vmem:[%s7 + $0x20] sm:$0xff]
  %v6854 = vld [vmem:[%s7 + $0x28] sm:$0xff]
  %v6855 = vld [vmem:[%s7 + $0x30] sm:$0xff]
  %v6856 = vld [vmem:[%s7 + $0x38] sm:$0xff]
  %v6857 = vld [vmem:[%s7 + $0x40] sm:$0xff]
  %v6858 = vld [vmem:[%s7 + $0x48] sm:$0xff]
  %s6859 = scalar_lea.vmem %s7, 80
  %v6860 = vld [vmem:[%s6859] sm:$0xff]
  %v6861 = vld [vmem:[%s6859 + $0x8] sm:$0xff]
  %v6862 = vld [vmem:[%s6859 + $0x10] sm:$0xff]
  %v6863 = vld [vmem:[%s6859 + $0x18] sm:$0xff]
  %v6864 = vld [vmem:[%s6859 + $0x20] sm:$0xff]
  %v6865 = vld [vmem:[%s6859 + $0x28] sm:$0xff]
  %v6866 = vld [vmem:[%s6859 + $0x30] sm:$0xff]
  %v6867 = vld [vmem:[%s6859 + $0x38] sm:$0xff]
  %v6868 = vld [vmem:[%s6859 + $0x40] sm:$0xff]
  %v6869 = vld [vmem:[%s6859 + $0x48] sm:$0xff]
  %vm6870 = vcmask 654336
  %v6872 = vsel %vm6870, %v6841, 0
  %v6875 = vsel %vm6870, %v6842, 0
  %6877 = vmatprep.subr.mxu0 0.0
  %6878 = vmatpush1.msra.mxu0 0.0
  %6879 = vmatprep.subr.mxu0 0.0
  %6880 = vmatpush1.msra.mxu0 0.0
  %6881 = vmatprep.subr.mxu0 0.0
  %6882 = vmatpush1.msra.mxu0 0.0
  %6883 = vmatprep.subr.mxu0 0.0
  %6884 = vmatpush1.msra.mxu0 0.0
  %6885 = vmatprep.subr.mxu0 0.0
  %6886 = vmatpush1.msra.mxu0 0.0
  %6887 = vmatprep.subr.mxu0 0.0
  %6888 = vmatpush1.msra.mxu0 0.0
  %6889 = vmatprep.subr.mxu0 0.0
  %6890 = vmatpush1.msra.mxu0 %v6869
  %6891 = vmatprep.subr.mxu0 0.0
  %6892 = vmatpush1.msra.mxu0 %v6868
  %6893 = vmatprep.subr.mxu0 0.0
  %6894 = vmatpush1.msra.mxu0 %v6867
  %6895 = vmatprep.subr.mxu0 0.0
  %6896 = vmatpush1.msra.mxu0 %v6866
  %6897 = vmatprep.subr.mxu0 0.0
  %6898 = vmatpush1.msra.mxu0 %v6865
  %6899 = vmatprep.subr.mxu0 0.0
  %6900 = vmatpush1.msra.mxu0 %v6864
  %6901 = vmatprep.subr.mxu0 0.0
  %6902 = vmatpush1.msra.mxu0 %v6863
  %6903 = vmatprep.subr.mxu0 0.0
  %6904 = vmatpush1.msra.mxu0 %v6862
  %6905 = vmatprep.subr.mxu0 0.0
  %6906 = vmatpush1.msra.mxu0 %v6861
  %6907 = vmatprep.subr.mxu0 0.0
  %6908 = vmatpush1.msra.mxu0 %v6860
  %6909 = vmatprep.subr.mxu0 0.0
  %6910 = vmatpush2.msra.mxu0 0.0
  %6911 = vmatprep.subr.mxu0 0.0
  %6912 = vmatpush2.msra.mxu0 0.0
  %6913 = vmatprep.subr.mxu0 0.0
  %6914 = vmatpush2.msra.mxu0 0.0
  %6915 = vmatprep.subr.mxu0 0.0
  %6916 = vmatpush2.msra.mxu0 0.0
  %6917 = vmatprep.subr.mxu0 0.0
  %6918 = vmatpush2.msra.mxu0 0.0
  %6919 = vmatprep.subr.mxu0 0.0
  %6920 = vmatpush2.msra.mxu0 0.0
  %6921 = vmatprep.subr.mxu0 0.0
  %6922 = vmatpush2.msra.mxu0 0.0
  %6923 = vmatprep.subr.mxu0 0.0
  %6924 = vmatpush2.msra.mxu0 0.0
  %6925 = vmatprep.subr.mxu0 0.0
  %6926 = vmatpush2.msra.mxu0 0.0
  %6927 = vmatprep.subr.mxu0 0.0
  %6928 = vmatpush2.msra.mxu0 0.0
  %6929 = vmatprep.subr.mxu0 0.0
  %6930 = vmatpush2.msra.mxu0 0.0
  %6931 = vmatprep.subr.mxu0 0.0
  %6932 = vmatpush2.msra.mxu0 0.0
  %6933 = vmatprep.subr.mxu0 0.0
  %6934 = vmatpush2.msra.mxu0 0.0
  %6935 = vmatprep.subr.mxu0 0.0
  %6936 = vmatpush2.msra.mxu0 0.0
  %6937 = vmatprep.subr.mxu0 0.0
  %6938 = vmatpush2.msra.mxu0 0.0
  %6939 = vmatprep.subr.mxu0 0.0
  %6940 = vmatpush2.msra.mxu0 0.0
  %6941 = vmatprep.mubr.f32.mxu0 0.0
  %6942 = vmatmul.mubr.f32.gmra.mxu0 %v6872
  %v6943 = vpop.f32.mrf.mxu0
  %v6944 = vadd.f32 0.0, %v6943
  %v6945 = vpop.f32.mrf.mxu0
  %6946 = vmatprep.mubr.f32.mxu0 0.0
  %6947 = vmatmul.mubr.f32.gmra.mxu0 %v6875
  %v6948 = vpop.f32.mrf.mxu0
  %v6949 = vadd.f32 0.0, %v6948
  %v6950 = vpop.f32.mrf.mxu0
  %6951 = vdwg.mxu0
  %v6953 = vsel %vm6870, %v6839, 0
  %v6956 = vsel %vm6870, %v6840, 0
  %6958 = vmatprep.subr.mxu0 0.0
  %6959 = vmatpush1.msra.mxu0 0.0
  %6960 = vmatprep.subr.mxu0 0.0
  %6961 = vmatpush1.msra.mxu0 0.0
  %6962 = vmatprep.subr.mxu0 0.0
  %6963 = vmatpush1.msra.mxu0 0.0
  %6964 = vmatprep.subr.mxu0 0.0
  %6965 = vmatpush1.msra.mxu0 0.0
  %6966 = vmatprep.subr.mxu0 0.0
  %6967 = vmatpush1.msra.mxu0 0.0
  %6968 = vmatprep.subr.mxu0 0.0
  %6969 = vmatpush1.msra.mxu0 0.0
  %6970 = vmatprep.subr.mxu0 0.0
  %6971 = vmatpush1.msra.mxu0 %v6858
  %6972 = vmatprep.subr.mxu0 0.0
  %6973 = vmatpush1.msra.mxu0 %v6857
  %6974 = vmatprep.subr.mxu0 0.0
  %6975 = vmatpush1.msra.mxu0 %v6856
  %6976 = vmatprep.subr.mxu0 0.0
  %6977 = vmatpush1.msra.mxu0 %v6855
  %6978 = vmatprep.subr.mxu0 0.0
  %6979 = vmatpush1.msra.mxu0 %v6854
  %6980 = vmatprep.subr.mxu0 0.0
  %6981 = vmatpush1.msra.mxu0 %v6853
  %6982 = vmatprep.subr.mxu0 0.0
  %6983 = vmatpush1.msra.mxu0 %v6852
  %6984 = vmatprep.subr.mxu0 0.0
  %6985 = vmatpush1.msra.mxu0 %v6851
  %6986 = vmatprep.subr.mxu0 0.0
  %6987 = vmatpush1.msra.mxu0 %v6850
  %6988 = vmatprep.subr.mxu0 0.0
  %6989 = vmatpush1.msra.mxu0 %v6849
  %6990 = vmatprep.subr.mxu0 0.0
  %6991 = vmatpush2.msra.mxu0 0.0
  %6992 = vmatprep.subr.mxu0 0.0
  %6993 = vmatpush2.msra.mxu0 0.0
  %6994 = vmatprep.subr.mxu0 0.0
  %6995 = vmatpush2.msra.mxu0 0.0
  %6996 = vmatprep.subr.mxu0 0.0
  %6997 = vmatpush2.msra.mxu0 0.0
  %6998 = vmatprep.subr.mxu0 0.0
  %6999 = vmatpush2.msra.mxu0 0.0
  %7000 = vmatprep.subr.mxu0 0.0
  %7001 = vmatpush2.msra.mxu0 0.0
  %7002 = vmatprep.subr.mxu0 0.0
  %7003 = vmatpush2.msra.mxu0 0.0
  %7004 = vmatprep.subr.mxu0 0.0
  %7005 = vmatpush2.msra.mxu0 0.0
  %7006 = vmatprep.subr.mxu0 0.0
  %7007 = vmatpush2.msra.mxu0 0.0
  %7008 = vmatprep.subr.mxu0 0.0
  %7009 = vmatpush2.msra.mxu0 0.0
  %7010 = vmatprep.subr.mxu0 0.0
  %7011 = vmatpush2.msra.mxu0 0.0
  %7012 = vmatprep.subr.mxu0 0.0
  %7013 = vmatpush2.msra.mxu0 0.0
  %7014 = vmatprep.subr.mxu0 0.0
  %7015 = vmatpush2.msra.mxu0 0.0
  %7016 = vmatprep.subr.mxu0 0.0
  %7017 = vmatpush2.msra.mxu0 0.0
  %7018 = vmatprep.subr.mxu0 0.0
  %7019 = vmatpush2.msra.mxu0 0.0
  %7020 = vmatprep.subr.mxu0 0.0
  %7021 = vmatpush2.msra.mxu0 0.0
  %7022 = vmatprep.mubr.f32.mxu0 0.0
  %7023 = vmatmul.mubr.f32.gmra.mxu0 %v6953
  %v7024 = vpop.f32.mrf.mxu0
  %v7025 = vadd.f32 %v6944, %v7024
  %v7026 = vpop.f32.mrf.mxu0
  %7027 = vmatprep.mubr.f32.mxu0 0.0
  %7028 = vmatmul.mubr.f32.gmra.mxu0 %v6956
  %v7029 = vpop.f32.mrf.mxu0
  %v7030 = vadd.f32 %v6949, %v7029
  %v7031 = vpop.f32.mrf.mxu0
  %7032 = vdwg.mxu0
  %s7033 = scalar_lea.vmem %s7, 160
  %v7034 = vld [vmem:[%s7033] sm:$0xff]
  %v7035 = vld [vmem:[%s7033 + $0x8] sm:$0xff]
  %v7036 = vld [vmem:[%s7033 + $0x10] sm:$0xff]
  %v7037 = vld [vmem:[%s7033 + $0x18] sm:$0xff]
  %v7038 = vld [vmem:[%s7033 + $0x20] sm:$0xff]
  %v7039 = vld [vmem:[%s7033 + $0x28] sm:$0xff]
  %v7040 = vld [vmem:[%s7033 + $0x30] sm:$0xff]
  %v7041 = vld [vmem:[%s7033 + $0x38] sm:$0xff]
  %v7042 = vld [vmem:[%s7033 + $0x40] sm:$0xff]
  %v7043 = vld [vmem:[%s7033 + $0x48] sm:$0xff]
  %v7045 = vsel %vm6870, %v6843, 0
  %v7048 = vsel %vm6870, %v6844, 0
  %7050 = vmatprep.subr.mxu0 0.0
  %7051 = vmatpush1.msra.mxu0 0.0
  %7052 = vmatprep.subr.mxu0 0.0
  %7053 = vmatpush1.msra.mxu0 0.0
  %7054 = vmatprep.subr.mxu0 0.0
  %7055 = vmatpush1.msra.mxu0 0.0
  %7056 = vmatprep.subr.mxu0 0.0
  %7057 = vmatpush1.msra.mxu0 0.0
  %7058 = vmatprep.subr.mxu0 0.0
  %7059 = vmatpush1.msra.mxu0 0.0
  %7060 = vmatprep.subr.mxu0 0.0
  %7061 = vmatpush1.msra.mxu0 0.0
  %7062 = vmatprep.subr.mxu0 0.0
  %7063 = vmatpush1.msra.mxu0 %v7043
  %7064 = vmatprep.subr.mxu0 0.0
  %7065 = vmatpush1.msra.mxu0 %v7042
  %7066 = vmatprep.subr.mxu0 0.0
  %7067 = vmatpush1.msra.mxu0 %v7041
  %7068 = vmatprep.subr.mxu0 0.0
  %7069 = vmatpush1.msra.mxu0 %v7040
  %7070 = vmatprep.subr.mxu0 0.0
  %7071 = vmatpush1.msra.mxu0 %v7039
  %7072 = vmatprep.subr.mxu0 0.0
  %7073 = vmatpush1.msra.mxu0 %v7038
  %7074 = vmatprep.subr.mxu0 0.0
  %7075 = vmatpush1.msra.mxu0 %v7037
  %7076 = vmatprep.subr.mxu0 0.0
  %7077 = vmatpush1.msra.mxu0 %v7036
  %7078 = vmatprep.subr.mxu0 0.0
  %7079 = vmatpush1.msra.mxu0 %v7035
  %7080 = vmatprep.subr.mxu0 0.0
  %7081 = vmatpush1.msra.mxu0 %v7034
  %7082 = vmatprep.subr.mxu0 0.0
  %7083 = vmatpush2.msra.mxu0 0.0
  %7084 = vmatprep.subr.mxu0 0.0
  %7085 = vmatpush2.msra.mxu0 0.0
  %7086 = vmatprep.subr.mxu0 0.0
  %7087 = vmatpush2.msra.mxu0 0.0
  %7088 = vmatprep.subr.mxu0 0.0
  %7089 = vmatpush2.msra.mxu0 0.0
  %7090 = vmatprep.subr.mxu0 0.0
  %7091 = vmatpush2.msra.mxu0 0.0
  %7092 = vmatprep.subr.mxu0 0.0
  %7093 = vmatpush2.msra.mxu0 0.0
  %7094 = vmatprep.subr.mxu0 0.0
  %7095 = vmatpush2.msra.mxu0 0.0
  %7096 = vmatprep.subr.mxu0 0.0
  %7097 = vmatpush2.msra.mxu0 0.0
  %7098 = vmatprep.subr.mxu0 0.0
  %7099 = vmatpush2.msra.mxu0 0.0
  %7100 = vmatprep.subr.mxu0 0.0
  %7101 = vmatpush2.msra.mxu0 0.0
  %7102 = vmatprep.subr.mxu0 0.0
  %7103 = vmatpush2.msra.mxu0 0.0
  %7104 = vmatprep.subr.mxu0 0.0
  %7105 = vmatpush2.msra.mxu0 0.0
  %7106 = vmatprep.subr.mxu0 0.0
  %7107 = vmatpush2.msra.mxu0 0.0
  %7108 = vmatprep.subr.mxu0 0.0
  %7109 = vmatpush2.msra.mxu0 0.0
  %7110 = vmatprep.subr.mxu0 0.0
  %7111 = vmatpush2.msra.mxu0 0.0
  %7112 = vmatprep.subr.mxu0 0.0
  %7113 = vmatpush2.msra.mxu0 0.0
  %7114 = vmatprep.mubr.f32.mxu0 0.0
  %7115 = vmatmul.mubr.f32.gmra.mxu0 %v7045
  %v7116 = vpop.f32.mrf.mxu0
  %v7117 = vadd.f32 0.0, %v7116
  %v7118 = vpop.f32.mrf.mxu0
  %7119 = vmatprep.mubr.f32.mxu0 0.0
  %7120 = vmatmul.mubr.f32.gmra.mxu0 %v7048
  %v7121 = vpop.f32.mrf.mxu0
  %v7122 = vadd.f32 0.0, %v7121
  %v7123 = vpop.f32.mrf.mxu0
  %7124 = vdwg.mxu0
  %v7125 = vadd.f32 %v7025, %v7117
  %v7126 = vadd.f32 %v7030, %v7122
  %s7127 = scalar_lea.vmem %s7, 240
  %v7128 = vld [vmem:[%s7127] sm:$0xff]
  %v7129 = vld [vmem:[%s7127 + $0x8] sm:$0xff]
  %v7130 = vld [vmem:[%s7127 + $0x10] sm:$0xff]
  %v7131 = vld [vmem:[%s7127 + $0x18] sm:$0xff]
  %v7132 = vld [vmem:[%s7127 + $0x20] sm:$0xff]
  %v7133 = vld [vmem:[%s7127 + $0x28] sm:$0xff]
  %v7134 = vld [vmem:[%s7127 + $0x30] sm:$0xff]
  %v7135 = vld [vmem:[%s7127 + $0x38] sm:$0xff]
  %v7136 = vld [vmem:[%s7127 + $0x40] sm:$0xff]
  %v7137 = vld [vmem:[%s7127 + $0x48] sm:$0xff]
  %v7139 = vsel %vm6870, %v6845, 0
  %v7142 = vsel %vm6870, %v6846, 0
  %7144 = vmatprep.subr.mxu0 0.0
  %7145 = vmatpush1.msra.mxu0 0.0
  %7146 = vmatprep.subr.mxu0 0.0
  %7147 = vmatpush1.msra.mxu0 0.0
  %7148 = vmatprep.subr.mxu0 0.0
  %7149 = vmatpush1.msra.mxu0 0.0
  %7150 = vmatprep.subr.mxu0 0.0
  %7151 = vmatpush1.msra.mxu0 0.0
  %7152 = vmatprep.subr.mxu0 0.0
  %7153 = vmatpush1.msra.mxu0 0.0
  %7154 = vmatprep.subr.mxu0 0.0
  %7155 = vmatpush1.msra.mxu0 0.0
  %7156 = vmatprep.subr.mxu0 0.0
  %7157 = vmatpush1.msra.mxu0 %v7137
  %7158 = vmatprep.subr.mxu0 0.0
  %7159 = vmatpush1.msra.mxu0 %v7136
  %7160 = vmatprep.subr.mxu0 0.0
  %7161 = vmatpush1.msra.mxu0 %v7135
  %7162 = vmatprep.subr.mxu0 0.0
  %7163 = vmatpush1.msra.mxu0 %v7134
  %7164 = vmatprep.subr.mxu0 0.0
  %7165 = vmatpush1.msra.mxu0 %v7133
  %7166 = vmatprep.subr.mxu0 0.0
  %7167 = vmatpush1.msra.mxu0 %v7132
  %7168 = vmatprep.subr.mxu0 0.0
  %7169 = vmatpush1.msra.mxu0 %v7131
  %7170 = vmatprep.subr.mxu0 0.0
  %7171 = vmatpush1.msra.mxu0 %v7130
  %7172 = vmatprep.subr.mxu0 0.0
  %7173 = vmatpush1.msra.mxu0 %v7129
  %7174 = vmatprep.subr.mxu0 0.0
  %7175 = vmatpush1.msra.mxu0 %v7128
  %7176 = vmatprep.subr.mxu0 0.0
  %7177 = vmatpush2.msra.mxu0 0.0
  %7178 = vmatprep.subr.mxu0 0.0
  %7179 = vmatpush2.msra.mxu0 0.0
  %7180 = vmatprep.subr.mxu0 0.0
  %7181 = vmatpush2.msra.mxu0 0.0
  %7182 = vmatprep.subr.mxu0 0.0
  %7183 = vmatpush2.msra.mxu0 0.0
  %7184 = vmatprep.subr.mxu0 0.0
  %7185 = vmatpush2.msra.mxu0 0.0
  %7186 = vmatprep.subr.mxu0 0.0
  %7187 = vmatpush2.msra.mxu0 0.0
  %7188 = vmatprep.subr.mxu0 0.0
  %7189 = vmatpush2.msra.mxu0 0.0
  %7190 = vmatprep.subr.mxu0 0.0
  %7191 = vmatpush2.msra.mxu0 0.0
  %7192 = vmatprep.subr.mxu0 0.0
  %7193 = vmatpush2.msra.mxu0 0.0
  %7194 = vmatprep.subr.mxu0 0.0
  %7195 = vmatpush2.msra.mxu0 0.0
  %7196 = vmatprep.subr.mxu0 0.0
  %7197 = vmatpush2.msra.mxu0 0.0
  %7198 = vmatprep.subr.mxu0 0.0
  %7199 = vmatpush2.msra.mxu0 0.0
  %7200 = vmatprep.subr.mxu0 0.0
  %7201 = vmatpush2.msra.mxu0 0.0
  %7202 = vmatprep.subr.mxu0 0.0
  %7203 = vmatpush2.msra.mxu0 0.0
  %7204 = vmatprep.subr.mxu0 0.0
  %7205 = vmatpush2.msra.mxu0 0.0
  %7206 = vmatprep.subr.mxu0 0.0
  %7207 = vmatpush2.msra.mxu0 0.0
  %7208 = vmatprep.mubr.f32.mxu0 0.0
  %7209 = vmatmul.mubr.f32.gmra.mxu0 %v7139
  %v7210 = vpop.f32.mrf.mxu0
  %v7211 = vadd.f32 0.0, %v7210
  %v7212 = vpop.f32.mrf.mxu0
  %7213 = vmatprep.mubr.f32.mxu0 0.0
  %7214 = vmatmul.mubr.f32.gmra.mxu0 %v7142
  %v7215 = vpop.f32.mrf.mxu0
  %v7216 = vadd.f32 0.0, %v7215
  %v7217 = vpop.f32.mrf.mxu0
  %7218 = vdwg.mxu0
  %v7219 = vadd.f32 %v7125, %v7211
  %v7220 = vadd.f32 %v7126, %v7216
  %s7221 = scalar_lea.vmem %s7, 320
  %v7222 = vld [vmem:[%s7221] sm:$0xff]
  %v7223 = vld [vmem:[%s7221 + $0x8] sm:$0xff]
  %v7224 = vld [vmem:[%s7221 + $0x10] sm:$0xff]
  %v7225 = vld [vmem:[%s7221 + $0x18] sm:$0xff]
  %v7226 = vld [vmem:[%s7221 + $0x20] sm:$0xff]
  %v7227 = vld [vmem:[%s7221 + $0x28] sm:$0xff]
  %v7228 = vld [vmem:[%s7221 + $0x30] sm:$0xff]
  %v7229 = vld [vmem:[%s7221 + $0x38] sm:$0xff]
  %v7230 = vld [vmem:[%s7221 + $0x40] sm:$0xff]
  %v7231 = vld [vmem:[%s7221 + $0x48] sm:$0xff]
  %v7233 = vsel %vm6870, %v6847, 0
  %v7236 = vsel %vm6870, %v6848, 0
  %7238 = vmatprep.subr.mxu0 0.0
  %7239 = vmatpush1.msra.mxu0 0.0
  %7240 = vmatprep.subr.mxu0 0.0
  %7241 = vmatpush1.msra.mxu0 0.0
  %7242 = vmatprep.subr.mxu0 0.0
  %7243 = vmatpush1.msra.mxu0 0.0
  %7244 = vmatprep.subr.mxu0 0.0
  %7245 = vmatpush1.msra.mxu0 0.0
  %7246 = vmatprep.subr.mxu0 0.0
  %7247 = vmatpush1.msra.mxu0 0.0
  %7248 = vmatprep.subr.mxu0 0.0
  %7249 = vmatpush1.msra.mxu0 0.0
  %7250 = vmatprep.subr.mxu0 0.0
  %7251 = vmatpush1.msra.mxu0 %v7231
  %7252 = vmatprep.subr.mxu0 0.0
  %7253 = vmatpush1.msra.mxu0 %v7230
  %7254 = vmatprep.subr.mxu0 0.0
  %7255 = vmatpush1.msra.mxu0 %v7229
  %7256 = vmatprep.subr.mxu0 0.0
  %7257 = vmatpush1.msra.mxu0 %v7228
  %7258 = vmatprep.subr.mxu0 0.0
  %7259 = vmatpush1.msra.mxu0 %v7227
  %7260 = vmatprep.subr.mxu0 0.0
  %7261 = vmatpush1.msra.mxu0 %v7226
  %7262 = vmatprep.subr.mxu0 0.0
  %7263 = vmatpush1.msra.mxu0 %v7225
  %7264 = vmatprep.subr.mxu0 0.0
  %7265 = vmatpush1.msra.mxu0 %v7224
  %7266 = vmatprep.subr.mxu0 0.0
  %7267 = vmatpush1.msra.mxu0 %v7223
  %7268 = vmatprep.subr.mxu0 0.0
  %7269 = vmatpush1.msra.mxu0 %v7222
  %7270 = vmatprep.subr.mxu0 0.0
  %7271 = vmatpush2.msra.mxu0 0.0
  %7272 = vmatprep.subr.mxu0 0.0
  %7273 = vmatpush2.msra.mxu0 0.0
  %7274 = vmatprep.subr.mxu0 0.0
  %7275 = vmatpush2.msra.mxu0 0.0
  %7276 = vmatprep.subr.mxu0 0.0
  %7277 = vmatpush2.msra.mxu0 0.0
  %7278 = vmatprep.subr.mxu0 0.0
  %7279 = vmatpush2.msra.mxu0 0.0
  %7280 = vmatprep.subr.mxu0 0.0
  %7281 = vmatpush2.msra.mxu0 0.0
  %7282 = vmatprep.subr.mxu0 0.0
  %7283 = vmatpush2.msra.mxu0 0.0
  %7284 = vmatprep.subr.mxu0 0.0
  %7285 = vmatpush2.msra.mxu0 0.0
  %7286 = vmatprep.subr.mxu0 0.0
  %7287 = vmatpush2.msra.mxu0 0.0
  %7288 = vmatprep.subr.mxu0 0.0
  %7289 = vmatpush2.msra.mxu0 0.0
  %7290 = vmatprep.subr.mxu0 0.0
  %7291 = vmatpush2.msra.mxu0 0.0
  %7292 = vmatprep.subr.mxu0 0.0
  %7293 = vmatpush2.msra.mxu0 0.0
  %7294 = vmatprep.subr.mxu0 0.0
  %7295 = vmatpush2.msra.mxu0 0.0
  %7296 = vmatprep.subr.mxu0 0.0
  %7297 = vmatpush2.msra.mxu0 0.0
  %7298 = vmatprep.subr.mxu0 0.0
  %7299 = vmatpush2.msra.mxu0 0.0
  %7300 = vmatprep.subr.mxu0 0.0
  %7301 = vmatpush2.msra.mxu0 0.0
  %7302 = vmatprep.mubr.f32.mxu0 0.0
  %7303 = vmatmul.mubr.f32.gmra.mxu0 %v7233
  %v7304 = vpop.f32.mrf.mxu0
  %v7305 = vadd.f32 0.0, %v7304
  %v7306 = vpop.f32.mrf.mxu0
  %7307 = vmatprep.mubr.f32.mxu0 0.0
  %7308 = vmatmul.mubr.f32.gmra.mxu0 %v7236
  %v7309 = vpop.f32.mrf.mxu0
  %v7310 = vadd.f32 0.0, %v7309
  %v7311 = vpop.f32.mrf.mxu0
  %7312 = vdwg.mxu0
  %v7313 = vadd.f32 %v7219, %v7305
  %v7314 = vadd.f32 %v7220, %v7310
  %v7315 = vld [vmem:[%s8] sm:$0x1]
  %v7317 = vlaneseq
  %v7318 = vshrl.u32 %v7317, 7
  %v7319 = vsub.s32 0, %v7318
  %v7320 = vrot.slane %v7315, %v7319
  %v7322 = vadd.f32 %v7313, %v7320
  %v7323 = vadd.f32 %v7314, %v7320
  %v7324 = vmax.f32 %v7322, 0.0
  %v7325 = vmax.f32 %v7323, 0.0
  %v7326 = vld [vmem:[%s9] sm:$0xff]
  %v7327 = vld [vmem:[%s9 + $0x8] sm:$0xff]
  %v7328 = vld [vmem:[%s9 + $0x10] sm:$0xff]
  %v7329 = vld [vmem:[%s9 + $0x18] sm:$0xff]
  %v7330 = vld [vmem:[%s9 + $0x20] sm:$0xff]
  %v7331 = vld [vmem:[%s9 + $0x28] sm:$0xff]
  %v7332 = vld [vmem:[%s9 + $0x30] sm:$0xff]
  %v7333 = vld [vmem:[%s9 + $0x38] sm:$0xff]
  %v7334 = vld [vmem:[%s9 + $0x40] sm:$0xff]
  %v7335 = vld [vmem:[%s9 + $0x48] sm:$0xff]
  %v7336 = vld [vmem:[%s9 + $0x50] sm:$0xff]
  %v7337 = vld [vmem:[%s9 + $0x58] sm:$0xff]
  %v7338 = vld [vmem:[%s9 + $0x60] sm:$0xff]
  %v7339 = vld [vmem:[%s9 + $0x68] sm:$0xff]
  %v7340 = vld [vmem:[%s9 + $0x70] sm:$0xff]
  %v7341 = vld [vmem:[%s10] sm:$0x1]
  %v7343 = vlaneseq
  %v7344 = vshrl.u32 %v7343, 7
  %v7345 = vsub.s32 0, %v7344
  %v7346 = vrot.slane %v7341, %v7345
  %vm7348 = vcmask 982016
  %v7350 = vsel %vm7348, %v7324, 0
  %v7353 = vsel %vm7348, %v7325, 0
  %7355 = vmatprep.subr.mxu0 0.0
  %7356 = vmatpush1.msra.mxu0 0.0
  %7357 = vmatprep.subr.mxu0 0.0
  %7358 = vmatpush1.msra.mxu0 %v7340
  %7359 = vmatprep.subr.mxu0 0.0
  %7360 = vmatpush1.msra.mxu0 %v7339
  %7361 = vmatprep.subr.mxu0 0.0
  %7362 = vmatpush1.msra.mxu0 %v7338
  %7363 = vmatprep.subr.mxu0 0.0
  %7364 = vmatpush1.msra.mxu0 %v7337
  %7365 = vmatprep.subr.mxu0 0.0
  %7366 = vmatpush1.msra.mxu0 %v7336
  %7367 = vmatprep.subr.mxu0 0.0
  %7368 = vmatpush1.msra.mxu0 %v7335
  %7369 = vmatprep.subr.mxu0 0.0
  %7370 = vmatpush1.msra.mxu0 %v7334
  %7371 = vmatprep.subr.mxu0 0.0
  %7372 = vmatpush1.msra.mxu0 %v7333
  %7373 = vmatprep.subr.mxu0 0.0
  %7374 = vmatpush1.msra.mxu0 %v7332
  %7375 = vmatprep.subr.mxu0 0.0
  %7376 = vmatpush1.msra.mxu0 %v7331
  %7377 = vmatprep.subr.mxu0 0.0
  %7378 = vmatpush1.msra.mxu0 %v7330
  %7379 = vmatprep.subr.mxu0 0.0
  %7380 = vmatpush1.msra.mxu0 %v7329
  %7381 = vmatprep.subr.mxu0 0.0
  %7382 = vmatpush1.msra.mxu0 %v7328
  %7383 = vmatprep.subr.mxu0 0.0
  %7384 = vmatpush1.msra.mxu0 %v7327
  %7385 = vmatprep.subr.mxu0 0.0
  %7386 = vmatpush1.msra.mxu0 %v7326
  %7387 = vmatprep.subr.mxu0 0.0
  %7388 = vmatpush2.msra.mxu0 0.0
  %7389 = vmatprep.subr.mxu0 0.0
  %7390 = vmatpush2.msra.mxu0 0.0
  %7391 = vmatprep.subr.mxu0 0.0
  %7392 = vmatpush2.msra.mxu0 0.0
  %7393 = vmatprep.subr.mxu0 0.0
  %7394 = vmatpush2.msra.mxu0 0.0
  %7395 = vmatprep.subr.mxu0 0.0
  %7396 = vmatpush2.msra.mxu0 0.0
  %7397 = vmatprep.subr.mxu0 0.0
  %7398 = vmatpush2.msra.mxu0 0.0
  %7399 = vmatprep.subr.mxu0 0.0
  %7400 = vmatpush2.msra.mxu0 0.0
  %7401 = vmatprep.subr.mxu0 0.0
  %7402 = vmatpush2.msra.mxu0 0.0
  %7403 = vmatprep.subr.mxu0 0.0
  %7404 = vmatpush2.msra.mxu0 0.0
  %7405 = vmatprep.subr.mxu0 0.0
  %7406 = vmatpush2.msra.mxu0 0.0
  %7407 = vmatprep.subr.mxu0 0.0
  %7408 = vmatpush2.msra.mxu0 0.0
  %7409 = vmatprep.subr.mxu0 0.0
  %7410 = vmatpush2.msra.mxu0 0.0
  %7411 = vmatprep.subr.mxu0 0.0
  %7412 = vmatpush2.msra.mxu0 0.0
  %7413 = vmatprep.subr.mxu0 0.0
  %7414 = vmatpush2.msra.mxu0 0.0
  %7415 = vmatprep.subr.mxu0 0.0
  %7416 = vmatpush2.msra.mxu0 0.0
  %7417 = vmatprep.subr.mxu0 0.0
  %7418 = vmatpush2.msra.mxu0 0.0
  %7419 = vmatprep.mubr.f32.mxu0 0.0
  %7420 = vmatmul.mubr.f32.gmra.mxu0 %v7350
  %v7421 = vpop.f32.mrf.mxu0
  %v7422 = vadd.f32 %v7346, %v7421
  %v7423 = vpop.f32.mrf.mxu0
  %7424 = vmatprep.mubr.f32.mxu0 0.0
  %7425 = vmatmul.mubr.f32.gmra.mxu0 %v7353
  %v7426 = vpop.f32.mrf.mxu0
  %v7427 = vadd.f32 %v7346, %v7426
  %v7428 = vpop.f32.mrf.mxu0
  %7429 = vdwg.mxu0
  %v7430 = vmax.f32 %v7422, 0.0
  %v7431 = vmax.f32 %v7427, 0.0
  %v7432 = vld [vmem:[%s11] sm:$0xff]
  %v7433 = vld [vmem:[%s11 + $0x8] sm:$0xff]
  %v7434 = vld [vmem:[%s11 + $0x10] sm:$0xff]
  %v7435 = vld [vmem:[%s11 + $0x18] sm:$0xff]
  %v7436 = vld [vmem:[%s11 + $0x20] sm:$0xff]
  %v7437 = vld [vmem:[%s11 + $0x28] sm:$0xff]
  %v7438 = vld [vmem:[%s11 + $0x30] sm:$0xff]
  %v7439 = vld [vmem:[%s11 + $0x38] sm:$0xff]
  %v7440 = vld [vmem:[%s11 + $0x40] sm:$0xff]
  %v7441 = vld [vmem:[%s11 + $0x48] sm:$0xff]
  %v7442 = vld [vmem:[%s11 + $0x50] sm:$0xf]
  %v7443 = vld [vmem:[%s12] sm:$0x1]
  %v7445 = vlaneseq
  %v7446 = vshrl.u32 %v7445, 7
  %v7447 = vsub.s32 0, %v7446
  %v7448 = vrot.slane %v7443, %v7447
  %v7451 = vsel %vm4085, %v7430, 0
  %v7454 = vsel %vm4085, %v7431, 0
  %v7457 = vsel %vm4200, %v7442, 0
  %7459 = vmatprep.subr.mxu0 0.0
  %7460 = vmatpush1.msra.mxu0 0.0
  %7461 = vmatprep.subr.mxu0 0.0
  %7462 = vmatpush1.msra.mxu0 0.0
  %7463 = vmatprep.subr.mxu0 0.0
  %7464 = vmatpush1.msra.mxu0 0.0
  %7465 = vmatprep.subr.mxu0 0.0
  %7466 = vmatpush1.msra.mxu0 0.0
  %7467 = vmatprep.subr.mxu0 0.0
  %7468 = vmatpush1.msra.mxu0 0.0
  %7469 = vmatprep.subr.mxu0 0.0
  %7470 = vmatpush1.msra.mxu0 %v7457
  %7471 = vmatprep.subr.mxu0 0.0
  %7472 = vmatpush1.msra.mxu0 %v7441
  %7473 = vmatprep.subr.mxu0 0.0
  %7474 = vmatpush1.msra.mxu0 %v7440
  %7475 = vmatprep.subr.mxu0 0.0
  %7476 = vmatpush1.msra.mxu0 %v7439
  %7477 = vmatprep.subr.mxu0 0.0
  %7478 = vmatpush1.msra.mxu0 %v7438
  %7479 = vmatprep.subr.mxu0 0.0
  %7480 = vmatpush1.msra.mxu0 %v7437
  %7481 = vmatprep.subr.mxu0 0.0
  %7482 = vmatpush1.msra.mxu0 %v7436
  %7483 = vmatprep.subr.mxu0 0.0
  %7484 = vmatpush1.msra.mxu0 %v7435
  %7485 = vmatprep.subr.mxu0 0.0
  %7486 = vmatpush1.msra.mxu0 %v7434
  %7487 = vmatprep.subr.mxu0 0.0
  %7488 = vmatpush1.msra.mxu0 %v7433
  %7489 = vmatprep.subr.mxu0 0.0
  %7490 = vmatpush1.msra.mxu0 %v7432
  %7491 = vmatprep.subr.mxu0 0.0
  %7492 = vmatpush2.msra.mxu0 0.0
  %7493 = vmatprep.subr.mxu0 0.0
  %7494 = vmatpush2.msra.mxu0 0.0
  %7495 = vmatprep.subr.mxu0 0.0
  %7496 = vmatpush2.msra.mxu0 0.0
  %7497 = vmatprep.subr.mxu0 0.0
  %7498 = vmatpush2.msra.mxu0 0.0
  %7499 = vmatprep.subr.mxu0 0.0
  %7500 = vmatpush2.msra.mxu0 0.0
  %7501 = vmatprep.subr.mxu0 0.0
  %7502 = vmatpush2.msra.mxu0 0.0
  %7503 = vmatprep.subr.mxu0 0.0
  %7504 = vmatpush2.msra.mxu0 0.0
  %7505 = vmatprep.subr.mxu0 0.0
  %7506 = vmatpush2.msra.mxu0 0.0
  %7507 = vmatprep.subr.mxu0 0.0
  %7508 = vmatpush2.msra.mxu0 0.0
  %7509 = vmatprep.subr.mxu0 0.0
  %7510 = vmatpush2.msra.mxu0 0.0
  %7511 = vmatprep.subr.mxu0 0.0
  %7512 = vmatpush2.msra.mxu0 0.0
  %7513 = vmatprep.subr.mxu0 0.0
  %7514 = vmatpush2.msra.mxu0 0.0
  %7515 = vmatprep.subr.mxu0 0.0
  %7516 = vmatpush2.msra.mxu0 0.0
  %7517 = vmatprep.subr.mxu0 0.0
  %7518 = vmatpush2.msra.mxu0 0.0
  %7519 = vmatprep.subr.mxu0 0.0
  %7520 = vmatpush2.msra.mxu0 0.0
  %7521 = vmatprep.subr.mxu0 0.0
  %7522 = vmatpush2.msra.mxu0 0.0
  %7523 = vmatprep.mubr.f32.mxu0 0.0
  %7524 = vmatmul.mubr.f32.gmra.mxu0 %v7451
  %v7525 = vpop.f32.mrf.mxu0
  %v7526 = vadd.f32 %v7448, %v7525
  %v7527 = vpop.f32.mrf.mxu0
  %7528 = vmatprep.mubr.f32.mxu0 0.0
  %7529 = vmatmul.mubr.f32.gmra.mxu0 %v7454
  %v7530 = vpop.f32.mrf.mxu0
  %v7531 = vadd.f32 %v7448, %v7530
  %v7532 = vpop.f32.mrf.mxu0
  %7533 = vdwg.mxu0
  %7534 = vst [vmem:[%s13] sm:$0xff] %v7526
  %7535 = vst [vmem:[%s13 + $0x8] sm:$0xff] %v7531
  // Predicated region
  $region54: #{forward.1} parent=0 // pred_check
    _
  $region55: #{forward.1} parent=0 // pred_check_branch
    %7537 = sbr.rel (0) target = $region57
  $region56: #{forward.1} parent=0 // pred_region
    _
  $region57: #{forward.1} parent=0 // pred_fallthru
    _
  // Predicated region
  $region58: #{forward.1} parent=0 // pred_check
    _
  $region59: #{forward.1} parent=0 // pred_check_branch
    %7539 = sbr.rel (0) target = $region61
  $region60: #{forward.1} parent=0 // pred_region
    _
  $region61: #{forward.1} parent=0 // pred_fallthru
    _

</llo_original>
